<compile_context>
chip_gen: v7x
topology: tpu7x:2x2x1
jax: 0.10.0
libtpu: 0.0.40
codegen_flags: <defaults>
</compile_context>

<pallas_src>
import functools
import math

import numpy as np
import jax
import jax.numpy as jnp
from jax import lax
from jax.experimental import pallas as pl
from jax.experimental.pallas import tpu as pltpu


NEG_INF = -1e30            # finite "minus infinity": avoids NaN on fully masked rows
LANE = 128                 # TPU lane width; padded vocab dims are multiples of this


def _round_up(n, m):
    return ((n + m - 1) // m) * m


# ---------------------------------------------------------------------------
# shared math helpers (pure jnp; used by BOTH the Pallas kernel body and the ref)
# ---------------------------------------------------------------------------
def _mm(a, w):
    """Matmul with bf16 MXU inputs and f32 accumulation."""
    return jnp.dot(a.astype(jnp.bfloat16), w.astype(jnp.bfloat16),
                   preferred_element_type=jnp.float32)


def _sigmoid(x):
    # tanh formulation -> EUP transcendental slot, no VPU divide
    return 0.5 * (jnp.tanh(0.5 * x) + 1.0)


def _silu(x):
    return x * _sigmoid(x)


def _ln(x, w, b, eps=1e-5):
    mu = jnp.mean(x, axis=-1, keepdims=True)
    var = jnp.mean(jnp.square(x - mu), axis=-1, keepdims=True)
    return (x - mu) * lax.rsqrt(var + eps) * w + b


def _ffn(h2, lnw, lnb, w1, b1, w2, b2):
    z = _ln(h2, lnw, lnb)
    z = _silu(_mm(z, w1) + b1)
    return _mm(z, w2) + b2


def _mhsa(h2, kbias, lnw, lnb, wq, bq, wk, bk, wv, bv, wo, bo, *,
          num_heads, batch, seq, approx_recip):
    """Multi-head self-attention on a (batch*seq, D) slab; kbias: (batch, 1, seq)."""
    D = h2.shape[-1]
    H = num_heads
    hd = D // H
    xn = _ln(h2, lnw, lnb)
    q = _mm(xn, wq) + bq
    k = _mm(xn, wk) + bk
    v = _mm(xn, wv) + bv

    def split_heads(z):        # (batch*seq, D) -> (H*batch, seq, hd), head-major
        return jnp.concatenate(
            [z[:, i * hd:(i + 1) * hd] for i in range(H)], axis=0
        ).reshape(H * batch, seq, hd)

    qh = split_heads(q).astype(jnp.bfloat16)
    kh = split_heads(k).astype(jnp.bfloat16)
    vh = split_heads(v).astype(jnp.bfloat16)

    s = jnp.einsum('bqd,bkd->bqk', qh, kh, preferred_element_type=jnp.float32)
    s = s * (1.0 / math.sqrt(hd)) + jnp.concatenate([kbias] * H, axis=0)
    m = jnp.max(s, axis=-1, keepdims=True)
    p = jnp.exp(s - m)
    denom = jnp.sum(p, axis=-1, keepdims=True)
    inv = pl.reciprocal(denom, approx=True) if approx_recip else 1.0 / denom
    p = p * inv
    ctx = jnp.einsum('bqk,bkd->bqd', p.astype(jnp.bfloat16), vh,
                     preferred_element_type=jnp.float32)       # (H*batch, seq, hd)
    ctx = ctx.reshape(H, batch * seq, hd)
    ctx = jnp.concatenate([ctx[i] for i in range(H)], axis=-1)  # (batch*seq, D)
    return _mm(ctx, wo) + bo


def _conv_glu(h2, lnw, lnb, pw1_w, pw1_b):
    D = h2.shape[-1]
    xn = _ln(h2, lnw, lnb)
    g = _mm(xn, pw1_w) + pw1_b              # (rows, 2D)
    return g[:, :D] * _sigmoid(g[:, D:])    # GLU over channels (lane-aligned slices)


def _conv_post(acc2, dw_b, bn_sc, bn_sh, pw2_w, pw2_b):
    y = acc2 + dw_b
    y = y * bn_sc + bn_sh                   # eval-mode BatchNorm folded to scale/shift
    y = _silu(y)
    return _mm(y, pw2_w) + pw2_b


def _head_logsoftmax(h2, w, b):
    logits = _mm(h2, w) + b                 # padded vocab columns carry -1e30 bias
    mx = jnp.max(logits, axis=-1, keepdims=True)
    z = logits - mx
    return z - jnp.log(jnp.sum(jnp.exp(z), axis=-1, keepdims=True))


# ---------------------------------------------------------------------------
# fused Pallas kernel: all layers + self-conditioning + final LM head
# ---------------------------------------------------------------------------
def conformer_stack_kernel(ph_flag_ref, lm_flag_ref, x_ref, kbias_ref, *refs,
                           num_heads, dw_pad, n_layer_tensors):
    layer_refs = refs[:n_layer_tensors]
    shared_refs = refs[n_layer_tensors:n_layer_tensors + 8]
    out_refs = refs[n_layer_tensors + 8:n_layer_tensors + 12]
    h_ref, pad_ref = refs[n_layer_tensors + 12:]

    (f1_ln_w, f1_ln_b, f1_w1, f1_b1, f1_w2, f1_b2,
     a_ln_w, a_ln_b, wq, bq, wk, bk, wv, bv, wo, bo,
     c_ln_w, c_ln_b, pw1_w, pw1_b, dw_w, dw_b, bn_sc, bn_sh, pw2_w, pw2_b,
     f2_ln_w, f2_ln_b, f2_w1, f2_b1, f2_w2, f2_b2,
     fin_ln_w, fin_ln_b) = layer_refs
    (lm_w, lm_b, b2h_w, b2h_b, ph_w, ph_b, phb2h_w, phb2h_b) = shared_refs
    pred_ref, hid_ref, inter_ref, phon_ref = out_refs

    l = pl.program_id(1)
    n_layers = pl.num_programs(1)
    BB, T, D = x_ref.shape
    BT = BB * T

    @pl.when(l == 0)
    def _init():
        # hidden state stays resident in VMEM across the layer grid axis
        h_ref[...] = x_ref[...].reshape(BT, D)
        # zero the depthwise-conv padding scratch once; boundary rows stay zero
        pad_ref[...] = jnp.zeros_like(pad_ref)

    h = h_ref[...]                                            # (BT, D) f32

    # ---- feed-forward module 1 (half-step residual) ----
    h = h + 0.5 * _ffn(h, f1_ln_w[0], f1_ln_b[0], f1_w1[0], f1_b1[0],
                       f1_w2[0], f1_b2[0])

    # ---- multi-head self-attention (key padding bias precomputed in wrapper) ----
    h = h + _mhsa(h, kbias_ref[...], a_ln_w[0], a_ln_b[0], wq[0], bq[0], wk[0], bk[0],
                  wv[0], bv[0], wo[0], bo[0],
                  num_heads=num_heads, batch=BB, seq=T, approx_recip=True)

    # ---- convolution module ----
    y = _conv_glu(h, c_ln_w[0], c_ln_b[0], pw1_w[0], pw1_b[0])            # (BT, D)
    pad_ref[:, dw_pad:dw_pad + T, :] = y.reshape(BB, T, D)
    dw = dw_w[0]                                                          # (K, D)
    K = dw.shape[0]
    acc = jnp.zeros((BB, T, D), jnp.float32)
    for kk in range(K):   # static shifted loads + VPU MAC (no (T,T) MXU matmuls)
        acc = acc + pad_ref[:, kk:kk + T, :] * dw[kk:kk + 1, :].reshape(1, 1, D)
    h = h + _conv_post(acc.reshape(BT, D), dw_b[0], bn_sc[0], bn_sh[0],
                       pw2_w[0], pw2_b[0])

    # ---- feed-forward module 2 + final LayerNorm ----
    h = h + 0.5 * _ffn(h, f2_ln_w[0], f2_ln_b[0], f2_w1[0], f2_b1[0],
                       f2_w2[0], f2_b2[0])
    h = _ln(h, fin_ln_w[0], fin_ln_b[0])
    h_ref[...] = h

    # ---- self-conditioning heads (shared weights); compute gated by SMEM flags ----
    # Both heads take the POST-layer hidden `h`; residual deltas accumulate in h_ref,
    # exactly matching the PyTorch control flow (new_hidden = hidden + ph_in + lm_in).
    @pl.when(ph_flag_ref[l] > 0)
    def _phoneme_head():
        ph_logp = _head_logsoftmax(h, ph_w[...], ph_b[...])    # (BT, PVp)
        phon_ref[0] = ph_logp.reshape(BB, T, ph_logp.shape[-1])
        h_ref[...] = h_ref[...] + _mm(ph_logp, phb2h_w[...]) + phb2h_b[...]

    @pl.when(lm_flag_ref[l] > 0)
    def _lm_head():
        lm_logp = _head_logsoftmax(h, lm_w[...], lm_b[...])    # (BT, Vp)
        inter_ref[0] = lm_logp.reshape(BB, T, lm_logp.shape[-1])
        h_ref[...] = h_ref[...] + _mm(lm_logp, b2h_w[...]) + b2h_b[...]

    # ---- final LM head + log-softmax on the last layer ----
    @pl.when(l == n_layers - 1)
    def _finalize():
        hfin = h_ref[...]
        hid_ref[...] = hfin.reshape(BB, T, D)
        pred = _head_logsoftmax(hfin, lm_w[...], lm_b[...])
        pred_ref[...] = pred.reshape(BB, T, pred.shape[-1])


# ---------------------------------------------------------------------------
# parameter preparation (stacking, bf16 weights, lane-padded vocab heads)
# ---------------------------------------------------------------------------
MATMUL_WEIGHT_IDX = frozenset({2, 4, 8, 10, 12, 14, 18, 24, 28, 30})


def _prepare_layer_stack(layer_params):
    n = len(layer_params[0])
    stacked = []
    for i in range(n):
        arr = jnp.stack([lp[i] for lp in layer_params])
        if i in MATMUL_WEIGHT_IDX:
            arr = arr.astype(jnp.bfloat16)        # bf16 MXU weights in HBM/VMEM
        stacked.append(arr)
    return tuple(stacked)


def _prepare_shared(shared):
    lm_w, lm_b, b2h_w, b2h_b, ph_w, ph_b, phb2h_w, phb2h_b = shared

    def pad_cols(w, b):   # head weight (D,V) -> (D,Vp); padded logits get -1e30 bias
        d, v = w.shape
        vp = _round_up(v, LANE)
        wp = jnp.zeros((d, vp), jnp.float32).at[:, :v].set(w).astype(jnp.bfloat16)
        bp = jnp.full((1, vp), NEG_INF, jnp.float32).at[:, :v].set(b)
        return wp, bp

    def pad_rows(w):      # back_to_hidden (V,D) -> (Vp,D); padded rows are zero
        v, d = w.shape
        vp = _round_up(v, LANE)
        return jnp.zeros((vp, d), jnp.float32).at[:v, :].set(w).astype(jnp.bfloat16)

    lm_wp, lm_bp = pad_cols(lm_w, lm_b)
    ph_wp, ph_bp = pad_cols(ph_w, ph_b)
    return (lm_wp, lm_bp, pad_rows(b2h_w), b2h_b,
            ph_wp, ph_bp, pad_rows(phb2h_w), phb2h_b)


# ---------------------------------------------------------------------------
# wrapper: one pallas_call for the whole encoder
# ---------------------------------------------------------------------------
def conformer_forward(x, lengths, layer_params, shared_params, *,
                      inter_layer, phoneme_inter_layer, num_heads, dw_kernel_size):
    B, T, D = x.shape
    L = len(layer_params)
    V = shared_params[0].shape[1]
    PV = shared_params[4].shape[1]
    pad = (dw_kernel_size - 1) // 2
    assert D % num_heads == 0

    stacked = _prepare_layer_stack(layer_params)
    shared = _prepare_shared(shared_params)
    Vp = shared[0].shape[1]
    PVp = shared[4].shape[1]

    ph_flags = jnp.array([1 if (i + 1) in phoneme_inter_layer else 0
                          for i in range(L)], dtype=jnp.int32)
    lm_flags = jnp.array([1 if (i + 1) in inter_layer else 0
                          for i in range(L)], dtype=jnp.int32)

    # key-padding bias: -1e30 where position >= length (masked key), else 0 — computed
    # once in the wrapper and DMA'd per batch block (saves a per-layer jnp.where).
    maskb = (jnp.arange(T)[None, :] >= lengths[:, None])
    kbias = jnp.where(maskb, NEG_INF, 0.0).astype(jnp.float32)[:, None, :]   # (B,1,T)

    BB = B               # fold the whole (small) batch into one program;
    NB = B // BB         # for realistic B, shrink BB and the NB axis scales out
    BT = BB * T          # (it is marked "parallel" -> megacore sharding on v7x).

    def layer_spec(p):
        nd = p.ndim - 1
        return pl.BlockSpec((1,) + p.shape[1:],
                            lambda nb, l, *_, n=nd: (l,) + (0,) * n)

    def shared_spec(p):   # constant index map -> fetched once, never re-DMA'd
        nd = p.ndim
        return pl.BlockSpec(p.shape, lambda nb, l, *_, n=nd: (0,) * n)

    in_specs = ([pl.BlockSpec((BB, T, D), lambda nb, l, *_: (nb, 0, 0)),
                 pl.BlockSpec((BB, 1, T), lambda nb, l, *_: (nb, 0, 0))]
                + [layer_spec(p) for p in stacked]
                + [shared_spec(p) for p in shared])

    out_shape = (jax.ShapeDtypeStruct((B, T, Vp), jnp.float32),     # final log-probs
                 jax.ShapeDtypeStruct((B, T, D), jnp.float32),      # last hidden
                 jax.ShapeDtypeStruct((L, B, T, Vp), jnp.float32),  # per-layer lm preds
                 jax.ShapeDtypeStruct((L, B, T, PVp), jnp.float32)) # per-layer ph preds
    out_specs = (pl.BlockSpec((BB, T, Vp), lambda nb, l, *_: (nb, 0, 0)),
                 pl.BlockSpec((BB, T, D), lambda nb, l, *_: (nb, 0, 0)),
                 pl.BlockSpec((1, BB, T, Vp), lambda nb, l, *_: (l, nb, 0, 0)),
                 pl.BlockSpec((1, BB, T, PVp), lambda nb, l, *_: (l, nb, 0, 0)))

    kernel = functools.partial(conformer_stack_kernel,
                               num_heads=num_heads, dw_pad=pad,
                               n_layer_tensors=len(stacked))

    pred_p, last_hidden, inter_all, ph_all = pl.pallas_call(
        kernel,
        out_shape=out_shape,
        grid_spec=pltpu.PrefetchScalarGridSpec(
            num_scalar_prefetch=2,
            grid=(NB, L),
            in_specs=in_specs,
            out_specs=out_specs,
            scratch_shapes=[pltpu.VMEM((BT, D), jnp.float32),           # resident hidden
                            pltpu.VMEM((BB, T + 2 * pad, D), jnp.float32)]),  # conv pad
        compiler_params=pltpu.CompilerParams(
            dimension_semantics=("parallel", "arbitrary")),
    )(ph_flags, lm_flags, x, kbias, *stacked, *shared)

    pred = pred_p[..., :V]
    inter_list = [inter_all[i, ..., :V] for i in range(L) if (i + 1) in inter_layer]
    ph_list = [ph_all[i, ..., :PV] for i in range(L) if (i + 1) in phoneme_inter_layer]
    # module returns (pred, lengths, inter_list, phoneme_list); last_hidden is extra
    # and only used for the correctness check below.
    return pred, lengths, inter_list, ph_list, last_hidden


# ---------------------------------------------------------------------------
# deterministic synthetic parameters
# ---------------------------------------------------------------------------
def init_layer_params(key, D, K):
    F = 4 * D
    ks = list(jax.random.split(key, 48))
    it = iter(ks)

    def nrm(shape, scale=0.05):
        return (scale * jax.random.normal(next(it), shape)).astype(jnp.float32)

    def ln_pair():
        return 1.0 + nrm((1, D), 0.1), nrm((1, D), 0.1)

    f1_ln_w, f1_ln_b = ln_pair()
    f1_w1, f1_b1 = nrm((D, F)), nrm((1, F))
    f1_w2, f1_b2 = nrm((F, D)), nrm((1, D))
    a_ln_w, a_ln_b = ln_pair()
    wq, bq = nrm((D, D)), nrm((1, D))
    wk, bk = nrm((D, D)), nrm((1, D))
    wv, bv = nrm((D, D)), nrm((1, D))
    wo, bo = nrm((D, D)), nrm((1, D))
    c_ln_w, c_ln_b = ln_pair()
    pw1_w, pw1_b = nrm((D, 2 * D)), nrm((1, 2 * D))
    dw_w, dw_b = nrm((K, D), 0.1), nrm((1, D))
    bn_w = 1.0 + nrm((1, D), 0.1)
    bn_b = nrm((1, D))
    bn_m = nrm((1, D), 0.1)
    bn_v = 1.0 + 0.1 * jax.random.uniform(next(it), (1, D), dtype=jnp.float32)
    # exact reparameterization of eval-mode BatchNorm1d: y*scale + shift
    bn_sc = bn_w * lax.rsqrt(bn_v + 1e-5)
    bn_sh = bn_b - bn_m * bn_sc
    pw2_w, pw2_b = nrm((D, D)), nrm((1, D))
    f2_ln_w, f2_ln_b = ln_pair()
    f2_w1, f2_b1 = nrm((D, F)), nrm((1, F))
    f2_w2, f2_b2 = nrm((F, D)), nrm((1, D))
    fin_ln_w, fin_ln_b = ln_pair()
    return (f1_ln_w, f1_ln_b, f1_w1, f1_b1, f1_w2, f1_b2,
            a_ln_w, a_ln_b, wq, bq, wk, bk, wv, bv, wo, bo,
            c_ln_w, c_ln_b, pw1_w, pw1_b, dw_w, dw_b, bn_sc, bn_sh, pw2_w, pw2_b,
            f2_ln_w, f2_ln_b, f2_w1, f2_b1, f2_w2, f2_b2,
            fin_ln_w, fin_ln_b)


def init_shared_params(key, D, V, PV):
    ks = jax.random.split(key, 8)

    def nrm(k, shape, scale=0.05):
        return (scale * jax.random.normal(k, shape)).astype(jnp.float32)

    lm_w, lm_b = nrm(ks[0], (D, V)), nrm(ks[1], (1, V))
    b2h_w, b2h_b = nrm(ks[2], (V, D)), nrm(ks[3], (1, D))
    ph_w, ph_b = nrm(ks[4], (D, PV)), nrm(ks[5], (1, PV))
    phb2h_w, phb2h_b = nrm(ks[6], (PV, D)), nrm(ks[7], (1, D))
    return (lm_w, lm_b, b2h_w, b2h_b, ph_w, ph_b, phb2h_w, phb2h_b)


# ---------------------------------------------------------------------------
# pure-JAX reference (same math, unpadded heads, PyTorch-style control flow)
# ---------------------------------------------------------------------------
def ref_forward(x, lengths, layer_params, shared_params,
                inter_layer, phoneme_inter_layer, num_heads, dw_ks):
    B, T, D = x.shape
    (lm_w, lm_b, b2h_w, b2h_b, ph_w, ph_b, phb2h_w, phb2h_b) = shared_params
    pad = (dw_ks - 1) // 2
    maskf = (jnp.arange(T)[None, :] >= lengths[:, None]).astype(jnp.float32)[:, None, :]
    kbias = jnp.where(maskf > 0.0, NEG_INF, 0.0)
    h = x.reshape(B * T, D)
    inter_list, ph_list = [], []
    for idx, p in enumerate(layer_params):
        (f1_ln_w, f1_ln_b, f1_w1, f1_b1, f1_w2, f1_b2,
         a_ln_w, a_ln_b, wq, bq, wk, bk, wv, bv, wo, bo,
         c_ln_w, c_ln_b, pw1_w, pw1_b, dw_w, dw_b, bn_sc, bn_sh, pw2_w, pw2_b,
         f2_ln_w, f2_ln_b, f2_w1, f2_b1, f2_w2, f2_b2,
         fin_ln_w, fin_ln_b) = p
        h = h + 0.5 * _ffn(h, f1_ln_w, f1_ln_b, f1_w1, f1_b1, f1_w2, f1_b2)
        h = h + _mhsa(h, kbias, a_ln_w, a_ln_b, wq, bq, wk, bk, wv, bv, wo, bo,
                      num_heads=num_heads, batch=B, seq=T, approx_recip=False)
        y = _conv_glu(h, c_ln_w, c_ln_b, pw1_w, pw1_b).reshape(B, T, D)
        yp = jnp.pad(y, ((0, 0), (pad, pad), (0, 0)))
        acc = jnp.zeros_like(y)
        for kk in range(dw_ks):
            acc = acc + yp[:, kk:kk + T, :] * dw_w[kk][None, None, :]
        h = h + _conv_post(acc.reshape(B * T, D), dw_b, bn_sc, bn_sh, pw2_w, pw2_b)
        h = h + 0.5 * _ffn(h, f2_ln_w, f2_ln_b, f2_w1, f2_b1, f2_w2, f2_b2)
        h = _ln(h, fin_ln_w, fin_ln_b)
        new_h = h
        if (idx + 1) in phoneme_inter_layer:
            ph_logp = _head_logsoftmax(h, ph_w, ph_b)
            ph_list.append(ph_logp.reshape(B, T, -1))
            new_h = new_h + _mm(ph_logp, phb2h_w) + phb2h_b
        if (idx + 1) in inter_layer:
            lm_logp = _head_logsoftmax(h, lm_w, lm_b)
            inter_list.append(lm_logp.reshape(B, T, -1))
            new_h = new_h + _mm(lm_logp, b2h_w) + b2h_b
        h = new_h
    pred = _head_logsoftmax(h, lm_w, lm_b).reshape(B, T, -1)
    return pred, h.reshape(B, T, D), inter_list, ph_list


# ---------------------------------------------------------------------------
if __name__ == "__main__":
    # batch, time, d_hidden, heads, layers, depthwise kernel, vocab, phoneme vocab
    B, T, D, H, L, K = 2, 16, 128, 4, 3, 7
    V, PV = 98, 8
    inter_layer = [3, 6, 9]
    phoneme_inter_layer = [2, 5, 7]

    key = jax.random.PRNGKey(0)
    kx, kp, kh = jax.random.split(key, 3)
    x = jax.random.normal(kx, (B, T, D), dtype=jnp.float32)
    lengths = jnp.array([T, T - 5], dtype=jnp.int32)

    layer_params = [init_layer_params(k, D, K) for k in jax.random.split(kp, L)]
    shared_params = init_shared_params(kh, D, V, PV)

    pred, lens_out, inter_list, ph_list, last_hidden = conformer_forward(
        x, lengths, layer_params, shared_params,
        inter_layer=inter_layer, phoneme_inter_layer=phoneme_inter_layer,
        num_heads=H, dw_kernel_size=K)
    pred = jax.block_until_ready(pred)
    last_hidden = jax.block_until_ready(last_hidden)

    # reference check
    pred_r, hid_r, inter_r, ph_r = ref_forward(
        x, lengths, layer_params, shared_params,
        inter_layer, phoneme_inter_layer, H, K)

    np.testing.assert_allclose(np.asarray(pred), np.asarray(pred_r),
                               rtol=2e-2, atol=2e-2)
    np.testing.assert_allclose(np.asarray(last_hidden), np.asarray(hid_r),
                               rtol=2e-2, atol=2e-2)
    assert len(inter_list) == len(inter_r) and len(ph_list) == len(ph_r)
    for a, b in zip(inter_list, inter_r):
        np.testing.assert_allclose(np.asarray(a), np.asarray(b), rtol=2e-2, atol=2e-2)
    for a, b in zip(ph_list, ph_r):
        np.testing.assert_allclose(np.asarray(a), np.asarray(b), rtol=2e-2, atol=2e-2)
    assert pred.shape == (B, T, V) and last_hidden.shape == (B, T, D)
    assert int(jnp.all(lens_out == lengths))
    print("KERNEL_OK")
</pallas_src>

<mosaic_0001>
module attributes {stable_mosaic.version = 11 : i64} {
  func.func @conformer_stack_kernel(%arg0: i32, %arg1: i32, %arg2: memref<3xi32, #tpu.memory_space<smem>>, %arg3: memref<3xi32, #tpu.memory_space<smem>>, %arg4: memref<2x16x128xf32, #tpu.memory_space<vmem>>, %arg5: memref<2x1x16xf32, #tpu.memory_space<vmem>>, %arg6: memref<1x1x128xf32, #tpu.memory_space<vmem>>, %arg7: memref<1x1x128xf32, #tpu.memory_space<vmem>>, %arg8: memref<1x128x512xbf16, #tpu.memory_space<vmem>>, %arg9: memref<1x1x512xf32, #tpu.memory_space<vmem>>, %arg10: memref<1x512x128xbf16, #tpu.memory_space<vmem>>, %arg11: memref<1x1x128xf32, #tpu.memory_space<vmem>>, %arg12: memref<1x1x128xf32, #tpu.memory_space<vmem>>, %arg13: memref<1x1x128xf32, #tpu.memory_space<vmem>>, %arg14: memref<1x128x128xbf16, #tpu.memory_space<vmem>>, %arg15: memref<1x1x128xf32, #tpu.memory_space<vmem>>, %arg16: memref<1x128x128xbf16, #tpu.memory_space<vmem>>, %arg17: memref<1x1x128xf32, #tpu.memory_space<vmem>>, %arg18: memref<1x128x128xbf16, #tpu.memory_space<vmem>>, %arg19: memref<1x1x128xf32, #tpu.memory_space<vmem>>, %arg20: memref<1x128x128xbf16, #tpu.memory_space<vmem>>, %arg21: memref<1x1x128xf32, #tpu.memory_space<vmem>>, %arg22: memref<1x1x128xf32, #tpu.memory_space<vmem>>, %arg23: memref<1x1x128xf32, #tpu.memory_space<vmem>>, %arg24: memref<1x128x256xbf16, #tpu.memory_space<vmem>>, %arg25: memref<1x1x256xf32, #tpu.memory_space<vmem>>, %arg26: memref<1x7x128xf32, #tpu.memory_space<vmem>>, %arg27: memref<1x1x128xf32, #tpu.memory_space<vmem>>, %arg28: memref<1x1x128xf32, #tpu.memory_space<vmem>>, %arg29: memref<1x1x128xf32, #tpu.memory_space<vmem>>, %arg30: memref<1x128x128xbf16, #tpu.memory_space<vmem>>, %arg31: memref<1x1x128xf32, #tpu.memory_space<vmem>>, %arg32: memref<1x1x128xf32, #tpu.memory_space<vmem>>, %arg33: memref<1x1x128xf32, #tpu.memory_space<vmem>>, %arg34: memref<1x128x512xbf16, #tpu.memory_space<vmem>>, %arg35: memref<1x1x512xf32, #tpu.memory_space<vmem>>, %arg36: memref<1x512x128xbf16, #tpu.memory_space<vmem>>, %arg37: memref<1x1x128xf32, #tpu.memory_space<vmem>>, %arg38: memref<1x1x128xf32, #tpu.memory_space<vmem>>, %arg39: memref<1x1x128xf32, #tpu.memory_space<vmem>>, %arg40: memref<128x128xbf16, #tpu.memory_space<vmem>>, %arg41: memref<1x128xf32, #tpu.memory_space<vmem>>, %arg42: memref<128x128xbf16, #tpu.memory_space<vmem>>, %arg43: memref<1x128xf32, #tpu.memory_space<vmem>>, %arg44: memref<128x128xbf16, #tpu.memory_space<vmem>>, %arg45: memref<1x128xf32, #tpu.memory_space<vmem>>, %arg46: memref<128x128xbf16, #tpu.memory_space<vmem>>, %arg47: memref<1x128xf32, #tpu.memory_space<vmem>>, %arg48: memref<2x16x128xf32, #tpu.memory_space<vmem>>, %arg49: memref<2x16x128xf32, #tpu.memory_space<vmem>>, %arg50: memref<1x2x16x128xf32, #tpu.memory_space<vmem>>, %arg51: memref<1x2x16x128xf32, #tpu.memory_space<vmem>>, %arg52: memref<32x128xf32, #tpu.memory_space<vmem>>, %arg53: memref<2x22x128xf32, #tpu.memory_space<vmem>>) attributes {dimension_semantics = [#tpu.dimension_semantics<parallel>, #tpu.dimension_semantics<arbitrary>], iteration_bounds = array<i64: 1, 3>, scalar_prefetch = 2 : i64, scratch_operands = 2 : i64, tpu.core_type = #tpu.core_type<tc>, window_params = [{transform_indices = @transform_0, window_bounds = array<i64: 2, 16, 128>}, {transform_indices = @transform_1, window_bounds = array<i64: 2, 1, 16>}, {transform_indices = @transform_2, window_bounds = array<i64: 1, 1, 128>}, {transform_indices = @transform_3, window_bounds = array<i64: 1, 1, 128>}, {transform_indices = @transform_4, window_bounds = array<i64: 1, 128, 512>}, {transform_indices = @transform_5, window_bounds = array<i64: 1, 1, 512>}, {transform_indices = @transform_6, window_bounds = array<i64: 1, 512, 128>}, {transform_indices = @transform_7, window_bounds = array<i64: 1, 1, 128>}, {transform_indices = @transform_8, window_bounds = array<i64: 1, 1, 128>}, {transform_indices = @transform_9, window_bounds = array<i64: 1, 1, 128>}, {transform_indices = @transform_10, window_bounds = array<i64: 1, 128, 128>}, {transform_indices = @transform_11, window_bounds = array<i64: 1, 1, 128>}, {transform_indices = @transform_12, window_bounds = array<i64: 1, 128, 128>}, {transform_indices = @transform_13, window_bounds = array<i64: 1, 1, 128>}, {transform_indices = @transform_14, window_bounds = array<i64: 1, 128, 128>}, {transform_indices = @transform_15, window_bounds = array<i64: 1, 1, 128>}, {transform_indices = @transform_16, window_bounds = array<i64: 1, 128, 128>}, {transform_indices = @transform_17, window_bounds = array<i64: 1, 1, 128>}, {transform_indices = @transform_18, window_bounds = array<i64: 1, 1, 128>}, {transform_indices = @transform_19, window_bounds = array<i64: 1, 1, 128>}, {transform_indices = @transform_20, window_bounds = array<i64: 1, 128, 256>}, {transform_indices = @transform_21, window_bounds = array<i64: 1, 1, 256>}, {transform_indices = @transform_22, window_bounds = array<i64: 1, 7, 128>}, {transform_indices = @transform_23, window_bounds = array<i64: 1, 1, 128>}, {transform_indices = @transform_24, window_bounds = array<i64: 1, 1, 128>}, {transform_indices = @transform_25, window_bounds = array<i64: 1, 1, 128>}, {transform_indices = @transform_26, window_bounds = array<i64: 1, 128, 128>}, {transform_indices = @transform_27, window_bounds = array<i64: 1, 1, 128>}, {transform_indices = @transform_28, window_bounds = array<i64: 1, 1, 128>}, {transform_indices = @transform_29, window_bounds = array<i64: 1, 1, 128>}, {transform_indices = @transform_30, window_bounds = array<i64: 1, 128, 512>}, {transform_indices = @transform_31, window_bounds = array<i64: 1, 1, 512>}, {transform_indices = @transform_32, window_bounds = array<i64: 1, 512, 128>}, {transform_indices = @transform_33, window_bounds = array<i64: 1, 1, 128>}, {transform_indices = @transform_34, window_bounds = array<i64: 1, 1, 128>}, {transform_indices = @transform_35, window_bounds = array<i64: 1, 1, 128>}, {pipeline_mode = #tpu.pipeline_mode<synchronous>, transform_indices = @transform_36, window_bounds = array<i64: 128, 128>}, {pipeline_mode = #tpu.pipeline_mode<synchronous>, transform_indices = @transform_37, window_bounds = array<i64: 1, 128>}, {pipeline_mode = #tpu.pipeline_mode<synchronous>, transform_indices = @transform_38, window_bounds = array<i64: 128, 128>}, {pipeline_mode = #tpu.pipeline_mode<synchronous>, transform_indices = @transform_39, window_bounds = array<i64: 1, 128>}, {pipeline_mode = #tpu.pipeline_mode<synchronous>, transform_indices = @transform_40, window_bounds = array<i64: 128, 128>}, {pipeline_mode = #tpu.pipeline_mode<synchronous>, transform_indices = @transform_41, window_bounds = array<i64: 1, 128>}, {pipeline_mode = #tpu.pipeline_mode<synchronous>, transform_indices = @transform_42, window_bounds = array<i64: 128, 128>}, {pipeline_mode = #tpu.pipeline_mode<synchronous>, transform_indices = @transform_43, window_bounds = array<i64: 1, 128>}, {transform_indices = @transform_44, window_bounds = array<i64: 2, 16, 128>}, {transform_indices = @transform_45, window_bounds = array<i64: 2, 16, 128>}, {transform_indices = @transform_46, window_bounds = array<i64: 1, 2, 16, 128>}, {transform_indices = @transform_47, window_bounds = array<i64: 1, 2, 16, 128>}]} {
    %c0_i32 = arith.constant 0 : i32
    %0 = arith.cmpi eq, %arg1, %c0_i32 : i32
    %1 = arith.extui %0 : i1 to i32
    %c0_i32_0 = arith.constant 0 : i32
    %2 = arith.cmpi ne, %1, %c0_i32_0 : i32
    scf.if %2 {
      %c0_186 = arith.constant 0 : index
      %c0_187 = arith.constant 0 : index
      %c0_188 = arith.constant 0 : index
      %380 = vector.load %arg4[%c0_186, %c0_187, %c0_188] : memref<2x16x128xf32, #tpu.memory_space<vmem>>, vector<2x16x128xf32>
      %381 = vector.shape_cast %380 : vector<2x16x128xf32> to vector<32x128xf32>
      %c0_189 = arith.constant 0 : index
      %c0_190 = arith.constant 0 : index
      %382 = vector.load %arg52[%c0_189, %c0_190] : memref<32x128xf32, #tpu.memory_space<vmem>>, vector<32x128xf32>
      tpu.vector_store %arg52[%c0_189, %c0_190], %381 {strides = array<i32>} : memref<32x128xf32, #tpu.memory_space<vmem>>, vector<32x128xf32>,
      %cst_191 = arith.constant 0.000000e+00 : f32
      %383 = vector.broadcast %cst_191 : f32 to vector<2x22x128xf32>
      %c0_192 = arith.constant 0 : index
      %c0_193 = arith.constant 0 : index
      %c0_194 = arith.constant 0 : index
      %384 = vector.load %arg53[%c0_192, %c0_193, %c0_194] : memref<2x22x128xf32, #tpu.memory_space<vmem>>, vector<2x22x128xf32>
      tpu.vector_store %arg53[%c0_192, %c0_193, %c0_194], %383 {strides = array<i32>} : memref<2x22x128xf32, #tpu.memory_space<vmem>>, vector<2x22x128xf32>,
    } else {
    }
    %c0 = arith.constant 0 : index
    %c0_1 = arith.constant 0 : index
    %3 = vector.load %arg52[%c0, %c0_1] : memref<32x128xf32, #tpu.memory_space<vmem>>, vector<32x128xf32>
    %c0_2 = arith.constant 0 : index
    %c0_3 = arith.constant 0 : index
    %c0_4 = arith.constant 0 : index
    %4 = vector.load %arg6[%c0_2, %c0_3, %c0_4] : memref<1x1x128xf32, #tpu.memory_space<vmem>>, vector<1x1x128xf32>
    %5 = vector.shape_cast %4 : vector<1x1x128xf32> to vector<1x128xf32>
    %c0_5 = arith.constant 0 : index
    %c0_6 = arith.constant 0 : index
    %c0_7 = arith.constant 0 : index
    %6 = vector.load %arg7[%c0_5, %c0_6, %c0_7] : memref<1x1x128xf32, #tpu.memory_space<vmem>>, vector<1x1x128xf32>
    %7 = vector.shape_cast %6 : vector<1x1x128xf32> to vector<1x128xf32>
    %c0_8 = arith.constant 0 : index
    %c0_9 = arith.constant 0 : index
    %c0_10 = arith.constant 0 : index
    %8 = vector.load %arg8[%c0_8, %c0_9, %c0_10] : memref<1x128x512xbf16, #tpu.memory_space<vmem>>, vector<1x128x512xbf16>
    %9 = vector.shape_cast %8 : vector<1x128x512xbf16> to vector<128x512xbf16>
    %c0_11 = arith.constant 0 : index
    %c0_12 = arith.constant 0 : index
    %c0_13 = arith.constant 0 : index
    %10 = vector.load %arg9[%c0_11, %c0_12, %c0_13] : memref<1x1x512xf32, #tpu.memory_space<vmem>>, vector<1x1x512xf32>
    %11 = vector.shape_cast %10 : vector<1x1x512xf32> to vector<1x512xf32>
    %c0_14 = arith.constant 0 : index
    %c0_15 = arith.constant 0 : index
    %c0_16 = arith.constant 0 : index
    %12 = vector.load %arg10[%c0_14, %c0_15, %c0_16] : memref<1x512x128xbf16, #tpu.memory_space<vmem>>, vector<1x512x128xbf16>
    %13 = vector.shape_cast %12 : vector<1x512x128xbf16> to vector<512x128xbf16>
    %c0_17 = arith.constant 0 : index
    %c0_18 = arith.constant 0 : index
    %c0_19 = arith.constant 0 : index
    %14 = vector.load %arg11[%c0_17, %c0_18, %c0_19] : memref<1x1x128xf32, #tpu.memory_space<vmem>>, vector<1x1x128xf32>
    %15 = vector.shape_cast %14 : vector<1x1x128xf32> to vector<1x128xf32>
    %cst = arith.constant dense<0.000000e+00> : vector<32xf32>
    %16 = vector.multi_reduction <add>, %3, %cst [1] : vector<32x128xf32> to vector<32xf32>
    %17 = vector.shape_cast %16 : vector<32xf32> to vector<32x1xf32>
    %cst_20 = arith.constant 1.280000e+02 : f32
    %18 = vector.broadcast %cst_20 : f32 to vector<32x1xf32>
    %19 = arith.divf %17, %18 : vector<32x1xf32>
    %20 = vector.broadcast %19 : vector<32x1xf32> to vector<32x128xf32>
    %21 = arith.subf %3, %20 : vector<32x128xf32>
    %22 = arith.mulf %21, %21 : vector<32x128xf32>
    %cst_21 = arith.constant dense<0.000000e+00> : vector<32xf32>
    %23 = vector.multi_reduction <add>, %22, %cst_21 [1] : vector<32x128xf32> to vector<32xf32>
    %24 = vector.shape_cast %23 : vector<32xf32> to vector<32x1xf32>
    %cst_22 = arith.constant 1.280000e+02 : f32
    %25 = vector.broadcast %cst_22 : f32 to vector<32x1xf32>
    %26 = arith.divf %24, %25 : vector<32x1xf32>
    %27 = vector.broadcast %19 : vector<32x1xf32> to vector<32x128xf32>
    %28 = arith.subf %3, %27 : vector<32x128xf32>
    %cst_23 = arith.constant 9.99999974E-6 : f32
    %29 = vector.broadcast %cst_23 : f32 to vector<32x1xf32>
    %30 = arith.addf %26, %29 : vector<32x1xf32>
    %31 = math.rsqrt %30 : vector<32x1xf32>
    %32 = vector.broadcast %31 : vector<32x1xf32> to vector<32x128xf32>
    %33 = arith.mulf %28, %32 : vector<32x128xf32>
    %34 = vector.broadcast %5 : vector<1x128xf32> to vector<32x128xf32>
    %35 = arith.mulf %33, %34 : vector<32x128xf32>
    %36 = vector.broadcast %7 : vector<1x128xf32> to vector<32x128xf32>
    %37 = arith.addf %35, %36 : vector<32x128xf32>
    %38 = arith.truncf %37 : vector<32x128xf32> to vector<32x128xbf16>
    %cst_24 = arith.constant dense<0.000000e+00> : vector<32x512xf32>
    %39 = tpu.matmul %38, %9, %cst_24 {dimension_numbers = #tpu.dot_dimension_numbers<[1], [0], [0], [1], [0, 0, 1, 1], [], []>} : vector<32x128xbf16>, vector<128x512xbf16>, vector<32x512xf32> -> vector<32x512xf32>
    %40 = vector.broadcast %11 : vector<1x512xf32> to vector<32x512xf32>
    %41 = arith.addf %39, %40 : vector<32x512xf32>
    %cst_25 = arith.constant 5.000000e-01 : f32
    %42 = vector.broadcast %cst_25 : f32 to vector<32x512xf32>
    %43 = arith.mulf %42, %41 : vector<32x512xf32>
    %44 = math.tanh %43 : vector<32x512xf32>
    %cst_26 = arith.constant 1.000000e+00 : f32
    %45 = vector.broadcast %cst_26 : f32 to vector<32x512xf32>
    %46 = arith.addf %44, %45 : vector<32x512xf32>
    %cst_27 = arith.constant 5.000000e-01 : f32
    %47 = vector.broadcast %cst_27 : f32 to vector<32x512xf32>
    %48 = arith.mulf %47, %46 : vector<32x512xf32>
    %49 = arith.mulf %41, %48 : vector<32x512xf32>
    %50 = arith.truncf %49 : vector<32x512xf32> to vector<32x512xbf16>
    %cst_28 = arith.constant dense<0.000000e+00> : vector<32x128xf32>
    %51 = tpu.matmul %50, %13, %cst_28 {dimension_numbers = #tpu.dot_dimension_numbers<[1], [0], [0], [1], [0, 0, 1, 1], [], []>} : vector<32x512xbf16>, vector<512x128xbf16>, vector<32x128xf32> -> vector<32x128xf32>
    %52 = vector.broadcast %15 : vector<1x128xf32> to vector<32x128xf32>
    %53 = arith.addf %51, %52 : vector<32x128xf32>
    %cst_29 = arith.constant 5.000000e-01 : f32
    %54 = vector.broadcast %cst_29 : f32 to vector<32x128xf32>
    %55 = arith.mulf %54, %53 : vector<32x128xf32>
    %56 = arith.addf %3, %55 : vector<32x128xf32>
    %c0_30 = arith.constant 0 : index
    %c0_31 = arith.constant 0 : index
    %c0_32 = arith.constant 0 : index
    %57 = vector.load %arg5[%c0_30, %c0_31, %c0_32] : memref<2x1x16xf32, #tpu.memory_space<vmem>>, vector<2x1x16xf32>
    %c0_33 = arith.constant 0 : index
    %c0_34 = arith.constant 0 : index
    %c0_35 = arith.constant 0 : index
    %58 = vector.load %arg12[%c0_33, %c0_34, %c0_35] : memref<1x1x128xf32, #tpu.memory_space<vmem>>, vector<1x1x128xf32>
    %59 = vector.shape_cast %58 : vector<1x1x128xf32> to vector<1x128xf32>
    %c0_36 = arith.constant 0 : index
    %c0_37 = arith.constant 0 : index
    %c0_38 = arith.constant 0 : index
    %60 = vector.load %arg13[%c0_36, %c0_37, %c0_38] : memref<1x1x128xf32, #tpu.memory_space<vmem>>, vector<1x1x128xf32>
    %61 = vector.shape_cast %60 : vector<1x1x128xf32> to vector<1x128xf32>
    %c0_39 = arith.constant 0 : index
    %c0_40 = arith.constant 0 : index
    %c0_41 = arith.constant 0 : index
    %62 = vector.load %arg14[%c0_39, %c0_40, %c0_41] : memref<1x128x128xbf16, #tpu.memory_space<vmem>>, vector<1x128x128xbf16>
    %63 = vector.shape_cast %62 : vector<1x128x128xbf16> to vector<128x128xbf16>
    %c0_42 = arith.constant 0 : index
    %c0_43 = arith.constant 0 : index
    %c0_44 = arith.constant 0 : index
    %64 = vector.load %arg15[%c0_42, %c0_43, %c0_44] : memref<1x1x128xf32, #tpu.memory_space<vmem>>, vector<1x1x128xf32>
    %65 = vector.shape_cast %64 : vector<1x1x128xf32> to vector<1x128xf32>
    %c0_45 = arith.constant 0 : index
    %c0_46 = arith.constant 0 : index
    %c0_47 = arith.constant 0 : index
    %66 = vector.load %arg16[%c0_45, %c0_46, %c0_47] : memref<1x128x128xbf16, #tpu.memory_space<vmem>>, vector<1x128x128xbf16>
    %67 = vector.shape_cast %66 : vector<1x128x128xbf16> to vector<128x128xbf16>
    %c0_48 = arith.constant 0 : index
    %c0_49 = arith.constant 0 : index
    %c0_50 = arith.constant 0 : index
    %68 = vector.load %arg17[%c0_48, %c0_49, %c0_50] : memref<1x1x128xf32, #tpu.memory_space<vmem>>, vector<1x1x128xf32>
    %69 = vector.shape_cast %68 : vector<1x1x128xf32> to vector<1x128xf32>
    %c0_51 = arith.constant 0 : index
    %c0_52 = arith.constant 0 : index
    %c0_53 = arith.constant 0 : index
    %70 = vector.load %arg18[%c0_51, %c0_52, %c0_53] : memref<1x128x128xbf16, #tpu.memory_space<vmem>>, vector<1x128x128xbf16>
    %71 = vector.shape_cast %70 : vector<1x128x128xbf16> to vector<128x128xbf16>
    %c0_54 = arith.constant 0 : index
    %c0_55 = arith.constant 0 : index
    %c0_56 = arith.constant 0 : index
    %72 = vector.load %arg19[%c0_54, %c0_55, %c0_56] : memref<1x1x128xf32, #tpu.memory_space<vmem>>, vector<1x1x128xf32>
    %73 = vector.shape_cast %72 : vector<1x1x128xf32> to vector<1x128xf32>
    %c0_57 = arith.constant 0 : index
    %c0_58 = arith.constant 0 : index
    %c0_59 = arith.constant 0 : index
    %74 = vector.load %arg20[%c0_57, %c0_58, %c0_59] : memref<1x128x128xbf16, #tpu.memory_space<vmem>>, vector<1x128x128xbf16>
    %75 = vector.shape_cast %74 : vector<1x128x128xbf16> to vector<128x128xbf16>
    %c0_60 = arith.constant 0 : index
    %c0_61 = arith.constant 0 : index
    %c0_62 = arith.constant 0 : index
    %76 = vector.load %arg21[%c0_60, %c0_61, %c0_62] : memref<1x1x128xf32, #tpu.memory_space<vmem>>, vector<1x1x128xf32>
    %77 = vector.shape_cast %76 : vector<1x1x128xf32> to vector<1x128xf32>
    %cst_63 = arith.constant dense<0.000000e+00> : vector<32xf32>
    %78 = vector.multi_reduction <add>, %56, %cst_63 [1] : vector<32x128xf32> to vector<32xf32>
    %79 = vector.shape_cast %78 : vector<32xf32> to vector<32x1xf32>
    %cst_64 = arith.constant 1.280000e+02 : f32
    %80 = vector.broadcast %cst_64 : f32 to vector<32x1xf32>
    %81 = arith.divf %79, %80 : vector<32x1xf32>
    %82 = vector.broadcast %81 : vector<32x1xf32> to vector<32x128xf32>
    %83 = arith.subf %56, %82 : vector<32x128xf32>
    %84 = arith.mulf %83, %83 : vector<32x128xf32>
    %cst_65 = arith.constant dense<0.000000e+00> : vector<32xf32>
    %85 = vector.multi_reduction <add>, %84, %cst_65 [1] : vector<32x128xf32> to vector<32xf32>
    %86 = vector.shape_cast %85 : vector<32xf32> to vector<32x1xf32>
    %cst_66 = arith.constant 1.280000e+02 : f32
    %87 = vector.broadcast %cst_66 : f32 to vector<32x1xf32>
    %88 = arith.divf %86, %87 : vector<32x1xf32>
    %89 = vector.broadcast %81 : vector<32x1xf32> to vector<32x128xf32>
    %90 = arith.subf %56, %89 : vector<32x128xf32>
    %cst_67 = arith.constant 9.99999974E-6 : f32
    %91 = vector.broadcast %cst_67 : f32 to vector<32x1xf32>
    %92 = arith.addf %88, %91 : vector<32x1xf32>
    %93 = math.rsqrt %92 : vector<32x1xf32>
    %94 = vector.broadcast %93 : vector<32x1xf32> to vector<32x128xf32>
    %95 = arith.mulf %90, %94 : vector<32x128xf32>
    %96 = vector.broadcast %59 : vector<1x128xf32> to vector<32x128xf32>
    %97 = arith.mulf %95, %96 : vector<32x128xf32>
    %98 = vector.broadcast %61 : vector<1x128xf32> to vector<32x128xf32>
    %99 = arith.addf %97, %98 : vector<32x128xf32>
    %100 = arith.truncf %99 : vector<32x128xf32> to vector<32x128xbf16>
    %cst_68 = arith.constant dense<0.000000e+00> : vector<32x128xf32>
    %101 = tpu.matmul %100, %63, %cst_68 {dimension_numbers = #tpu.dot_dimension_numbers<[1], [0], [0], [1], [0, 0, 1, 1], [], []>} : vector<32x128xbf16>, vector<128x128xbf16>, vector<32x128xf32> -> vector<32x128xf32>
    %102 = vector.broadcast %65 : vector<1x128xf32> to vector<32x128xf32>
    %103 = arith.addf %101, %102 : vector<32x128xf32>
    %104 = arith.truncf %99 : vector<32x128xf32> to vector<32x128xbf16>
    %cst_69 = arith.constant dense<0.000000e+00> : vector<32x128xf32>
    %105 = tpu.matmul %104, %67, %cst_69 {dimension_numbers = #tpu.dot_dimension_numbers<[1], [0], [0], [1], [0, 0, 1, 1], [], []>} : vector<32x128xbf16>, vector<128x128xbf16>, vector<32x128xf32> -> vector<32x128xf32>
    %106 = vector.broadcast %69 : vector<1x128xf32> to vector<32x128xf32>
    %107 = arith.addf %105, %106 : vector<32x128xf32>
    %108 = arith.truncf %99 : vector<32x128xf32> to vector<32x128xbf16>
    %cst_70 = arith.constant dense<0.000000e+00> : vector<32x128xf32>
    %109 = tpu.matmul %108, %71, %cst_70 {dimension_numbers = #tpu.dot_dimension_numbers<[1], [0], [0], [1], [0, 0, 1, 1], [], []>} : vector<32x128xbf16>, vector<128x128xbf16>, vector<32x128xf32> -> vector<32x128xf32>
    %110 = vector.broadcast %73 : vector<1x128xf32> to vector<32x128xf32>
    %111 = arith.addf %109, %110 : vector<32x128xf32>
    %112 = vector.extract_strided_slice %103 {offsets = [0, 0], sizes = [32, 32], strides = [1, 1]} : vector<32x128xf32> to vector<32x32xf32>
    %113 = vector.extract_strided_slice %103 {offsets = [0, 32], sizes = [32, 32], strides = [1, 1]} : vector<32x128xf32> to vector<32x32xf32>
    %114 = vector.extract_strided_slice %103 {offsets = [0, 64], sizes = [32, 32], strides = [1, 1]} : vector<32x128xf32> to vector<32x32xf32>
    %115 = vector.extract_strided_slice %103 {offsets = [0, 96], sizes = [32, 32], strides = [1, 1]} : vector<32x128xf32> to vector<32x32xf32>
    %116 = tpu.concatenate %112, %113, %114, %115 in 0 : vector<32x32xf32>, vector<32x32xf32>, vector<32x32xf32>, vector<32x32xf32> -> vector<128x32xf32>
    %117 = vector.shape_cast %116 : vector<128x32xf32> to vector<8x16x32xf32>
    %118 = arith.truncf %117 : vector<8x16x32xf32> to vector<8x16x32xbf16>
    %119 = vector.extract_strided_slice %107 {offsets = [0, 0], sizes = [32, 32], strides = [1, 1]} : vector<32x128xf32> to vector<32x32xf32>
    %120 = vector.extract_strided_slice %107 {offsets = [0, 32], sizes = [32, 32], strides = [1, 1]} : vector<32x128xf32> to vector<32x32xf32>
    %121 = vector.extract_strided_slice %107 {offsets = [0, 64], sizes = [32, 32], strides = [1, 1]} : vector<32x128xf32> to vector<32x32xf32>
    %122 = vector.extract_strided_slice %107 {offsets = [0, 96], sizes = [32, 32], strides = [1, 1]} : vector<32x128xf32> to vector<32x32xf32>
    %123 = tpu.concatenate %119, %120, %121, %122 in 0 : vector<32x32xf32>, vector<32x32xf32>, vector<32x32xf32>, vector<32x32xf32> -> vector<128x32xf32>
    %124 = vector.shape_cast %123 : vector<128x32xf32> to vector<8x16x32xf32>
    %125 = arith.truncf %124 : vector<8x16x32xf32> to vector<8x16x32xbf16>
    %126 = vector.extract_strided_slice %111 {offsets = [0, 0], sizes = [32, 32], strides = [1, 1]} : vector<32x128xf32> to vector<32x32xf32>
    %127 = vector.extract_strided_slice %111 {offsets = [0, 32], sizes = [32, 32], strides = [1, 1]} : vector<32x128xf32> to vector<32x32xf32>
    %128 = vector.extract_strided_slice %111 {offsets = [0, 64], sizes = [32, 32], strides = [1, 1]} : vector<32x128xf32> to vector<32x32xf32>
    %129 = vector.extract_strided_slice %111 {offsets = [0, 96], sizes = [32, 32], strides = [1, 1]} : vector<32x128xf32> to vector<32x32xf32>
    %130 = tpu.concatenate %126, %127, %128, %129 in 0 : vector<32x32xf32>, vector<32x32xf32>, vector<32x32xf32>, vector<32x32xf32> -> vector<128x32xf32>
    %131 = vector.shape_cast %130 : vector<128x32xf32> to vector<8x16x32xf32>
    %132 = arith.truncf %131 : vector<8x16x32xf32> to vector<8x16x32xbf16>
    "tpu.trace_start"() <{level = 10 : i32, message = "bqd,bkd->bqk"}> : () -> ()
    %cst_71 = arith.constant dense<0.000000e+00> : vector<8x16x16xf32>
    %133 = tpu.matmul %118, %125, %cst_71 {dimension_numbers = #tpu.dot_dimension_numbers<[2], [2], [1], [1], [0, 0, 0, 1, 1, 1], [0], [0]>} : vector<8x16x32xbf16>, vector<8x16x32xbf16>, vector<8x16x16xf32> -> vector<8x16x16xf32>
    "tpu.trace_stop"() : () -> ()
    %cst_72 = arith.constant 0.176776692 : f32
    %134 = vector.broadcast %cst_72 : f32 to vector<8x16x16xf32>
    %135 = arith.mulf %133, %134 : vector<8x16x16xf32>
    %136 = tpu.concatenate %57, %57, %57, %57 in 0 : vector<2x1x16xf32>, vector<2x1x16xf32>, vector<2x1x16xf32>, vector<2x1x16xf32> -> vector<8x1x16xf32>
    %137 = vector.broadcast %136 : vector<8x1x16xf32> to vector<8x16x16xf32>
    %138 = arith.addf %135, %137 : vector<8x16x16xf32>
    %cst_73 = arith.constant dense<0xFF800000> : vector<8x16xf32>
    %139 = vector.multi_reduction <maximumf>, %138, %cst_73 [2] : vector<8x16x16xf32> to vector<8x16xf32>
    %140 = vector.shape_cast %139 : vector<8x16xf32> to vector<8x16x1xf32>
    %141 = vector.broadcast %140 : vector<8x16x1xf32> to vector<8x16x16xf32>
    %142 = arith.subf %138, %141 : vector<8x16x16xf32>
    %143 = math.exp %142 : vector<8x16x16xf32>
    %cst_74 = arith.constant dense<0.000000e+00> : vector<8x16xf32>
    %144 = vector.multi_reduction <add>, %143, %cst_74 [2] : vector<8x16x16xf32> to vector<8x16xf32>
    %145 = vector.shape_cast %144 : vector<8x16xf32> to vector<8x16x1xf32>
    %146 = tpu.reciprocal %145 {approx = true} : vector<8x16x1xf32> -> vector<8x16x1xf32>
    %147 = vector.broadcast %146 : vector<8x16x1xf32> to vector<8x16x16xf32>
    %148 = arith.mulf %143, %147 : vector<8x16x16xf32>
    %149 = arith.truncf %148 : vector<8x16x16xf32> to vector<8x16x16xbf16>
    "tpu.trace_start"() <{level = 10 : i32, message = "bqk,bkd->bqd"}> : () -> ()
    %cst_75 = arith.constant dense<0.000000e+00> : vector<8x16x32xf32>
    %150 = tpu.matmul %149, %132, %cst_75 {dimension_numbers = #tpu.dot_dimension_numbers<[2], [1], [1], [2], [0, 0, 0, 1, 1, 2], [0], [0]>} : vector<8x16x16xbf16>, vector<8x16x32xbf16>, vector<8x16x32xf32> -> vector<8x16x32xf32>
    "tpu.trace_stop"() : () -> ()
    %151 = vector.shape_cast %150 : vector<8x16x32xf32> to vector<4x32x32xf32>
    %152 = vector.extract_strided_slice %151 {offsets = [0, 0, 0], sizes = [1, 32, 32], strides = [1, 1, 1]} : vector<4x32x32xf32> to vector<1x32x32xf32>
    %153 = vector.shape_cast %152 : vector<1x32x32xf32> to vector<32x32xf32>
    %154 = vector.extract_strided_slice %151 {offsets = [1, 0, 0], sizes = [1, 32, 32], strides = [1, 1, 1]} : vector<4x32x32xf32> to vector<1x32x32xf32>
    %155 = vector.shape_cast %154 : vector<1x32x32xf32> to vector<32x32xf32>
    %156 = vector.extract_strided_slice %151 {offsets = [2, 0, 0], sizes = [1, 32, 32], strides = [1, 1, 1]} : vector<4x32x32xf32> to vector<1x32x32xf32>
    %157 = vector.shape_cast %156 : vector<1x32x32xf32> to vector<32x32xf32>
    %158 = vector.extract_strided_slice %151 {offsets = [3, 0, 0], sizes = [1, 32, 32], strides = [1, 1, 1]} : vector<4x32x32xf32> to vector<1x32x32xf32>
    %159 = vector.shape_cast %158 : vector<1x32x32xf32> to vector<32x32xf32>
    %160 = tpu.concatenate %153, %155, %157, %159 in 1 : vector<32x32xf32>, vector<32x32xf32>, vector<32x32xf32>, vector<32x32xf32> -> vector<32x128xf32>
    %161 = arith.truncf %160 : vector<32x128xf32> to vector<32x128xbf16>
    %cst_76 = arith.constant dense<0.000000e+00> : vector<32x128xf32>
    %162 = tpu.matmul %161, %75, %cst_76 {dimension_numbers = #tpu.dot_dimension_numbers<[1], [0], [0], [1], [0, 0, 1, 1], [], []>} : vector<32x128xbf16>, vector<128x128xbf16>, vector<32x128xf32> -> vector<32x128xf32>
    %163 = vector.broadcast %77 : vector<1x128xf32> to vector<32x128xf32>
    %164 = arith.addf %162, %163 : vector<32x128xf32>
    %165 = arith.addf %56, %164 : vector<32x128xf32>
    %c0_77 = arith.constant 0 : index
    %c0_78 = arith.constant 0 : index
    %c0_79 = arith.constant 0 : index
    %166 = vector.load %arg22[%c0_77, %c0_78, %c0_79] : memref<1x1x128xf32, #tpu.memory_space<vmem>>, vector<1x1x128xf32>
    %167 = vector.shape_cast %166 : vector<1x1x128xf32> to vector<1x128xf32>
    %c0_80 = arith.constant 0 : index
    %c0_81 = arith.constant 0 : index
    %c0_82 = arith.constant 0 : index
    %168 = vector.load %arg23[%c0_80, %c0_81, %c0_82] : memref<1x1x128xf32, #tpu.memory_space<vmem>>, vector<1x1x128xf32>
    %169 = vector.shape_cast %168 : vector<1x1x128xf32> to vector<1x128xf32>
    %c0_83 = arith.constant 0 : index
    %c0_84 = arith.constant 0 : index
    %c0_85 = arith.constant 0 : index
    %170 = vector.load %arg24[%c0_83, %c0_84, %c0_85] : memref<1x128x256xbf16, #tpu.memory_space<vmem>>, vector<1x128x256xbf16>
    %171 = vector.shape_cast %170 : vector<1x128x256xbf16> to vector<128x256xbf16>
    %c0_86 = arith.constant 0 : index
    %c0_87 = arith.constant 0 : index
    %c0_88 = arith.constant 0 : index
    %172 = vector.load %arg25[%c0_86, %c0_87, %c0_88] : memref<1x1x256xf32, #tpu.memory_space<vmem>>, vector<1x1x256xf32>
    %173 = vector.shape_cast %172 : vector<1x1x256xf32> to vector<1x256xf32>
    %cst_89 = arith.constant dense<0.000000e+00> : vector<32xf32>
    %174 = vector.multi_reduction <add>, %165, %cst_89 [1] : vector<32x128xf32> to vector<32xf32>
    %175 = vector.shape_cast %174 : vector<32xf32> to vector<32x1xf32>
    %cst_90 = arith.constant 1.280000e+02 : f32
    %176 = vector.broadcast %cst_90 : f32 to vector<32x1xf32>
    %177 = arith.divf %175, %176 : vector<32x1xf32>
    %178 = vector.broadcast %177 : vector<32x1xf32> to vector<32x128xf32>
    %179 = arith.subf %165, %178 : vector<32x128xf32>
    %180 = arith.mulf %179, %179 : vector<32x128xf32>
    %cst_91 = arith.constant dense<0.000000e+00> : vector<32xf32>
    %181 = vector.multi_reduction <add>, %180, %cst_91 [1] : vector<32x128xf32> to vector<32xf32>
    %182 = vector.shape_cast %181 : vector<32xf32> to vector<32x1xf32>
    %cst_92 = arith.constant 1.280000e+02 : f32
    %183 = vector.broadcast %cst_92 : f32 to vector<32x1xf32>
    %184 = arith.divf %182, %183 : vector<32x1xf32>
    %185 = vector.broadcast %177 : vector<32x1xf32> to vector<32x128xf32>
    %186 = arith.subf %165, %185 : vector<32x128xf32>
    %cst_93 = arith.constant 9.99999974E-6 : f32
    %187 = vector.broadcast %cst_93 : f32 to vector<32x1xf32>
    %188 = arith.addf %184, %187 : vector<32x1xf32>
    %189 = math.rsqrt %188 : vector<32x1xf32>
    %190 = vector.broadcast %189 : vector<32x1xf32> to vector<32x128xf32>
    %191 = arith.mulf %186, %190 : vector<32x128xf32>
    %192 = vector.broadcast %167 : vector<1x128xf32> to vector<32x128xf32>
    %193 = arith.mulf %191, %192 : vector<32x128xf32>
    %194 = vector.broadcast %169 : vector<1x128xf32> to vector<32x128xf32>
    %195 = arith.addf %193, %194 : vector<32x128xf32>
    %196 = arith.truncf %195 : vector<32x128xf32> to vector<32x128xbf16>
    %cst_94 = arith.constant dense<0.000000e+00> : vector<32x256xf32>
    %197 = tpu.matmul %196, %171, %cst_94 {dimension_numbers = #tpu.dot_dimension_numbers<[1], [0], [0], [1], [0, 0, 1, 1], [], []>} : vector<32x128xbf16>, vector<128x256xbf16>, vector<32x256xf32> -> vector<32x256xf32>
    %198 = vector.broadcast %173 : vector<1x256xf32> to vector<32x256xf32>
    %199 = arith.addf %197, %198 : vector<32x256xf32>
    %200 = vector.extract_strided_slice %199 {offsets = [0, 0], sizes = [32, 128], strides = [1, 1]} : vector<32x256xf32> to vector<32x128xf32>
    %201 = vector.extract_strided_slice %199 {offsets = [0, 128], sizes = [32, 128], strides = [1, 1]} : vector<32x256xf32> to vector<32x128xf32>
    %cst_95 = arith.constant 5.000000e-01 : f32
    %202 = vector.broadcast %cst_95 : f32 to vector<32x128xf32>
    %203 = arith.mulf %202, %201 : vector<32x128xf32>
    %204 = math.tanh %203 : vector<32x128xf32>
    %cst_96 = arith.constant 1.000000e+00 : f32
    %205 = vector.broadcast %cst_96 : f32 to vector<32x128xf32>
    %206 = arith.addf %204, %205 : vector<32x128xf32>
    %cst_97 = arith.constant 5.000000e-01 : f32
    %207 = vector.broadcast %cst_97 : f32 to vector<32x128xf32>
    %208 = arith.mulf %207, %206 : vector<32x128xf32>
    %209 = arith.mulf %200, %208 : vector<32x128xf32>
    %210 = vector.shape_cast %209 : vector<32x128xf32> to vector<2x16x128xf32>
    %c0_98 = arith.constant 0 : index
    %c3 = arith.constant 3 : index
    %c0_99 = arith.constant 0 : index
    %211 = vector.load %arg53[%c0_98, %c3, %c0_99] : memref<2x22x128xf32, #tpu.memory_space<vmem>>, vector<2x16x128xf32>
    tpu.vector_store %arg53[%c0_98, %c3, %c0_99], %210 {strides = array<i32>} : memref<2x22x128xf32, #tpu.memory_space<vmem>>, vector<2x16x128xf32>,
    %c0_100 = arith.constant 0 : index
    %c0_101 = arith.constant 0 : index
    %c0_102 = arith.constant 0 : index
    %212 = vector.load %arg26[%c0_100, %c0_101, %c0_102] : memref<1x7x128xf32, #tpu.memory_space<vmem>>, vector<1x7x128xf32>
    %213 = vector.shape_cast %212 : vector<1x7x128xf32> to vector<7x128xf32>
    %cst_103 = arith.constant 0.000000e+00 : f32
    %214 = vector.broadcast %cst_103 : f32 to vector<2x16x128xf32>
    %c0_104 = arith.constant 0 : index
    %c0_105 = arith.constant 0 : index
    %c0_106 = arith.constant 0 : index
    %215 = vector.load %arg53[%c0_104, %c0_105, %c0_106] : memref<2x22x128xf32, #tpu.memory_space<vmem>>, vector<2x16x128xf32>
    %216 = vector.extract_strided_slice %213 {offsets = [0, 0], sizes = [1, 128], strides = [1, 1]} : vector<7x128xf32> to vector<1x128xf32>
    %217 = vector.shape_cast %216 : vector<1x128xf32> to vector<1x1x128xf32>
    %218 = vector.broadcast %217 : vector<1x1x128xf32> to vector<2x16x128xf32>
    %219 = arith.mulf %215, %218 : vector<2x16x128xf32>
    %220 = arith.addf %214, %219 : vector<2x16x128xf32>
    %c0_107 = arith.constant 0 : index
    %c1 = arith.constant 1 : index
    %c0_108 = arith.constant 0 : index
    %221 = vector.load %arg53[%c0_107, %c1, %c0_108] : memref<2x22x128xf32, #tpu.memory_space<vmem>>, vector<2x16x128xf32>
    %222 = vector.extract_strided_slice %213 {offsets = [1, 0], sizes = [1, 128], strides = [1, 1]} : vector<7x128xf32> to vector<1x128xf32>
    %223 = vector.shape_cast %222 : vector<1x128xf32> to vector<1x1x128xf32>
    %224 = vector.broadcast %223 : vector<1x1x128xf32> to vector<2x16x128xf32>
    %225 = arith.mulf %221, %224 : vector<2x16x128xf32>
    %226 = arith.addf %220, %225 : vector<2x16x128xf32>
    %c0_109 = arith.constant 0 : index
    %c2 = arith.constant 2 : index
    %c0_110 = arith.constant 0 : index
    %227 = vector.load %arg53[%c0_109, %c2, %c0_110] : memref<2x22x128xf32, #tpu.memory_space<vmem>>, vector<2x16x128xf32>
    %228 = vector.extract_strided_slice %213 {offsets = [2, 0], sizes = [1, 128], strides = [1, 1]} : vector<7x128xf32> to vector<1x128xf32>
    %229 = vector.shape_cast %228 : vector<1x128xf32> to vector<1x1x128xf32>
    %230 = vector.broadcast %229 : vector<1x1x128xf32> to vector<2x16x128xf32>
    %231 = arith.mulf %227, %230 : vector<2x16x128xf32>
    %232 = arith.addf %226, %231 : vector<2x16x128xf32>
    %c0_111 = arith.constant 0 : index
    %c3_112 = arith.constant 3 : index
    %c0_113 = arith.constant 0 : index
    %233 = vector.load %arg53[%c0_111, %c3_112, %c0_113] : memref<2x22x128xf32, #tpu.memory_space<vmem>>, vector<2x16x128xf32>
    %234 = vector.extract_strided_slice %213 {offsets = [3, 0], sizes = [1, 128], strides = [1, 1]} : vector<7x128xf32> to vector<1x128xf32>
    %235 = vector.shape_cast %234 : vector<1x128xf32> to vector<1x1x128xf32>
    %236 = vector.broadcast %235 : vector<1x1x128xf32> to vector<2x16x128xf32>
    %237 = arith.mulf %233, %236 : vector<2x16x128xf32>
    %238 = arith.addf %232, %237 : vector<2x16x128xf32>
    %c0_114 = arith.constant 0 : index
    %c4 = arith.constant 4 : index
    %c0_115 = arith.constant 0 : index
    %239 = vector.load %arg53[%c0_114, %c4, %c0_115] : memref<2x22x128xf32, #tpu.memory_space<vmem>>, vector<2x16x128xf32>
    %240 = vector.extract_strided_slice %213 {offsets = [4, 0], sizes = [1, 128], strides = [1, 1]} : vector<7x128xf32> to vector<1x128xf32>
    %241 = vector.shape_cast %240 : vector<1x128xf32> to vector<1x1x128xf32>
    %242 = vector.broadcast %241 : vector<1x1x128xf32> to vector<2x16x128xf32>
    %243 = arith.mulf %239, %242 : vector<2x16x128xf32>
    %244 = arith.addf %238, %243 : vector<2x16x128xf32>
    %c0_116 = arith.constant 0 : index
    %c5 = arith.constant 5 : index
    %c0_117 = arith.constant 0 : index
    %245 = vector.load %arg53[%c0_116, %c5, %c0_117] : memref<2x22x128xf32, #tpu.memory_space<vmem>>, vector<2x16x128xf32>
    %246 = vector.extract_strided_slice %213 {offsets = [5, 0], sizes = [1, 128], strides = [1, 1]} : vector<7x128xf32> to vector<1x128xf32>
    %247 = vector.shape_cast %246 : vector<1x128xf32> to vector<1x1x128xf32>
    %248 = vector.broadcast %247 : vector<1x1x128xf32> to vector<2x16x128xf32>
    %249 = arith.mulf %245, %248 : vector<2x16x128xf32>
    %250 = arith.addf %244, %249 : vector<2x16x128xf32>
    %c0_118 = arith.constant 0 : index
    %c6 = arith.constant 6 : index
    %c0_119 = arith.constant 0 : index
    %251 = vector.load %arg53[%c0_118, %c6, %c0_119] : memref<2x22x128xf32, #tpu.memory_space<vmem>>, vector<2x16x128xf32>
    %252 = vector.extract_strided_slice %213 {offsets = [6, 0], sizes = [1, 128], strides = [1, 1]} : vector<7x128xf32> to vector<1x128xf32>
    %253 = vector.shape_cast %252 : vector<1x128xf32> to vector<1x1x128xf32>
    %254 = vector.broadcast %253 : vector<1x1x128xf32> to vector<2x16x128xf32>
    %255 = arith.mulf %251, %254 : vector<2x16x128xf32>
    %256 = arith.addf %250, %255 : vector<2x16x128xf32>
    %257 = vector.shape_cast %256 : vector<2x16x128xf32> to vector<32x128xf32>
    %c0_120 = arith.constant 0 : index
    %c0_121 = arith.constant 0 : index
    %c0_122 = arith.constant 0 : index
    %258 = vector.load %arg27[%c0_120, %c0_121, %c0_122] : memref<1x1x128xf32, #tpu.memory_space<vmem>>, vector<1x1x128xf32>
    %259 = vector.shape_cast %258 : vector<1x1x128xf32> to vector<1x128xf32>
    %c0_123 = arith.constant 0 : index
    %c0_124 = arith.constant 0 : index
    %c0_125 = arith.constant 0 : index
    %260 = vector.load %arg28[%c0_123, %c0_124, %c0_125] : memref<1x1x128xf32, #tpu.memory_space<vmem>>, vector<1x1x128xf32>
    %261 = vector.shape_cast %260 : vector<1x1x128xf32> to vector<1x128xf32>
    %c0_126 = arith.constant 0 : index
    %c0_127 = arith.constant 0 : index
    %c0_128 = arith.constant 0 : index
    %262 = vector.load %arg29[%c0_126, %c0_127, %c0_128] : memref<1x1x128xf32, #tpu.memory_space<vmem>>, vector<1x1x128xf32>
    %263 = vector.shape_cast %262 : vector<1x1x128xf32> to vector<1x128xf32>
    %c0_129 = arith.constant 0 : index
    %c0_130 = arith.constant 0 : index
    %c0_131 = arith.constant 0 : index
    %264 = vector.load %arg30[%c0_129, %c0_130, %c0_131] : memref<1x128x128xbf16, #tpu.memory_space<vmem>>, vector<1x128x128xbf16>
    %265 = vector.shape_cast %264 : vector<1x128x128xbf16> to vector<128x128xbf16>
    %c0_132 = arith.constant 0 : index
    %c0_133 = arith.constant 0 : index
    %c0_134 = arith.constant 0 : index
    %266 = vector.load %arg31[%c0_132, %c0_133, %c0_134] : memref<1x1x128xf32, #tpu.memory_space<vmem>>, vector<1x1x128xf32>
    %267 = vector.shape_cast %266 : vector<1x1x128xf32> to vector<1x128xf32>
    %268 = vector.broadcast %259 : vector<1x128xf32> to vector<32x128xf32>
    %269 = arith.addf %257, %268 : vector<32x128xf32>
    %270 = vector.broadcast %261 : vector<1x128xf32> to vector<32x128xf32>
    %271 = arith.mulf %269, %270 : vector<32x128xf32>
    %272 = vector.broadcast %263 : vector<1x128xf32> to vector<32x128xf32>
    %273 = arith.addf %271, %272 : vector<32x128xf32>
    %cst_135 = arith.constant 5.000000e-01 : f32
    %274 = vector.broadcast %cst_135 : f32 to vector<32x128xf32>
    %275 = arith.mulf %274, %273 : vector<32x128xf32>
    %276 = math.tanh %275 : vector<32x128xf32>
    %cst_136 = arith.constant 1.000000e+00 : f32
    %277 = vector.broadcast %cst_136 : f32 to vector<32x128xf32>
    %278 = arith.addf %276, %277 : vector<32x128xf32>
    %cst_137 = arith.constant 5.000000e-01 : f32
    %279 = vector.broadcast %cst_137 : f32 to vector<32x128xf32>
    %280 = arith.mulf %279, %278 : vector<32x128xf32>
    %281 = arith.mulf %273, %280 : vector<32x128xf32>
    %282 = arith.truncf %281 : vector<32x128xf32> to vector<32x128xbf16>
    %cst_138 = arith.constant dense<0.000000e+00> : vector<32x128xf32>
    %283 = tpu.matmul %282, %265, %cst_138 {dimension_numbers = #tpu.dot_dimension_numbers<[1], [0], [0], [1], [0, 0, 1, 1], [], []>} : vector<32x128xbf16>, vector<128x128xbf16>, vector<32x128xf32> -> vector<32x128xf32>
    %284 = vector.broadcast %267 : vector<1x128xf32> to vector<32x128xf32>
    %285 = arith.addf %283, %284 : vector<32x128xf32>
    %286 = arith.addf %165, %285 : vector<32x128xf32>
    %c0_139 = arith.constant 0 : index
    %c0_140 = arith.constant 0 : index
    %c0_141 = arith.constant 0 : index
    %287 = vector.load %arg32[%c0_139, %c0_140, %c0_141] : memref<1x1x128xf32, #tpu.memory_space<vmem>>, vector<1x1x128xf32>
    %288 = vector.shape_cast %287 : vector<1x1x128xf32> to vector<1x128xf32>
    %c0_142 = arith.constant 0 : index
    %c0_143 = arith.constant 0 : index
    %c0_144 = arith.constant 0 : index
    %289 = vector.load %arg33[%c0_142, %c0_143, %c0_144] : memref<1x1x128xf32, #tpu.memory_space<vmem>>, vector<1x1x128xf32>
    %290 = vector.shape_cast %289 : vector<1x1x128xf32> to vector<1x128xf32>
    %c0_145 = arith.constant 0 : index
    %c0_146 = arith.constant 0 : index
    %c0_147 = arith.constant 0 : index
    %291 = vector.load %arg34[%c0_145, %c0_146, %c0_147] : memref<1x128x512xbf16, #tpu.memory_space<vmem>>, vector<1x128x512xbf16>
    %292 = vector.shape_cast %291 : vector<1x128x512xbf16> to vector<128x512xbf16>
    %c0_148 = arith.constant 0 : index
    %c0_149 = arith.constant 0 : index
    %c0_150 = arith.constant 0 : index
    %293 = vector.load %arg35[%c0_148, %c0_149, %c0_150] : memref<1x1x512xf32, #tpu.memory_space<vmem>>, vector<1x1x512xf32>
    %294 = vector.shape_cast %293 : vector<1x1x512xf32> to vector<1x512xf32>
    %c0_151 = arith.constant 0 : index
    %c0_152 = arith.constant 0 : index
    %c0_153 = arith.constant 0 : index
    %295 = vector.load %arg36[%c0_151, %c0_152, %c0_153] : memref<1x512x128xbf16, #tpu.memory_space<vmem>>, vector<1x512x128xbf16>
    %296 = vector.shape_cast %295 : vector<1x512x128xbf16> to vector<512x128xbf16>
    %c0_154 = arith.constant 0 : index
    %c0_155 = arith.constant 0 : index
    %c0_156 = arith.constant 0 : index
    %297 = vector.load %arg37[%c0_154, %c0_155, %c0_156] : memref<1x1x128xf32, #tpu.memory_space<vmem>>, vector<1x1x128xf32>
    %298 = vector.shape_cast %297 : vector<1x1x128xf32> to vector<1x128xf32>
    %cst_157 = arith.constant dense<0.000000e+00> : vector<32xf32>
    %299 = vector.multi_reduction <add>, %286, %cst_157 [1] : vector<32x128xf32> to vector<32xf32>
    %300 = vector.shape_cast %299 : vector<32xf32> to vector<32x1xf32>
    %cst_158 = arith.constant 1.280000e+02 : f32
    %301 = vector.broadcast %cst_158 : f32 to vector<32x1xf32>
    %302 = arith.divf %300, %301 : vector<32x1xf32>
    %303 = vector.broadcast %302 : vector<32x1xf32> to vector<32x128xf32>
    %304 = arith.subf %286, %303 : vector<32x128xf32>
    %305 = arith.mulf %304, %304 : vector<32x128xf32>
    %cst_159 = arith.constant dense<0.000000e+00> : vector<32xf32>
    %306 = vector.multi_reduction <add>, %305, %cst_159 [1] : vector<32x128xf32> to vector<32xf32>
    %307 = vector.shape_cast %306 : vector<32xf32> to vector<32x1xf32>
    %cst_160 = arith.constant 1.280000e+02 : f32
    %308 = vector.broadcast %cst_160 : f32 to vector<32x1xf32>
    %309 = arith.divf %307, %308 : vector<32x1xf32>
    %310 = vector.broadcast %302 : vector<32x1xf32> to vector<32x128xf32>
    %311 = arith.subf %286, %310 : vector<32x128xf32>
    %cst_161 = arith.constant 9.99999974E-6 : f32
    %312 = vector.broadcast %cst_161 : f32 to vector<32x1xf32>
    %313 = arith.addf %309, %312 : vector<32x1xf32>
    %314 = math.rsqrt %313 : vector<32x1xf32>
    %315 = vector.broadcast %314 : vector<32x1xf32> to vector<32x128xf32>
    %316 = arith.mulf %311, %315 : vector<32x128xf32>
    %317 = vector.broadcast %288 : vector<1x128xf32> to vector<32x128xf32>
    %318 = arith.mulf %316, %317 : vector<32x128xf32>
    %319 = vector.broadcast %290 : vector<1x128xf32> to vector<32x128xf32>
    %320 = arith.addf %318, %319 : vector<32x128xf32>
    %321 = arith.truncf %320 : vector<32x128xf32> to vector<32x128xbf16>
    %cst_162 = arith.constant dense<0.000000e+00> : vector<32x512xf32>
    %322 = tpu.matmul %321, %292, %cst_162 {dimension_numbers = #tpu.dot_dimension_numbers<[1], [0], [0], [1], [0, 0, 1, 1], [], []>} : vector<32x128xbf16>, vector<128x512xbf16>, vector<32x512xf32> -> vector<32x512xf32>
    %323 = vector.broadcast %294 : vector<1x512xf32> to vector<32x512xf32>
    %324 = arith.addf %322, %323 : vector<32x512xf32>
    %cst_163 = arith.constant 5.000000e-01 : f32
    %325 = vector.broadcast %cst_163 : f32 to vector<32x512xf32>
    %326 = arith.mulf %325, %324 : vector<32x512xf32>
    %327 = math.tanh %326 : vector<32x512xf32>
    %cst_164 = arith.constant 1.000000e+00 : f32
    %328 = vector.broadcast %cst_164 : f32 to vector<32x512xf32>
    %329 = arith.addf %327, %328 : vector<32x512xf32>
    %cst_165 = arith.constant 5.000000e-01 : f32
    %330 = vector.broadcast %cst_165 : f32 to vector<32x512xf32>
    %331 = arith.mulf %330, %329 : vector<32x512xf32>
    %332 = arith.mulf %324, %331 : vector<32x512xf32>
    %333 = arith.truncf %332 : vector<32x512xf32> to vector<32x512xbf16>
    %cst_166 = arith.constant dense<0.000000e+00> : vector<32x128xf32>
    %334 = tpu.matmul %333, %296, %cst_166 {dimension_numbers = #tpu.dot_dimension_numbers<[1], [0], [0], [1], [0, 0, 1, 1], [], []>} : vector<32x512xbf16>, vector<512x128xbf16>, vector<32x128xf32> -> vector<32x128xf32>
    %335 = vector.broadcast %298 : vector<1x128xf32> to vector<32x128xf32>
    %336 = arith.addf %334, %335 : vector<32x128xf32>
    %cst_167 = arith.constant 5.000000e-01 : f32
    %337 = vector.broadcast %cst_167 : f32 to vector<32x128xf32>
    %338 = arith.mulf %337, %336 : vector<32x128xf32>
    %339 = arith.addf %286, %338 : vector<32x128xf32>
    %c0_168 = arith.constant 0 : index
    %c0_169 = arith.constant 0 : index
    %c0_170 = arith.constant 0 : index
    %340 = vector.load %arg38[%c0_168, %c0_169, %c0_170] : memref<1x1x128xf32, #tpu.memory_space<vmem>>, vector<1x1x128xf32>
    %341 = vector.shape_cast %340 : vector<1x1x128xf32> to vector<1x128xf32>
    %c0_171 = arith.constant 0 : index
    %c0_172 = arith.constant 0 : index
    %c0_173 = arith.constant 0 : index
    %342 = vector.load %arg39[%c0_171, %c0_172, %c0_173] : memref<1x1x128xf32, #tpu.memory_space<vmem>>, vector<1x1x128xf32>
    %343 = vector.shape_cast %342 : vector<1x1x128xf32> to vector<1x128xf32>
    %cst_174 = arith.constant dense<0.000000e+00> : vector<32xf32>
    %344 = vector.multi_reduction <add>, %339, %cst_174 [1] : vector<32x128xf32> to vector<32xf32>
    %345 = vector.shape_cast %344 : vector<32xf32> to vector<32x1xf32>
    %cst_175 = arith.constant 1.280000e+02 : f32
    %346 = vector.broadcast %cst_175 : f32 to vector<32x1xf32>
    %347 = arith.divf %345, %346 : vector<32x1xf32>
    %348 = vector.broadcast %347 : vector<32x1xf32> to vector<32x128xf32>
    %349 = arith.subf %339, %348 : vector<32x128xf32>
    %350 = arith.mulf %349, %349 : vector<32x128xf32>
    %cst_176 = arith.constant dense<0.000000e+00> : vector<32xf32>
    %351 = vector.multi_reduction <add>, %350, %cst_176 [1] : vector<32x128xf32> to vector<32xf32>
    %352 = vector.shape_cast %351 : vector<32xf32> to vector<32x1xf32>
    %cst_177 = arith.constant 1.280000e+02 : f32
    %353 = vector.broadcast %cst_177 : f32 to vector<32x1xf32>
    %354 = arith.divf %352, %353 : vector<32x1xf32>
    %355 = vector.broadcast %347 : vector<32x1xf32> to vector<32x128xf32>
    %356 = arith.subf %339, %355 : vector<32x128xf32>
    %cst_178 = arith.constant 9.99999974E-6 : f32
    %357 = vector.broadcast %cst_178 : f32 to vector<32x1xf32>
    %358 = arith.addf %354, %357 : vector<32x1xf32>
    %359 = math.rsqrt %358 : vector<32x1xf32>
    %360 = vector.broadcast %359 : vector<32x1xf32> to vector<32x128xf32>
    %361 = arith.mulf %356, %360 : vector<32x128xf32>
    %362 = vector.broadcast %341 : vector<1x128xf32> to vector<32x128xf32>
    %363 = arith.mulf %361, %362 : vector<32x128xf32>
    %364 = vector.broadcast %343 : vector<1x128xf32> to vector<32x128xf32>
    %365 = arith.addf %363, %364 : vector<32x128xf32>
    %c0_179 = arith.constant 0 : index
    %c0_180 = arith.constant 0 : index
    %366 = vector.load %arg52[%c0_179, %c0_180] : memref<32x128xf32, #tpu.memory_space<vmem>>, vector<32x128xf32>
    tpu.vector_store %arg52[%c0_179, %c0_180], %365 {strides = array<i32>} : memref<32x128xf32, #tpu.memory_space<vmem>>, vector<32x128xf32>,
    %367 = arith.index_cast %arg1 : i32 to index
    %368 = memref.load %arg2[%367] : memref<3xi32, #tpu.memory_space<smem>>
    %c0_i32_181 = arith.constant 0 : i32
    %369 = arith.cmpi sgt, %368, %c0_i32_181 : i32
    %370 = arith.extui %369 : i1 to i32
    %c0_i32_182 = arith.constant 0 : i32
    %371 = arith.cmpi ne, %370, %c0_i32_182 : i32
    scf.if %371 {
      %c0_186 = arith.constant 0 : index
      %c0_187 = arith.constant 0 : index
      %380 = vector.load %arg44[%c0_186, %c0_187] : memref<128x128xbf16, #tpu.memory_space<vmem>>, vector<128x128xbf16>
      %c0_188 = arith.constant 0 : index
      %c0_189 = arith.constant 0 : index
      %381 = vector.load %arg45[%c0_188, %c0_189] : memref<1x128xf32, #tpu.memory_space<vmem>>, vector<1x128xf32>
      %382 = arith.truncf %365 : vector<32x128xf32> to vector<32x128xbf16>
      %cst_190 = arith.constant dense<0.000000e+00> : vector<32x128xf32>
      %383 = tpu.matmul %382, %380, %cst_190 {dimension_numbers = #tpu.dot_dimension_numbers<[1], [0], [0], [1], [0, 0, 1, 1], [], []>} : vector<32x128xbf16>, vector<128x128xbf16>, vector<32x128xf32> -> vector<32x128xf32>
      %384 = vector.broadcast %381 : vector<1x128xf32> to vector<32x128xf32>
      %385 = arith.addf %383, %384 : vector<32x128xf32>
      %cst_191 = arith.constant dense<0xFF800000> : vector<32xf32>
      %386 = vector.multi_reduction <maximumf>, %385, %cst_191 [1] : vector<32x128xf32> to vector<32xf32>
      %387 = vector.shape_cast %386 : vector<32xf32> to vector<32x1xf32>
      %388 = vector.broadcast %387 : vector<32x1xf32> to vector<32x128xf32>
      %389 = arith.subf %385, %388 : vector<32x128xf32>
      %390 = math.exp %389 : vector<32x128xf32>
      %cst_192 = arith.constant dense<0.000000e+00> : vector<32xf32>
      %391 = vector.multi_reduction <add>, %390, %cst_192 [1] : vector<32x128xf32> to vector<32xf32>
      %392 = vector.shape_cast %391 : vector<32xf32> to vector<32x1xf32>
      %393 = math.log %392 : vector<32x1xf32>
      %394 = vector.broadcast %393 : vector<32x1xf32> to vector<32x128xf32>
      %395 = arith.subf %389, %394 : vector<32x128xf32>
      %396 = vector.shape_cast %395 : vector<32x128xf32> to vector<2x16x128xf32>
      %c0_193 = arith.constant 0 : index
      %c0_194 = arith.constant 0 : index
      %c0_195 = arith.constant 0 : index
      %c0_196 = arith.constant 0 : index
      %397 = vector.load %arg51[%c0_193, %c0_194, %c0_195, %c0_196] : memref<1x2x16x128xf32, #tpu.memory_space<vmem>>, vector<1x2x16x128xf32>
      %398 = vector.shape_cast %397 : vector<1x2x16x128xf32> to vector<2x16x128xf32>
      %399 = vector.shape_cast %396 : vector<2x16x128xf32> to vector<1x2x16x128xf32>
      tpu.vector_store %arg51[%c0_193, %c0_194, %c0_195, %c0_196], %399 {strides = array<i32>} : memref<1x2x16x128xf32, #tpu.memory_space<vmem>>, vector<1x2x16x128xf32>,
      %c0_197 = arith.constant 0 : index
      %c0_198 = arith.constant 0 : index
      %400 = vector.load %arg52[%c0_197, %c0_198] : memref<32x128xf32, #tpu.memory_space<vmem>>, vector<32x128xf32>
      %c0_199 = arith.constant 0 : index
      %c0_200 = arith.constant 0 : index
      %401 = vector.load %arg46[%c0_199, %c0_200] : memref<128x128xbf16, #tpu.memory_space<vmem>>, vector<128x128xbf16>
      %402 = arith.truncf %395 : vector<32x128xf32> to vector<32x128xbf16>
      %cst_201 = arith.constant dense<0.000000e+00> : vector<32x128xf32>
      %403 = tpu.matmul %402, %401, %cst_201 {dimension_numbers = #tpu.dot_dimension_numbers<[1], [0], [0], [1], [0, 0, 1, 1], [], []>} : vector<32x128xbf16>, vector<128x128xbf16>, vector<32x128xf32> -> vector<32x128xf32>
      %404 = arith.addf %400, %403 : vector<32x128xf32>
      %c0_202 = arith.constant 0 : index
      %c0_203 = arith.constant 0 : index
      %405 = vector.load %arg47[%c0_202, %c0_203] : memref<1x128xf32, #tpu.memory_space<vmem>>, vector<1x128xf32>
      %406 = vector.broadcast %405 : vector<1x128xf32> to vector<32x128xf32>
      %407 = arith.addf %404, %406 : vector<32x128xf32>
      %c0_204 = arith.constant 0 : index
      %c0_205 = arith.constant 0 : index
      %408 = vector.load %arg52[%c0_204, %c0_205] : memref<32x128xf32, #tpu.memory_space<vmem>>, vector<32x128xf32>
      tpu.vector_store %arg52[%c0_204, %c0_205], %407 {strides = array<i32>} : memref<32x128xf32, #tpu.memory_space<vmem>>, vector<32x128xf32>,
    } else {
    }
    %372 = arith.index_cast %arg1 : i32 to index
    %373 = memref.load %arg3[%372] : memref<3xi32, #tpu.memory_space<smem>>
    %c0_i32_183 = arith.constant 0 : i32
    %374 = arith.cmpi sgt, %373, %c0_i32_183 : i32
    %375 = arith.extui %374 : i1 to i32
    %c0_i32_184 = arith.constant 0 : i32
    %376 = arith.cmpi ne, %375, %c0_i32_184 : i32
    scf.if %376 {
      %c0_186 = arith.constant 0 : index
      %c0_187 = arith.constant 0 : index
      %380 = vector.load %arg40[%c0_186, %c0_187] : memref<128x128xbf16, #tpu.memory_space<vmem>>, vector<128x128xbf16>
      %c0_188 = arith.constant 0 : index
      %c0_189 = arith.constant 0 : index
      %381 = vector.load %arg41[%c0_188, %c0_189] : memref<1x128xf32, #tpu.memory_space<vmem>>, vector<1x128xf32>
      %382 = arith.truncf %365 : vector<32x128xf32> to vector<32x128xbf16>
      %cst_190 = arith.constant dense<0.000000e+00> : vector<32x128xf32>
      %383 = tpu.matmul %382, %380, %cst_190 {dimension_numbers = #tpu.dot_dimension_numbers<[1], [0], [0], [1], [0, 0, 1, 1], [], []>} : vector<32x128xbf16>, vector<128x128xbf16>, vector<32x128xf32> -> vector<32x128xf32>
      %384 = vector.broadcast %381 : vector<1x128xf32> to vector<32x128xf32>
      %385 = arith.addf %383, %384 : vector<32x128xf32>
      %cst_191 = arith.constant dense<0xFF800000> : vector<32xf32>
      %386 = vector.multi_reduction <maximumf>, %385, %cst_191 [1] : vector<32x128xf32> to vector<32xf32>
      %387 = vector.shape_cast %386 : vector<32xf32> to vector<32x1xf32>
      %388 = vector.broadcast %387 : vector<32x1xf32> to vector<32x128xf32>
      %389 = arith.subf %385, %388 : vector<32x128xf32>
      %390 = math.exp %389 : vector<32x128xf32>
      %cst_192 = arith.constant dense<0.000000e+00> : vector<32xf32>
      %391 = vector.multi_reduction <add>, %390, %cst_192 [1] : vector<32x128xf32> to vector<32xf32>
      %392 = vector.shape_cast %391 : vector<32xf32> to vector<32x1xf32>
      %393 = math.log %392 : vector<32x1xf32>
      %394 = vector.broadcast %393 : vector<32x1xf32> to vector<32x128xf32>
      %395 = arith.subf %389, %394 : vector<32x128xf32>
      %396 = vector.shape_cast %395 : vector<32x128xf32> to vector<2x16x128xf32>
      %c0_193 = arith.constant 0 : index
      %c0_194 = arith.constant 0 : index
      %c0_195 = arith.constant 0 : index
      %c0_196 = arith.constant 0 : index
      %397 = vector.load %arg50[%c0_193, %c0_194, %c0_195, %c0_196] : memref<1x2x16x128xf32, #tpu.memory_space<vmem>>, vector<1x2x16x128xf32>
      %398 = vector.shape_cast %397 : vector<1x2x16x128xf32> to vector<2x16x128xf32>
      %399 = vector.shape_cast %396 : vector<2x16x128xf32> to vector<1x2x16x128xf32>
      tpu.vector_store %arg50[%c0_193, %c0_194, %c0_195, %c0_196], %399 {strides = array<i32>} : memref<1x2x16x128xf32, #tpu.memory_space<vmem>>, vector<1x2x16x128xf32>,
      %c0_197 = arith.constant 0 : index
      %c0_198 = arith.constant 0 : index
      %400 = vector.load %arg52[%c0_197, %c0_198] : memref<32x128xf32, #tpu.memory_space<vmem>>, vector<32x128xf32>
      %c0_199 = arith.constant 0 : index
      %c0_200 = arith.constant 0 : index
      %401 = vector.load %arg42[%c0_199, %c0_200] : memref<128x128xbf16, #tpu.memory_space<vmem>>, vector<128x128xbf16>
      %402 = arith.truncf %395 : vector<32x128xf32> to vector<32x128xbf16>
      %cst_201 = arith.constant dense<0.000000e+00> : vector<32x128xf32>
      %403 = tpu.matmul %402, %401, %cst_201 {dimension_numbers = #tpu.dot_dimension_numbers<[1], [0], [0], [1], [0, 0, 1, 1], [], []>} : vector<32x128xbf16>, vector<128x128xbf16>, vector<32x128xf32> -> vector<32x128xf32>
      %404 = arith.addf %400, %403 : vector<32x128xf32>
      %c0_202 = arith.constant 0 : index
      %c0_203 = arith.constant 0 : index
      %405 = vector.load %arg43[%c0_202, %c0_203] : memref<1x128xf32, #tpu.memory_space<vmem>>, vector<1x128xf32>
      %406 = vector.broadcast %405 : vector<1x128xf32> to vector<32x128xf32>
      %407 = arith.addf %404, %406 : vector<32x128xf32>
      %c0_204 = arith.constant 0 : index
      %c0_205 = arith.constant 0 : index
      %408 = vector.load %arg52[%c0_204, %c0_205] : memref<32x128xf32, #tpu.memory_space<vmem>>, vector<32x128xf32>
      tpu.vector_store %arg52[%c0_204, %c0_205], %407 {strides = array<i32>} : memref<32x128xf32, #tpu.memory_space<vmem>>, vector<32x128xf32>,
    } else {
    }
    %c2_i32 = arith.constant 2 : i32
    %377 = arith.cmpi eq, %arg1, %c2_i32 : i32
    %378 = arith.extui %377 : i1 to i32
    %c0_i32_185 = arith.constant 0 : i32
    %379 = arith.cmpi ne, %378, %c0_i32_185 : i32
    scf.if %379 {
      %c0_186 = arith.constant 0 : index
      %c0_187 = arith.constant 0 : index
      %380 = vector.load %arg52[%c0_186, %c0_187] : memref<32x128xf32, #tpu.memory_space<vmem>>, vector<32x128xf32>
      %381 = vector.shape_cast %380 : vector<32x128xf32> to vector<2x16x128xf32>
      %c0_188 = arith.constant 0 : index
      %c0_189 = arith.constant 0 : index
      %c0_190 = arith.constant 0 : index
      %382 = vector.load %arg49[%c0_188, %c0_189, %c0_190] : memref<2x16x128xf32, #tpu.memory_space<vmem>>, vector<2x16x128xf32>
      tpu.vector_store %arg49[%c0_188, %c0_189, %c0_190], %381 {strides = array<i32>} : memref<2x16x128xf32, #tpu.memory_space<vmem>>, vector<2x16x128xf32>,
      %c0_191 = arith.constant 0 : index
      %c0_192 = arith.constant 0 : index
      %383 = vector.load %arg40[%c0_191, %c0_192] : memref<128x128xbf16, #tpu.memory_space<vmem>>, vector<128x128xbf16>
      %c0_193 = arith.constant 0 : index
      %c0_194 = arith.constant 0 : index
      %384 = vector.load %arg41[%c0_193, %c0_194] : memref<1x128xf32, #tpu.memory_space<vmem>>, vector<1x128xf32>
      %385 = arith.truncf %380 : vector<32x128xf32> to vector<32x128xbf16>
      %cst_195 = arith.constant dense<0.000000e+00> : vector<32x128xf32>
      %386 = tpu.matmul %385, %383, %cst_195 {dimension_numbers = #tpu.dot_dimension_numbers<[1], [0], [0], [1], [0, 0, 1, 1], [], []>} : vector<32x128xbf16>, vector<128x128xbf16>, vector<32x128xf32> -> vector<32x128xf32>
      %387 = vector.broadcast %384 : vector<1x128xf32> to vector<32x128xf32>
      %388 = arith.addf %386, %387 : vector<32x128xf32>
      %cst_196 = arith.constant dense<0xFF800000> : vector<32xf32>
      %389 = vector.multi_reduction <maximumf>, %388, %cst_196 [1] : vector<32x128xf32> to vector<32xf32>
      %390 = vector.shape_cast %389 : vector<32xf32> to vector<32x1xf32>
      %391 = vector.broadcast %390 : vector<32x1xf32> to vector<32x128xf32>
      %392 = arith.subf %388, %391 : vector<32x128xf32>
      %393 = math.exp %392 : vector<32x128xf32>
      %cst_197 = arith.constant dense<0.000000e+00> : vector<32xf32>
      %394 = vector.multi_reduction <add>, %393, %cst_197 [1] : vector<32x128xf32> to vector<32xf32>
      %395 = vector.shape_cast %394 : vector<32xf32> to vector<32x1xf32>
      %396 = math.log %395 : vector<32x1xf32>
      %397 = vector.broadcast %396 : vector<32x1xf32> to vector<32x128xf32>
      %398 = arith.subf %392, %397 : vector<32x128xf32>
      %399 = vector.shape_cast %398 : vector<32x128xf32> to vector<2x16x128xf32>
      %c0_198 = arith.constant 0 : index
      %c0_199 = arith.constant 0 : index
      %c0_200 = arith.constant 0 : index
      %400 = vector.load %arg48[%c0_198, %c0_199, %c0_200] : memref<2x16x128xf32, #tpu.memory_space<vmem>>, vector<2x16x128xf32>
      tpu.vector_store %arg48[%c0_198, %c0_199, %c0_200], %399 {strides = array<i32>} : memref<2x16x128xf32, #tpu.memory_space<vmem>>, vector<2x16x128xf32>,
    } else {
    }
    return
  }
  func.func @transform_0(%arg0: i32, %arg1: i32, %arg2: memref<3xi32, #tpu.memory_space<smem>>, %arg3: memref<3xi32, #tpu.memory_space<smem>>) -> (i32, i32, i32) {
    %c0_i32 = arith.constant 0 : i32
    %c0_i32_0 = arith.constant 0 : i32
    %c0_i32_1 = arith.constant 0 : i32
    return %arg0, %c0_i32, %c0_i32_0 : i32, i32, i32
  }
  func.func @transform_1(%arg0: i32, %arg1: i32, %arg2: memref<3xi32, #tpu.memory_space<smem>>, %arg3: memref<3xi32, #tpu.memory_space<smem>>) -> (i32, i32, i32) {
    %c0_i32 = arith.constant 0 : i32
    %c0_i32_0 = arith.constant 0 : i32
    %c0_i32_1 = arith.constant 0 : i32
    return %arg0, %c0_i32, %c0_i32_0 : i32, i32, i32
  }
  func.func @transform_2(%arg0: i32, %arg1: i32, %arg2: memref<3xi32, #tpu.memory_space<smem>>, %arg3: memref<3xi32, #tpu.memory_space<smem>>) -> (i32, i32, i32) {
    %c0_i32 = arith.constant 0 : i32
    %c0_i32_0 = arith.constant 0 : i32
    %c0_i32_1 = arith.constant 0 : i32
    return %arg1, %c0_i32, %c0_i32_0 : i32, i32, i32
  }
  func.func @transform_3(%arg0: i32, %arg1: i32, %arg2: memref<3xi32, #tpu.memory_space<smem>>, %arg3: memref<3xi32, #tpu.memory_space<smem>>) -> (i32, i32, i32) {
    %c0_i32 = arith.constant 0 : i32
    %c0_i32_0 = arith.constant 0 : i32
    %c0_i32_1 = arith.constant 0 : i32
    return %arg1, %c0_i32, %c0_i32_0 : i32, i32, i32
  }
  func.func @transform_4(%arg0: i32, %arg1: i32, %arg2: memref<3xi32, #tpu.memory_space<smem>>, %arg3: memref<3xi32, #tpu.memory_space<smem>>) -> (i32, i32, i32) {
    %c0_i32 = arith.constant 0 : i32
    %c0_i32_0 = arith.constant 0 : i32
    %c0_i32_1 = arith.constant 0 : i32
    return %arg1, %c0_i32, %c0_i32_0 : i32, i32, i32
  }
  func.func @transform_5(%arg0: i32, %arg1: i32, %arg2: memref<3xi32, #tpu.memory_space<smem>>, %arg3: memref<3xi32, #tpu.memory_space<smem>>) -> (i32, i32, i32) {
    %c0_i32 = arith.constant 0 : i32
    %c0_i32_0 = arith.constant 0 : i32
    %c0_i32_1 = arith.constant 0 : i32
    return %arg1, %c0_i32, %c0_i32_0 : i32, i32, i32
  }
  func.func @transform_6(%arg0: i32, %arg1: i32, %arg2: memref<3xi32, #tpu.memory_space<smem>>, %arg3: memref<3xi32, #tpu.memory_space<smem>>) -> (i32, i32, i32) {
    %c0_i32 = arith.constant 0 : i32
    %c0_i32_0 = arith.constant 0 : i32
    %c0_i32_1 = arith.constant 0 : i32
    return %arg1, %c0_i32, %c0_i32_0 : i32, i32, i32
  }
  func.func @transform_7(%arg0: i32, %arg1: i32, %arg2: memref<3xi32, #tpu.memory_space<smem>>, %arg3: memref<3xi32, #tpu.memory_space<smem>>) -> (i32, i32, i32) {
    %c0_i32 = arith.constant 0 : i32
    %c0_i32_0 = arith.constant 0 : i32
    %c0_i32_1 = arith.constant 0 : i32
    return %arg1, %c0_i32, %c0_i32_0 : i32, i32, i32
  }
  func.func @transform_8(%arg0: i32, %arg1: i32, %arg2: memref<3xi32, #tpu.memory_space<smem>>, %arg3: memref<3xi32, #tpu.memory_space<smem>>) -> (i32, i32, i32) {
    %c0_i32 = arith.constant 0 : i32
    %c0_i32_0 = arith.constant 0 : i32
    %c0_i32_1 = arith.constant 0 : i32
    return %arg1, %c0_i32, %c0_i32_0 : i32, i32, i32
  }
  func.func @transform_9(%arg0: i32, %arg1: i32, %arg2: memref<3xi32, #tpu.memory_space<smem>>, %arg3: memref<3xi32, #tpu.memory_space<smem>>) -> (i32, i32, i32) {
    %c0_i32 = arith.constant 0 : i32
    %c0_i32_0 = arith.constant 0 : i32
    %c0_i32_1 = arith.constant 0 : i32
    return %arg1, %c0_i32, %c0_i32_0 : i32, i32, i32
  }
  func.func @transform_10(%arg0: i32, %arg1: i32, %arg2: memref<3xi32, #tpu.memory_space<smem>>, %arg3: memref<3xi32, #tpu.memory_space<smem>>) -> (i32, i32, i32) {
    %c0_i32 = arith.constant 0 : i32
    %c0_i32_0 = arith.constant 0 : i32
    %c0_i32_1 = arith.constant 0 : i32
    return %arg1, %c0_i32, %c0_i32_0 : i32, i32, i32
  }
  func.func @transform_11(%arg0: i32, %arg1: i32, %arg2: memref<3xi32, #tpu.memory_space<smem>>, %arg3: memref<3xi32, #tpu.memory_space<smem>>) -> (i32, i32, i32) {
    %c0_i32 = arith.constant 0 : i32
    %c0_i32_0 = arith.constant 0 : i32
    %c0_i32_1 = arith.constant 0 : i32
    return %arg1, %c0_i32, %c0_i32_0 : i32, i32, i32
  }
  func.func @transform_12(%arg0: i32, %arg1: i32, %arg2: memref<3xi32, #tpu.memory_space<smem>>, %arg3: memref<3xi32, #tpu.memory_space<smem>>) -> (i32, i32, i32) {
    %c0_i32 = arith.constant 0 : i32
    %c0_i32_0 = arith.constant 0 : i32
    %c0_i32_1 = arith.constant 0 : i32
    return %arg1, %c0_i32, %c0_i32_0 : i32, i32, i32
  }
  func.func @transform_13(%arg0: i32, %arg1: i32, %arg2: memref<3xi32, #tpu.memory_space<smem>>, %arg3: memref<3xi32, #tpu.memory_space<smem>>) -> (i32, i32, i32) {
    %c0_i32 = arith.constant 0 : i32
    %c0_i32_0 = arith.constant 0 : i32
    %c0_i32_1 = arith.constant 0 : i32
    return %arg1, %c0_i32, %c0_i32_0 : i32, i32, i32
  }
  func.func @transform_14(%arg0: i32, %arg1: i32, %arg2: memref<3xi32, #tpu.memory_space<smem>>, %arg3: memref<3xi32, #tpu.memory_space<smem>>) -> (i32, i32, i32) {
    %c0_i32 = arith.constant 0 : i32
    %c0_i32_0 = arith.constant 0 : i32
    %c0_i32_1 = arith.constant 0 : i32
    return %arg1, %c0_i32, %c0_i32_0 : i32, i32, i32
  }
  func.func @transform_15(%arg0: i32, %arg1: i32, %arg2: memref<3xi32, #tpu.memory_space<smem>>, %arg3: memref<3xi32, #tpu.memory_space<smem>>) -> (i32, i32, i32) {
    %c0_i32 = arith.constant 0 : i32
    %c0_i32_0 = arith.constant 0 : i32
    %c0_i32_1 = arith.constant 0 : i32
    return %arg1, %c0_i32, %c0_i32_0 : i32, i32, i32
  }
  func.func @transform_16(%arg0: i32, %arg1: i32, %arg2: memref<3xi32, #tpu.memory_space<smem>>, %arg3: memref<3xi32, #tpu.memory_space<smem>>) -> (i32, i32, i32) {
    %c0_i32 = arith.constant 0 : i32
    %c0_i32_0 = arith.constant 0 : i32
    %c0_i32_1 = arith.constant 0 : i32
    return %arg1, %c0_i32, %c0_i32_0 : i32, i32, i32
  }
  func.func @transform_17(%arg0: i32, %arg1: i32, %arg2: memref<3xi32, #tpu.memory_space<smem>>, %arg3: memref<3xi32, #tpu.memory_space<smem>>) -> (i32, i32, i32) {
    %c0_i32 = arith.constant 0 : i32
    %c0_i32_0 = arith.constant 0 : i32
    %c0_i32_1 = arith.constant 0 : i32
    return %arg1, %c0_i32, %c0_i32_0 : i32, i32, i32
  }
  func.func @transform_18(%arg0: i32, %arg1: i32, %arg2: memref<3xi32, #tpu.memory_space<smem>>, %arg3: memref<3xi32, #tpu.memory_space<smem>>) -> (i32, i32, i32) {
    %c0_i32 = arith.constant 0 : i32
    %c0_i32_0 = arith.constant 0 : i32
    %c0_i32_1 = arith.constant 0 : i32
    return %arg1, %c0_i32, %c0_i32_0 : i32, i32, i32
  }
  func.func @transform_19(%arg0: i32, %arg1: i32, %arg2: memref<3xi32, #tpu.memory_space<smem>>, %arg3: memref<3xi32, #tpu.memory_space<smem>>) -> (i32, i32, i32) {
    %c0_i32 = arith.constant 0 : i32
    %c0_i32_0 = arith.constant 0 : i32
    %c0_i32_1 = arith.constant 0 : i32
    return %arg1, %c0_i32, %c0_i32_0 : i32, i32, i32
  }
  func.func @transform_20(%arg0: i32, %arg1: i32, %arg2: memref<3xi32, #tpu.memory_space<smem>>, %arg3: memref<3xi32, #tpu.memory_space<smem>>) -> (i32, i32, i32) {
    %c0_i32 = arith.constant 0 : i32
    %c0_i32_0 = arith.constant 0 : i32
    %c0_i32_1 = arith.constant 0 : i32
    return %arg1, %c0_i32, %c0_i32_0 : i32, i32, i32
  }
  func.func @transform_21(%arg0: i32, %arg1: i32, %arg2: memref<3xi32, #tpu.memory_space<smem>>, %arg3: memref<3xi32, #tpu.memory_space<smem>>) -> (i32, i32, i32) {
    %c0_i32 = arith.constant 0 : i32
    %c0_i32_0 = arith.constant 0 : i32
    %c0_i32_1 = arith.constant 0 : i32
    return %arg1, %c0_i32, %c0_i32_0 : i32, i32, i32
  }
  func.func @transform_22(%arg0: i32, %arg1: i32, %arg2: memref<3xi32, #tpu.memory_space<smem>>, %arg3: memref<3xi32, #tpu.memory_space<smem>>) -> (i32, i32, i32) {
    %c0_i32 = arith.constant 0 : i32
    %c0_i32_0 = arith.constant 0 : i32
    %c0_i32_1 = arith.constant 0 : i32
    return %arg1, %c0_i32, %c0_i32_0 : i32, i32, i32
  }
  func.func @transform_23(%arg0: i32, %arg1: i32, %arg2: memref<3xi32, #tpu.memory_space<smem>>, %arg3: memref<3xi32, #tpu.memory_space<smem>>) -> (i32, i32, i32) {
    %c0_i32 = arith.constant 0 : i32
    %c0_i32_0 = arith.constant 0 : i32
    %c0_i32_1 = arith.constant 0 : i32
    return %arg1, %c0_i32, %c0_i32_0 : i32, i32, i32
  }
  func.func @transform_24(%arg0: i32, %arg1: i32, %arg2: memref<3xi32, #tpu.memory_space<smem>>, %arg3: memref<3xi32, #tpu.memory_space<smem>>) -> (i32, i32, i32) {
    %c0_i32 = arith.constant 0 : i32
    %c0_i32_0 = arith.constant 0 : i32
    %c0_i32_1 = arith.constant 0 : i32
    return %arg1, %c0_i32, %c0_i32_0 : i32, i32, i32
  }
  func.func @transform_25(%arg0: i32, %arg1: i32, %arg2: memref<3xi32, #tpu.memory_space<smem>>, %arg3: memref<3xi32, #tpu.memory_space<smem>>) -> (i32, i32, i32) {
    %c0_i32 = arith.constant 0 : i32
    %c0_i32_0 = arith.constant 0 : i32
    %c0_i32_1 = arith.constant 0 : i32
    return %arg1, %c0_i32, %c0_i32_0 : i32, i32, i32
  }
  func.func @transform_26(%arg0: i32, %arg1: i32, %arg2: memref<3xi32, #tpu.memory_space<smem>>, %arg3: memref<3xi32, #tpu.memory_space<smem>>) -> (i32, i32, i32) {
    %c0_i32 = arith.constant 0 : i32
    %c0_i32_0 = arith.constant 0 : i32
    %c0_i32_1 = arith.constant 0 : i32
    return %arg1, %c0_i32, %c0_i32_0 : i32, i32, i32
  }
  func.func @transform_27(%arg0: i32, %arg1: i32, %arg2: memref<3xi32, #tpu.memory_space<smem>>, %arg3: memref<3xi32, #tpu.memory_space<smem>>) -> (i32, i32, i32) {
    %c0_i32 = arith.constant 0 : i32
    %c0_i32_0 = arith.constant 0 : i32
    %c0_i32_1 = arith.constant 0 : i32
    return %arg1, %c0_i32, %c0_i32_0 : i32, i32, i32
  }
  func.func @transform_28(%arg0: i32, %arg1: i32, %arg2: memref<3xi32, #tpu.memory_space<smem>>, %arg3: memref<3xi32, #tpu.memory_space<smem>>) -> (i32, i32, i32) {
    %c0_i32 = arith.constant 0 : i32
    %c0_i32_0 = arith.constant 0 : i32
    %c0_i32_1 = arith.constant 0 : i32
    return %arg1, %c0_i32, %c0_i32_0 : i32, i32, i32
  }
  func.func @transform_29(%arg0: i32, %arg1: i32, %arg2: memref<3xi32, #tpu.memory_space<smem>>, %arg3: memref<3xi32, #tpu.memory_space<smem>>) -> (i32, i32, i32) {
    %c0_i32 = arith.constant 0 : i32
    %c0_i32_0 = arith.constant 0 : i32
    %c0_i32_1 = arith.constant 0 : i32
    return %arg1, %c0_i32, %c0_i32_0 : i32, i32, i32
  }
  func.func @transform_30(%arg0: i32, %arg1: i32, %arg2: memref<3xi32, #tpu.memory_space<smem>>, %arg3: memref<3xi32, #tpu.memory_space<smem>>) -> (i32, i32, i32) {
    %c0_i32 = arith.constant 0 : i32
    %c0_i32_0 = arith.constant 0 : i32
    %c0_i32_1 = arith.constant 0 : i32
    return %arg1, %c0_i32, %c0_i32_0 : i32, i32, i32
  }
  func.func @transform_31(%arg0: i32, %arg1: i32, %arg2: memref<3xi32, #tpu.memory_space<smem>>, %arg3: memref<3xi32, #tpu.memory_space<smem>>) -> (i32, i32, i32) {
    %c0_i32 = arith.constant 0 : i32
    %c0_i32_0 = arith.constant 0 : i32
    %c0_i32_1 = arith.constant 0 : i32
    return %arg1, %c0_i32, %c0_i32_0 : i32, i32, i32
  }
  func.func @transform_32(%arg0: i32, %arg1: i32, %arg2: memref<3xi32, #tpu.memory_space<smem>>, %arg3: memref<3xi32, #tpu.memory_space<smem>>) -> (i32, i32, i32) {
    %c0_i32 = arith.constant 0 : i32
    %c0_i32_0 = arith.constant 0 : i32
    %c0_i32_1 = arith.constant 0 : i32
    return %arg1, %c0_i32, %c0_i32_0 : i32, i32, i32
  }
  func.func @transform_33(%arg0: i32, %arg1: i32, %arg2: memref<3xi32, #tpu.memory_space<smem>>, %arg3: memref<3xi32, #tpu.memory_space<smem>>) -> (i32, i32, i32) {
    %c0_i32 = arith.constant 0 : i32
    %c0_i32_0 = arith.constant 0 : i32
    %c0_i32_1 = arith.constant 0 : i32
    return %arg1, %c0_i32, %c0_i32_0 : i32, i32, i32
  }
  func.func @transform_34(%arg0: i32, %arg1: i32, %arg2: memref<3xi32, #tpu.memory_space<smem>>, %arg3: memref<3xi32, #tpu.memory_space<smem>>) -> (i32, i32, i32) {
    %c0_i32 = arith.constant 0 : i32
    %c0_i32_0 = arith.constant 0 : i32
    %c0_i32_1 = arith.constant 0 : i32
    return %arg1, %c0_i32, %c0_i32_0 : i32, i32, i32
  }
  func.func @transform_35(%arg0: i32, %arg1: i32, %arg2: memref<3xi32, #tpu.memory_space<smem>>, %arg3: memref<3xi32, #tpu.memory_space<smem>>) -> (i32, i32, i32) {
    %c0_i32 = arith.constant 0 : i32
    %c0_i32_0 = arith.constant 0 : i32
    %c0_i32_1 = arith.constant 0 : i32
    return %arg1, %c0_i32, %c0_i32_0 : i32, i32, i32
  }
  func.func @transform_36(%arg0: i32, %arg1: i32, %arg2: memref<3xi32, #tpu.memory_space<smem>>, %arg3: memref<3xi32, #tpu.memory_space<smem>>) -> (i32, i32) {
    %c0_i32 = arith.constant 0 : i32
    %c0_i32_0 = arith.constant 0 : i32
    %c0_i32_1 = arith.constant 0 : i32
    return %c0_i32, %c0_i32_0 : i32, i32
  }
  func.func @transform_37(%arg0: i32, %arg1: i32, %arg2: memref<3xi32, #tpu.memory_space<smem>>, %arg3: memref<3xi32, #tpu.memory_space<smem>>) -> (i32, i32) {
    %c0_i32 = arith.constant 0 : i32
    %c0_i32_0 = arith.constant 0 : i32
    %c0_i32_1 = arith.constant 0 : i32
    return %c0_i32, %c0_i32_0 : i32, i32
  }
  func.func @transform_38(%arg0: i32, %arg1: i32, %arg2: memref<3xi32, #tpu.memory_space<smem>>, %arg3: memref<3xi32, #tpu.memory_space<smem>>) -> (i32, i32) {
    %c0_i32 = arith.constant 0 : i32
    %c0_i32_0 = arith.constant 0 : i32
    %c0_i32_1 = arith.constant 0 : i32
    return %c0_i32, %c0_i32_0 : i32, i32
  }
  func.func @transform_39(%arg0: i32, %arg1: i32, %arg2: memref<3xi32, #tpu.memory_space<smem>>, %arg3: memref<3xi32, #tpu.memory_space<smem>>) -> (i32, i32) {
    %c0_i32 = arith.constant 0 : i32
    %c0_i32_0 = arith.constant 0 : i32
    %c0_i32_1 = arith.constant 0 : i32
    return %c0_i32, %c0_i32_0 : i32, i32
  }
  func.func @transform_40(%arg0: i32, %arg1: i32, %arg2: memref<3xi32, #tpu.memory_space<smem>>, %arg3: memref<3xi32, #tpu.memory_space<smem>>) -> (i32, i32) {
    %c0_i32 = arith.constant 0 : i32
    %c0_i32_0 = arith.constant 0 : i32
    %c0_i32_1 = arith.constant 0 : i32
    return %c0_i32, %c0_i32_0 : i32, i32
  }
  func.func @transform_41(%arg0: i32, %arg1: i32, %arg2: memref<3xi32, #tpu.memory_space<smem>>, %arg3: memref<3xi32, #tpu.memory_space<smem>>) -> (i32, i32) {
    %c0_i32 = arith.constant 0 : i32
    %c0_i32_0 = arith.constant 0 : i32
    %c0_i32_1 = arith.constant 0 : i32
    return %c0_i32, %c0_i32_0 : i32, i32
  }
  func.func @transform_42(%arg0: i32, %arg1: i32, %arg2: memref<3xi32, #tpu.memory_space<smem>>, %arg3: memref<3xi32, #tpu.memory_space<smem>>) -> (i32, i32) {
    %c0_i32 = arith.constant 0 : i32
    %c0_i32_0 = arith.constant 0 : i32
    %c0_i32_1 = arith.constant 0 : i32
    return %c0_i32, %c0_i32_0 : i32, i32
  }
  func.func @transform_43(%arg0: i32, %arg1: i32, %arg2: memref<3xi32, #tpu.memory_space<smem>>, %arg3: memref<3xi32, #tpu.memory_space<smem>>) -> (i32, i32) {
    %c0_i32 = arith.constant 0 : i32
    %c0_i32_0 = arith.constant 0 : i32
    %c0_i32_1 = arith.constant 0 : i32
    return %c0_i32, %c0_i32_0 : i32, i32
  }
  func.func @transform_44(%arg0: i32, %arg1: i32, %arg2: memref<3xi32, #tpu.memory_space<smem>>, %arg3: memref<3xi32, #tpu.memory_space<smem>>) -> (i32, i32, i32) {
    %c0_i32 = arith.constant 0 : i32
    %c0_i32_0 = arith.constant 0 : i32
    %c0_i32_1 = arith.constant 0 : i32
    return %arg0, %c0_i32, %c0_i32_0 : i32, i32, i32
  }
  func.func @transform_45(%arg0: i32, %arg1: i32, %arg2: memref<3xi32, #tpu.memory_space<smem>>, %arg3: memref<3xi32, #tpu.memory_space<smem>>) -> (i32, i32, i32) {
    %c0_i32 = arith.constant 0 : i32
    %c0_i32_0 = arith.constant 0 : i32
    %c0_i32_1 = arith.constant 0 : i32
    return %arg0, %c0_i32, %c0_i32_0 : i32, i32, i32
  }
  func.func @transform_46(%arg0: i32, %arg1: i32, %arg2: memref<3xi32, #tpu.memory_space<smem>>, %arg3: memref<3xi32, #tpu.memory_space<smem>>) -> (i32, i32, i32, i32) {
    %c0_i32 = arith.constant 0 : i32
    %c0_i32_0 = arith.constant 0 : i32
    %c0_i32_1 = arith.constant 0 : i32
    return %arg1, %arg0, %c0_i32, %c0_i32_0 : i32, i32, i32, i32
  }
  func.func @transform_47(%arg0: i32, %arg1: i32, %arg2: memref<3xi32, #tpu.memory_space<smem>>, %arg3: memref<3xi32, #tpu.memory_space<smem>>) -> (i32, i32, i32, i32) {
    %c0_i32 = arith.constant 0 : i32
    %c0_i32_0 = arith.constant 0 : i32
    %c0_i32_1 = arith.constant 0 : i32
    return %arg1, %arg0, %c0_i32, %c0_i32_0 : i32, i32, i32, i32
  }
}

</mosaic_0001>

<llo_original>
// kernel: tpu_custom_call.1
$region0: #{tpu_custom_call.1}
  #allocation0 [shape = 'u32[]', space=smem, size = 0x4, offset = 0x4, fixed_abs, tag = 'smem constant byte address 0x4 - core index']
  #allocation1 [shape = 'u32[144,128]{1,0:T(1,128)}', space=vmem, size = 0x12000, scoped, tag = 'internal scratch']
  #allocation2 [shape = 'f32[32,128]{1,0:T(8,128)}', space=vmem, size = 0x4000, scoped, tag = 'scratch operand']
  #allocation3 [shape = 'f32[2,22,128]{2,1,0:T(8,128)}', space=vmem, size = 0x6000, scoped, tag = 'scratch operand']
  #allocation4 [shape = 's32[1]{0}', space=sflag, size = 0x4, scoped, tag = 'scoped memory for tpu_custom_call.1']
  #allocation5 [shape = 'u8[512]{0}', space=smem, size = 0x200, scoped, tag = 'prefetched SMEM operand 0']
  #allocation6 [shape = 'u8[512]{0}', space=smem, size = 0x200, scoped, tag = 'prefetched SMEM operand 1']
  %s0 = inlined_call_operand.smem [shape: u32[50], index: -1, kind: input, shape index: {}]
  %s1 = sld [smem:[%s0]]
  %s2 = scalar_lea.smem %s0, 1
  %s3 = sld [smem:[%s2]]
  %s4 = scalar_lea.smem %s0, 2
  %s5 = sld [smem:[%s4]]
  %s6 = scalar_lea.smem %s0, 3
  %s7 = sld [smem:[%s6]]
  %s8 = scalar_lea.smem %s0, 4
  %s9 = sld [smem:[%s8]]
  %s10 = scalar_lea.smem %s0, 5
  %s11 = sld [smem:[%s10]]
  %s12 = scalar_lea.smem %s0, 6
  %s13 = sld [smem:[%s12]]
  %s14 = scalar_lea.smem %s0, 7
  %s15 = sld [smem:[%s14]]
  %s16 = scalar_lea.smem %s0, 8
  %s17 = sld [smem:[%s16]]
  %s18 = scalar_lea.smem %s0, 9
  %s19 = sld [smem:[%s18]]
  %s20 = scalar_lea.smem %s0, 10
  %s21 = sld [smem:[%s20]]
  %s22 = scalar_lea.smem %s0, 11
  %s23 = sld [smem:[%s22]]
  %s24 = scalar_lea.smem %s0, 12
  %s25 = sld [smem:[%s24]]
  %s26 = scalar_lea.smem %s0, 13
  %s27 = sld [smem:[%s26]]
  %s28 = scalar_lea.smem %s0, 14
  %s29 = sld [smem:[%s28]]
  %s30 = scalar_lea.smem %s0, 15
  %s31 = sld [smem:[%s30]]
  %s32 = scalar_lea.smem %s0, 16
  %s33 = sld [smem:[%s32]]
  %s34 = scalar_lea.smem %s0, 17
  %s35 = sld [smem:[%s34]]
  %s36 = scalar_lea.smem %s0, 18
  %s37 = sld [smem:[%s36]]
  %s38 = scalar_lea.smem %s0, 19
  %s39 = sld [smem:[%s38]]
  %s40 = scalar_lea.smem %s0, 20
  %s41 = sld [smem:[%s40]]
  %s42 = scalar_lea.smem %s0, 21
  %s43 = sld [smem:[%s42]]
  %s44 = scalar_lea.smem %s0, 22
  %s45 = sld [smem:[%s44]]
  %s46 = scalar_lea.smem %s0, 23
  %s47 = sld [smem:[%s46]]
  %s48 = scalar_lea.smem %s0, 24
  %s49 = sld [smem:[%s48]]
  %s50 = scalar_lea.smem %s0, 25
  %s51 = sld [smem:[%s50]]
  %s52 = scalar_lea.smem %s0, 26
  %s53 = sld [smem:[%s52]]
  %s54 = scalar_lea.smem %s0, 27
  %s55 = sld [smem:[%s54]]
  %s56 = scalar_lea.smem %s0, 28
  %s57 = sld [smem:[%s56]]
  %s58 = scalar_lea.smem %s0, 29
  %s59 = sld [smem:[%s58]]
  %s60 = scalar_lea.smem %s0, 30
  %s61 = sld [smem:[%s60]]
  %s62 = scalar_lea.smem %s0, 31
  %s63 = sld [smem:[%s62]]
  %s64 = scalar_lea.smem %s0, 32
  %s65 = sld [smem:[%s64]]
  %s66 = scalar_lea.smem %s0, 33
  %s67 = sld [smem:[%s66]]
  %s68 = scalar_lea.smem %s0, 34
  %s69 = sld [smem:[%s68]]
  %s70 = scalar_lea.smem %s0, 35
  %s71 = sld [smem:[%s70]]
  %s72 = scalar_lea.smem %s0, 36
  %s73 = sld [smem:[%s72]]
  %s74 = scalar_lea.smem %s0, 37
  %s75 = sld [smem:[%s74]]
  %s76 = scalar_lea.smem %s0, 38
  %s77 = sld [smem:[%s76]]
  %s78 = scalar_lea.smem %s0, 39
  %s79 = sld [smem:[%s78]]
  %s80 = scalar_lea.smem %s0, 40
  %s81 = sld [smem:[%s80]]
  %s82 = scalar_lea.smem %s0, 41
  %s83 = sld [smem:[%s82]]
  %s84 = scalar_lea.smem %s0, 42
  %s85 = sld [smem:[%s84]]
  %s86 = scalar_lea.smem %s0, 43
  %s87 = sld [smem:[%s86]]
  %s88 = scalar_lea.smem %s0, 44
  %s89 = sld [smem:[%s88]]
  %s90 = scalar_lea.smem %s0, 45
  %s91 = sld [smem:[%s90]]
  %s92 = scalar_lea.smem %s0, 46
  %s93 = sld [smem:[%s92]]
  %s94 = scalar_lea.smem %s0, 47
  %s95 = sld [smem:[%s94]]
  %s96 = scalar_lea.smem %s0, 48
  %s97 = sld [smem:[%s96]]
  %s98 = scalar_lea.smem %s0, 49
  %s99 = sld [smem:[%s98]]
  %100 = xla_tuple %s93, %s95, %s97, %s99
  %s101 = sld [smem:[#allocation0]]
  $region389: #{tpu_custom_call.1} parent=0
    _
  %s103 = ssub.s32 1, %s101
  %s104 = scalar_select 0, %s103, %s101
  %106 = dma.hbm_to_smem %s1, 16, [#allocation5], [#allocation4]
  %108 = dma.hbm_to_smem %s3, 16, [#allocation6], [#allocation4]
  %109 = dma.done [#allocation4], 32
  %110 = sfence
  $region1: #{tpu_custom_call.1} parent=0
    #allocation7 [shape = 'u8[16384]{0}', space=vmem, size = 0x4000, scoped, tag = 'input window, operand 2, single buffered']
    #allocation8 [shape = 's32[2]{0}', space=sflag, size = 0x8, scoped, tag = 'scoped memory for tpu_custom_call.1']
    #allocation9 [shape = 's32[2]{0}', space=sflag, size = 0x8, scoped, tag = 'scoped memory for tpu_custom_call.1']
    #allocation10 [shape = 'u8[1024]{0}', space=vmem, size = 0x400, scoped, tag = 'input window, operand 3, single buffered']
    #allocation11 [shape = 's32[1]{0}', space=sflag, size = 0x4, scoped, tag = 'scoped memory for tpu_custom_call.1']
    #allocation12 [shape = 'u8[1024]{0}', space=vmem, size = 0x400, scoped, tag = 'input window, operand 4']
    #allocation13 [shape = 'u8[1024]{0}', space=vmem, size = 0x400, scoped, tag = 'input window, operand 5']
    #allocation14 [shape = 'u8[262144]{0}', space=vmem, size = 0x40000, scoped, tag = 'input window, operand 6']
    #allocation15 [shape = 'u8[4096]{0}', space=vmem, size = 0x1000, scoped, tag = 'input window, operand 7']
    #allocation16 [shape = 'u8[262144]{0}', space=vmem, size = 0x40000, scoped, tag = 'input window, operand 8']
    #allocation17 [shape = 'u8[1024]{0}', space=vmem, size = 0x400, scoped, tag = 'input window, operand 9']
    #allocation18 [shape = 'u8[1024]{0}', space=vmem, size = 0x400, scoped, tag = 'input window, operand 10']
    #allocation19 [shape = 'u8[1024]{0}', space=vmem, size = 0x400, scoped, tag = 'input window, operand 11']
    #allocation20 [shape = 'u8[65536]{0}', space=vmem, size = 0x10000, scoped, tag = 'input window, operand 12']
    #allocation21 [shape = 'u8[1024]{0}', space=vmem, size = 0x400, scoped, tag = 'input window, operand 13']
    #allocation22 [shape = 'u8[65536]{0}', space=vmem, size = 0x10000, scoped, tag = 'input window, operand 14']
    #allocation23 [shape = 'u8[1024]{0}', space=vmem, size = 0x400, scoped, tag = 'input window, operand 15']
    #allocation24 [shape = 'u8[65536]{0}', space=vmem, size = 0x10000, scoped, tag = 'input window, operand 16']
    #allocation25 [shape = 'u8[1024]{0}', space=vmem, size = 0x400, scoped, tag = 'input window, operand 17']
    #allocation26 [shape = 'u8[65536]{0}', space=vmem, size = 0x10000, scoped, tag = 'input window, operand 18']
    #allocation27 [shape = 'u8[1024]{0}', space=vmem, size = 0x400, scoped, tag = 'input window, operand 19']
    #allocation28 [shape = 'u8[1024]{0}', space=vmem, size = 0x400, scoped, tag = 'input window, operand 20']
    #allocation29 [shape = 'u8[1024]{0}', space=vmem, size = 0x400, scoped, tag = 'input window, operand 21']
    #allocation30 [shape = 'u8[131072]{0}', space=vmem, size = 0x20000, scoped, tag = 'input window, operand 22']
    #allocation31 [shape = 'u8[2048]{0}', space=vmem, size = 0x800, scoped, tag = 'input window, operand 23']
    #allocation32 [shape = 'u8[8192]{0}', space=vmem, size = 0x2000, scoped, tag = 'input window, operand 24']
    #allocation33 [shape = 'u8[1024]{0}', space=vmem, size = 0x400, scoped, tag = 'input window, operand 25']
    #allocation34 [shape = 'u8[1024]{0}', space=vmem, size = 0x400, scoped, tag = 'input window, operand 26']
    #allocation35 [shape = 'u8[1024]{0}', space=vmem, size = 0x400, scoped, tag = 'input window, operand 27']
    #allocation36 [shape = 'u8[65536]{0}', space=vmem, size = 0x10000, scoped, tag = 'input window, operand 28']
    #allocation37 [shape = 'u8[1024]{0}', space=vmem, size = 0x400, scoped, tag = 'input window, operand 29']
    #allocation38 [shape = 'u8[1024]{0}', space=vmem, size = 0x400, scoped, tag = 'input window, operand 30']
    #allocation39 [shape = 'u8[1024]{0}', space=vmem, size = 0x400, scoped, tag = 'input window, operand 31']
    #allocation40 [shape = 'u8[262144]{0}', space=vmem, size = 0x40000, scoped, tag = 'input window, operand 32']
    #allocation41 [shape = 'u8[4096]{0}', space=vmem, size = 0x1000, scoped, tag = 'input window, operand 33']
    #allocation42 [shape = 'u8[262144]{0}', space=vmem, size = 0x40000, scoped, tag = 'input window, operand 34']
    #allocation43 [shape = 'u8[32768]{0}', space=vmem, size = 0x8000, scoped, tag = 'input window, operand 42, single buffered']
    #allocation44 [shape = 'u8[32768]{0}', space=vmem, size = 0x8000, scoped, tag = 'input window, operand 44, single buffered']
    #allocation45 [shape = 's32[1]{0}', space=sflag, size = 0x4, scoped, tag = 'scoped memory for tpu_custom_call.1']
    #allocation46 [shape = 'u8[16384]{0}', space=vmem, size = 0x4000, scoped, tag = 'output window, operand 0, single buffered']
    #allocation47 [shape = 'u8[16384]{0}', space=vmem, size = 0x4000, scoped, tag = 'output window, operand 1, single buffered']
    #allocation48 [shape = 's32[1]{0}', space=sflag, size = 0x4, scoped, tag = 'scoped memory for tpu_custom_call.1']
    #allocation49 [shape = 'u8[32768]{0}', space=vmem, size = 0x8000, scoped, tag = 'output window, operand 2']
    #allocation50 [shape = 'u8[32768]{0}', space=vmem, size = 0x8000, scoped, tag = 'output window, operand 3']
    %111 = vsyncpa [#allocation8], 0
    %112 = vsyncpa [#allocation11], 0
    %113 = vsyncpa [#allocation45], 0
    %114 = vsyncpa [#allocation9], 0
    %115 = vsyncpa [#allocation48], 0
    loop: start=0, step=1, limit=5
    $region2: #{tpu_custom_call.1} parent=1 // loop_pre_header
      _
    $region3: #{tpu_custom_call.1} parent=1 // loop_header
      %s117 = sphi 0, %s121
      %p118 = scmp.ge.s32.totalorder %s117, 5
      %s124 = sphi 0, %s136
      %s125 = sphi 0, %s132
      %s126 = sphi 0, %s124
      %s127 = sphi 0, %s125
      %s128 = sphi 0, %s126
      %s129 = sphi 0, %s127
      %s139 = sphi 0, %s141
      %s142 = sphi 0, %s139
      %s143 = sphi 0, %s142
      %s159 = sphi 0, %s143
      %s165 = sphi 0, %s167
      %s168 = sphi 0, %s165
      %s169 = sphi 0, %s168
      %s185 = sphi 0, %s169
      %s191 = sphi 0, %s193
      %s194 = sphi 0, %s191
      %s195 = sphi 0, %s194
      %s211 = sphi 0, %s195
      %s217 = sphi 0, %s219
      %s220 = sphi 0, %s217
      %s221 = sphi 0, %s220
      %s237 = sphi 0, %s221
      %s243 = sphi 0, %s245
      %s246 = sphi 0, %s243
      %s247 = sphi 0, %s246
      %s263 = sphi 0, %s247
      %s269 = sphi 0, %s271
      %s272 = sphi 0, %s269
      %s273 = sphi 0, %s272
      %s289 = sphi 0, %s273
      %s295 = sphi 0, %s297
      %s298 = sphi 0, %s295
      %s299 = sphi 0, %s298
      %s315 = sphi 0, %s299
      %s321 = sphi 0, %s323
      %s324 = sphi 0, %s321
      %s325 = sphi 0, %s324
      %s341 = sphi 0, %s325
      %s347 = sphi 0, %s349
      %s350 = sphi 0, %s347
      %s351 = sphi 0, %s350
      %s367 = sphi 0, %s351
      %s373 = sphi 0, %s375
      %s376 = sphi 0, %s373
      %s377 = sphi 0, %s376
      %s393 = sphi 0, %s377
      %s399 = sphi 0, %s401
      %s402 = sphi 0, %s399
      %s403 = sphi 0, %s402
      %s419 = sphi 0, %s403
      %s425 = sphi 0, %s427
      %s428 = sphi 0, %s425
      %s429 = sphi 0, %s428
      %s445 = sphi 0, %s429
      %s451 = sphi 0, %s453
      %s454 = sphi 0, %s451
      %s455 = sphi 0, %s454
      %s471 = sphi 0, %s455
      %s477 = sphi 0, %s479
      %s480 = sphi 0, %s477
      %s481 = sphi 0, %s480
      %s497 = sphi 0, %s481
      %s503 = sphi 0, %s505
      %s506 = sphi 0, %s503
      %s507 = sphi 0, %s506
      %s523 = sphi 0, %s507
      %s529 = sphi 0, %s531
      %s532 = sphi 0, %s529
      %s533 = sphi 0, %s532
      %s549 = sphi 0, %s533
      %s555 = sphi 0, %s557
      %s558 = sphi 0, %s555
      %s559 = sphi 0, %s558
      %s575 = sphi 0, %s559
      %s581 = sphi 0, %s583
      %s584 = sphi 0, %s581
      %s585 = sphi 0, %s584
      %s601 = sphi 0, %s585
      %s607 = sphi 0, %s609
      %s610 = sphi 0, %s607
      %s611 = sphi 0, %s610
      %s627 = sphi 0, %s611
      %s633 = sphi 0, %s635
      %s636 = sphi 0, %s633
      %s637 = sphi 0, %s636
      %s653 = sphi 0, %s637
      %s659 = sphi 0, %s661
      %s662 = sphi 0, %s659
      %s663 = sphi 0, %s662
      %s679 = sphi 0, %s663
      %s685 = sphi 0, %s687
      %s688 = sphi 0, %s685
      %s689 = sphi 0, %s688
      %s705 = sphi 0, %s689
      %s711 = sphi 0, %s713
      %s714 = sphi 0, %s711
      %s715 = sphi 0, %s714
      %s731 = sphi 0, %s715
      %s737 = sphi 0, %s739
      %s740 = sphi 0, %s737
      %s741 = sphi 0, %s740
      %s757 = sphi 0, %s741
      %s763 = sphi 0, %s765
      %s766 = sphi 0, %s763
      %s767 = sphi 0, %s766
      %s783 = sphi 0, %s767
      %s789 = sphi 0, %s791
      %s792 = sphi 0, %s789
      %s793 = sphi 0, %s792
      %s809 = sphi 0, %s793
      %s815 = sphi 0, %s817
      %s818 = sphi 0, %s815
      %s819 = sphi 0, %s818
      %s835 = sphi 0, %s819
      %s841 = sphi 0, %s843
      %s844 = sphi 0, %s841
      %s845 = sphi 0, %s844
      %s861 = sphi 0, %s845
      %s867 = sphi 0, %s869
      %s870 = sphi 0, %s867
      %s871 = sphi 0, %s870
      %s887 = sphi 0, %s871
      %s893 = sphi 0, %s895
      %s896 = sphi 0, %s893
      %s897 = sphi 0, %s896
      %s913 = sphi 0, %s897
      %s919 = sphi 0, %s921
      %s922 = sphi 0, %s919
      %s923 = sphi 0, %s922
      %s939 = sphi 0, %s923
      %s945 = sphi 0, %s947
      %s948 = sphi 0, %s945
      %s949 = sphi 0, %s948
      %s965 = sphi 0, %s949
      %s971 = sphi 0, %s973
      %s974 = sphi 0, %s971
      %s975 = sphi 0, %s974
      %s991 = sphi 0, %s975
      %s997 = sphi 0, %s999
      %s1000 = sphi 0, %s997
      %s1001 = sphi 0, %s1000
      %s1017 = sphi 0, %s1001
      %s1023 = sphi 0, %s1025
      %s1026 = sphi 0, %s1023
      %s1027 = sphi 0, %s1026
      %s1043 = sphi 0, %s1027
      %s1049 = sphi 0, %s1051
      %s1052 = sphi 0, %s1049
      %s1053 = sphi 0, %s1052
      %s1069 = sphi 0, %s1053
      %s1073 = sphi 0, %s1073
      %s1075 = sphi 0, %s1073
      %s1076 = sphi 0, %s1075
      %s1090 = sphi 0, %s1076
      %s1094 = sphi 0, %s1094
      %s1096 = sphi 0, %s1094
      %s1097 = sphi 0, %s1096
      %s1111 = sphi 0, %s1097
      %s1115 = sphi 0, %s1115
      %s1117 = sphi 0, %s1115
      %s1118 = sphi 0, %s1117
      %s1132 = sphi 0, %s1118
      %s1136 = sphi 0, %s1136
      %s1138 = sphi 0, %s1136
      %s1139 = sphi 0, %s1138
      %s1153 = sphi 0, %s1139
      %s1157 = sphi 0, %s1157
      %s1159 = sphi 0, %s1157
      %s1160 = sphi 0, %s1159
      %s1174 = sphi 0, %s1160
      %s1178 = sphi 0, %s1178
      %s1180 = sphi 0, %s1178
      %s1181 = sphi 0, %s1180
      %s1195 = sphi 0, %s1181
      %s1199 = sphi 0, %s1199
      %s1201 = sphi 0, %s1199
      %s1202 = sphi 0, %s1201
      %s1216 = sphi 0, %s1202
      %s1220 = sphi 0, %s1220
      %s1222 = sphi 0, %s1220
      %s1223 = sphi 0, %s1222
      %s1237 = sphi 0, %s1223
      %s1243 = sphi 0, %s1245
      %s1246 = sphi 0, %s1243
      %s1247 = sphi 0, %s1246
      %s1263 = sphi 0, %s1247
      %s1269 = sphi 0, %s1271
      %s1272 = sphi 0, %s1269
      %s1273 = sphi 0, %s1272
      %s1289 = sphi 0, %s1273
      %s1297 = sphi 0, %s1299
      %s1300 = sphi 0, %s1297
      %s1301 = sphi 0, %s1300
      %s1317 = sphi 0, %s1301
      %s1325 = sphi 0, %s1327
      %s1328 = sphi 0, %s1325
      %s1329 = sphi 0, %s1328
      %s1345 = sphi 0, %s1329
    $region4: #{tpu_custom_call.1} parent=1 // loop_header_branch
      %120 = sbr.rel (%p118) target = $region8
    $region5: #{tpu_custom_call.1} parent=1 // loop_body
      %s122 = ssub.s32 %s117, 1
      %s123 = ssub.s32 %s117, 2
      %s130 = sadd.s32 1, %s125
      %p131 = scmp.ge.s32.totalorder %s130, 3
      %s132 = scalar_select %p131, 0, %s130
      %s133 = sadd.s32 1, %s124
      %s134 = scalar_select %p131, %s133, %s124
      %p135 = scmp.ge.s32.totalorder %s134, 1
      %s136 = scalar_select %p135, 0, %s134
      %s137 = ssub.s32 %s124, %s136
      %p138 = scmp.eq.s32.totalorder %s137, 0
      %s140 = sadd.s32 %s139, 1
      %s141 = scalar_select %p138, %s139, %s140
      %p144 = pneg %p138
      %p145 = scmp.eq.s32.totalorder %s117, 2
      %p146 = por %p144, %p145
      %p147 = scmp.ne.s32.totalorder %s139, %s142
      %p148 = scmp.eq.s32.totalorder %s117, 0
      %p149 = por %p147, %p148
      %p150 = scmp.ne.s32.totalorder %s139, %s142
      %p151 = scmp.eq.s32.totalorder %s122, 2
      %p152 = por %p150, %p151
      %p153 = scmp.ne.s32.totalorder %s142, %s143
      %p154 = scmp.eq.s32.totalorder %s122, 0
      %p155 = por %p153, %p154
      %p156 = scmp.ne.s32.totalorder %s142, %s143
      %p157 = scmp.eq.s32.totalorder %s123, 2
      %p158 = por %p156, %p157
      %p160 = scmp.ne.s32.totalorder %s143, %s159
      %p161 = scmp.eq.s32.totalorder %s123, 0
      %p162 = por %p160, %p161
      %s163 = ssub.s32 %s124, %s136
      %p164 = scmp.eq.s32.totalorder %s163, 0
      %s166 = sadd.s32 %s165, 1
      %s167 = scalar_select %p164, %s165, %s166
      %p170 = pneg %p164
      %p171 = scmp.eq.s32.totalorder %s117, 2
      %p172 = por %p170, %p171
      %p173 = scmp.ne.s32.totalorder %s165, %s168
      %p174 = scmp.eq.s32.totalorder %s117, 0
      %p175 = por %p173, %p174
      %p176 = scmp.ne.s32.totalorder %s165, %s168
      %p177 = scmp.eq.s32.totalorder %s122, 2
      %p178 = por %p176, %p177
      %p179 = scmp.ne.s32.totalorder %s168, %s169
      %p180 = scmp.eq.s32.totalorder %s122, 0
      %p181 = por %p179, %p180
      %p182 = scmp.ne.s32.totalorder %s168, %s169
      %p183 = scmp.eq.s32.totalorder %s123, 2
      %p184 = por %p182, %p183
      %p186 = scmp.ne.s32.totalorder %s169, %s185
      %p187 = scmp.eq.s32.totalorder %s123, 0
      %p188 = por %p186, %p187
      %s189 = ssub.s32 %s125, %s132
      %p190 = scmp.eq.s32.totalorder %s189, 0
      %s192 = sadd.s32 %s191, 1
      %s193 = scalar_select %p190, %s191, %s192
      %p196 = pneg %p190
      %p197 = scmp.eq.s32.totalorder %s117, 2
      %p198 = por %p196, %p197
      %p199 = scmp.ne.s32.totalorder %s191, %s194
      %p200 = scmp.eq.s32.totalorder %s117, 0
      %p201 = por %p199, %p200
      %p202 = scmp.ne.s32.totalorder %s191, %s194
      %p203 = scmp.eq.s32.totalorder %s122, 2
      %p204 = por %p202, %p203
      %p205 = scmp.ne.s32.totalorder %s194, %s195
      %p206 = scmp.eq.s32.totalorder %s122, 0
      %p207 = por %p205, %p206
      %p208 = scmp.ne.s32.totalorder %s194, %s195
      %p209 = scmp.eq.s32.totalorder %s123, 2
      %p210 = por %p208, %p209
      %p212 = scmp.ne.s32.totalorder %s195, %s211
      %p213 = scmp.eq.s32.totalorder %s123, 0
      %p214 = por %p212, %p213
      %s215 = ssub.s32 %s125, %s132
      %p216 = scmp.eq.s32.totalorder %s215, 0
      %s218 = sadd.s32 %s217, 1
      %s219 = scalar_select %p216, %s217, %s218
      %p222 = pneg %p216
      %p223 = scmp.eq.s32.totalorder %s117, 2
      %p224 = por %p222, %p223
      %p225 = scmp.ne.s32.totalorder %s217, %s220
      %p226 = scmp.eq.s32.totalorder %s117, 0
      %p227 = por %p225, %p226
      %p228 = scmp.ne.s32.totalorder %s217, %s220
      %p229 = scmp.eq.s32.totalorder %s122, 2
      %p230 = por %p228, %p229
      %p231 = scmp.ne.s32.totalorder %s220, %s221
      %p232 = scmp.eq.s32.totalorder %s122, 0
      %p233 = por %p231, %p232
      %p234 = scmp.ne.s32.totalorder %s220, %s221
      %p235 = scmp.eq.s32.totalorder %s123, 2
      %p236 = por %p234, %p235
      %p238 = scmp.ne.s32.totalorder %s221, %s237
      %p239 = scmp.eq.s32.totalorder %s123, 0
      %p240 = por %p238, %p239
      %s241 = ssub.s32 %s125, %s132
      %p242 = scmp.eq.s32.totalorder %s241, 0
      %s244 = sadd.s32 %s243, 1
      %s245 = scalar_select %p242, %s243, %s244
      %p248 = pneg %p242
      %p249 = scmp.eq.s32.totalorder %s117, 2
      %p250 = por %p248, %p249
      %p251 = scmp.ne.s32.totalorder %s243, %s246
      %p252 = scmp.eq.s32.totalorder %s117, 0
      %p253 = por %p251, %p252
      %p254 = scmp.ne.s32.totalorder %s243, %s246
      %p255 = scmp.eq.s32.totalorder %s122, 2
      %p256 = por %p254, %p255
      %p257 = scmp.ne.s32.totalorder %s246, %s247
      %p258 = scmp.eq.s32.totalorder %s122, 0
      %p259 = por %p257, %p258
      %p260 = scmp.ne.s32.totalorder %s246, %s247
      %p261 = scmp.eq.s32.totalorder %s123, 2
      %p262 = por %p260, %p261
      %p264 = scmp.ne.s32.totalorder %s247, %s263
      %p265 = scmp.eq.s32.totalorder %s123, 0
      %p266 = por %p264, %p265
      %s267 = ssub.s32 %s125, %s132
      %p268 = scmp.eq.s32.totalorder %s267, 0
      %s270 = sadd.s32 %s269, 1
      %s271 = scalar_select %p268, %s269, %s270
      %p274 = pneg %p268
      %p275 = scmp.eq.s32.totalorder %s117, 2
      %p276 = por %p274, %p275
      %p277 = scmp.ne.s32.totalorder %s269, %s272
      %p278 = scmp.eq.s32.totalorder %s117, 0
      %p279 = por %p277, %p278
      %p280 = scmp.ne.s32.totalorder %s269, %s272
      %p281 = scmp.eq.s32.totalorder %s122, 2
      %p282 = por %p280, %p281
      %p283 = scmp.ne.s32.totalorder %s272, %s273
      %p284 = scmp.eq.s32.totalorder %s122, 0
      %p285 = por %p283, %p284
      %p286 = scmp.ne.s32.totalorder %s272, %s273
      %p287 = scmp.eq.s32.totalorder %s123, 2
      %p288 = por %p286, %p287
      %p290 = scmp.ne.s32.totalorder %s273, %s289
      %p291 = scmp.eq.s32.totalorder %s123, 0
      %p292 = por %p290, %p291
      %s293 = ssub.s32 %s125, %s132
      %p294 = scmp.eq.s32.totalorder %s293, 0
      %s296 = sadd.s32 %s295, 1
      %s297 = scalar_select %p294, %s295, %s296
      %p300 = pneg %p294
      %p301 = scmp.eq.s32.totalorder %s117, 2
      %p302 = por %p300, %p301
      %p303 = scmp.ne.s32.totalorder %s295, %s298
      %p304 = scmp.eq.s32.totalorder %s117, 0
      %p305 = por %p303, %p304
      %p306 = scmp.ne.s32.totalorder %s295, %s298
      %p307 = scmp.eq.s32.totalorder %s122, 2
      %p308 = por %p306, %p307
      %p309 = scmp.ne.s32.totalorder %s298, %s299
      %p310 = scmp.eq.s32.totalorder %s122, 0
      %p311 = por %p309, %p310
      %p312 = scmp.ne.s32.totalorder %s298, %s299
      %p313 = scmp.eq.s32.totalorder %s123, 2
      %p314 = por %p312, %p313
      %p316 = scmp.ne.s32.totalorder %s299, %s315
      %p317 = scmp.eq.s32.totalorder %s123, 0
      %p318 = por %p316, %p317
      %s319 = ssub.s32 %s125, %s132
      %p320 = scmp.eq.s32.totalorder %s319, 0
      %s322 = sadd.s32 %s321, 1
      %s323 = scalar_select %p320, %s321, %s322
      %p326 = pneg %p320
      %p327 = scmp.eq.s32.totalorder %s117, 2
      %p328 = por %p326, %p327
      %p329 = scmp.ne.s32.totalorder %s321, %s324
      %p330 = scmp.eq.s32.totalorder %s117, 0
      %p331 = por %p329, %p330
      %p332 = scmp.ne.s32.totalorder %s321, %s324
      %p333 = scmp.eq.s32.totalorder %s122, 2
      %p334 = por %p332, %p333
      %p335 = scmp.ne.s32.totalorder %s324, %s325
      %p336 = scmp.eq.s32.totalorder %s122, 0
      %p337 = por %p335, %p336
      %p338 = scmp.ne.s32.totalorder %s324, %s325
      %p339 = scmp.eq.s32.totalorder %s123, 2
      %p340 = por %p338, %p339
      %p342 = scmp.ne.s32.totalorder %s325, %s341
      %p343 = scmp.eq.s32.totalorder %s123, 0
      %p344 = por %p342, %p343
      %s345 = ssub.s32 %s125, %s132
      %p346 = scmp.eq.s32.totalorder %s345, 0
      %s348 = sadd.s32 %s347, 1
      %s349 = scalar_select %p346, %s347, %s348
      %p352 = pneg %p346
      %p353 = scmp.eq.s32.totalorder %s117, 2
      %p354 = por %p352, %p353
      %p355 = scmp.ne.s32.totalorder %s347, %s350
      %p356 = scmp.eq.s32.totalorder %s117, 0
      %p357 = por %p355, %p356
      %p358 = scmp.ne.s32.totalorder %s347, %s350
      %p359 = scmp.eq.s32.totalorder %s122, 2
      %p360 = por %p358, %p359
      %p361 = scmp.ne.s32.totalorder %s350, %s351
      %p362 = scmp.eq.s32.totalorder %s122, 0
      %p363 = por %p361, %p362
      %p364 = scmp.ne.s32.totalorder %s350, %s351
      %p365 = scmp.eq.s32.totalorder %s123, 2
      %p366 = por %p364, %p365
      %p368 = scmp.ne.s32.totalorder %s351, %s367
      %p369 = scmp.eq.s32.totalorder %s123, 0
      %p370 = por %p368, %p369
      %s371 = ssub.s32 %s125, %s132
      %p372 = scmp.eq.s32.totalorder %s371, 0
      %s374 = sadd.s32 %s373, 1
      %s375 = scalar_select %p372, %s373, %s374
      %p378 = pneg %p372
      %p379 = scmp.eq.s32.totalorder %s117, 2
      %p380 = por %p378, %p379
      %p381 = scmp.ne.s32.totalorder %s373, %s376
      %p382 = scmp.eq.s32.totalorder %s117, 0
      %p383 = por %p381, %p382
      %p384 = scmp.ne.s32.totalorder %s373, %s376
      %p385 = scmp.eq.s32.totalorder %s122, 2
      %p386 = por %p384, %p385
      %p387 = scmp.ne.s32.totalorder %s376, %s377
      %p388 = scmp.eq.s32.totalorder %s122, 0
      %p389 = por %p387, %p388
      %p390 = scmp.ne.s32.totalorder %s376, %s377
      %p391 = scmp.eq.s32.totalorder %s123, 2
      %p392 = por %p390, %p391
      %p394 = scmp.ne.s32.totalorder %s377, %s393
      %p395 = scmp.eq.s32.totalorder %s123, 0
      %p396 = por %p394, %p395
      %s397 = ssub.s32 %s125, %s132
      %p398 = scmp.eq.s32.totalorder %s397, 0
      %s400 = sadd.s32 %s399, 1
      %s401 = scalar_select %p398, %s399, %s400
      %p404 = pneg %p398
      %p405 = scmp.eq.s32.totalorder %s117, 2
      %p406 = por %p404, %p405
      %p407 = scmp.ne.s32.totalorder %s399, %s402
      %p408 = scmp.eq.s32.totalorder %s117, 0
      %p409 = por %p407, %p408
      %p410 = scmp.ne.s32.totalorder %s399, %s402
      %p411 = scmp.eq.s32.totalorder %s122, 2
      %p412 = por %p410, %p411
      %p413 = scmp.ne.s32.totalorder %s402, %s403
      %p414 = scmp.eq.s32.totalorder %s122, 0
      %p415 = por %p413, %p414
      %p416 = scmp.ne.s32.totalorder %s402, %s403
      %p417 = scmp.eq.s32.totalorder %s123, 2
      %p418 = por %p416, %p417
      %p420 = scmp.ne.s32.totalorder %s403, %s419
      %p421 = scmp.eq.s32.totalorder %s123, 0
      %p422 = por %p420, %p421
      %s423 = ssub.s32 %s125, %s132
      %p424 = scmp.eq.s32.totalorder %s423, 0
      %s426 = sadd.s32 %s425, 1
      %s427 = scalar_select %p424, %s425, %s426
      %p430 = pneg %p424
      %p431 = scmp.eq.s32.totalorder %s117, 2
      %p432 = por %p430, %p431
      %p433 = scmp.ne.s32.totalorder %s425, %s428
      %p434 = scmp.eq.s32.totalorder %s117, 0
      %p435 = por %p433, %p434
      %p436 = scmp.ne.s32.totalorder %s425, %s428
      %p437 = scmp.eq.s32.totalorder %s122, 2
      %p438 = por %p436, %p437
      %p439 = scmp.ne.s32.totalorder %s428, %s429
      %p440 = scmp.eq.s32.totalorder %s122, 0
      %p441 = por %p439, %p440
      %p442 = scmp.ne.s32.totalorder %s428, %s429
      %p443 = scmp.eq.s32.totalorder %s123, 2
      %p444 = por %p442, %p443
      %p446 = scmp.ne.s32.totalorder %s429, %s445
      %p447 = scmp.eq.s32.totalorder %s123, 0
      %p448 = por %p446, %p447
      %s449 = ssub.s32 %s125, %s132
      %p450 = scmp.eq.s32.totalorder %s449, 0
      %s452 = sadd.s32 %s451, 1
      %s453 = scalar_select %p450, %s451, %s452
      %p456 = pneg %p450
      %p457 = scmp.eq.s32.totalorder %s117, 2
      %p458 = por %p456, %p457
      %p459 = scmp.ne.s32.totalorder %s451, %s454
      %p460 = scmp.eq.s32.totalorder %s117, 0
      %p461 = por %p459, %p460
      %p462 = scmp.ne.s32.totalorder %s451, %s454
      %p463 = scmp.eq.s32.totalorder %s122, 2
      %p464 = por %p462, %p463
      %p465 = scmp.ne.s32.totalorder %s454, %s455
      %p466 = scmp.eq.s32.totalorder %s122, 0
      %p467 = por %p465, %p466
      %p468 = scmp.ne.s32.totalorder %s454, %s455
      %p469 = scmp.eq.s32.totalorder %s123, 2
      %p470 = por %p468, %p469
      %p472 = scmp.ne.s32.totalorder %s455, %s471
      %p473 = scmp.eq.s32.totalorder %s123, 0
      %p474 = por %p472, %p473
      %s475 = ssub.s32 %s125, %s132
      %p476 = scmp.eq.s32.totalorder %s475, 0
      %s478 = sadd.s32 %s477, 1
      %s479 = scalar_select %p476, %s477, %s478
      %p482 = pneg %p476
      %p483 = scmp.eq.s32.totalorder %s117, 2
      %p484 = por %p482, %p483
      %p485 = scmp.ne.s32.totalorder %s477, %s480
      %p486 = scmp.eq.s32.totalorder %s117, 0
      %p487 = por %p485, %p486
      %p488 = scmp.ne.s32.totalorder %s477, %s480
      %p489 = scmp.eq.s32.totalorder %s122, 2
      %p490 = por %p488, %p489
      %p491 = scmp.ne.s32.totalorder %s480, %s481
      %p492 = scmp.eq.s32.totalorder %s122, 0
      %p493 = por %p491, %p492
      %p494 = scmp.ne.s32.totalorder %s480, %s481
      %p495 = scmp.eq.s32.totalorder %s123, 2
      %p496 = por %p494, %p495
      %p498 = scmp.ne.s32.totalorder %s481, %s497
      %p499 = scmp.eq.s32.totalorder %s123, 0
      %p500 = por %p498, %p499
      %s501 = ssub.s32 %s125, %s132
      %p502 = scmp.eq.s32.totalorder %s501, 0
      %s504 = sadd.s32 %s503, 1
      %s505 = scalar_select %p502, %s503, %s504
      %p508 = pneg %p502
      %p509 = scmp.eq.s32.totalorder %s117, 2
      %p510 = por %p508, %p509
      %p511 = scmp.ne.s32.totalorder %s503, %s506
      %p512 = scmp.eq.s32.totalorder %s117, 0
      %p513 = por %p511, %p512
      %p514 = scmp.ne.s32.totalorder %s503, %s506
      %p515 = scmp.eq.s32.totalorder %s122, 2
      %p516 = por %p514, %p515
      %p517 = scmp.ne.s32.totalorder %s506, %s507
      %p518 = scmp.eq.s32.totalorder %s122, 0
      %p519 = por %p517, %p518
      %p520 = scmp.ne.s32.totalorder %s506, %s507
      %p521 = scmp.eq.s32.totalorder %s123, 2
      %p522 = por %p520, %p521
      %p524 = scmp.ne.s32.totalorder %s507, %s523
      %p525 = scmp.eq.s32.totalorder %s123, 0
      %p526 = por %p524, %p525
      %s527 = ssub.s32 %s125, %s132
      %p528 = scmp.eq.s32.totalorder %s527, 0
      %s530 = sadd.s32 %s529, 1
      %s531 = scalar_select %p528, %s529, %s530
      %p534 = pneg %p528
      %p535 = scmp.eq.s32.totalorder %s117, 2
      %p536 = por %p534, %p535
      %p537 = scmp.ne.s32.totalorder %s529, %s532
      %p538 = scmp.eq.s32.totalorder %s117, 0
      %p539 = por %p537, %p538
      %p540 = scmp.ne.s32.totalorder %s529, %s532
      %p541 = scmp.eq.s32.totalorder %s122, 2
      %p542 = por %p540, %p541
      %p543 = scmp.ne.s32.totalorder %s532, %s533
      %p544 = scmp.eq.s32.totalorder %s122, 0
      %p545 = por %p543, %p544
      %p546 = scmp.ne.s32.totalorder %s532, %s533
      %p547 = scmp.eq.s32.totalorder %s123, 2
      %p548 = por %p546, %p547
      %p550 = scmp.ne.s32.totalorder %s533, %s549
      %p551 = scmp.eq.s32.totalorder %s123, 0
      %p552 = por %p550, %p551
      %s553 = ssub.s32 %s125, %s132
      %p554 = scmp.eq.s32.totalorder %s553, 0
      %s556 = sadd.s32 %s555, 1
      %s557 = scalar_select %p554, %s555, %s556
      %p560 = pneg %p554
      %p561 = scmp.eq.s32.totalorder %s117, 2
      %p562 = por %p560, %p561
      %p563 = scmp.ne.s32.totalorder %s555, %s558
      %p564 = scmp.eq.s32.totalorder %s117, 0
      %p565 = por %p563, %p564
      %p566 = scmp.ne.s32.totalorder %s555, %s558
      %p567 = scmp.eq.s32.totalorder %s122, 2
      %p568 = por %p566, %p567
      %p569 = scmp.ne.s32.totalorder %s558, %s559
      %p570 = scmp.eq.s32.totalorder %s122, 0
      %p571 = por %p569, %p570
      %p572 = scmp.ne.s32.totalorder %s558, %s559
      %p573 = scmp.eq.s32.totalorder %s123, 2
      %p574 = por %p572, %p573
      %p576 = scmp.ne.s32.totalorder %s559, %s575
      %p577 = scmp.eq.s32.totalorder %s123, 0
      %p578 = por %p576, %p577
      %s579 = ssub.s32 %s125, %s132
      %p580 = scmp.eq.s32.totalorder %s579, 0
      %s582 = sadd.s32 %s581, 1
      %s583 = scalar_select %p580, %s581, %s582
      %p586 = pneg %p580
      %p587 = scmp.eq.s32.totalorder %s117, 2
      %p588 = por %p586, %p587
      %p589 = scmp.ne.s32.totalorder %s581, %s584
      %p590 = scmp.eq.s32.totalorder %s117, 0
      %p591 = por %p589, %p590
      %p592 = scmp.ne.s32.totalorder %s581, %s584
      %p593 = scmp.eq.s32.totalorder %s122, 2
      %p594 = por %p592, %p593
      %p595 = scmp.ne.s32.totalorder %s584, %s585
      %p596 = scmp.eq.s32.totalorder %s122, 0
      %p597 = por %p595, %p596
      %p598 = scmp.ne.s32.totalorder %s584, %s585
      %p599 = scmp.eq.s32.totalorder %s123, 2
      %p600 = por %p598, %p599
      %p602 = scmp.ne.s32.totalorder %s585, %s601
      %p603 = scmp.eq.s32.totalorder %s123, 0
      %p604 = por %p602, %p603
      %s605 = ssub.s32 %s125, %s132
      %p606 = scmp.eq.s32.totalorder %s605, 0
      %s608 = sadd.s32 %s607, 1
      %s609 = scalar_select %p606, %s607, %s608
      %p612 = pneg %p606
      %p613 = scmp.eq.s32.totalorder %s117, 2
      %p614 = por %p612, %p613
      %p615 = scmp.ne.s32.totalorder %s607, %s610
      %p616 = scmp.eq.s32.totalorder %s117, 0
      %p617 = por %p615, %p616
      %p618 = scmp.ne.s32.totalorder %s607, %s610
      %p619 = scmp.eq.s32.totalorder %s122, 2
      %p620 = por %p618, %p619
      %p621 = scmp.ne.s32.totalorder %s610, %s611
      %p622 = scmp.eq.s32.totalorder %s122, 0
      %p623 = por %p621, %p622
      %p624 = scmp.ne.s32.totalorder %s610, %s611
      %p625 = scmp.eq.s32.totalorder %s123, 2
      %p626 = por %p624, %p625
      %p628 = scmp.ne.s32.totalorder %s611, %s627
      %p629 = scmp.eq.s32.totalorder %s123, 0
      %p630 = por %p628, %p629
      %s631 = ssub.s32 %s125, %s132
      %p632 = scmp.eq.s32.totalorder %s631, 0
      %s634 = sadd.s32 %s633, 1
      %s635 = scalar_select %p632, %s633, %s634
      %p638 = pneg %p632
      %p639 = scmp.eq.s32.totalorder %s117, 2
      %p640 = por %p638, %p639
      %p641 = scmp.ne.s32.totalorder %s633, %s636
      %p642 = scmp.eq.s32.totalorder %s117, 0
      %p643 = por %p641, %p642
      %p644 = scmp.ne.s32.totalorder %s633, %s636
      %p645 = scmp.eq.s32.totalorder %s122, 2
      %p646 = por %p644, %p645
      %p647 = scmp.ne.s32.totalorder %s636, %s637
      %p648 = scmp.eq.s32.totalorder %s122, 0
      %p649 = por %p647, %p648
      %p650 = scmp.ne.s32.totalorder %s636, %s637
      %p651 = scmp.eq.s32.totalorder %s123, 2
      %p652 = por %p650, %p651
      %p654 = scmp.ne.s32.totalorder %s637, %s653
      %p655 = scmp.eq.s32.totalorder %s123, 0
      %p656 = por %p654, %p655
      %s657 = ssub.s32 %s125, %s132
      %p658 = scmp.eq.s32.totalorder %s657, 0
      %s660 = sadd.s32 %s659, 1
      %s661 = scalar_select %p658, %s659, %s660
      %p664 = pneg %p658
      %p665 = scmp.eq.s32.totalorder %s117, 2
      %p666 = por %p664, %p665
      %p667 = scmp.ne.s32.totalorder %s659, %s662
      %p668 = scmp.eq.s32.totalorder %s117, 0
      %p669 = por %p667, %p668
      %p670 = scmp.ne.s32.totalorder %s659, %s662
      %p671 = scmp.eq.s32.totalorder %s122, 2
      %p672 = por %p670, %p671
      %p673 = scmp.ne.s32.totalorder %s662, %s663
      %p674 = scmp.eq.s32.totalorder %s122, 0
      %p675 = por %p673, %p674
      %p676 = scmp.ne.s32.totalorder %s662, %s663
      %p677 = scmp.eq.s32.totalorder %s123, 2
      %p678 = por %p676, %p677
      %p680 = scmp.ne.s32.totalorder %s663, %s679
      %p681 = scmp.eq.s32.totalorder %s123, 0
      %p682 = por %p680, %p681
      %s683 = ssub.s32 %s125, %s132
      %p684 = scmp.eq.s32.totalorder %s683, 0
      %s686 = sadd.s32 %s685, 1
      %s687 = scalar_select %p684, %s685, %s686
      %p690 = pneg %p684
      %p691 = scmp.eq.s32.totalorder %s117, 2
      %p692 = por %p690, %p691
      %p693 = scmp.ne.s32.totalorder %s685, %s688
      %p694 = scmp.eq.s32.totalorder %s117, 0
      %p695 = por %p693, %p694
      %p696 = scmp.ne.s32.totalorder %s685, %s688
      %p697 = scmp.eq.s32.totalorder %s122, 2
      %p698 = por %p696, %p697
      %p699 = scmp.ne.s32.totalorder %s688, %s689
      %p700 = scmp.eq.s32.totalorder %s122, 0
      %p701 = por %p699, %p700
      %p702 = scmp.ne.s32.totalorder %s688, %s689
      %p703 = scmp.eq.s32.totalorder %s123, 2
      %p704 = por %p702, %p703
      %p706 = scmp.ne.s32.totalorder %s689, %s705
      %p707 = scmp.eq.s32.totalorder %s123, 0
      %p708 = por %p706, %p707
      %s709 = ssub.s32 %s125, %s132
      %p710 = scmp.eq.s32.totalorder %s709, 0
      %s712 = sadd.s32 %s711, 1
      %s713 = scalar_select %p710, %s711, %s712
      %p716 = pneg %p710
      %p717 = scmp.eq.s32.totalorder %s117, 2
      %p718 = por %p716, %p717
      %p719 = scmp.ne.s32.totalorder %s711, %s714
      %p720 = scmp.eq.s32.totalorder %s117, 0
      %p721 = por %p719, %p720
      %p722 = scmp.ne.s32.totalorder %s711, %s714
      %p723 = scmp.eq.s32.totalorder %s122, 2
      %p724 = por %p722, %p723
      %p725 = scmp.ne.s32.totalorder %s714, %s715
      %p726 = scmp.eq.s32.totalorder %s122, 0
      %p727 = por %p725, %p726
      %p728 = scmp.ne.s32.totalorder %s714, %s715
      %p729 = scmp.eq.s32.totalorder %s123, 2
      %p730 = por %p728, %p729
      %p732 = scmp.ne.s32.totalorder %s715, %s731
      %p733 = scmp.eq.s32.totalorder %s123, 0
      %p734 = por %p732, %p733
      %s735 = ssub.s32 %s125, %s132
      %p736 = scmp.eq.s32.totalorder %s735, 0
      %s738 = sadd.s32 %s737, 1
      %s739 = scalar_select %p736, %s737, %s738
      %p742 = pneg %p736
      %p743 = scmp.eq.s32.totalorder %s117, 2
      %p744 = por %p742, %p743
      %p745 = scmp.ne.s32.totalorder %s737, %s740
      %p746 = scmp.eq.s32.totalorder %s117, 0
      %p747 = por %p745, %p746
      %p748 = scmp.ne.s32.totalorder %s737, %s740
      %p749 = scmp.eq.s32.totalorder %s122, 2
      %p750 = por %p748, %p749
      %p751 = scmp.ne.s32.totalorder %s740, %s741
      %p752 = scmp.eq.s32.totalorder %s122, 0
      %p753 = por %p751, %p752
      %p754 = scmp.ne.s32.totalorder %s740, %s741
      %p755 = scmp.eq.s32.totalorder %s123, 2
      %p756 = por %p754, %p755
      %p758 = scmp.ne.s32.totalorder %s741, %s757
      %p759 = scmp.eq.s32.totalorder %s123, 0
      %p760 = por %p758, %p759
      %s761 = ssub.s32 %s125, %s132
      %p762 = scmp.eq.s32.totalorder %s761, 0
      %s764 = sadd.s32 %s763, 1
      %s765 = scalar_select %p762, %s763, %s764
      %p768 = pneg %p762
      %p769 = scmp.eq.s32.totalorder %s117, 2
      %p770 = por %p768, %p769
      %p771 = scmp.ne.s32.totalorder %s763, %s766
      %p772 = scmp.eq.s32.totalorder %s117, 0
      %p773 = por %p771, %p772
      %p774 = scmp.ne.s32.totalorder %s763, %s766
      %p775 = scmp.eq.s32.totalorder %s122, 2
      %p776 = por %p774, %p775
      %p777 = scmp.ne.s32.totalorder %s766, %s767
      %p778 = scmp.eq.s32.totalorder %s122, 0
      %p779 = por %p777, %p778
      %p780 = scmp.ne.s32.totalorder %s766, %s767
      %p781 = scmp.eq.s32.totalorder %s123, 2
      %p782 = por %p780, %p781
      %p784 = scmp.ne.s32.totalorder %s767, %s783
      %p785 = scmp.eq.s32.totalorder %s123, 0
      %p786 = por %p784, %p785
      %s787 = ssub.s32 %s125, %s132
      %p788 = scmp.eq.s32.totalorder %s787, 0
      %s790 = sadd.s32 %s789, 1
      %s791 = scalar_select %p788, %s789, %s790
      %p794 = pneg %p788
      %p795 = scmp.eq.s32.totalorder %s117, 2
      %p796 = por %p794, %p795
      %p797 = scmp.ne.s32.totalorder %s789, %s792
      %p798 = scmp.eq.s32.totalorder %s117, 0
      %p799 = por %p797, %p798
      %p800 = scmp.ne.s32.totalorder %s789, %s792
      %p801 = scmp.eq.s32.totalorder %s122, 2
      %p802 = por %p800, %p801
      %p803 = scmp.ne.s32.totalorder %s792, %s793
      %p804 = scmp.eq.s32.totalorder %s122, 0
      %p805 = por %p803, %p804
      %p806 = scmp.ne.s32.totalorder %s792, %s793
      %p807 = scmp.eq.s32.totalorder %s123, 2
      %p808 = por %p806, %p807
      %p810 = scmp.ne.s32.totalorder %s793, %s809
      %p811 = scmp.eq.s32.totalorder %s123, 0
      %p812 = por %p810, %p811
      %s813 = ssub.s32 %s125, %s132
      %p814 = scmp.eq.s32.totalorder %s813, 0
      %s816 = sadd.s32 %s815, 1
      %s817 = scalar_select %p814, %s815, %s816
      %p820 = pneg %p814
      %p821 = scmp.eq.s32.totalorder %s117, 2
      %p822 = por %p820, %p821
      %p823 = scmp.ne.s32.totalorder %s815, %s818
      %p824 = scmp.eq.s32.totalorder %s117, 0
      %p825 = por %p823, %p824
      %p826 = scmp.ne.s32.totalorder %s815, %s818
      %p827 = scmp.eq.s32.totalorder %s122, 2
      %p828 = por %p826, %p827
      %p829 = scmp.ne.s32.totalorder %s818, %s819
      %p830 = scmp.eq.s32.totalorder %s122, 0
      %p831 = por %p829, %p830
      %p832 = scmp.ne.s32.totalorder %s818, %s819
      %p833 = scmp.eq.s32.totalorder %s123, 2
      %p834 = por %p832, %p833
      %p836 = scmp.ne.s32.totalorder %s819, %s835
      %p837 = scmp.eq.s32.totalorder %s123, 0
      %p838 = por %p836, %p837
      %s839 = ssub.s32 %s125, %s132
      %p840 = scmp.eq.s32.totalorder %s839, 0
      %s842 = sadd.s32 %s841, 1
      %s843 = scalar_select %p840, %s841, %s842
      %p846 = pneg %p840
      %p847 = scmp.eq.s32.totalorder %s117, 2
      %p848 = por %p846, %p847
      %p849 = scmp.ne.s32.totalorder %s841, %s844
      %p850 = scmp.eq.s32.totalorder %s117, 0
      %p851 = por %p849, %p850
      %p852 = scmp.ne.s32.totalorder %s841, %s844
      %p853 = scmp.eq.s32.totalorder %s122, 2
      %p854 = por %p852, %p853
      %p855 = scmp.ne.s32.totalorder %s844, %s845
      %p856 = scmp.eq.s32.totalorder %s122, 0
      %p857 = por %p855, %p856
      %p858 = scmp.ne.s32.totalorder %s844, %s845
      %p859 = scmp.eq.s32.totalorder %s123, 2
      %p860 = por %p858, %p859
      %p862 = scmp.ne.s32.totalorder %s845, %s861
      %p863 = scmp.eq.s32.totalorder %s123, 0
      %p864 = por %p862, %p863
      %s865 = ssub.s32 %s125, %s132
      %p866 = scmp.eq.s32.totalorder %s865, 0
      %s868 = sadd.s32 %s867, 1
      %s869 = scalar_select %p866, %s867, %s868
      %p872 = pneg %p866
      %p873 = scmp.eq.s32.totalorder %s117, 2
      %p874 = por %p872, %p873
      %p875 = scmp.ne.s32.totalorder %s867, %s870
      %p876 = scmp.eq.s32.totalorder %s117, 0
      %p877 = por %p875, %p876
      %p878 = scmp.ne.s32.totalorder %s867, %s870
      %p879 = scmp.eq.s32.totalorder %s122, 2
      %p880 = por %p878, %p879
      %p881 = scmp.ne.s32.totalorder %s870, %s871
      %p882 = scmp.eq.s32.totalorder %s122, 0
      %p883 = por %p881, %p882
      %p884 = scmp.ne.s32.totalorder %s870, %s871
      %p885 = scmp.eq.s32.totalorder %s123, 2
      %p886 = por %p884, %p885
      %p888 = scmp.ne.s32.totalorder %s871, %s887
      %p889 = scmp.eq.s32.totalorder %s123, 0
      %p890 = por %p888, %p889
      %s891 = ssub.s32 %s125, %s132
      %p892 = scmp.eq.s32.totalorder %s891, 0
      %s894 = sadd.s32 %s893, 1
      %s895 = scalar_select %p892, %s893, %s894
      %p898 = pneg %p892
      %p899 = scmp.eq.s32.totalorder %s117, 2
      %p900 = por %p898, %p899
      %p901 = scmp.ne.s32.totalorder %s893, %s896
      %p902 = scmp.eq.s32.totalorder %s117, 0
      %p903 = por %p901, %p902
      %p904 = scmp.ne.s32.totalorder %s893, %s896
      %p905 = scmp.eq.s32.totalorder %s122, 2
      %p906 = por %p904, %p905
      %p907 = scmp.ne.s32.totalorder %s896, %s897
      %p908 = scmp.eq.s32.totalorder %s122, 0
      %p909 = por %p907, %p908
      %p910 = scmp.ne.s32.totalorder %s896, %s897
      %p911 = scmp.eq.s32.totalorder %s123, 2
      %p912 = por %p910, %p911
      %p914 = scmp.ne.s32.totalorder %s897, %s913
      %p915 = scmp.eq.s32.totalorder %s123, 0
      %p916 = por %p914, %p915
      %s917 = ssub.s32 %s125, %s132
      %p918 = scmp.eq.s32.totalorder %s917, 0
      %s920 = sadd.s32 %s919, 1
      %s921 = scalar_select %p918, %s919, %s920
      %p924 = pneg %p918
      %p925 = scmp.eq.s32.totalorder %s117, 2
      %p926 = por %p924, %p925
      %p927 = scmp.ne.s32.totalorder %s919, %s922
      %p928 = scmp.eq.s32.totalorder %s117, 0
      %p929 = por %p927, %p928
      %p930 = scmp.ne.s32.totalorder %s919, %s922
      %p931 = scmp.eq.s32.totalorder %s122, 2
      %p932 = por %p930, %p931
      %p933 = scmp.ne.s32.totalorder %s922, %s923
      %p934 = scmp.eq.s32.totalorder %s122, 0
      %p935 = por %p933, %p934
      %p936 = scmp.ne.s32.totalorder %s922, %s923
      %p937 = scmp.eq.s32.totalorder %s123, 2
      %p938 = por %p936, %p937
      %p940 = scmp.ne.s32.totalorder %s923, %s939
      %p941 = scmp.eq.s32.totalorder %s123, 0
      %p942 = por %p940, %p941
      %s943 = ssub.s32 %s125, %s132
      %p944 = scmp.eq.s32.totalorder %s943, 0
      %s946 = sadd.s32 %s945, 1
      %s947 = scalar_select %p944, %s945, %s946
      %p950 = pneg %p944
      %p951 = scmp.eq.s32.totalorder %s117, 2
      %p952 = por %p950, %p951
      %p953 = scmp.ne.s32.totalorder %s945, %s948
      %p954 = scmp.eq.s32.totalorder %s117, 0
      %p955 = por %p953, %p954
      %p956 = scmp.ne.s32.totalorder %s945, %s948
      %p957 = scmp.eq.s32.totalorder %s122, 2
      %p958 = por %p956, %p957
      %p959 = scmp.ne.s32.totalorder %s948, %s949
      %p960 = scmp.eq.s32.totalorder %s122, 0
      %p961 = por %p959, %p960
      %p962 = scmp.ne.s32.totalorder %s948, %s949
      %p963 = scmp.eq.s32.totalorder %s123, 2
      %p964 = por %p962, %p963
      %p966 = scmp.ne.s32.totalorder %s949, %s965
      %p967 = scmp.eq.s32.totalorder %s123, 0
      %p968 = por %p966, %p967
      %s969 = ssub.s32 %s125, %s132
      %p970 = scmp.eq.s32.totalorder %s969, 0
      %s972 = sadd.s32 %s971, 1
      %s973 = scalar_select %p970, %s971, %s972
      %p976 = pneg %p970
      %p977 = scmp.eq.s32.totalorder %s117, 2
      %p978 = por %p976, %p977
      %p979 = scmp.ne.s32.totalorder %s971, %s974
      %p980 = scmp.eq.s32.totalorder %s117, 0
      %p981 = por %p979, %p980
      %p982 = scmp.ne.s32.totalorder %s971, %s974
      %p983 = scmp.eq.s32.totalorder %s122, 2
      %p984 = por %p982, %p983
      %p985 = scmp.ne.s32.totalorder %s974, %s975
      %p986 = scmp.eq.s32.totalorder %s122, 0
      %p987 = por %p985, %p986
      %p988 = scmp.ne.s32.totalorder %s974, %s975
      %p989 = scmp.eq.s32.totalorder %s123, 2
      %p990 = por %p988, %p989
      %p992 = scmp.ne.s32.totalorder %s975, %s991
      %p993 = scmp.eq.s32.totalorder %s123, 0
      %p994 = por %p992, %p993
      %s995 = ssub.s32 %s125, %s132
      %p996 = scmp.eq.s32.totalorder %s995, 0
      %s998 = sadd.s32 %s997, 1
      %s999 = scalar_select %p996, %s997, %s998
      %p1002 = pneg %p996
      %p1003 = scmp.eq.s32.totalorder %s117, 2
      %p1004 = por %p1002, %p1003
      %p1005 = scmp.ne.s32.totalorder %s997, %s1000
      %p1006 = scmp.eq.s32.totalorder %s117, 0
      %p1007 = por %p1005, %p1006
      %p1008 = scmp.ne.s32.totalorder %s997, %s1000
      %p1009 = scmp.eq.s32.totalorder %s122, 2
      %p1010 = por %p1008, %p1009
      %p1011 = scmp.ne.s32.totalorder %s1000, %s1001
      %p1012 = scmp.eq.s32.totalorder %s122, 0
      %p1013 = por %p1011, %p1012
      %p1014 = scmp.ne.s32.totalorder %s1000, %s1001
      %p1015 = scmp.eq.s32.totalorder %s123, 2
      %p1016 = por %p1014, %p1015
      %p1018 = scmp.ne.s32.totalorder %s1001, %s1017
      %p1019 = scmp.eq.s32.totalorder %s123, 0
      %p1020 = por %p1018, %p1019
      %s1021 = ssub.s32 %s125, %s132
      %p1022 = scmp.eq.s32.totalorder %s1021, 0
      %s1024 = sadd.s32 %s1023, 1
      %s1025 = scalar_select %p1022, %s1023, %s1024
      %p1028 = pneg %p1022
      %p1029 = scmp.eq.s32.totalorder %s117, 2
      %p1030 = por %p1028, %p1029
      %p1031 = scmp.ne.s32.totalorder %s1023, %s1026
      %p1032 = scmp.eq.s32.totalorder %s117, 0
      %p1033 = por %p1031, %p1032
      %p1034 = scmp.ne.s32.totalorder %s1023, %s1026
      %p1035 = scmp.eq.s32.totalorder %s122, 2
      %p1036 = por %p1034, %p1035
      %p1037 = scmp.ne.s32.totalorder %s1026, %s1027
      %p1038 = scmp.eq.s32.totalorder %s122, 0
      %p1039 = por %p1037, %p1038
      %p1040 = scmp.ne.s32.totalorder %s1026, %s1027
      %p1041 = scmp.eq.s32.totalorder %s123, 2
      %p1042 = por %p1040, %p1041
      %p1044 = scmp.ne.s32.totalorder %s1027, %s1043
      %p1045 = scmp.eq.s32.totalorder %s123, 0
      %p1046 = por %p1044, %p1045
      %s1047 = ssub.s32 %s125, %s132
      %p1048 = scmp.eq.s32.totalorder %s1047, 0
      %s1050 = sadd.s32 %s1049, 1
      %s1051 = scalar_select %p1048, %s1049, %s1050
      %p1054 = pneg %p1048
      %p1055 = scmp.eq.s32.totalorder %s117, 2
      %p1056 = por %p1054, %p1055
      %p1057 = scmp.ne.s32.totalorder %s1049, %s1052
      %p1058 = scmp.eq.s32.totalorder %s117, 0
      %p1059 = por %p1057, %p1058
      %p1060 = scmp.ne.s32.totalorder %s1049, %s1052
      %p1061 = scmp.eq.s32.totalorder %s122, 2
      %p1062 = por %p1060, %p1061
      %p1063 = scmp.ne.s32.totalorder %s1052, %s1053
      %p1064 = scmp.eq.s32.totalorder %s122, 0
      %p1065 = por %p1063, %p1064
      %p1066 = scmp.ne.s32.totalorder %s1052, %s1053
      %p1067 = scmp.eq.s32.totalorder %s123, 2
      %p1068 = por %p1066, %p1067
      %p1070 = scmp.ne.s32.totalorder %s1053, %s1069
      %p1071 = scmp.eq.s32.totalorder %s123, 0
      %p1072 = por %p1070, %p1071
      %s1074 = sadd.s32 %s1073, 1
      %p1077 = scmp.eq.s32.totalorder %s117, 2
      %p1078 = scmp.ne.s32.totalorder %s1073, %s1075
      %p1079 = scmp.eq.s32.totalorder %s117, 0
      %p1080 = por %p1078, %p1079
      %p1081 = scmp.ne.s32.totalorder %s1073, %s1075
      %p1082 = scmp.eq.s32.totalorder %s122, 2
      %p1083 = por %p1081, %p1082
      %p1084 = scmp.ne.s32.totalorder %s1075, %s1076
      %p1085 = scmp.eq.s32.totalorder %s122, 0
      %p1086 = por %p1084, %p1085
      %p1087 = scmp.ne.s32.totalorder %s1075, %s1076
      %p1088 = scmp.eq.s32.totalorder %s123, 2
      %p1089 = por %p1087, %p1088
      %p1091 = scmp.ne.s32.totalorder %s1076, %s1090
      %p1092 = scmp.eq.s32.totalorder %s123, 0
      %p1093 = por %p1091, %p1092
      %s1095 = sadd.s32 %s1094, 1
      %p1098 = scmp.eq.s32.totalorder %s117, 2
      %p1099 = scmp.ne.s32.totalorder %s1094, %s1096
      %p1100 = scmp.eq.s32.totalorder %s117, 0
      %p1101 = por %p1099, %p1100
      %p1102 = scmp.ne.s32.totalorder %s1094, %s1096
      %p1103 = scmp.eq.s32.totalorder %s122, 2
      %p1104 = por %p1102, %p1103
      %p1105 = scmp.ne.s32.totalorder %s1096, %s1097
      %p1106 = scmp.eq.s32.totalorder %s122, 0
      %p1107 = por %p1105, %p1106
      %p1108 = scmp.ne.s32.totalorder %s1096, %s1097
      %p1109 = scmp.eq.s32.totalorder %s123, 2
      %p1110 = por %p1108, %p1109
      %p1112 = scmp.ne.s32.totalorder %s1097, %s1111
      %p1113 = scmp.eq.s32.totalorder %s123, 0
      %p1114 = por %p1112, %p1113
      %s1116 = sadd.s32 %s1115, 1
      %p1119 = scmp.eq.s32.totalorder %s117, 2
      %p1120 = scmp.ne.s32.totalorder %s1115, %s1117
      %p1121 = scmp.eq.s32.totalorder %s117, 0
      %p1122 = por %p1120, %p1121
      %p1123 = scmp.ne.s32.totalorder %s1115, %s1117
      %p1124 = scmp.eq.s32.totalorder %s122, 2
      %p1125 = por %p1123, %p1124
      %p1126 = scmp.ne.s32.totalorder %s1117, %s1118
      %p1127 = scmp.eq.s32.totalorder %s122, 0
      %p1128 = por %p1126, %p1127
      %p1129 = scmp.ne.s32.totalorder %s1117, %s1118
      %p1130 = scmp.eq.s32.totalorder %s123, 2
      %p1131 = por %p1129, %p1130
      %p1133 = scmp.ne.s32.totalorder %s1118, %s1132
      %p1134 = scmp.eq.s32.totalorder %s123, 0
      %p1135 = por %p1133, %p1134
      %s1137 = sadd.s32 %s1136, 1
      %p1140 = scmp.eq.s32.totalorder %s117, 2
      %p1141 = scmp.ne.s32.totalorder %s1136, %s1138
      %p1142 = scmp.eq.s32.totalorder %s117, 0
      %p1143 = por %p1141, %p1142
      %p1144 = scmp.ne.s32.totalorder %s1136, %s1138
      %p1145 = scmp.eq.s32.totalorder %s122, 2
      %p1146 = por %p1144, %p1145
      %p1147 = scmp.ne.s32.totalorder %s1138, %s1139
      %p1148 = scmp.eq.s32.totalorder %s122, 0
      %p1149 = por %p1147, %p1148
      %p1150 = scmp.ne.s32.totalorder %s1138, %s1139
      %p1151 = scmp.eq.s32.totalorder %s123, 2
      %p1152 = por %p1150, %p1151
      %p1154 = scmp.ne.s32.totalorder %s1139, %s1153
      %p1155 = scmp.eq.s32.totalorder %s123, 0
      %p1156 = por %p1154, %p1155
      %s1158 = sadd.s32 %s1157, 1
      %p1161 = scmp.eq.s32.totalorder %s117, 2
      %p1162 = scmp.ne.s32.totalorder %s1157, %s1159
      %p1163 = scmp.eq.s32.totalorder %s117, 0
      %p1164 = por %p1162, %p1163
      %p1165 = scmp.ne.s32.totalorder %s1157, %s1159
      %p1166 = scmp.eq.s32.totalorder %s122, 2
      %p1167 = por %p1165, %p1166
      %p1168 = scmp.ne.s32.totalorder %s1159, %s1160
      %p1169 = scmp.eq.s32.totalorder %s122, 0
      %p1170 = por %p1168, %p1169
      %p1171 = scmp.ne.s32.totalorder %s1159, %s1160
      %p1172 = scmp.eq.s32.totalorder %s123, 2
      %p1173 = por %p1171, %p1172
      %p1175 = scmp.ne.s32.totalorder %s1160, %s1174
      %p1176 = scmp.eq.s32.totalorder %s123, 0
      %p1177 = por %p1175, %p1176
      %s1179 = sadd.s32 %s1178, 1
      %p1182 = scmp.eq.s32.totalorder %s117, 2
      %p1183 = scmp.ne.s32.totalorder %s1178, %s1180
      %p1184 = scmp.eq.s32.totalorder %s117, 0
      %p1185 = por %p1183, %p1184
      %p1186 = scmp.ne.s32.totalorder %s1178, %s1180
      %p1187 = scmp.eq.s32.totalorder %s122, 2
      %p1188 = por %p1186, %p1187
      %p1189 = scmp.ne.s32.totalorder %s1180, %s1181
      %p1190 = scmp.eq.s32.totalorder %s122, 0
      %p1191 = por %p1189, %p1190
      %p1192 = scmp.ne.s32.totalorder %s1180, %s1181
      %p1193 = scmp.eq.s32.totalorder %s123, 2
      %p1194 = por %p1192, %p1193
      %p1196 = scmp.ne.s32.totalorder %s1181, %s1195
      %p1197 = scmp.eq.s32.totalorder %s123, 0
      %p1198 = por %p1196, %p1197
      %s1200 = sadd.s32 %s1199, 1
      %p1203 = scmp.eq.s32.totalorder %s117, 2
      %p1204 = scmp.ne.s32.totalorder %s1199, %s1201
      %p1205 = scmp.eq.s32.totalorder %s117, 0
      %p1206 = por %p1204, %p1205
      %p1207 = scmp.ne.s32.totalorder %s1199, %s1201
      %p1208 = scmp.eq.s32.totalorder %s122, 2
      %p1209 = por %p1207, %p1208
      %p1210 = scmp.ne.s32.totalorder %s1201, %s1202
      %p1211 = scmp.eq.s32.totalorder %s122, 0
      %p1212 = por %p1210, %p1211
      %p1213 = scmp.ne.s32.totalorder %s1201, %s1202
      %p1214 = scmp.eq.s32.totalorder %s123, 2
      %p1215 = por %p1213, %p1214
      %p1217 = scmp.ne.s32.totalorder %s1202, %s1216
      %p1218 = scmp.eq.s32.totalorder %s123, 0
      %p1219 = por %p1217, %p1218
      %s1221 = sadd.s32 %s1220, 1
      %p1224 = scmp.eq.s32.totalorder %s117, 2
      %p1225 = scmp.ne.s32.totalorder %s1220, %s1222
      %p1226 = scmp.eq.s32.totalorder %s117, 0
      %p1227 = por %p1225, %p1226
      %p1228 = scmp.ne.s32.totalorder %s1220, %s1222
      %p1229 = scmp.eq.s32.totalorder %s122, 2
      %p1230 = por %p1228, %p1229
      %p1231 = scmp.ne.s32.totalorder %s1222, %s1223
      %p1232 = scmp.eq.s32.totalorder %s122, 0
      %p1233 = por %p1231, %p1232
      %p1234 = scmp.ne.s32.totalorder %s1222, %s1223
      %p1235 = scmp.eq.s32.totalorder %s123, 2
      %p1236 = por %p1234, %p1235
      %p1238 = scmp.ne.s32.totalorder %s1223, %s1237
      %p1239 = scmp.eq.s32.totalorder %s123, 0
      %p1240 = por %p1238, %p1239
      %s1241 = ssub.s32 %s124, %s136
      %p1242 = scmp.eq.s32.totalorder %s1241, 0
      %s1244 = sadd.s32 %s1243, 1
      %s1245 = scalar_select %p1242, %s1243, %s1244
      %p1248 = pneg %p1242
      %p1249 = scmp.eq.s32.totalorder %s117, 2
      %p1250 = por %p1248, %p1249
      %p1251 = scmp.ne.s32.totalorder %s1243, %s1246
      %p1252 = scmp.eq.s32.totalorder %s117, 0
      %p1253 = por %p1251, %p1252
      %p1254 = scmp.ne.s32.totalorder %s1243, %s1246
      %p1255 = scmp.eq.s32.totalorder %s122, 2
      %p1256 = por %p1254, %p1255
      %p1257 = scmp.ne.s32.totalorder %s1246, %s1247
      %p1258 = scmp.eq.s32.totalorder %s122, 0
      %p1259 = por %p1257, %p1258
      %p1260 = scmp.ne.s32.totalorder %s1246, %s1247
      %p1261 = scmp.eq.s32.totalorder %s123, 2
      %p1262 = por %p1260, %p1261
      %p1264 = scmp.ne.s32.totalorder %s1247, %s1263
      %p1265 = scmp.eq.s32.totalorder %s123, 0
      %p1266 = por %p1264, %p1265
      %s1267 = ssub.s32 %s124, %s136
      %p1268 = scmp.eq.s32.totalorder %s1267, 0
      %s1270 = sadd.s32 %s1269, 1
      %s1271 = scalar_select %p1268, %s1269, %s1270
      %p1274 = pneg %p1268
      %p1275 = scmp.eq.s32.totalorder %s117, 2
      %p1276 = por %p1274, %p1275
      %p1277 = scmp.ne.s32.totalorder %s1269, %s1272
      %p1278 = scmp.eq.s32.totalorder %s117, 0
      %p1279 = por %p1277, %p1278
      %p1280 = scmp.ne.s32.totalorder %s1269, %s1272
      %p1281 = scmp.eq.s32.totalorder %s122, 2
      %p1282 = por %p1280, %p1281
      %p1283 = scmp.ne.s32.totalorder %s1272, %s1273
      %p1284 = scmp.eq.s32.totalorder %s122, 0
      %p1285 = por %p1283, %p1284
      %p1286 = scmp.ne.s32.totalorder %s1272, %s1273
      %p1287 = scmp.eq.s32.totalorder %s123, 2
      %p1288 = por %p1286, %p1287
      %p1290 = scmp.ne.s32.totalorder %s1273, %s1289
      %p1291 = scmp.eq.s32.totalorder %s123, 0
      %p1292 = por %p1290, %p1291
      %s1293 = ssub.s32 %s125, %s132
      %s1294 = ssub.s32 %s124, %s136
      %s1295 = sor.u32 %s1293, %s1294
      %p1296 = scmp.eq.s32.totalorder %s1295, 0
      %s1298 = sadd.s32 %s1297, 1
      %s1299 = scalar_select %p1296, %s1297, %s1298
      %p1302 = pneg %p1296
      %p1303 = scmp.eq.s32.totalorder %s117, 2
      %p1304 = por %p1302, %p1303
      %p1305 = scmp.ne.s32.totalorder %s1297, %s1300
      %p1306 = scmp.eq.s32.totalorder %s117, 0
      %p1307 = por %p1305, %p1306
      %p1308 = scmp.ne.s32.totalorder %s1297, %s1300
      %p1309 = scmp.eq.s32.totalorder %s122, 2
      %p1310 = por %p1308, %p1309
      %p1311 = scmp.ne.s32.totalorder %s1300, %s1301
      %p1312 = scmp.eq.s32.totalorder %s122, 0
      %p1313 = por %p1311, %p1312
      %p1314 = scmp.ne.s32.totalorder %s1300, %s1301
      %p1315 = scmp.eq.s32.totalorder %s123, 2
      %p1316 = por %p1314, %p1315
      %p1318 = scmp.ne.s32.totalorder %s1301, %s1317
      %p1319 = scmp.eq.s32.totalorder %s123, 0
      %p1320 = por %p1318, %p1319
      %s1321 = ssub.s32 %s125, %s132
      %s1322 = ssub.s32 %s124, %s136
      %s1323 = sor.u32 %s1321, %s1322
      %p1324 = scmp.eq.s32.totalorder %s1323, 0
      %s1326 = sadd.s32 %s1325, 1
      %s1327 = scalar_select %p1324, %s1325, %s1326
      %p1330 = pneg %p1324
      %p1331 = scmp.eq.s32.totalorder %s117, 2
      %p1332 = por %p1330, %p1331
      %p1333 = scmp.ne.s32.totalorder %s1325, %s1328
      %p1334 = scmp.eq.s32.totalorder %s117, 0
      %p1335 = por %p1333, %p1334
      %p1336 = scmp.ne.s32.totalorder %s1325, %s1328
      %p1337 = scmp.eq.s32.totalorder %s122, 2
      %p1338 = por %p1336, %p1337
      %p1339 = scmp.ne.s32.totalorder %s1328, %s1329
      %p1340 = scmp.eq.s32.totalorder %s122, 0
      %p1341 = por %p1339, %p1340
      %p1342 = scmp.ne.s32.totalorder %s1328, %s1329
      %p1343 = scmp.eq.s32.totalorder %s123, 2
      %p1344 = por %p1342, %p1343
      %p1346 = scmp.ne.s32.totalorder %s1329, %s1345
      %p1347 = scmp.eq.s32.totalorder %s123, 0
      %p1348 = por %p1346, %p1347
      %p1349 = scmp.le.s32.totalorder 1, %s117
      %p1350 = scmp.lt.s32.totalorder %s117, 4
      %p1351 = pnand %p1349, %p1350
      %p1352 = pneg %p1351
      // Predicated region
      $region9: #{tpu_custom_call.1} parent=5 // pred_check
        _
      $region10: #{tpu_custom_call.1} parent=5 // pred_check_branch
        %1354 = sbr.rel (%p1351) target = $region12
      $region11: #{tpu_custom_call.1} parent=5 // pred_region
        %s1355 = ssub.s32 %s117, 1
        // Predicated region
        $region13: #{tpu_custom_call.1} parent=11 // pred_check
          %p1356 = pneg %p155
        $region14: #{tpu_custom_call.1} parent=11 // pred_check_branch
          %1358 = sbr.rel (%p1356) target = $region16
        $region15: #{tpu_custom_call.1} parent=11 // pred_region
          %s1359 = smul.u32 2, %s126
          %s1361 = ssub.s32 512, 512
          %1362 = vsyncadd [#allocation8], %s1361
          %s1363 = smul.addr %s1359, 2
          %s1364 = smul.addr %s1363, 128
          %s1365 = scalar_lea.hbm %s5, %s1364
          %s1366 = sshll.u32 [#allocation7], 4
          %s1367 = int_to_ptr.vmem [resolvable:$true] %s1366
          %1372 = dma.hbm_to_vmem [thread:$0]  %s1365, 512, %s1367, [#allocation8], 128, 128, 8
        $region16: #{tpu_custom_call.1} parent=11 // pred_fallthru
          _
        // Predicated region
        $region17: #{tpu_custom_call.1} parent=11 // pred_check
          %p1373 = pneg %p181
        $region18: #{tpu_custom_call.1} parent=11 // pred_check_branch
          %1375 = sbr.rel (%p1373) target = $region20
        $region19: #{tpu_custom_call.1} parent=11 // pred_region
          %s1376 = smul.u32 2, %s126
          %s1378 = ssub.s32 32, 32
          %1379 = vsyncadd [#allocation11], %s1378
          %s1380 = smul.addr %s1376, 16
          %s1381 = scalar_lea.hbm %s7, %s1380
          %s1382 = sshll.u32 [#allocation10], 4
          %s1383 = int_to_ptr.vmem [resolvable:$true] %s1382
          %1388 = dma.hbm_to_vmem [thread:$0]  %s1381, 32, %s1383, [#allocation11], 16, 16, 1
        $region20: #{tpu_custom_call.1} parent=11 // pred_fallthru
          _
        // Predicated region
        $region21: #{tpu_custom_call.1} parent=11 // pred_check
          %p1389 = pneg %p1086
        $region22: #{tpu_custom_call.1} parent=11 // pred_check_branch
          %1391 = sbr.rel (%p1389) target = $region24
        $region23: #{tpu_custom_call.1} parent=11 // pred_region
          _
        $region24: #{tpu_custom_call.1} parent=11 // pred_fallthru
          _
        // Predicated region
        $region25: #{tpu_custom_call.1} parent=11 // pred_check
          %p1392 = pneg %p1107
        $region26: #{tpu_custom_call.1} parent=11 // pred_check_branch
          %1394 = sbr.rel (%p1392) target = $region28
        $region27: #{tpu_custom_call.1} parent=11 // pred_region
          _
        $region28: #{tpu_custom_call.1} parent=11 // pred_fallthru
          _
        // Predicated region
        $region29: #{tpu_custom_call.1} parent=11 // pred_check
          %p1395 = pneg %p1128
        $region30: #{tpu_custom_call.1} parent=11 // pred_check_branch
          %1397 = sbr.rel (%p1395) target = $region32
        $region31: #{tpu_custom_call.1} parent=11 // pred_region
          _
        $region32: #{tpu_custom_call.1} parent=11 // pred_fallthru
          _
        // Predicated region
        $region33: #{tpu_custom_call.1} parent=11 // pred_check
          %p1398 = pneg %p1149
        $region34: #{tpu_custom_call.1} parent=11 // pred_check_branch
          %1400 = sbr.rel (%p1398) target = $region36
        $region35: #{tpu_custom_call.1} parent=11 // pred_region
          _
        $region36: #{tpu_custom_call.1} parent=11 // pred_fallthru
          _
        // Predicated region
        $region37: #{tpu_custom_call.1} parent=11 // pred_check
          %p1401 = pneg %p1170
        $region38: #{tpu_custom_call.1} parent=11 // pred_check_branch
          %1403 = sbr.rel (%p1401) target = $region40
        $region39: #{tpu_custom_call.1} parent=11 // pred_region
          %s1405 = ssub.s32 1024, 1024
          %1406 = vsyncadd [#allocation11], %s1405
          %s1407 = sshll.u32 [#allocation43], 4
          %s1408 = int_to_ptr.vmem [resolvable:$true] %s1407
          %1413 = dma.hbm_to_vmem [thread:$0]  %s85, 1024, %s1408, [#allocation11], 64, 64, 4
        $region40: #{tpu_custom_call.1} parent=11 // pred_fallthru
          _
        // Predicated region
        $region41: #{tpu_custom_call.1} parent=11 // pred_check
          %p1414 = pneg %p1191
        $region42: #{tpu_custom_call.1} parent=11 // pred_check_branch
          %1416 = sbr.rel (%p1414) target = $region44
        $region43: #{tpu_custom_call.1} parent=11 // pred_region
          _
        $region44: #{tpu_custom_call.1} parent=11 // pred_fallthru
          _
        // Predicated region
        $region45: #{tpu_custom_call.1} parent=11 // pred_check
          %p1417 = pneg %p1212
        $region46: #{tpu_custom_call.1} parent=11 // pred_check_branch
          %1419 = sbr.rel (%p1417) target = $region48
        $region47: #{tpu_custom_call.1} parent=11 // pred_region
          %s1421 = ssub.s32 1024, 1024
          %1422 = vsyncadd [#allocation45], %s1421
          %s1423 = sshll.u32 [#allocation44], 4
          %s1424 = int_to_ptr.vmem [resolvable:$true] %s1423
          %1429 = dma.hbm_to_vmem [thread:$0]  %s89, 1024, %s1424, [#allocation45], 64, 64, 4
        $region48: #{tpu_custom_call.1} parent=11 // pred_fallthru
          _
        // Predicated region
        $region49: #{tpu_custom_call.1} parent=11 // pred_check
          %p1430 = pneg %p1233
        $region50: #{tpu_custom_call.1} parent=11 // pred_check_branch
          %1432 = sbr.rel (%p1430) target = $region52
        $region51: #{tpu_custom_call.1} parent=11 // pred_region
          _
        $region52: #{tpu_custom_call.1} parent=11 // pred_fallthru
          _
      $region12: #{tpu_custom_call.1} parent=5 // pred_fallthru
        _
      %p1433 = scmp.lt.s32.totalorder %s117, 3
      // Predicated region
      $region53: #{tpu_custom_call.1} parent=5 // pred_check
        %p1434 = pneg %p1433
      $region54: #{tpu_custom_call.1} parent=5 // pred_check_branch
        %1436 = sbr.rel (%p1434) target = $region56
      $region55: #{tpu_custom_call.1} parent=5 // pred_region
        // Predicated region
        $region57: #{tpu_custom_call.1} parent=55 // pred_check
          %p1437 = pneg %p201
        $region58: #{tpu_custom_call.1} parent=55 // pred_check_branch
          %1439 = sbr.rel (%p1437) target = $region60
        $region59: #{tpu_custom_call.1} parent=55 // pred_region
          %s1440 = sand.u32 %s117, 1
          %s1441 = scalar_lea.sflag [#allocation8], %s1440
          %s1442 = sand.u32 %s191, 1
          %s1443 = scalar_lea.vmem [#allocation12], %s1442
          %s1445 = ssub.s32 16, 16
          %1446 = vsyncadd %s1441, %s1445
          %s1447 = smul.addr %s125, 16
          %s1448 = scalar_lea.hbm %s9, %s1447
          %s1450 = sshll.u32 %s1443, 4
          %s1451 = int_to_ptr.vmem [resolvable:$true] %s1450
          %1453 = dma.hbm_to_vmem [thread:$0]  %s1448, 16, %s1451, %s1441
        $region60: #{tpu_custom_call.1} parent=55 // pred_fallthru
          _
        // Predicated region
        $region61: #{tpu_custom_call.1} parent=55 // pred_check
          %p1454 = pneg %p227
        $region62: #{tpu_custom_call.1} parent=55 // pred_check_branch
          %1456 = sbr.rel (%p1454) target = $region64
        $region63: #{tpu_custom_call.1} parent=55 // pred_region
          %s1457 = sand.u32 %s117, 1
          %s1458 = scalar_lea.sflag [#allocation8], %s1457
          %s1459 = sand.u32 %s217, 1
          %s1460 = scalar_lea.vmem [#allocation13], %s1459
          %s1462 = ssub.s32 16, 16
          %1463 = vsyncadd %s1458, %s1462
          %s1464 = smul.addr %s125, 16
          %s1465 = scalar_lea.hbm %s11, %s1464
          %s1467 = sshll.u32 %s1460, 4
          %s1468 = int_to_ptr.vmem [resolvable:$true] %s1467
          %1470 = dma.hbm_to_vmem [thread:$0]  %s1465, 16, %s1468, %s1458
        $region64: #{tpu_custom_call.1} parent=55 // pred_fallthru
          _
        // Predicated region
        $region65: #{tpu_custom_call.1} parent=55 // pred_check
          %p1471 = pneg %p253
        $region66: #{tpu_custom_call.1} parent=55 // pred_check_branch
          %1473 = sbr.rel (%p1471) target = $region68
        $region67: #{tpu_custom_call.1} parent=55 // pred_region
          %s1474 = sand.u32 %s117, 1
          %s1475 = scalar_lea.sflag [#allocation8], %s1474
          %s1476 = sand.u32 %s243, 1
          %s1477 = smul.addr %s1476, 256
          %s1478 = scalar_lea.vmem [#allocation14], %s1477
          %s1480 = ssub.s32 4096, 4096
          %1481 = vsyncadd %s1475, %s1480
          %s1482 = smul.addr %s125, 64
          %s1483 = smul.addr %s1482, 64
          %s1484 = scalar_lea.hbm %s13, %s1483
          %s1485 = sshll.u32 %s1478, 4
          %s1486 = int_to_ptr.vmem [resolvable:$true] %s1485
          %1491 = dma.hbm_to_vmem [thread:$0]  %s1484, 4096, %s1486, %s1475, 256, 256, 16
        $region68: #{tpu_custom_call.1} parent=55 // pred_fallthru
          _
        // Predicated region
        $region69: #{tpu_custom_call.1} parent=55 // pred_check
          %p1492 = pneg %p279
        $region70: #{tpu_custom_call.1} parent=55 // pred_check_branch
          %1494 = sbr.rel (%p1492) target = $region72
        $region71: #{tpu_custom_call.1} parent=55 // pred_region
          %s1495 = sand.u32 %s117, 1
          %s1496 = scalar_lea.sflag [#allocation8], %s1495
          %s1497 = sand.u32 %s269, 1
          %s1498 = smul.addr %s1497, 4
          %s1499 = scalar_lea.vmem [#allocation15], %s1498
          %s1501 = ssub.s32 64, 64
          %1502 = vsyncadd %s1496, %s1501
          %s1503 = smul.addr %s125, 4
          %s1504 = smul.addr %s1503, 16
          %s1505 = scalar_lea.hbm %s15, %s1504
          %s1507 = sshll.u32 %s1499, 4
          %s1508 = int_to_ptr.vmem [resolvable:$true] %s1507
          %1510 = dma.hbm_to_vmem [thread:$0]  %s1505, 64, %s1508, %s1496
        $region72: #{tpu_custom_call.1} parent=55 // pred_fallthru
          _
        // Predicated region
        $region73: #{tpu_custom_call.1} parent=55 // pred_check
          %p1511 = pneg %p305
        $region74: #{tpu_custom_call.1} parent=55 // pred_check_branch
          %1513 = sbr.rel (%p1511) target = $region76
        $region75: #{tpu_custom_call.1} parent=55 // pred_region
          %s1514 = sand.u32 %s117, 1
          %s1515 = scalar_lea.sflag [#allocation8], %s1514
          %s1516 = sand.u32 %s295, 1
          %s1517 = smul.addr %s1516, 256
          %s1518 = scalar_lea.vmem [#allocation16], %s1517
          %s1520 = ssub.s32 4096, 4096
          %1521 = vsyncadd %s1515, %s1520
          %s1522 = smul.addr %s125, 64
          %s1523 = smul.addr %s1522, 64
          %s1524 = scalar_lea.hbm %s17, %s1523
          %s1525 = sshll.u32 %s1518, 4
          %s1526 = int_to_ptr.vmem [resolvable:$true] %s1525
          %1531 = dma.hbm_to_vmem [thread:$0]  %s1524, 4096, %s1526, %s1515, 64, 64, 4
        $region76: #{tpu_custom_call.1} parent=55 // pred_fallthru
          _
        // Predicated region
        $region77: #{tpu_custom_call.1} parent=55 // pred_check
          %p1532 = pneg %p331
        $region78: #{tpu_custom_call.1} parent=55 // pred_check_branch
          %1534 = sbr.rel (%p1532) target = $region80
        $region79: #{tpu_custom_call.1} parent=55 // pred_region
          %s1535 = sand.u32 %s117, 1
          %s1536 = scalar_lea.sflag [#allocation8], %s1535
          %s1537 = sand.u32 %s321, 1
          %s1538 = scalar_lea.vmem [#allocation17], %s1537
          %s1540 = ssub.s32 16, 16
          %1541 = vsyncadd %s1536, %s1540
          %s1542 = smul.addr %s125, 16
          %s1543 = scalar_lea.hbm %s19, %s1542
          %s1545 = sshll.u32 %s1538, 4
          %s1546 = int_to_ptr.vmem [resolvable:$true] %s1545
          %1548 = dma.hbm_to_vmem [thread:$0]  %s1543, 16, %s1546, %s1536
        $region80: #{tpu_custom_call.1} parent=55 // pred_fallthru
          _
        // Predicated region
        $region81: #{tpu_custom_call.1} parent=55 // pred_check
          %p1549 = pneg %p357
        $region82: #{tpu_custom_call.1} parent=55 // pred_check_branch
          %1551 = sbr.rel (%p1549) target = $region84
        $region83: #{tpu_custom_call.1} parent=55 // pred_region
          %s1552 = sand.u32 %s117, 1
          %s1553 = scalar_lea.sflag [#allocation8], %s1552
          %s1554 = sand.u32 %s347, 1
          %s1555 = scalar_lea.vmem [#allocation18], %s1554
          %s1557 = ssub.s32 16, 16
          %1558 = vsyncadd %s1553, %s1557
          %s1559 = smul.addr %s125, 16
          %s1560 = scalar_lea.hbm %s21, %s1559
          %s1562 = sshll.u32 %s1555, 4
          %s1563 = int_to_ptr.vmem [resolvable:$true] %s1562
          %1565 = dma.hbm_to_vmem [thread:$0]  %s1560, 16, %s1563, %s1553
        $region84: #{tpu_custom_call.1} parent=55 // pred_fallthru
          _
        // Predicated region
        $region85: #{tpu_custom_call.1} parent=55 // pred_check
          %p1566 = pneg %p383
        $region86: #{tpu_custom_call.1} parent=55 // pred_check_branch
          %1568 = sbr.rel (%p1566) target = $region88
        $region87: #{tpu_custom_call.1} parent=55 // pred_region
          %s1569 = sand.u32 %s117, 1
          %s1570 = scalar_lea.sflag [#allocation8], %s1569
          %s1571 = sand.u32 %s373, 1
          %s1572 = scalar_lea.vmem [#allocation19], %s1571
          %s1574 = ssub.s32 16, 16
          %1575 = vsyncadd %s1570, %s1574
          %s1576 = smul.addr %s125, 16
          %s1577 = scalar_lea.hbm %s23, %s1576
          %s1579 = sshll.u32 %s1572, 4
          %s1580 = int_to_ptr.vmem [resolvable:$true] %s1579
          %1582 = dma.hbm_to_vmem [thread:$0]  %s1577, 16, %s1580, %s1570
        $region88: #{tpu_custom_call.1} parent=55 // pred_fallthru
          _
        // Predicated region
        $region89: #{tpu_custom_call.1} parent=55 // pred_check
          %p1583 = pneg %p409
        $region90: #{tpu_custom_call.1} parent=55 // pred_check_branch
          %1585 = sbr.rel (%p1583) target = $region92
        $region91: #{tpu_custom_call.1} parent=55 // pred_region
          %s1586 = sand.u32 %s117, 1
          %s1587 = scalar_lea.sflag [#allocation8], %s1586
          %s1588 = sand.u32 %s399, 1
          %s1589 = smul.addr %s1588, 64
          %s1590 = scalar_lea.vmem [#allocation20], %s1589
          %s1592 = ssub.s32 1024, 1024
          %1593 = vsyncadd %s1587, %s1592
          %s1594 = smul.addr %s125, 16
          %s1595 = smul.addr %s1594, 64
          %s1596 = scalar_lea.hbm %s25, %s1595
          %s1597 = sshll.u32 %s1590, 4
          %s1598 = int_to_ptr.vmem [resolvable:$true] %s1597
          %1603 = dma.hbm_to_vmem [thread:$0]  %s1596, 1024, %s1598, %s1587, 64, 64, 4
        $region92: #{tpu_custom_call.1} parent=55 // pred_fallthru
          _
        // Predicated region
        $region93: #{tpu_custom_call.1} parent=55 // pred_check
          %p1604 = pneg %p435
        $region94: #{tpu_custom_call.1} parent=55 // pred_check_branch
          %1606 = sbr.rel (%p1604) target = $region96
        $region95: #{tpu_custom_call.1} parent=55 // pred_region
          %s1607 = sand.u32 %s117, 1
          %s1608 = scalar_lea.sflag [#allocation8], %s1607
          %s1609 = sand.u32 %s425, 1
          %s1610 = scalar_lea.vmem [#allocation21], %s1609
          %s1612 = ssub.s32 16, 16
          %1613 = vsyncadd %s1608, %s1612
          %s1614 = smul.addr %s125, 16
          %s1615 = scalar_lea.hbm %s27, %s1614
          %s1617 = sshll.u32 %s1610, 4
          %s1618 = int_to_ptr.vmem [resolvable:$true] %s1617
          %1620 = dma.hbm_to_vmem [thread:$0]  %s1615, 16, %s1618, %s1608
        $region96: #{tpu_custom_call.1} parent=55 // pred_fallthru
          _
        // Predicated region
        $region97: #{tpu_custom_call.1} parent=55 // pred_check
          %p1621 = pneg %p461
        $region98: #{tpu_custom_call.1} parent=55 // pred_check_branch
          %1623 = sbr.rel (%p1621) target = $region100
        $region99: #{tpu_custom_call.1} parent=55 // pred_region
          %s1624 = sand.u32 %s117, 1
          %s1625 = scalar_lea.sflag [#allocation8], %s1624
          %s1626 = sand.u32 %s451, 1
          %s1627 = smul.addr %s1626, 64
          %s1628 = scalar_lea.vmem [#allocation22], %s1627
          %s1630 = ssub.s32 1024, 1024
          %1631 = vsyncadd %s1625, %s1630
          %s1632 = smul.addr %s125, 16
          %s1633 = smul.addr %s1632, 64
          %s1634 = scalar_lea.hbm %s29, %s1633
          %s1635 = sshll.u32 %s1628, 4
          %s1636 = int_to_ptr.vmem [resolvable:$true] %s1635
          %1641 = dma.hbm_to_vmem [thread:$0]  %s1634, 1024, %s1636, %s1625, 64, 64, 4
        $region100: #{tpu_custom_call.1} parent=55 // pred_fallthru
          _
        // Predicated region
        $region101: #{tpu_custom_call.1} parent=55 // pred_check
          %p1642 = pneg %p487
        $region102: #{tpu_custom_call.1} parent=55 // pred_check_branch
          %1644 = sbr.rel (%p1642) target = $region104
        $region103: #{tpu_custom_call.1} parent=55 // pred_region
          %s1645 = sand.u32 %s117, 1
          %s1646 = scalar_lea.sflag [#allocation8], %s1645
          %s1647 = sand.u32 %s477, 1
          %s1648 = scalar_lea.vmem [#allocation23], %s1647
          %s1650 = ssub.s32 16, 16
          %1651 = vsyncadd %s1646, %s1650
          %s1652 = smul.addr %s125, 16
          %s1653 = scalar_lea.hbm %s31, %s1652
          %s1655 = sshll.u32 %s1648, 4
          %s1656 = int_to_ptr.vmem [resolvable:$true] %s1655
          %1658 = dma.hbm_to_vmem [thread:$0]  %s1653, 16, %s1656, %s1646
        $region104: #{tpu_custom_call.1} parent=55 // pred_fallthru
          _
        // Predicated region
        $region105: #{tpu_custom_call.1} parent=55 // pred_check
          %p1659 = pneg %p513
        $region106: #{tpu_custom_call.1} parent=55 // pred_check_branch
          %1661 = sbr.rel (%p1659) target = $region108
        $region107: #{tpu_custom_call.1} parent=55 // pred_region
          %s1662 = sand.u32 %s117, 1
          %s1663 = scalar_lea.sflag [#allocation8], %s1662
          %s1664 = sand.u32 %s503, 1
          %s1665 = smul.addr %s1664, 64
          %s1666 = scalar_lea.vmem [#allocation24], %s1665
          %s1668 = ssub.s32 1024, 1024
          %1669 = vsyncadd %s1663, %s1668
          %s1670 = smul.addr %s125, 16
          %s1671 = smul.addr %s1670, 64
          %s1672 = scalar_lea.hbm %s33, %s1671
          %s1673 = sshll.u32 %s1666, 4
          %s1674 = int_to_ptr.vmem [resolvable:$true] %s1673
          %1679 = dma.hbm_to_vmem [thread:$0]  %s1672, 1024, %s1674, %s1663, 64, 64, 4
        $region108: #{tpu_custom_call.1} parent=55 // pred_fallthru
          _
        // Predicated region
        $region109: #{tpu_custom_call.1} parent=55 // pred_check
          %p1680 = pneg %p539
        $region110: #{tpu_custom_call.1} parent=55 // pred_check_branch
          %1682 = sbr.rel (%p1680) target = $region112
        $region111: #{tpu_custom_call.1} parent=55 // pred_region
          %s1683 = sand.u32 %s117, 1
          %s1684 = scalar_lea.sflag [#allocation8], %s1683
          %s1685 = sand.u32 %s529, 1
          %s1686 = scalar_lea.vmem [#allocation25], %s1685
          %s1688 = ssub.s32 16, 16
          %1689 = vsyncadd %s1684, %s1688
          %s1690 = smul.addr %s125, 16
          %s1691 = scalar_lea.hbm %s35, %s1690
          %s1693 = sshll.u32 %s1686, 4
          %s1694 = int_to_ptr.vmem [resolvable:$true] %s1693
          %1696 = dma.hbm_to_vmem [thread:$0]  %s1691, 16, %s1694, %s1684
        $region112: #{tpu_custom_call.1} parent=55 // pred_fallthru
          _
        // Predicated region
        $region113: #{tpu_custom_call.1} parent=55 // pred_check
          %p1697 = pneg %p565
        $region114: #{tpu_custom_call.1} parent=55 // pred_check_branch
          %1699 = sbr.rel (%p1697) target = $region116
        $region115: #{tpu_custom_call.1} parent=55 // pred_region
          %s1700 = sand.u32 %s117, 1
          %s1701 = scalar_lea.sflag [#allocation8], %s1700
          %s1702 = sand.u32 %s555, 1
          %s1703 = smul.addr %s1702, 64
          %s1704 = scalar_lea.vmem [#allocation26], %s1703
          %s1706 = ssub.s32 1024, 1024
          %1707 = vsyncadd %s1701, %s1706
          %s1708 = smul.addr %s125, 16
          %s1709 = smul.addr %s1708, 64
          %s1710 = scalar_lea.hbm %s37, %s1709
          %s1711 = sshll.u32 %s1704, 4
          %s1712 = int_to_ptr.vmem [resolvable:$true] %s1711
          %1717 = dma.hbm_to_vmem [thread:$0]  %s1710, 1024, %s1712, %s1701, 64, 64, 4
        $region116: #{tpu_custom_call.1} parent=55 // pred_fallthru
          _
        // Predicated region
        $region117: #{tpu_custom_call.1} parent=55 // pred_check
          %p1718 = pneg %p591
        $region118: #{tpu_custom_call.1} parent=55 // pred_check_branch
          %1720 = sbr.rel (%p1718) target = $region120
        $region119: #{tpu_custom_call.1} parent=55 // pred_region
          %s1721 = sand.u32 %s117, 1
          %s1722 = scalar_lea.sflag [#allocation8], %s1721
          %s1723 = sand.u32 %s581, 1
          %s1724 = scalar_lea.vmem [#allocation27], %s1723
          %s1726 = ssub.s32 16, 16
          %1727 = vsyncadd %s1722, %s1726
          %s1728 = smul.addr %s125, 16
          %s1729 = scalar_lea.hbm %s39, %s1728
          %s1731 = sshll.u32 %s1724, 4
          %s1732 = int_to_ptr.vmem [resolvable:$true] %s1731
          %1734 = dma.hbm_to_vmem [thread:$0]  %s1729, 16, %s1732, %s1722
        $region120: #{tpu_custom_call.1} parent=55 // pred_fallthru
          _
        // Predicated region
        $region121: #{tpu_custom_call.1} parent=55 // pred_check
          %p1735 = pneg %p617
        $region122: #{tpu_custom_call.1} parent=55 // pred_check_branch
          %1737 = sbr.rel (%p1735) target = $region124
        $region123: #{tpu_custom_call.1} parent=55 // pred_region
          %s1738 = sand.u32 %s117, 1
          %s1739 = scalar_lea.sflag [#allocation8], %s1738
          %s1740 = sand.u32 %s607, 1
          %s1741 = scalar_lea.vmem [#allocation28], %s1740
          %s1743 = ssub.s32 16, 16
          %1744 = vsyncadd %s1739, %s1743
          %s1745 = smul.addr %s125, 16
          %s1746 = scalar_lea.hbm %s41, %s1745
          %s1748 = sshll.u32 %s1741, 4
          %s1749 = int_to_ptr.vmem [resolvable:$true] %s1748
          %1751 = dma.hbm_to_vmem [thread:$0]  %s1746, 16, %s1749, %s1739
        $region124: #{tpu_custom_call.1} parent=55 // pred_fallthru
          _
        // Predicated region
        $region125: #{tpu_custom_call.1} parent=55 // pred_check
          %p1752 = pneg %p643
        $region126: #{tpu_custom_call.1} parent=55 // pred_check_branch
          %1754 = sbr.rel (%p1752) target = $region128
        $region127: #{tpu_custom_call.1} parent=55 // pred_region
          %s1755 = sand.u32 %s117, 1
          %s1756 = scalar_lea.sflag [#allocation8], %s1755
          %s1757 = sand.u32 %s633, 1
          %s1758 = scalar_lea.vmem [#allocation29], %s1757
          %s1760 = ssub.s32 16, 16
          %1761 = vsyncadd %s1756, %s1760
          %s1762 = smul.addr %s125, 16
          %s1763 = scalar_lea.hbm %s43, %s1762
          %s1765 = sshll.u32 %s1758, 4
          %s1766 = int_to_ptr.vmem [resolvable:$true] %s1765
          %1768 = dma.hbm_to_vmem [thread:$0]  %s1763, 16, %s1766, %s1756
        $region128: #{tpu_custom_call.1} parent=55 // pred_fallthru
          _
        // Predicated region
        $region129: #{tpu_custom_call.1} parent=55 // pred_check
          %p1769 = pneg %p669
        $region130: #{tpu_custom_call.1} parent=55 // pred_check_branch
          %1771 = sbr.rel (%p1769) target = $region132
        $region131: #{tpu_custom_call.1} parent=55 // pred_region
          %s1772 = sand.u32 %s117, 1
          %s1773 = scalar_lea.sflag [#allocation8], %s1772
          %s1774 = sand.u32 %s659, 1
          %s1775 = smul.addr %s1774, 128
          %s1776 = scalar_lea.vmem [#allocation30], %s1775
          %s1778 = ssub.s32 2048, 2048
          %1779 = vsyncadd %s1773, %s1778
          %s1780 = smul.addr %s125, 32
          %s1781 = smul.addr %s1780, 64
          %s1782 = scalar_lea.hbm %s45, %s1781
          %s1783 = sshll.u32 %s1776, 4
          %s1784 = int_to_ptr.vmem [resolvable:$true] %s1783
          %1789 = dma.hbm_to_vmem [thread:$0]  %s1782, 2048, %s1784, %s1773, 128, 128, 8
        $region132: #{tpu_custom_call.1} parent=55 // pred_fallthru
          _
        // Predicated region
        $region133: #{tpu_custom_call.1} parent=55 // pred_check
          %p1790 = pneg %p695
        $region134: #{tpu_custom_call.1} parent=55 // pred_check_branch
          %1792 = sbr.rel (%p1790) target = $region136
        $region135: #{tpu_custom_call.1} parent=55 // pred_region
          %s1793 = sand.u32 %s117, 1
          %s1794 = scalar_lea.sflag [#allocation8], %s1793
          %s1795 = sand.u32 %s685, 1
          %s1796 = smul.addr %s1795, 2
          %s1797 = scalar_lea.vmem [#allocation31], %s1796
          %s1799 = ssub.s32 32, 32
          %1800 = vsyncadd %s1794, %s1799
          %s1801 = smul.addr %s125, 2
          %s1802 = smul.addr %s1801, 16
          %s1803 = scalar_lea.hbm %s47, %s1802
          %s1805 = sshll.u32 %s1797, 4
          %s1806 = int_to_ptr.vmem [resolvable:$true] %s1805
          %1808 = dma.hbm_to_vmem [thread:$0]  %s1803, 32, %s1806, %s1794
        $region136: #{tpu_custom_call.1} parent=55 // pred_fallthru
          _
        // Predicated region
        $region137: #{tpu_custom_call.1} parent=55 // pred_check
          %p1809 = pneg %p721
        $region138: #{tpu_custom_call.1} parent=55 // pred_check_branch
          %1811 = sbr.rel (%p1809) target = $region140
        $region139: #{tpu_custom_call.1} parent=55 // pred_region
          %s1812 = sand.u32 %s117, 1
          %s1813 = scalar_lea.sflag [#allocation8], %s1812
          %s1814 = sand.u32 %s711, 1
          %s1815 = smul.addr %s1814, 8
          %s1816 = scalar_lea.vmem [#allocation32], %s1815
          %s1818 = ssub.s32 128, 128
          %1819 = vsyncadd %s1813, %s1818
          %s1820 = smul.addr %s125, 128
          %s1821 = scalar_lea.hbm %s49, %s1820
          %s1823 = sshll.u32 %s1816, 4
          %s1824 = int_to_ptr.vmem [resolvable:$true] %s1823
          %1826 = dma.hbm_to_vmem [thread:$0]  %s1821, 128, %s1824, %s1813
        $region140: #{tpu_custom_call.1} parent=55 // pred_fallthru
          _
        // Predicated region
        $region141: #{tpu_custom_call.1} parent=55 // pred_check
          %p1827 = pneg %p747
        $region142: #{tpu_custom_call.1} parent=55 // pred_check_branch
          %1829 = sbr.rel (%p1827) target = $region144
        $region143: #{tpu_custom_call.1} parent=55 // pred_region
          %s1830 = sand.u32 %s117, 1
          %s1831 = scalar_lea.sflag [#allocation8], %s1830
          %s1832 = sand.u32 %s737, 1
          %s1833 = scalar_lea.vmem [#allocation33], %s1832
          %s1835 = ssub.s32 16, 16
          %1836 = vsyncadd %s1831, %s1835
          %s1837 = smul.addr %s125, 16
          %s1838 = scalar_lea.hbm %s51, %s1837
          %s1840 = sshll.u32 %s1833, 4
          %s1841 = int_to_ptr.vmem [resolvable:$true] %s1840
          %1843 = dma.hbm_to_vmem [thread:$0]  %s1838, 16, %s1841, %s1831
        $region144: #{tpu_custom_call.1} parent=55 // pred_fallthru
          _
        // Predicated region
        $region145: #{tpu_custom_call.1} parent=55 // pred_check
          %p1844 = pneg %p773
        $region146: #{tpu_custom_call.1} parent=55 // pred_check_branch
          %1846 = sbr.rel (%p1844) target = $region148
        $region147: #{tpu_custom_call.1} parent=55 // pred_region
          %s1847 = sand.u32 %s117, 1
          %s1848 = scalar_lea.sflag [#allocation8], %s1847
          %s1849 = sand.u32 %s763, 1
          %s1850 = scalar_lea.vmem [#allocation34], %s1849
          %s1852 = ssub.s32 16, 16
          %1853 = vsyncadd %s1848, %s1852
          %s1854 = smul.addr %s125, 16
          %s1855 = scalar_lea.hbm %s53, %s1854
          %s1857 = sshll.u32 %s1850, 4
          %s1858 = int_to_ptr.vmem [resolvable:$true] %s1857
          %1860 = dma.hbm_to_vmem [thread:$0]  %s1855, 16, %s1858, %s1848
        $region148: #{tpu_custom_call.1} parent=55 // pred_fallthru
          _
        // Predicated region
        $region149: #{tpu_custom_call.1} parent=55 // pred_check
          %p1861 = pneg %p799
        $region150: #{tpu_custom_call.1} parent=55 // pred_check_branch
          %1863 = sbr.rel (%p1861) target = $region152
        $region151: #{tpu_custom_call.1} parent=55 // pred_region
          %s1864 = sand.u32 %s117, 1
          %s1865 = scalar_lea.sflag [#allocation8], %s1864
          %s1866 = sand.u32 %s789, 1
          %s1867 = scalar_lea.vmem [#allocation35], %s1866
          %s1869 = ssub.s32 16, 16
          %1870 = vsyncadd %s1865, %s1869
          %s1871 = smul.addr %s125, 16
          %s1872 = scalar_lea.hbm %s55, %s1871
          %s1874 = sshll.u32 %s1867, 4
          %s1875 = int_to_ptr.vmem [resolvable:$true] %s1874
          %1877 = dma.hbm_to_vmem [thread:$0]  %s1872, 16, %s1875, %s1865
        $region152: #{tpu_custom_call.1} parent=55 // pred_fallthru
          _
        // Predicated region
        $region153: #{tpu_custom_call.1} parent=55 // pred_check
          %p1878 = pneg %p825
        $region154: #{tpu_custom_call.1} parent=55 // pred_check_branch
          %1880 = sbr.rel (%p1878) target = $region156
        $region155: #{tpu_custom_call.1} parent=55 // pred_region
          %s1881 = sand.u32 %s117, 1
          %s1882 = scalar_lea.sflag [#allocation8], %s1881
          %s1883 = sand.u32 %s815, 1
          %s1884 = smul.addr %s1883, 64
          %s1885 = scalar_lea.vmem [#allocation36], %s1884
          %s1887 = ssub.s32 1024, 1024
          %1888 = vsyncadd %s1882, %s1887
          %s1889 = smul.addr %s125, 16
          %s1890 = smul.addr %s1889, 64
          %s1891 = scalar_lea.hbm %s57, %s1890
          %s1892 = sshll.u32 %s1885, 4
          %s1893 = int_to_ptr.vmem [resolvable:$true] %s1892
          %1898 = dma.hbm_to_vmem [thread:$0]  %s1891, 1024, %s1893, %s1882, 64, 64, 4
        $region156: #{tpu_custom_call.1} parent=55 // pred_fallthru
          _
        // Predicated region
        $region157: #{tpu_custom_call.1} parent=55 // pred_check
          %p1899 = pneg %p851
        $region158: #{tpu_custom_call.1} parent=55 // pred_check_branch
          %1901 = sbr.rel (%p1899) target = $region160
        $region159: #{tpu_custom_call.1} parent=55 // pred_region
          %s1902 = sand.u32 %s117, 1
          %s1903 = scalar_lea.sflag [#allocation8], %s1902
          %s1904 = sand.u32 %s841, 1
          %s1905 = scalar_lea.vmem [#allocation37], %s1904
          %s1907 = ssub.s32 16, 16
          %1908 = vsyncadd %s1903, %s1907
          %s1909 = smul.addr %s125, 16
          %s1910 = scalar_lea.hbm %s59, %s1909
          %s1912 = sshll.u32 %s1905, 4
          %s1913 = int_to_ptr.vmem [resolvable:$true] %s1912
          %1915 = dma.hbm_to_vmem [thread:$0]  %s1910, 16, %s1913, %s1903
        $region160: #{tpu_custom_call.1} parent=55 // pred_fallthru
          _
        // Predicated region
        $region161: #{tpu_custom_call.1} parent=55 // pred_check
          %p1916 = pneg %p877
        $region162: #{tpu_custom_call.1} parent=55 // pred_check_branch
          %1918 = sbr.rel (%p1916) target = $region164
        $region163: #{tpu_custom_call.1} parent=55 // pred_region
          %s1919 = sand.u32 %s117, 1
          %s1920 = scalar_lea.sflag [#allocation8], %s1919
          %s1921 = sand.u32 %s867, 1
          %s1922 = scalar_lea.vmem [#allocation38], %s1921
          %s1924 = ssub.s32 16, 16
          %1925 = vsyncadd %s1920, %s1924
          %s1926 = smul.addr %s125, 16
          %s1927 = scalar_lea.hbm %s61, %s1926
          %s1929 = sshll.u32 %s1922, 4
          %s1930 = int_to_ptr.vmem [resolvable:$true] %s1929
          %1932 = dma.hbm_to_vmem [thread:$0]  %s1927, 16, %s1930, %s1920
        $region164: #{tpu_custom_call.1} parent=55 // pred_fallthru
          _
        // Predicated region
        $region165: #{tpu_custom_call.1} parent=55 // pred_check
          %p1933 = pneg %p903
        $region166: #{tpu_custom_call.1} parent=55 // pred_check_branch
          %1935 = sbr.rel (%p1933) target = $region168
        $region167: #{tpu_custom_call.1} parent=55 // pred_region
          %s1936 = sand.u32 %s117, 1
          %s1937 = scalar_lea.sflag [#allocation8], %s1936
          %s1938 = sand.u32 %s893, 1
          %s1939 = scalar_lea.vmem [#allocation39], %s1938
          %s1941 = ssub.s32 16, 16
          %1942 = vsyncadd %s1937, %s1941
          %s1943 = smul.addr %s125, 16
          %s1944 = scalar_lea.hbm %s63, %s1943
          %s1946 = sshll.u32 %s1939, 4
          %s1947 = int_to_ptr.vmem [resolvable:$true] %s1946
          %1949 = dma.hbm_to_vmem [thread:$0]  %s1944, 16, %s1947, %s1937
        $region168: #{tpu_custom_call.1} parent=55 // pred_fallthru
          _
        // Predicated region
        $region169: #{tpu_custom_call.1} parent=55 // pred_check
          %p1950 = pneg %p929
        $region170: #{tpu_custom_call.1} parent=55 // pred_check_branch
          %1952 = sbr.rel (%p1950) target = $region172
        $region171: #{tpu_custom_call.1} parent=55 // pred_region
          %s1953 = sand.u32 %s117, 1
          %s1954 = scalar_lea.sflag [#allocation8], %s1953
          %s1955 = sand.u32 %s919, 1
          %s1956 = smul.addr %s1955, 256
          %s1957 = scalar_lea.vmem [#allocation40], %s1956
          %s1959 = ssub.s32 4096, 4096
          %1960 = vsyncadd %s1954, %s1959
          %s1961 = smul.addr %s125, 64
          %s1962 = smul.addr %s1961, 64
          %s1963 = scalar_lea.hbm %s65, %s1962
          %s1964 = sshll.u32 %s1957, 4
          %s1965 = int_to_ptr.vmem [resolvable:$true] %s1964
          %1970 = dma.hbm_to_vmem [thread:$0]  %s1963, 4096, %s1965, %s1954, 256, 256, 16
        $region172: #{tpu_custom_call.1} parent=55 // pred_fallthru
          _
        // Predicated region
        $region173: #{tpu_custom_call.1} parent=55 // pred_check
          %p1971 = pneg %p955
        $region174: #{tpu_custom_call.1} parent=55 // pred_check_branch
          %1973 = sbr.rel (%p1971) target = $region176
        $region175: #{tpu_custom_call.1} parent=55 // pred_region
          %s1974 = sand.u32 %s117, 1
          %s1975 = scalar_lea.sflag [#allocation8], %s1974
          %s1976 = sand.u32 %s945, 1
          %s1977 = smul.addr %s1976, 4
          %s1978 = scalar_lea.vmem [#allocation41], %s1977
          %s1980 = ssub.s32 64, 64
          %1981 = vsyncadd %s1975, %s1980
          %s1982 = smul.addr %s125, 4
          %s1983 = smul.addr %s1982, 16
          %s1984 = scalar_lea.hbm %s67, %s1983
          %s1986 = sshll.u32 %s1978, 4
          %s1987 = int_to_ptr.vmem [resolvable:$true] %s1986
          %1989 = dma.hbm_to_vmem [thread:$0]  %s1984, 64, %s1987, %s1975
        $region176: #{tpu_custom_call.1} parent=55 // pred_fallthru
          _
        // Predicated region
        $region177: #{tpu_custom_call.1} parent=55 // pred_check
          %p1990 = pneg %p981
        $region178: #{tpu_custom_call.1} parent=55 // pred_check_branch
          %1992 = sbr.rel (%p1990) target = $region180
        $region179: #{tpu_custom_call.1} parent=55 // pred_region
          %s1993 = sand.u32 %s117, 1
          %s1994 = scalar_lea.sflag [#allocation8], %s1993
          %s1995 = sand.u32 %s971, 1
          %s1996 = smul.addr %s1995, 256
          %s1997 = scalar_lea.vmem [#allocation42], %s1996
          %s1999 = ssub.s32 4096, 4096
          %2000 = vsyncadd %s1994, %s1999
          %s2001 = smul.addr %s125, 64
          %s2002 = smul.addr %s2001, 64
          %s2003 = scalar_lea.hbm %s69, %s2002
          %s2004 = sshll.u32 %s1997, 4
          %s2005 = int_to_ptr.vmem [resolvable:$true] %s2004
          %2010 = dma.hbm_to_vmem [thread:$0]  %s2003, 4096, %s2005, %s1994, 64, 64, 4
        $region180: #{tpu_custom_call.1} parent=55 // pred_fallthru
          _
        // Predicated region
        $region181: #{tpu_custom_call.1} parent=55 // pred_check
          %p2011 = pneg %p1007
        $region182: #{tpu_custom_call.1} parent=55 // pred_check_branch
          %2013 = sbr.rel (%p2011) target = $region184
        $region183: #{tpu_custom_call.1} parent=55 // pred_region
          %p2014 = scmp.lt.s32.totalorder %s125, 2
          %s2015 = scalar_select %p2014, %s125, 2
          %s2016 = scalar_lea.vmem %s71, %s2015
        $region184: #{tpu_custom_call.1} parent=55 // pred_fallthru
          _
        // Predicated region
        $region185: #{tpu_custom_call.1} parent=55 // pred_check
          %p2017 = pneg %p1033
        $region186: #{tpu_custom_call.1} parent=55 // pred_check_branch
          %2019 = sbr.rel (%p2017) target = $region188
        $region187: #{tpu_custom_call.1} parent=55 // pred_region
          %p2020 = scmp.lt.s32.totalorder %s125, 2
          %s2021 = scalar_select %p2020, %s125, 2
          %s2022 = scalar_lea.vmem %s73, %s2021
        $region188: #{tpu_custom_call.1} parent=55 // pred_fallthru
          _
        // Predicated region
        $region189: #{tpu_custom_call.1} parent=55 // pred_check
          %p2023 = pneg %p1059
        $region190: #{tpu_custom_call.1} parent=55 // pred_check_branch
          %2025 = sbr.rel (%p2023) target = $region192
        $region191: #{tpu_custom_call.1} parent=55 // pred_region
          %p2026 = scmp.lt.s32.totalorder %s125, 2
          %s2027 = scalar_select %p2026, %s125, 2
          %s2028 = scalar_lea.vmem %s75, %s2027
        $region192: #{tpu_custom_call.1} parent=55 // pred_fallthru
          _
      $region56: #{tpu_custom_call.1} parent=5 // pred_fallthru
        _
      %p2029 = scmp.le.s32.totalorder 1, %s117
      %p2030 = scmp.lt.s32.totalorder %s117, 4
      %p2031 = pnand %p2029, %p2030
      %p2032 = pneg %p2031
      // Predicated region
      $region193: #{tpu_custom_call.1} parent=5 // pred_check
        _
      $region194: #{tpu_custom_call.1} parent=5 // pred_check_branch
        %2034 = sbr.rel (%p2031) target = $region196
      $region195: #{tpu_custom_call.1} parent=5 // pred_region
        %s2035 = ssub.s32 %s117, 1
        // Predicated region
        $region197: #{tpu_custom_call.1} parent=195 // pred_check
          %p2036 = pneg %p155
        $region198: #{tpu_custom_call.1} parent=195 // pred_check_branch
          %2038 = sbr.rel (%p2036) target = $region200
        $region199: #{tpu_custom_call.1} parent=195 // pred_region
          %2039 = dma.done [#allocation8], 512
        $region200: #{tpu_custom_call.1} parent=195 // pred_fallthru
          _
        // Predicated region
        $region201: #{tpu_custom_call.1} parent=195 // pred_check
          %p2040 = pneg %p181
        $region202: #{tpu_custom_call.1} parent=195 // pred_check_branch
          %2042 = sbr.rel (%p2040) target = $region204
        $region203: #{tpu_custom_call.1} parent=195 // pred_region
          %2043 = dma.done [#allocation11], 32
        $region204: #{tpu_custom_call.1} parent=195 // pred_fallthru
          _
        %s2044 = sand.u32 %s122, 1
        %s2045 = scalar_lea.sflag [#allocation8], %s2044
        %s2046 = sand.u32 %s194, 1
        %s2047 = scalar_lea.vmem [#allocation12], %s2046
        // Predicated region
        $region205: #{tpu_custom_call.1} parent=195 // pred_check
          %p2048 = pneg %p207
        $region206: #{tpu_custom_call.1} parent=195 // pred_check_branch
          %2050 = sbr.rel (%p2048) target = $region208
        $region207: #{tpu_custom_call.1} parent=195 // pred_region
          %2051 = dma.done %s2045, 16
        $region208: #{tpu_custom_call.1} parent=195 // pred_fallthru
          _
        %s2052 = sand.u32 %s122, 1
        %s2053 = scalar_lea.sflag [#allocation8], %s2052
        %s2054 = sand.u32 %s220, 1
        %s2055 = scalar_lea.vmem [#allocation13], %s2054
        // Predicated region
        $region209: #{tpu_custom_call.1} parent=195 // pred_check
          %p2056 = pneg %p233
        $region210: #{tpu_custom_call.1} parent=195 // pred_check_branch
          %2058 = sbr.rel (%p2056) target = $region212
        $region211: #{tpu_custom_call.1} parent=195 // pred_region
          %2059 = dma.done %s2053, 16
        $region212: #{tpu_custom_call.1} parent=195 // pred_fallthru
          _
        %s2060 = sand.u32 %s122, 1
        %s2061 = scalar_lea.sflag [#allocation8], %s2060
        %s2062 = sand.u32 %s246, 1
        %s2063 = smul.addr %s2062, 256
        %s2064 = scalar_lea.vmem [#allocation14], %s2063
        // Predicated region
        $region213: #{tpu_custom_call.1} parent=195 // pred_check
          %p2065 = pneg %p259
        $region214: #{tpu_custom_call.1} parent=195 // pred_check_branch
          %2067 = sbr.rel (%p2065) target = $region216
        $region215: #{tpu_custom_call.1} parent=195 // pred_region
          %2068 = dma.done %s2061, 4096
        $region216: #{tpu_custom_call.1} parent=195 // pred_fallthru
          _
        %s2069 = sand.u32 %s122, 1
        %s2070 = scalar_lea.sflag [#allocation8], %s2069
        %s2071 = sand.u32 %s272, 1
        %s2072 = smul.addr %s2071, 4
        %s2073 = scalar_lea.vmem [#allocation15], %s2072
        // Predicated region
        $region217: #{tpu_custom_call.1} parent=195 // pred_check
          %p2074 = pneg %p285
        $region218: #{tpu_custom_call.1} parent=195 // pred_check_branch
          %2076 = sbr.rel (%p2074) target = $region220
        $region219: #{tpu_custom_call.1} parent=195 // pred_region
          %2077 = dma.done %s2070, 64
        $region220: #{tpu_custom_call.1} parent=195 // pred_fallthru
          _
        %s2078 = sand.u32 %s122, 1
        %s2079 = scalar_lea.sflag [#allocation8], %s2078
        %s2080 = sand.u32 %s298, 1
        %s2081 = smul.addr %s2080, 256
        %s2082 = scalar_lea.vmem [#allocation16], %s2081
        // Predicated region
        $region221: #{tpu_custom_call.1} parent=195 // pred_check
          %p2083 = pneg %p311
        $region222: #{tpu_custom_call.1} parent=195 // pred_check_branch
          %2085 = sbr.rel (%p2083) target = $region224
        $region223: #{tpu_custom_call.1} parent=195 // pred_region
          %2086 = dma.done %s2079, 4096
        $region224: #{tpu_custom_call.1} parent=195 // pred_fallthru
          _
        %s2087 = sand.u32 %s122, 1
        %s2088 = scalar_lea.sflag [#allocation8], %s2087
        %s2089 = sand.u32 %s324, 1
        %s2090 = scalar_lea.vmem [#allocation17], %s2089
        // Predicated region
        $region225: #{tpu_custom_call.1} parent=195 // pred_check
          %p2091 = pneg %p337
        $region226: #{tpu_custom_call.1} parent=195 // pred_check_branch
          %2093 = sbr.rel (%p2091) target = $region228
        $region227: #{tpu_custom_call.1} parent=195 // pred_region
          %2094 = dma.done %s2088, 16
        $region228: #{tpu_custom_call.1} parent=195 // pred_fallthru
          _
        %s2095 = sand.u32 %s122, 1
        %s2096 = scalar_lea.sflag [#allocation8], %s2095
        %s2097 = sand.u32 %s350, 1
        %s2098 = scalar_lea.vmem [#allocation18], %s2097
        // Predicated region
        $region229: #{tpu_custom_call.1} parent=195 // pred_check
          %p2099 = pneg %p363
        $region230: #{tpu_custom_call.1} parent=195 // pred_check_branch
          %2101 = sbr.rel (%p2099) target = $region232
        $region231: #{tpu_custom_call.1} parent=195 // pred_region
          %2102 = dma.done %s2096, 16
        $region232: #{tpu_custom_call.1} parent=195 // pred_fallthru
          _
        %s2103 = sand.u32 %s122, 1
        %s2104 = scalar_lea.sflag [#allocation8], %s2103
        %s2105 = sand.u32 %s376, 1
        %s2106 = scalar_lea.vmem [#allocation19], %s2105
        // Predicated region
        $region233: #{tpu_custom_call.1} parent=195 // pred_check
          %p2107 = pneg %p389
        $region234: #{tpu_custom_call.1} parent=195 // pred_check_branch
          %2109 = sbr.rel (%p2107) target = $region236
        $region235: #{tpu_custom_call.1} parent=195 // pred_region
          %2110 = dma.done %s2104, 16
        $region236: #{tpu_custom_call.1} parent=195 // pred_fallthru
          _
        %s2111 = sand.u32 %s122, 1
        %s2112 = scalar_lea.sflag [#allocation8], %s2111
        %s2113 = sand.u32 %s402, 1
        %s2114 = smul.addr %s2113, 64
        %s2115 = scalar_lea.vmem [#allocation20], %s2114
        // Predicated region
        $region237: #{tpu_custom_call.1} parent=195 // pred_check
          %p2116 = pneg %p415
        $region238: #{tpu_custom_call.1} parent=195 // pred_check_branch
          %2118 = sbr.rel (%p2116) target = $region240
        $region239: #{tpu_custom_call.1} parent=195 // pred_region
          %2119 = dma.done %s2112, 1024
        $region240: #{tpu_custom_call.1} parent=195 // pred_fallthru
          _
        %s2120 = sand.u32 %s122, 1
        %s2121 = scalar_lea.sflag [#allocation8], %s2120
        %s2122 = sand.u32 %s428, 1
        %s2123 = scalar_lea.vmem [#allocation21], %s2122
        // Predicated region
        $region241: #{tpu_custom_call.1} parent=195 // pred_check
          %p2124 = pneg %p441
        $region242: #{tpu_custom_call.1} parent=195 // pred_check_branch
          %2126 = sbr.rel (%p2124) target = $region244
        $region243: #{tpu_custom_call.1} parent=195 // pred_region
          %2127 = dma.done %s2121, 16
        $region244: #{tpu_custom_call.1} parent=195 // pred_fallthru
          _
        %s2128 = sand.u32 %s122, 1
        %s2129 = scalar_lea.sflag [#allocation8], %s2128
        %s2130 = sand.u32 %s454, 1
        %s2131 = smul.addr %s2130, 64
        %s2132 = scalar_lea.vmem [#allocation22], %s2131
        // Predicated region
        $region245: #{tpu_custom_call.1} parent=195 // pred_check
          %p2133 = pneg %p467
        $region246: #{tpu_custom_call.1} parent=195 // pred_check_branch
          %2135 = sbr.rel (%p2133) target = $region248
        $region247: #{tpu_custom_call.1} parent=195 // pred_region
          %2136 = dma.done %s2129, 1024
        $region248: #{tpu_custom_call.1} parent=195 // pred_fallthru
          _
        %s2137 = sand.u32 %s122, 1
        %s2138 = scalar_lea.sflag [#allocation8], %s2137
        %s2139 = sand.u32 %s480, 1
        %s2140 = scalar_lea.vmem [#allocation23], %s2139
        // Predicated region
        $region249: #{tpu_custom_call.1} parent=195 // pred_check
          %p2141 = pneg %p493
        $region250: #{tpu_custom_call.1} parent=195 // pred_check_branch
          %2143 = sbr.rel (%p2141) target = $region252
        $region251: #{tpu_custom_call.1} parent=195 // pred_region
          %2144 = dma.done %s2138, 16
        $region252: #{tpu_custom_call.1} parent=195 // pred_fallthru
          _
        %s2145 = sand.u32 %s122, 1
        %s2146 = scalar_lea.sflag [#allocation8], %s2145
        %s2147 = sand.u32 %s506, 1
        %s2148 = smul.addr %s2147, 64
        %s2149 = scalar_lea.vmem [#allocation24], %s2148
        // Predicated region
        $region253: #{tpu_custom_call.1} parent=195 // pred_check
          %p2150 = pneg %p519
        $region254: #{tpu_custom_call.1} parent=195 // pred_check_branch
          %2152 = sbr.rel (%p2150) target = $region256
        $region255: #{tpu_custom_call.1} parent=195 // pred_region
          %2153 = dma.done %s2146, 1024
        $region256: #{tpu_custom_call.1} parent=195 // pred_fallthru
          _
        %s2154 = sand.u32 %s122, 1
        %s2155 = scalar_lea.sflag [#allocation8], %s2154
        %s2156 = sand.u32 %s532, 1
        %s2157 = scalar_lea.vmem [#allocation25], %s2156
        // Predicated region
        $region257: #{tpu_custom_call.1} parent=195 // pred_check
          %p2158 = pneg %p545
        $region258: #{tpu_custom_call.1} parent=195 // pred_check_branch
          %2160 = sbr.rel (%p2158) target = $region260
        $region259: #{tpu_custom_call.1} parent=195 // pred_region
          %2161 = dma.done %s2155, 16
        $region260: #{tpu_custom_call.1} parent=195 // pred_fallthru
          _
        %s2162 = sand.u32 %s122, 1
        %s2163 = scalar_lea.sflag [#allocation8], %s2162
        %s2164 = sand.u32 %s558, 1
        %s2165 = smul.addr %s2164, 64
        %s2166 = scalar_lea.vmem [#allocation26], %s2165
        // Predicated region
        $region261: #{tpu_custom_call.1} parent=195 // pred_check
          %p2167 = pneg %p571
        $region262: #{tpu_custom_call.1} parent=195 // pred_check_branch
          %2169 = sbr.rel (%p2167) target = $region264
        $region263: #{tpu_custom_call.1} parent=195 // pred_region
          %2170 = dma.done %s2163, 1024
        $region264: #{tpu_custom_call.1} parent=195 // pred_fallthru
          _
        %s2171 = sand.u32 %s122, 1
        %s2172 = scalar_lea.sflag [#allocation8], %s2171
        %s2173 = sand.u32 %s584, 1
        %s2174 = scalar_lea.vmem [#allocation27], %s2173
        // Predicated region
        $region265: #{tpu_custom_call.1} parent=195 // pred_check
          %p2175 = pneg %p597
        $region266: #{tpu_custom_call.1} parent=195 // pred_check_branch
          %2177 = sbr.rel (%p2175) target = $region268
        $region267: #{tpu_custom_call.1} parent=195 // pred_region
          %2178 = dma.done %s2172, 16
        $region268: #{tpu_custom_call.1} parent=195 // pred_fallthru
          _
        %s2179 = sand.u32 %s122, 1
        %s2180 = scalar_lea.sflag [#allocation8], %s2179
        %s2181 = sand.u32 %s610, 1
        %s2182 = scalar_lea.vmem [#allocation28], %s2181
        // Predicated region
        $region269: #{tpu_custom_call.1} parent=195 // pred_check
          %p2183 = pneg %p623
        $region270: #{tpu_custom_call.1} parent=195 // pred_check_branch
          %2185 = sbr.rel (%p2183) target = $region272
        $region271: #{tpu_custom_call.1} parent=195 // pred_region
          %2186 = dma.done %s2180, 16
        $region272: #{tpu_custom_call.1} parent=195 // pred_fallthru
          _
        %s2187 = sand.u32 %s122, 1
        %s2188 = scalar_lea.sflag [#allocation8], %s2187
        %s2189 = sand.u32 %s636, 1
        %s2190 = scalar_lea.vmem [#allocation29], %s2189
        // Predicated region
        $region273: #{tpu_custom_call.1} parent=195 // pred_check
          %p2191 = pneg %p649
        $region274: #{tpu_custom_call.1} parent=195 // pred_check_branch
          %2193 = sbr.rel (%p2191) target = $region276
        $region275: #{tpu_custom_call.1} parent=195 // pred_region
          %2194 = dma.done %s2188, 16
        $region276: #{tpu_custom_call.1} parent=195 // pred_fallthru
          _
        %s2195 = sand.u32 %s122, 1
        %s2196 = scalar_lea.sflag [#allocation8], %s2195
        %s2197 = sand.u32 %s662, 1
        %s2198 = smul.addr %s2197, 128
        %s2199 = scalar_lea.vmem [#allocation30], %s2198
        // Predicated region
        $region277: #{tpu_custom_call.1} parent=195 // pred_check
          %p2200 = pneg %p675
        $region278: #{tpu_custom_call.1} parent=195 // pred_check_branch
          %2202 = sbr.rel (%p2200) target = $region280
        $region279: #{tpu_custom_call.1} parent=195 // pred_region
          %2203 = dma.done %s2196, 2048
        $region280: #{tpu_custom_call.1} parent=195 // pred_fallthru
          _
        %s2204 = sand.u32 %s122, 1
        %s2205 = scalar_lea.sflag [#allocation8], %s2204
        %s2206 = sand.u32 %s688, 1
        %s2207 = smul.addr %s2206, 2
        %s2208 = scalar_lea.vmem [#allocation31], %s2207
        // Predicated region
        $region281: #{tpu_custom_call.1} parent=195 // pred_check
          %p2209 = pneg %p701
        $region282: #{tpu_custom_call.1} parent=195 // pred_check_branch
          %2211 = sbr.rel (%p2209) target = $region284
        $region283: #{tpu_custom_call.1} parent=195 // pred_region
          %2212 = dma.done %s2205, 32
        $region284: #{tpu_custom_call.1} parent=195 // pred_fallthru
          _
        %s2213 = sand.u32 %s122, 1
        %s2214 = scalar_lea.sflag [#allocation8], %s2213
        %s2215 = sand.u32 %s714, 1
        %s2216 = smul.addr %s2215, 8
        %s2217 = scalar_lea.vmem [#allocation32], %s2216
        // Predicated region
        $region285: #{tpu_custom_call.1} parent=195 // pred_check
          %p2218 = pneg %p727
        $region286: #{tpu_custom_call.1} parent=195 // pred_check_branch
          %2220 = sbr.rel (%p2218) target = $region288
        $region287: #{tpu_custom_call.1} parent=195 // pred_region
          %2221 = dma.done %s2214, 128
        $region288: #{tpu_custom_call.1} parent=195 // pred_fallthru
          _
        %s2222 = sand.u32 %s122, 1
        %s2223 = scalar_lea.sflag [#allocation8], %s2222
        %s2224 = sand.u32 %s740, 1
        %s2225 = scalar_lea.vmem [#allocation33], %s2224
        // Predicated region
        $region289: #{tpu_custom_call.1} parent=195 // pred_check
          %p2226 = pneg %p753
        $region290: #{tpu_custom_call.1} parent=195 // pred_check_branch
          %2228 = sbr.rel (%p2226) target = $region292
        $region291: #{tpu_custom_call.1} parent=195 // pred_region
          %2229 = dma.done %s2223, 16
        $region292: #{tpu_custom_call.1} parent=195 // pred_fallthru
          _
        %s2230 = sand.u32 %s122, 1
        %s2231 = scalar_lea.sflag [#allocation8], %s2230
        %s2232 = sand.u32 %s766, 1
        %s2233 = scalar_lea.vmem [#allocation34], %s2232
        // Predicated region
        $region293: #{tpu_custom_call.1} parent=195 // pred_check
          %p2234 = pneg %p779
        $region294: #{tpu_custom_call.1} parent=195 // pred_check_branch
          %2236 = sbr.rel (%p2234) target = $region296
        $region295: #{tpu_custom_call.1} parent=195 // pred_region
          %2237 = dma.done %s2231, 16
        $region296: #{tpu_custom_call.1} parent=195 // pred_fallthru
          _
        %s2238 = sand.u32 %s122, 1
        %s2239 = scalar_lea.sflag [#allocation8], %s2238
        %s2240 = sand.u32 %s792, 1
        %s2241 = scalar_lea.vmem [#allocation35], %s2240
        // Predicated region
        $region297: #{tpu_custom_call.1} parent=195 // pred_check
          %p2242 = pneg %p805
        $region298: #{tpu_custom_call.1} parent=195 // pred_check_branch
          %2244 = sbr.rel (%p2242) target = $region300
        $region299: #{tpu_custom_call.1} parent=195 // pred_region
          %2245 = dma.done %s2239, 16
        $region300: #{tpu_custom_call.1} parent=195 // pred_fallthru
          _
        %s2246 = sand.u32 %s122, 1
        %s2247 = scalar_lea.sflag [#allocation8], %s2246
        %s2248 = sand.u32 %s818, 1
        %s2249 = smul.addr %s2248, 64
        %s2250 = scalar_lea.vmem [#allocation36], %s2249
        // Predicated region
        $region301: #{tpu_custom_call.1} parent=195 // pred_check
          %p2251 = pneg %p831
        $region302: #{tpu_custom_call.1} parent=195 // pred_check_branch
          %2253 = sbr.rel (%p2251) target = $region304
        $region303: #{tpu_custom_call.1} parent=195 // pred_region
          %2254 = dma.done %s2247, 1024
        $region304: #{tpu_custom_call.1} parent=195 // pred_fallthru
          _
        %s2255 = sand.u32 %s122, 1
        %s2256 = scalar_lea.sflag [#allocation8], %s2255
        %s2257 = sand.u32 %s844, 1
        %s2258 = scalar_lea.vmem [#allocation37], %s2257
        // Predicated region
        $region305: #{tpu_custom_call.1} parent=195 // pred_check
          %p2259 = pneg %p857
        $region306: #{tpu_custom_call.1} parent=195 // pred_check_branch
          %2261 = sbr.rel (%p2259) target = $region308
        $region307: #{tpu_custom_call.1} parent=195 // pred_region
          %2262 = dma.done %s2256, 16
        $region308: #{tpu_custom_call.1} parent=195 // pred_fallthru
          _
        %s2263 = sand.u32 %s122, 1
        %s2264 = scalar_lea.sflag [#allocation8], %s2263
        %s2265 = sand.u32 %s870, 1
        %s2266 = scalar_lea.vmem [#allocation38], %s2265
        // Predicated region
        $region309: #{tpu_custom_call.1} parent=195 // pred_check
          %p2267 = pneg %p883
        $region310: #{tpu_custom_call.1} parent=195 // pred_check_branch
          %2269 = sbr.rel (%p2267) target = $region312
        $region311: #{tpu_custom_call.1} parent=195 // pred_region
          %2270 = dma.done %s2264, 16
        $region312: #{tpu_custom_call.1} parent=195 // pred_fallthru
          _
        %s2271 = sand.u32 %s122, 1
        %s2272 = scalar_lea.sflag [#allocation8], %s2271
        %s2273 = sand.u32 %s896, 1
        %s2274 = scalar_lea.vmem [#allocation39], %s2273
        // Predicated region
        $region313: #{tpu_custom_call.1} parent=195 // pred_check
          %p2275 = pneg %p909
        $region314: #{tpu_custom_call.1} parent=195 // pred_check_branch
          %2277 = sbr.rel (%p2275) target = $region316
        $region315: #{tpu_custom_call.1} parent=195 // pred_region
          %2278 = dma.done %s2272, 16
        $region316: #{tpu_custom_call.1} parent=195 // pred_fallthru
          _
        %s2279 = sand.u32 %s122, 1
        %s2280 = scalar_lea.sflag [#allocation8], %s2279
        %s2281 = sand.u32 %s922, 1
        %s2282 = smul.addr %s2281, 256
        %s2283 = scalar_lea.vmem [#allocation40], %s2282
        // Predicated region
        $region317: #{tpu_custom_call.1} parent=195 // pred_check
          %p2284 = pneg %p935
        $region318: #{tpu_custom_call.1} parent=195 // pred_check_branch
          %2286 = sbr.rel (%p2284) target = $region320
        $region319: #{tpu_custom_call.1} parent=195 // pred_region
          %2287 = dma.done %s2280, 4096
        $region320: #{tpu_custom_call.1} parent=195 // pred_fallthru
          _
        %s2288 = sand.u32 %s122, 1
        %s2289 = scalar_lea.sflag [#allocation8], %s2288
        %s2290 = sand.u32 %s948, 1
        %s2291 = smul.addr %s2290, 4
        %s2292 = scalar_lea.vmem [#allocation41], %s2291
        // Predicated region
        $region321: #{tpu_custom_call.1} parent=195 // pred_check
          %p2293 = pneg %p961
        $region322: #{tpu_custom_call.1} parent=195 // pred_check_branch
          %2295 = sbr.rel (%p2293) target = $region324
        $region323: #{tpu_custom_call.1} parent=195 // pred_region
          %2296 = dma.done %s2289, 64
        $region324: #{tpu_custom_call.1} parent=195 // pred_fallthru
          _
        %s2297 = sand.u32 %s122, 1
        %s2298 = scalar_lea.sflag [#allocation8], %s2297
        %s2299 = sand.u32 %s974, 1
        %s2300 = smul.addr %s2299, 256
        %s2301 = scalar_lea.vmem [#allocation42], %s2300
        // Predicated region
        $region325: #{tpu_custom_call.1} parent=195 // pred_check
          %p2302 = pneg %p987
        $region326: #{tpu_custom_call.1} parent=195 // pred_check_branch
          %2304 = sbr.rel (%p2302) target = $region328
        $region327: #{tpu_custom_call.1} parent=195 // pred_region
          %2305 = dma.done %s2298, 4096
        $region328: #{tpu_custom_call.1} parent=195 // pred_fallthru
          _
        // Predicated region
        $region329: #{tpu_custom_call.1} parent=195 // pred_check
          %p2306 = pneg %p1170
        $region330: #{tpu_custom_call.1} parent=195 // pred_check_branch
          %2308 = sbr.rel (%p2306) target = $region332
        $region331: #{tpu_custom_call.1} parent=195 // pred_region
          %2309 = dma.done [#allocation11], 1024
        $region332: #{tpu_custom_call.1} parent=195 // pred_fallthru
          _
        // Predicated region
        $region333: #{tpu_custom_call.1} parent=195 // pred_check
          %p2310 = pneg %p1212
        $region334: #{tpu_custom_call.1} parent=195 // pred_check_branch
          %2312 = sbr.rel (%p2310) target = $region336
        $region335: #{tpu_custom_call.1} parent=195 // pred_region
          %2313 = dma.done [#allocation45], 1024
        $region336: #{tpu_custom_call.1} parent=195 // pred_fallthru
          _
        %p2314 = pneg %p155
        %p2315 = pneg %p152
        %p2316 = pneg %p181
        %p2317 = pneg %p178
        %s2318 = sand.u32 %s122, 1
        %s2319 = scalar_lea.sflag [#allocation8], %s2318
        %s2320 = sand.u32 %s194, 1
        %s2321 = scalar_lea.vmem [#allocation12], %s2320
        %p2322 = pneg %p207
        %p2323 = pneg %p204
        %s2324 = sand.u32 %s122, 1
        %s2325 = scalar_lea.sflag [#allocation8], %s2324
        %s2326 = sand.u32 %s220, 1
        %s2327 = scalar_lea.vmem [#allocation13], %s2326
        %p2328 = pneg %p233
        %p2329 = pneg %p230
        %s2330 = sand.u32 %s122, 1
        %s2331 = scalar_lea.sflag [#allocation8], %s2330
        %s2332 = sand.u32 %s246, 1
        %s2333 = smul.addr %s2332, 256
        %s2334 = scalar_lea.vmem [#allocation14], %s2333
        %p2335 = pneg %p259
        %p2336 = pneg %p256
        %s2337 = sand.u32 %s122, 1
        %s2338 = scalar_lea.sflag [#allocation8], %s2337
        %s2339 = sand.u32 %s272, 1
        %s2340 = smul.addr %s2339, 4
        %s2341 = scalar_lea.vmem [#allocation15], %s2340
        %p2342 = pneg %p285
        %p2343 = pneg %p282
        %s2344 = sand.u32 %s122, 1
        %s2345 = scalar_lea.sflag [#allocation8], %s2344
        %s2346 = sand.u32 %s298, 1
        %s2347 = smul.addr %s2346, 256
        %s2348 = scalar_lea.vmem [#allocation16], %s2347
        %p2349 = pneg %p311
        %p2350 = pneg %p308
        %s2351 = sand.u32 %s122, 1
        %s2352 = scalar_lea.sflag [#allocation8], %s2351
        %s2353 = sand.u32 %s324, 1
        %s2354 = scalar_lea.vmem [#allocation17], %s2353
        %p2355 = pneg %p337
        %p2356 = pneg %p334
        %s2357 = sand.u32 %s122, 1
        %s2358 = scalar_lea.sflag [#allocation8], %s2357
        %s2359 = sand.u32 %s350, 1
        %s2360 = scalar_lea.vmem [#allocation18], %s2359
        %p2361 = pneg %p363
        %p2362 = pneg %p360
        %s2363 = sand.u32 %s122, 1
        %s2364 = scalar_lea.sflag [#allocation8], %s2363
        %s2365 = sand.u32 %s376, 1
        %s2366 = scalar_lea.vmem [#allocation19], %s2365
        %p2367 = pneg %p389
        %p2368 = pneg %p386
        %s2369 = sand.u32 %s122, 1
        %s2370 = scalar_lea.sflag [#allocation8], %s2369
        %s2371 = sand.u32 %s402, 1
        %s2372 = smul.addr %s2371, 64
        %s2373 = scalar_lea.vmem [#allocation20], %s2372
        %p2374 = pneg %p415
        %p2375 = pneg %p412
        %s2376 = sand.u32 %s122, 1
        %s2377 = scalar_lea.sflag [#allocation8], %s2376
        %s2378 = sand.u32 %s428, 1
        %s2379 = scalar_lea.vmem [#allocation21], %s2378
        %p2380 = pneg %p441
        %p2381 = pneg %p438
        %s2382 = sand.u32 %s122, 1
        %s2383 = scalar_lea.sflag [#allocation8], %s2382
        %s2384 = sand.u32 %s454, 1
        %s2385 = smul.addr %s2384, 64
        %s2386 = scalar_lea.vmem [#allocation22], %s2385
        %p2387 = pneg %p467
        %p2388 = pneg %p464
        %s2389 = sand.u32 %s122, 1
        %s2390 = scalar_lea.sflag [#allocation8], %s2389
        %s2391 = sand.u32 %s480, 1
        %s2392 = scalar_lea.vmem [#allocation23], %s2391
        %p2393 = pneg %p493
        %p2394 = pneg %p490
        %s2395 = sand.u32 %s122, 1
        %s2396 = scalar_lea.sflag [#allocation8], %s2395
        %s2397 = sand.u32 %s506, 1
        %s2398 = smul.addr %s2397, 64
        %s2399 = scalar_lea.vmem [#allocation24], %s2398
        %p2400 = pneg %p519
        %p2401 = pneg %p516
        %s2402 = sand.u32 %s122, 1
        %s2403 = scalar_lea.sflag [#allocation8], %s2402
        %s2404 = sand.u32 %s532, 1
        %s2405 = scalar_lea.vmem [#allocation25], %s2404
        %p2406 = pneg %p545
        %p2407 = pneg %p542
        %s2408 = sand.u32 %s122, 1
        %s2409 = scalar_lea.sflag [#allocation8], %s2408
        %s2410 = sand.u32 %s558, 1
        %s2411 = smul.addr %s2410, 64
        %s2412 = scalar_lea.vmem [#allocation26], %s2411
        %p2413 = pneg %p571
        %p2414 = pneg %p568
        %s2415 = sand.u32 %s122, 1
        %s2416 = scalar_lea.sflag [#allocation8], %s2415
        %s2417 = sand.u32 %s584, 1
        %s2418 = scalar_lea.vmem [#allocation27], %s2417
        %p2419 = pneg %p597
        %p2420 = pneg %p594
        %s2421 = sand.u32 %s122, 1
        %s2422 = scalar_lea.sflag [#allocation8], %s2421
        %s2423 = sand.u32 %s610, 1
        %s2424 = scalar_lea.vmem [#allocation28], %s2423
        %p2425 = pneg %p623
        %p2426 = pneg %p620
        %s2427 = sand.u32 %s122, 1
        %s2428 = scalar_lea.sflag [#allocation8], %s2427
        %s2429 = sand.u32 %s636, 1
        %s2430 = scalar_lea.vmem [#allocation29], %s2429
        %p2431 = pneg %p649
        %p2432 = pneg %p646
        %s2433 = sand.u32 %s122, 1
        %s2434 = scalar_lea.sflag [#allocation8], %s2433
        %s2435 = sand.u32 %s662, 1
        %s2436 = smul.addr %s2435, 128
        %s2437 = scalar_lea.vmem [#allocation30], %s2436
        %p2438 = pneg %p675
        %p2439 = pneg %p672
        %s2440 = sand.u32 %s122, 1
        %s2441 = scalar_lea.sflag [#allocation8], %s2440
        %s2442 = sand.u32 %s688, 1
        %s2443 = smul.addr %s2442, 2
        %s2444 = scalar_lea.vmem [#allocation31], %s2443
        %p2445 = pneg %p701
        %p2446 = pneg %p698
        %s2447 = sand.u32 %s122, 1
        %s2448 = scalar_lea.sflag [#allocation8], %s2447
        %s2449 = sand.u32 %s714, 1
        %s2450 = smul.addr %s2449, 8
        %s2451 = scalar_lea.vmem [#allocation32], %s2450
        %p2452 = pneg %p727
        %p2453 = pneg %p724
        %s2454 = sand.u32 %s122, 1
        %s2455 = scalar_lea.sflag [#allocation8], %s2454
        %s2456 = sand.u32 %s740, 1
        %s2457 = scalar_lea.vmem [#allocation33], %s2456
        %p2458 = pneg %p753
        %p2459 = pneg %p750
        %s2460 = sand.u32 %s122, 1
        %s2461 = scalar_lea.sflag [#allocation8], %s2460
        %s2462 = sand.u32 %s766, 1
        %s2463 = scalar_lea.vmem [#allocation34], %s2462
        %p2464 = pneg %p779
        %p2465 = pneg %p776
        %s2466 = sand.u32 %s122, 1
        %s2467 = scalar_lea.sflag [#allocation8], %s2466
        %s2468 = sand.u32 %s792, 1
        %s2469 = scalar_lea.vmem [#allocation35], %s2468
        %p2470 = pneg %p805
        %p2471 = pneg %p802
        %s2472 = sand.u32 %s122, 1
        %s2473 = scalar_lea.sflag [#allocation8], %s2472
        %s2474 = sand.u32 %s818, 1
        %s2475 = smul.addr %s2474, 64
        %s2476 = scalar_lea.vmem [#allocation36], %s2475
        %p2477 = pneg %p831
        %p2478 = pneg %p828
        %s2479 = sand.u32 %s122, 1
        %s2480 = scalar_lea.sflag [#allocation8], %s2479
        %s2481 = sand.u32 %s844, 1
        %s2482 = scalar_lea.vmem [#allocation37], %s2481
        %p2483 = pneg %p857
        %p2484 = pneg %p854
        %s2485 = sand.u32 %s122, 1
        %s2486 = scalar_lea.sflag [#allocation8], %s2485
        %s2487 = sand.u32 %s870, 1
        %s2488 = scalar_lea.vmem [#allocation38], %s2487
        %p2489 = pneg %p883
        %p2490 = pneg %p880
        %s2491 = sand.u32 %s122, 1
        %s2492 = scalar_lea.sflag [#allocation8], %s2491
        %s2493 = sand.u32 %s896, 1
        %s2494 = scalar_lea.vmem [#allocation39], %s2493
        %p2495 = pneg %p909
        %p2496 = pneg %p906
        %s2497 = sand.u32 %s122, 1
        %s2498 = scalar_lea.sflag [#allocation8], %s2497
        %s2499 = sand.u32 %s922, 1
        %s2500 = smul.addr %s2499, 256
        %s2501 = scalar_lea.vmem [#allocation40], %s2500
        %p2502 = pneg %p935
        %p2503 = pneg %p932
        %s2504 = sand.u32 %s122, 1
        %s2505 = scalar_lea.sflag [#allocation8], %s2504
        %s2506 = sand.u32 %s948, 1
        %s2507 = smul.addr %s2506, 4
        %s2508 = scalar_lea.vmem [#allocation41], %s2507
        %p2509 = pneg %p961
        %p2510 = pneg %p958
        %s2511 = sand.u32 %s122, 1
        %s2512 = scalar_lea.sflag [#allocation8], %s2511
        %s2513 = sand.u32 %s974, 1
        %s2514 = smul.addr %s2513, 256
        %s2515 = scalar_lea.vmem [#allocation42], %s2514
        %p2516 = pneg %p987
        %p2517 = pneg %p984
        %p2518 = scmp.lt.s32.totalorder %s127, 2
        %s2519 = scalar_select %p2518, %s127, 2
        %s2520 = scalar_lea.vmem %s71, %s2519
        %p2521 = pneg %p1013
        %p2522 = pneg %p1010
        %p2523 = scmp.lt.s32.totalorder %s127, 2
        %s2524 = scalar_select %p2523, %s127, 2
        %s2525 = scalar_lea.vmem %s73, %s2524
        %p2526 = pneg %p1039
        %p2527 = pneg %p1036
        %p2528 = scmp.lt.s32.totalorder %s127, 2
        %s2529 = scalar_select %p2528, %s127, 2
        %s2530 = scalar_lea.vmem %s75, %s2529
        %p2531 = pneg %p1065
        %p2532 = pneg %p1062
        %p2533 = pneg %p1086
        %p2534 = pneg %p1083
        %p2535 = pneg %p1107
        %p2536 = pneg %p1104
        %p2537 = pneg %p1128
        %p2538 = pneg %p1125
        %p2539 = pneg %p1149
        %p2540 = pneg %p1146
        %p2541 = pneg %p1170
        %p2542 = pneg %p1167
        %p2543 = pneg %p1191
        %p2544 = pneg %p1188
        %p2545 = pneg %p1212
        %p2546 = pneg %p1209
        %p2547 = pneg %p1233
        %p2548 = pneg %p1230
        %p2549 = pneg %p1259
        %p2550 = pneg %p1256
        %p2551 = pneg %p1285
        %p2552 = pneg %p1282
        %p2553 = pneg %p1313
        %p2554 = pneg %p1310
        %s2555 = sand.u32 %s122, 1
        %s2556 = scalar_lea.sflag [#allocation9], %s2555
        %s2557 = sand.u32 %s1300, 1
        %s2558 = smul.addr %s2557, 32
        %s2559 = scalar_lea.vmem [#allocation49], %s2558
        %p2560 = pneg %p1341
        %p2561 = pneg %p1338
        %s2562 = sand.u32 %s122, 1
        %s2563 = scalar_lea.sflag [#allocation9], %s2562
        %s2564 = sand.u32 %s1328, 1
        %s2565 = smul.addr %s2564, 32
        %s2566 = scalar_lea.vmem [#allocation50], %s2565
        %s2567 = smul.u32 2, %s126
        %s2568 = smul.u32 2, %s126
        %p2569 = scmp.lt.s32.totalorder %s127, 2
        %s2570 = scalar_select %p2569, %s127, 2
        %s2571 = scalar_lea.vmem %s71, %s2570
        %p2572 = scmp.lt.s32.totalorder %s127, 2
        %s2573 = scalar_select %p2572, %s127, 2
        %s2574 = scalar_lea.vmem %s73, %s2573
        %p2575 = scmp.lt.s32.totalorder %s127, 2
        %s2576 = scalar_select %p2575, %s127, 2
        %s2577 = scalar_lea.vmem %s75, %s2576
        %s2578 = smul.u32 2, %s126
        %s2579 = smul.u32 2, %s126
        %s2580 = smul.u32 2, %s126
        %s2581 = smul.u32 2, %s126
        %p2583 = scmp.eq.s32.totalorder %s127, 0
        // Predicated region
        $region337: #{tpu_custom_call.1} parent=195 // pred_check
          %p2584 = pneg %p2583
        $region338: #{tpu_custom_call.1} parent=195 // pred_check_branch
          %2586 = sbr.rel (%p2584) target = $region340
        $region339: #{tpu_custom_call.1} parent=195 // pred_region
          %v2587 = vld [vmem:[#allocation7] sm:$0xff]
          %v2588 = vld [vmem:[#allocation7 + $0x8] sm:$0xff]
          %v2589 = vld [vmem:[#allocation7 + $0x10] sm:$0xff]
          %v2590 = vld [vmem:[#allocation7 + $0x18] sm:$0xff]
          %2591 = vst [vmem:[#allocation2] sm:$0xff] %v2587
          %2592 = vst [vmem:[#allocation2 + $0x8] sm:$0xff] %v2588
          %2593 = vst [vmem:[#allocation2 + $0x10] sm:$0xff] %v2589
          %2594 = vst [vmem:[#allocation2 + $0x18] sm:$0xff] %v2590
          %2595 = vst [vmem:[#allocation3] sm:$0xff] 0.0
          %2596 = vst [vmem:[#allocation3 + $0x8] sm:$0xff] 0.0
          %2597 = vst [vmem:[#allocation3 + $0x10] sm:$0x3f] 0.0
          %2598 = vst [vmem:[#allocation3 + $0x18] sm:$0xff] 0.0
          %2599 = vst [vmem:[#allocation3 + $0x20] sm:$0xff] 0.0
          %2600 = vst [vmem:[#allocation3 + $0x28] sm:$0x3f] 0.0
        $region340: #{tpu_custom_call.1} parent=195 // pred_fallthru
          _
        %v2601 = vld [vmem:[#allocation2] sm:$0xff]
        %v2602 = vld [vmem:[#allocation2 + $0x8] sm:$0xff]
        %v2603 = vld [vmem:[#allocation2 + $0x10] sm:$0xff]
        %v2604 = vld [vmem:[#allocation2 + $0x18] sm:$0xff]
        %v2605 = vld [vmem:[%s2047] sm:$0x1]
        %v2606 = vld [vmem:[%s2055] sm:$0x1]
        %v2607 = vld [vmem:[%s2064] sm:$0xff]
        %v2608 = vld [vmem:[%s2064 + $0x8] sm:$0xff]
        %v2609 = vld [vmem:[%s2064 + $0x10] sm:$0xff]
        %v2610 = vld [vmem:[%s2064 + $0x18] sm:$0xff]
        %v2611 = vld [vmem:[%s2064 + $0x20] sm:$0xff]
        %v2612 = vld [vmem:[%s2064 + $0x28] sm:$0xff]
        %v2613 = vld [vmem:[%s2064 + $0x30] sm:$0xff]
        %v2614 = vld [vmem:[%s2064 + $0x38] sm:$0xff]
        %v2615 = vld [vmem:[%s2064 + $0x40] sm:$0xff]
        %v2616 = vld [vmem:[%s2064 + $0x48] sm:$0xff]
        %v2617 = vld [vmem:[%s2064 + $0x50] sm:$0xff]
        %v2618 = vld [vmem:[%s2064 + $0x58] sm:$0xff]
        %v2619 = vld [vmem:[%s2064 + $0x60] sm:$0xff]
        %v2620 = vld [vmem:[%s2064 + $0x68] sm:$0xff]
        %v2621 = vld [vmem:[%s2064 + $0x70] sm:$0xff]
        %v2622 = vld [vmem:[%s2064 + $0x78] sm:$0xff]
        %v2623 = vld [vmem:[%s2064 + $0x80] sm:$0xff]
        %v2624 = vld [vmem:[%s2064 + $0x88] sm:$0xff]
        %v2625 = vld [vmem:[%s2064 + $0x90] sm:$0xff]
        %v2626 = vld [vmem:[%s2064 + $0x98] sm:$0xff]
        %v2627 = vld [vmem:[%s2064 + $0xa0] sm:$0xff]
        %v2628 = vld [vmem:[%s2064 + $0xa8] sm:$0xff]
        %v2629 = vld [vmem:[%s2064 + $0xb0] sm:$0xff]
        %v2630 = vld [vmem:[%s2064 + $0xb8] sm:$0xff]
        %v2631 = vld [vmem:[%s2064 + $0xc0] sm:$0xff]
        %v2632 = vld [vmem:[%s2064 + $0xc8] sm:$0xff]
        %v2633 = vld [vmem:[%s2064 + $0xd0] sm:$0xff]
        %v2634 = vld [vmem:[%s2064 + $0xd8] sm:$0xff]
        %v2635 = vld [vmem:[%s2064 + $0xe0] sm:$0xff]
        %v2636 = vld [vmem:[%s2064 + $0xe8] sm:$0xff]
        %v2637 = vld [vmem:[%s2064 + $0xf0] sm:$0xff]
        %v2638 = vld [vmem:[%s2064 + $0xf8] sm:$0xff]
        %v2639 = vld [vmem:[%s2073] sm:$0xf]
        %v2640 = vld [vmem:[%s2082] sm:$0xf]
        %v2641 = vld [vmem:[%s2082 + $0x4] sm:$0xf]
        %v2642 = vld [vmem:[%s2082 + $0x8] sm:$0xf]
        %v2643 = vld [vmem:[%s2082 + $0xc] sm:$0xf]
        %v2644 = vld [vmem:[%s2082 + $0x10] sm:$0xf]
        %v2645 = vld [vmem:[%s2082 + $0x14] sm:$0xf]
        %v2646 = vld [vmem:[%s2082 + $0x18] sm:$0xf]
        %v2647 = vld [vmem:[%s2082 + $0x1c] sm:$0xf]
        %v2648 = vld [vmem:[%s2082 + $0x20] sm:$0xf]
        %v2649 = vld [vmem:[%s2082 + $0x24] sm:$0xf]
        %v2650 = vld [vmem:[%s2082 + $0x28] sm:$0xf]
        %v2651 = vld [vmem:[%s2082 + $0x2c] sm:$0xf]
        %v2652 = vld [vmem:[%s2082 + $0x30] sm:$0xf]
        %v2653 = vld [vmem:[%s2082 + $0x34] sm:$0xf]
        %v2654 = vld [vmem:[%s2082 + $0x38] sm:$0xf]
        %v2655 = vld [vmem:[%s2082 + $0x3c] sm:$0xf]
        %v2656 = vld [vmem:[%s2082 + $0x40] sm:$0xf]
        %v2657 = vld [vmem:[%s2082 + $0x44] sm:$0xf]
        %v2658 = vld [vmem:[%s2082 + $0x48] sm:$0xf]
        %v2659 = vld [vmem:[%s2082 + $0x4c] sm:$0xf]
        %v2660 = vld [vmem:[%s2082 + $0x50] sm:$0xf]
        %v2661 = vld [vmem:[%s2082 + $0x54] sm:$0xf]
        %v2662 = vld [vmem:[%s2082 + $0x58] sm:$0xf]
        %v2663 = vld [vmem:[%s2082 + $0x5c] sm:$0xf]
        %v2664 = vld [vmem:[%s2082 + $0x60] sm:$0xf]
        %v2665 = vld [vmem:[%s2082 + $0x64] sm:$0xf]
        %v2666 = vld [vmem:[%s2082 + $0x68] sm:$0xf]
        %v2667 = vld [vmem:[%s2082 + $0x6c] sm:$0xf]
        %v2668 = vld [vmem:[%s2082 + $0x70] sm:$0xf]
        %v2669 = vld [vmem:[%s2082 + $0x74] sm:$0xf]
        %v2670 = vld [vmem:[%s2082 + $0x78] sm:$0xf]
        %v2671 = vld [vmem:[%s2082 + $0x7c] sm:$0xf]
        %v2672 = vld [vmem:[%s2082 + $0x80] sm:$0xf]
        %v2673 = vld [vmem:[%s2082 + $0x84] sm:$0xf]
        %v2674 = vld [vmem:[%s2082 + $0x88] sm:$0xf]
        %v2675 = vld [vmem:[%s2082 + $0x8c] sm:$0xf]
        %v2676 = vld [vmem:[%s2082 + $0x90] sm:$0xf]
        %v2677 = vld [vmem:[%s2082 + $0x94] sm:$0xf]
        %v2678 = vld [vmem:[%s2082 + $0x98] sm:$0xf]
        %v2679 = vld [vmem:[%s2082 + $0x9c] sm:$0xf]
        %v2680 = vld [vmem:[%s2082 + $0xa0] sm:$0xf]
        %v2681 = vld [vmem:[%s2082 + $0xa4] sm:$0xf]
        %v2682 = vld [vmem:[%s2082 + $0xa8] sm:$0xf]
        %v2683 = vld [vmem:[%s2082 + $0xac] sm:$0xf]
        %v2684 = vld [vmem:[%s2082 + $0xb0] sm:$0xf]
        %v2685 = vld [vmem:[%s2082 + $0xb4] sm:$0xf]
        %v2686 = vld [vmem:[%s2082 + $0xb8] sm:$0xf]
        %v2687 = vld [vmem:[%s2082 + $0xbc] sm:$0xf]
        %v2688 = vld [vmem:[%s2082 + $0xc0] sm:$0xf]
        %v2689 = vld [vmem:[%s2082 + $0xc4] sm:$0xf]
        %v2690 = vld [vmem:[%s2082 + $0xc8] sm:$0xf]
        %v2691 = vld [vmem:[%s2082 + $0xcc] sm:$0xf]
        %v2692 = vld [vmem:[%s2082 + $0xd0] sm:$0xf]
        %v2693 = vld [vmem:[%s2082 + $0xd4] sm:$0xf]
        %v2694 = vld [vmem:[%s2082 + $0xd8] sm:$0xf]
        %v2695 = vld [vmem:[%s2082 + $0xdc] sm:$0xf]
        %v2696 = vld [vmem:[%s2082 + $0xe0] sm:$0xf]
        %v2697 = vld [vmem:[%s2082 + $0xe4] sm:$0xf]
        %v2698 = vld [vmem:[%s2082 + $0xe8] sm:$0xf]
        %v2699 = vld [vmem:[%s2082 + $0xec] sm:$0xf]
        %v2700 = vld [vmem:[%s2082 + $0xf0] sm:$0xf]
        %v2701 = vld [vmem:[%s2082 + $0xf4] sm:$0xf]
        %v2702 = vld [vmem:[%s2082 + $0xf8] sm:$0xf]
        %v2703 = vld [vmem:[%s2082 + $0xfc] sm:$0xf]
        %v2704 = vld [vmem:[%s2090] sm:$0x1]
        %2705 = vadd.xlane.f32.xlu0 %v2601
        %v2706 = vpop.xlane.xlu0 %2705
        %2707 = vadd.xlane.f32.xlu0 %v2602
        %v2708 = vpop.xlane.xlu0 %2707
        %2709 = vadd.xlane.f32.xlu0 %v2603
        %v2710 = vpop.xlane.xlu0 %2709
        %2711 = vadd.xlane.f32.xlu0 %v2604
        %v2712 = vpop.xlane.xlu0 %2711
        %v2713 = vrcp.pop 128.0
        %v2714 = vmul.f32 %v2706, %v2713
        %v2715 = vmul.f32 %v2708, %v2713
        %v2716 = vmul.f32 %v2710, %v2713
        %v2717 = vmul.f32 %v2712, %v2713
        %v2718 = vsub.f32 %v2601, %v2714
        %v2719 = vsub.f32 %v2602, %v2715
        %v2720 = vsub.f32 %v2603, %v2716
        %v2721 = vsub.f32 %v2604, %v2717
        %v2722 = vmul.f32 %v2718, %v2718
        %v2723 = vmul.f32 %v2719, %v2719
        %v2724 = vmul.f32 %v2720, %v2720
        %v2725 = vmul.f32 %v2721, %v2721
        %2726 = vadd.xlane.f32.xlu0 %v2722
        %v2727 = vpop.xlane.xlu0 %2726
        %2728 = vadd.xlane.f32.xlu0 %v2723
        %v2729 = vpop.xlane.xlu0 %2728
        %2730 = vadd.xlane.f32.xlu0 %v2724
        %v2731 = vpop.xlane.xlu0 %2730
        %2732 = vadd.xlane.f32.xlu0 %v2725
        %v2733 = vpop.xlane.xlu0 %2732
        %v2734 = vmul.f32 %v2727, %v2713
        %v2735 = vmul.f32 %v2729, %v2713
        %v2736 = vmul.f32 %v2731, %v2713
        %v2737 = vmul.f32 %v2733, %v2713
        %v2738 = vadd.f32 %v2734, 1e-05
        %v2739 = vadd.f32 %v2735, 1e-05
        %v2740 = vadd.f32 %v2736, 1e-05
        %v2741 = vadd.f32 %v2737, 1e-05
        %v2742 = vrsqrt.pop %v2738
        %v2743 = vrsqrt.pop %v2739
        %v2744 = vrsqrt.pop %v2740
        %v2745 = vrsqrt.pop %v2741
        %v2746 = vmul.f32 %v2718, %v2742
        %v2747 = vmul.f32 %v2719, %v2743
        %v2748 = vmul.f32 %v2720, %v2744
        %v2749 = vmul.f32 %v2721, %v2745
        %v2751 = vlaneseq
        %v2752 = vshrl.u32 %v2751, 7
        %v2753 = vsub.s32 0, %v2752
        %v2754 = vrot.slane %v2605, %v2753
        %v2756 = vmul.f32 %v2746, %v2754
        %v2757 = vmul.f32 %v2747, %v2754
        %v2758 = vmul.f32 %v2748, %v2754
        %v2759 = vmul.f32 %v2749, %v2754
        %v2761 = vlaneseq
        %v2762 = vshrl.u32 %v2761, 7
        %v2763 = vsub.s32 0, %v2762
        %v2764 = vrot.slane %v2606, %v2763
        %v2766 = vadd.f32 %v2756, %v2764
        %v2767 = vadd.f32 %v2757, %v2764
        %v2768 = vadd.f32 %v2758, %v2764
        %v2769 = vadd.f32 %v2759, %v2764
        %v2770 = vpack.c.bf16 %v2767, %v2766
        %v2771 = vpack.c.bf16 %v2769, %v2768
        %v2773 = vlaneseq
        %v2774 = vshrl.u32 %v2773, 7
        %v2775 = vsub.s32 0, %v2774
        %v2776 = vrot.slane %v2639, %v2775
        %v2777 = vlaneseq
        %v2778 = vshrl.u32 %v2777, 7
        %v2779 = vsub.s32 1, %v2778
        %v2780 = vrot.slane %v2639, %v2779
        %v2781 = vlaneseq
        %v2782 = vshrl.u32 %v2781, 7
        %v2783 = vsub.s32 2, %v2782
        %v2784 = vrot.slane %v2639, %v2783
        %v2785 = vlaneseq
        %v2786 = vshrl.u32 %v2785, 7
        %v2787 = vsub.s32 3, %v2786
        %v2788 = vrot.slane %v2639, %v2787
        %v2825 = vunpack.c.l.b16 %v2607
        %v2826 = vunpack.c.h.b16 %v2607
        %v2827 = vunpack.c.l.b16 %v2608
        %v2828 = vunpack.c.h.b16 %v2608
        %v2829 = vunpack.c.l.b16 %v2609
        %v2830 = vunpack.c.h.b16 %v2609
        %v2831 = vunpack.c.l.b16 %v2610
        %v2832 = vunpack.c.h.b16 %v2610
        %v2833 = vunpack.c.l.b16 %v2611
        %v2834 = vunpack.c.h.b16 %v2611
        %v2835 = vunpack.c.l.b16 %v2612
        %v2836 = vunpack.c.h.b16 %v2612
        %v2837 = vunpack.c.l.b16 %v2613
        %v2838 = vunpack.c.h.b16 %v2613
        %v2839 = vunpack.c.l.b16 %v2614
        %v2840 = vunpack.c.h.b16 %v2614
        %v2841 = vunpack.c.l.b16 %v2615
        %v2842 = vunpack.c.h.b16 %v2615
        %v2843 = vunpack.c.l.b16 %v2616
        %v2844 = vunpack.c.h.b16 %v2616
        %v2845 = vunpack.c.l.b16 %v2617
        %v2846 = vunpack.c.h.b16 %v2617
        %v2847 = vunpack.c.l.b16 %v2618
        %v2848 = vunpack.c.h.b16 %v2618
        %v2849 = vunpack.c.l.b16 %v2619
        %v2850 = vunpack.c.h.b16 %v2619
        %v2851 = vunpack.c.l.b16 %v2620
        %v2852 = vunpack.c.h.b16 %v2620
        %v2853 = vunpack.c.l.b16 %v2621
        %v2854 = vunpack.c.h.b16 %v2621
        %v2855 = vunpack.c.l.b16 %v2622
        %v2856 = vunpack.c.h.b16 %v2622
        %v2857 = vunpack.c.l.b16 %v2623
        %v2858 = vunpack.c.h.b16 %v2623
        %v2859 = vunpack.c.l.b16 %v2624
        %v2860 = vunpack.c.h.b16 %v2624
        %v2861 = vunpack.c.l.b16 %v2625
        %v2862 = vunpack.c.h.b16 %v2625
        %v2863 = vunpack.c.l.b16 %v2626
        %v2864 = vunpack.c.h.b16 %v2626
        %v2865 = vunpack.c.l.b16 %v2627
        %v2866 = vunpack.c.h.b16 %v2627
        %v2867 = vunpack.c.l.b16 %v2628
        %v2868 = vunpack.c.h.b16 %v2628
        %v2869 = vunpack.c.l.b16 %v2629
        %v2870 = vunpack.c.h.b16 %v2629
        %v2871 = vunpack.c.l.b16 %v2630
        %v2872 = vunpack.c.h.b16 %v2630
        %v2873 = vunpack.c.l.b16 %v2631
        %v2874 = vunpack.c.h.b16 %v2631
        %v2875 = vunpack.c.l.b16 %v2632
        %v2876 = vunpack.c.h.b16 %v2632
        %v2877 = vunpack.c.l.b16 %v2633
        %v2878 = vunpack.c.h.b16 %v2633
        %v2879 = vunpack.c.l.b16 %v2634
        %v2880 = vunpack.c.h.b16 %v2634
        %v2881 = vunpack.c.l.b16 %v2635
        %v2882 = vunpack.c.h.b16 %v2635
        %v2883 = vunpack.c.l.b16 %v2636
        %v2884 = vunpack.c.h.b16 %v2636
        %v2885 = vunpack.c.l.b16 %v2637
        %v2886 = vunpack.c.h.b16 %v2637
        %v2887 = vunpack.c.l.b16 %v2638
        %v2888 = vunpack.c.h.b16 %v2638
        %v2889 = vpack.c.b16 %v2829, %v2825
        %v2890 = vpack.c.b16 %v2830, %v2826
        %v2891 = vpack.c.b16 %v2831, %v2827
        %v2892 = vpack.c.b16 %v2832, %v2828
        %v2893 = vpack.c.b16 %v2837, %v2833
        %v2894 = vpack.c.b16 %v2838, %v2834
        %v2895 = vpack.c.b16 %v2839, %v2835
        %v2896 = vpack.c.b16 %v2840, %v2836
        %v2897 = vpack.c.b16 %v2845, %v2841
        %v2898 = vpack.c.b16 %v2846, %v2842
        %v2899 = vpack.c.b16 %v2847, %v2843
        %v2900 = vpack.c.b16 %v2848, %v2844
        %v2901 = vpack.c.b16 %v2853, %v2849
        %v2902 = vpack.c.b16 %v2854, %v2850
        %v2903 = vpack.c.b16 %v2855, %v2851
        %v2904 = vpack.c.b16 %v2856, %v2852
        %v2905 = vpack.c.b16 %v2861, %v2857
        %v2906 = vpack.c.b16 %v2862, %v2858
        %v2907 = vpack.c.b16 %v2863, %v2859
        %v2908 = vpack.c.b16 %v2864, %v2860
        %v2909 = vpack.c.b16 %v2869, %v2865
        %v2910 = vpack.c.b16 %v2870, %v2866
        %v2911 = vpack.c.b16 %v2871, %v2867
        %v2912 = vpack.c.b16 %v2872, %v2868
        %v2913 = vpack.c.b16 %v2877, %v2873
        %v2914 = vpack.c.b16 %v2878, %v2874
        %v2915 = vpack.c.b16 %v2879, %v2875
        %v2916 = vpack.c.b16 %v2880, %v2876
        %v2917 = vpack.c.b16 %v2885, %v2881
        %v2918 = vpack.c.b16 %v2886, %v2882
        %v2919 = vpack.c.b16 %v2887, %v2883
        %v2920 = vpack.c.b16 %v2888, %v2884
        %2953 = vmatprep.subr.bf16.mxu0 %v2890
        %2954 = vmatpush1.bf16.msra.mxu0 %v2889
        %2955 = vmatprep.subr.bf16.mxu0 %v2894
        %2956 = vmatpush1.bf16.msra.mxu0 %v2893
        %2957 = vmatprep.subr.bf16.mxu0 %v2898
        %2958 = vmatpush1.bf16.msra.mxu0 %v2897
        %2959 = vmatprep.subr.bf16.mxu0 %v2902
        %2960 = vmatpush1.bf16.msra.mxu0 %v2901
        %2961 = vmatprep.subr.bf16.mxu0 %v2906
        %2962 = vmatpush1.bf16.msra.mxu0 %v2905
        %2963 = vmatprep.subr.bf16.mxu0 %v2910
        %2964 = vmatpush1.bf16.msra.mxu0 %v2909
        %2965 = vmatprep.subr.bf16.mxu0 %v2914
        %2966 = vmatpush1.bf16.msra.mxu0 %v2913
        %2967 = vmatprep.subr.bf16.mxu0 %v2918
        %2968 = vmatpush1.bf16.msra.mxu0 %v2917
        %2969 = vmatprep.subr.bf16.mxu0 0
        %2970 = vmatpush1.bf16.msra.mxu0 0
        %2971 = vmatprep.subr.bf16.mxu0 0
        %2972 = vmatpush1.bf16.msra.mxu0 0
        %2973 = vmatprep.subr.bf16.mxu0 0
        %2974 = vmatpush1.bf16.msra.mxu0 0
        %2975 = vmatprep.subr.bf16.mxu0 0
        %2976 = vmatpush1.bf16.msra.mxu0 0
        %2977 = vmatprep.subr.bf16.mxu0 0
        %2978 = vmatpush1.bf16.msra.mxu0 0
        %2979 = vmatprep.subr.bf16.mxu0 0
        %2980 = vmatpush1.bf16.msra.mxu0 0
        %2981 = vmatprep.subr.bf16.mxu0 0
        %2982 = vmatpush1.bf16.msra.mxu0 0
        %2983 = vmatprep.subr.bf16.mxu0 0
        %2984 = vmatpush1.bf16.msra.mxu0 0
        %2985 = vmatprep.mubr.bf16.mxu0 0
        %2986 = vmatmul.mubr.bf16.gmra.mrb[0].mxu0 %v2770
        %v2987 = vpop.f32.mrb[0].mxu0
        %v2988 = vadd.f32 %v2776, %v2987
        %v2989 = vpop.f32.mrb[0].mxu0
        %v2990 = vadd.f32 %v2780, %v2989
        %v2991 = vpop.f32.mrb[0].mxu0
        %v2992 = vadd.f32 %v2776, %v2991
        %v2993 = vpop.f32.mrb[0].mxu0
        %v2994 = vadd.f32 %v2780, %v2993
        %2995 = vmatprep.mubr.bf16.mxu0 0
        %2996 = vmatmul.mubr.bf16.gmra.mrb[0].mxu0 %v2771
        %v2997 = vpop.f32.mrb[0].mxu0
        %v2998 = vadd.f32 %v2776, %v2997
        %v2999 = vpop.f32.mrb[0].mxu0
        %v3000 = vadd.f32 %v2780, %v2999
        %v3001 = vpop.f32.mrb[0].mxu0
        %v3002 = vadd.f32 %v2776, %v3001
        %v3003 = vpop.f32.mrb[0].mxu0
        %v3004 = vadd.f32 %v2780, %v3003
        %3005 = vdwg.mxu0
        %3006 = vmatprep.subr.bf16.mxu0 %v2892
        %3007 = vmatpush1.bf16.msra.mxu0 %v2891
        %3008 = vmatprep.subr.bf16.mxu0 %v2896
        %3009 = vmatpush1.bf16.msra.mxu0 %v2895
        %3010 = vmatprep.subr.bf16.mxu0 %v2900
        %3011 = vmatpush1.bf16.msra.mxu0 %v2899
        %3012 = vmatprep.subr.bf16.mxu0 %v2904
        %3013 = vmatpush1.bf16.msra.mxu0 %v2903
        %3014 = vmatprep.subr.bf16.mxu0 %v2908
        %3015 = vmatpush1.bf16.msra.mxu0 %v2907
        %3016 = vmatprep.subr.bf16.mxu0 %v2912
        %3017 = vmatpush1.bf16.msra.mxu0 %v2911
        %3018 = vmatprep.subr.bf16.mxu0 %v2916
        %3019 = vmatpush1.bf16.msra.mxu0 %v2915
        %3020 = vmatprep.subr.bf16.mxu0 %v2920
        %3021 = vmatpush1.bf16.msra.mxu0 %v2919
        %3022 = vmatprep.subr.bf16.mxu0 0
        %3023 = vmatpush1.bf16.msra.mxu0 0
        %3024 = vmatprep.subr.bf16.mxu0 0
        %3025 = vmatpush1.bf16.msra.mxu0 0
        %3026 = vmatprep.subr.bf16.mxu0 0
        %3027 = vmatpush1.bf16.msra.mxu0 0
        %3028 = vmatprep.subr.bf16.mxu0 0
        %3029 = vmatpush1.bf16.msra.mxu0 0
        %3030 = vmatprep.subr.bf16.mxu0 0
        %3031 = vmatpush1.bf16.msra.mxu0 0
        %3032 = vmatprep.subr.bf16.mxu0 0
        %3033 = vmatpush1.bf16.msra.mxu0 0
        %3034 = vmatprep.subr.bf16.mxu0 0
        %3035 = vmatpush1.bf16.msra.mxu0 0
        %3036 = vmatprep.subr.bf16.mxu0 0
        %3037 = vmatpush1.bf16.msra.mxu0 0
        %3038 = vmatprep.mubr.bf16.mxu0 0
        %3039 = vmatmul.mubr.bf16.gmra.mrb[0].mxu0 %v2770
        %v3040 = vpop.f32.mrb[0].mxu0
        %v3041 = vadd.f32 %v2784, %v3040
        %v3042 = vpop.f32.mrb[0].mxu0
        %v3043 = vadd.f32 %v2788, %v3042
        %v3044 = vpop.f32.mrb[0].mxu0
        %v3045 = vadd.f32 %v2784, %v3044
        %v3046 = vpop.f32.mrb[0].mxu0
        %v3047 = vadd.f32 %v2788, %v3046
        %3048 = vmatprep.mubr.bf16.mxu0 0
        %3049 = vmatmul.mubr.bf16.gmra.mrb[0].mxu0 %v2771
        %v3050 = vpop.f32.mrb[0].mxu0
        %v3051 = vadd.f32 %v2784, %v3050
        %v3052 = vpop.f32.mrb[0].mxu0
        %v3053 = vadd.f32 %v2788, %v3052
        %v3054 = vpop.f32.mrb[0].mxu0
        %v3055 = vadd.f32 %v2784, %v3054
        %v3056 = vpop.f32.mrb[0].mxu0
        %v3057 = vadd.f32 %v2788, %v3056
        %3058 = vdwg.mxu0
        %v3059 = vmul.f32 %v2988, 0.5
        %v3060 = vmul.f32 %v2990, 0.5
        %v3061 = vmul.f32 %v3041, 0.5
        %v3062 = vmul.f32 %v3043, 0.5
        %v3063 = vmul.f32 %v2992, 0.5
        %v3064 = vmul.f32 %v2994, 0.5
        %v3065 = vmul.f32 %v3045, 0.5
        %v3066 = vmul.f32 %v3047, 0.5
        %v3067 = vmul.f32 %v2998, 0.5
        %v3068 = vmul.f32 %v3000, 0.5
        %v3069 = vmul.f32 %v3051, 0.5
        %v3070 = vmul.f32 %v3053, 0.5
        %v3071 = vmul.f32 %v3002, 0.5
        %v3072 = vmul.f32 %v3004, 0.5
        %v3073 = vmul.f32 %v3055, 0.5
        %v3074 = vmul.f32 %v3057, 0.5
        %v3075 = vtanh.pop %v3059
        %v3076 = vtanh.pop %v3060
        %v3077 = vtanh.pop %v3061
        %v3078 = vtanh.pop %v3062
        %v3079 = vtanh.pop %v3063
        %v3080 = vtanh.pop %v3064
        %v3081 = vtanh.pop %v3065
        %v3082 = vtanh.pop %v3066
        %v3083 = vtanh.pop %v3067
        %v3084 = vtanh.pop %v3068
        %v3085 = vtanh.pop %v3069
        %v3086 = vtanh.pop %v3070
        %v3087 = vtanh.pop %v3071
        %v3088 = vtanh.pop %v3072
        %v3089 = vtanh.pop %v3073
        %v3090 = vtanh.pop %v3074
        %v3091 = vadd.f32 %v3075, 1.0
        %v3092 = vadd.f32 %v3076, 1.0
        %v3093 = vadd.f32 %v3077, 1.0
        %v3094 = vadd.f32 %v3078, 1.0
        %v3095 = vadd.f32 %v3079, 1.0
        %v3096 = vadd.f32 %v3080, 1.0
        %v3097 = vadd.f32 %v3081, 1.0
        %v3098 = vadd.f32 %v3082, 1.0
        %v3099 = vadd.f32 %v3083, 1.0
        %v3100 = vadd.f32 %v3084, 1.0
        %v3101 = vadd.f32 %v3085, 1.0
        %v3102 = vadd.f32 %v3086, 1.0
        %v3103 = vadd.f32 %v3087, 1.0
        %v3104 = vadd.f32 %v3088, 1.0
        %v3105 = vadd.f32 %v3089, 1.0
        %v3106 = vadd.f32 %v3090, 1.0
        %v3107 = vmul.f32 %v3091, 0.5
        %v3108 = vmul.f32 %v3092, 0.5
        %v3109 = vmul.f32 %v3093, 0.5
        %v3110 = vmul.f32 %v3094, 0.5
        %v3111 = vmul.f32 %v3095, 0.5
        %v3112 = vmul.f32 %v3096, 0.5
        %v3113 = vmul.f32 %v3097, 0.5
        %v3114 = vmul.f32 %v3098, 0.5
        %v3115 = vmul.f32 %v3099, 0.5
        %v3116 = vmul.f32 %v3100, 0.5
        %v3117 = vmul.f32 %v3101, 0.5
        %v3118 = vmul.f32 %v3102, 0.5
        %v3119 = vmul.f32 %v3103, 0.5
        %v3120 = vmul.f32 %v3104, 0.5
        %v3121 = vmul.f32 %v3105, 0.5
        %v3122 = vmul.f32 %v3106, 0.5
        %v3123 = vmul.f32 %v2988, %v3107
        %v3124 = vmul.f32 %v2990, %v3108
        %v3125 = vmul.f32 %v3041, %v3109
        %v3126 = vmul.f32 %v3043, %v3110
        %v3127 = vmul.f32 %v2992, %v3111
        %v3128 = vmul.f32 %v2994, %v3112
        %v3129 = vmul.f32 %v3045, %v3113
        %v3130 = vmul.f32 %v3047, %v3114
        %v3131 = vmul.f32 %v2998, %v3115
        %v3132 = vmul.f32 %v3000, %v3116
        %v3133 = vmul.f32 %v3051, %v3117
        %v3134 = vmul.f32 %v3053, %v3118
        %v3135 = vmul.f32 %v3002, %v3119
        %v3136 = vmul.f32 %v3004, %v3120
        %v3137 = vmul.f32 %v3055, %v3121
        %v3138 = vmul.f32 %v3057, %v3122
        %v3139 = vpack.c.bf16 %v3127, %v3123
        %v3140 = vpack.c.bf16 %v3128, %v3124
        %v3141 = vpack.c.bf16 %v3129, %v3125
        %v3142 = vpack.c.bf16 %v3130, %v3126
        %v3143 = vpack.c.bf16 %v3135, %v3131
        %v3144 = vpack.c.bf16 %v3136, %v3132
        %v3145 = vpack.c.bf16 %v3137, %v3133
        %v3146 = vpack.c.bf16 %v3138, %v3134
        %v3148 = vlaneseq
        %v3149 = vshrl.u32 %v3148, 7
        %v3150 = vsub.s32 0, %v3149
        %v3151 = vrot.slane %v2704, %v3150
        %v3217 = vunpack.c.l.b16 %v2640
        %v3218 = vunpack.c.l.b16 %v2641
        %v3219 = vunpack.c.l.b16 %v2642
        %v3220 = vunpack.c.l.b16 %v2643
        %v3221 = vunpack.c.l.b16 %v2644
        %v3222 = vunpack.c.l.b16 %v2645
        %v3223 = vunpack.c.l.b16 %v2646
        %v3224 = vunpack.c.l.b16 %v2647
        %v3225 = vunpack.c.l.b16 %v2648
        %v3226 = vunpack.c.l.b16 %v2649
        %v3227 = vunpack.c.l.b16 %v2650
        %v3228 = vunpack.c.l.b16 %v2651
        %v3229 = vunpack.c.l.b16 %v2652
        %v3230 = vunpack.c.l.b16 %v2653
        %v3231 = vunpack.c.l.b16 %v2654
        %v3232 = vunpack.c.l.b16 %v2655
        %v3233 = vunpack.c.l.b16 %v2656
        %v3234 = vunpack.c.l.b16 %v2657
        %v3235 = vunpack.c.l.b16 %v2658
        %v3236 = vunpack.c.l.b16 %v2659
        %v3237 = vunpack.c.l.b16 %v2660
        %v3238 = vunpack.c.l.b16 %v2661
        %v3239 = vunpack.c.l.b16 %v2662
        %v3240 = vunpack.c.l.b16 %v2663
        %v3241 = vunpack.c.l.b16 %v2664
        %v3242 = vunpack.c.l.b16 %v2665
        %v3243 = vunpack.c.l.b16 %v2666
        %v3244 = vunpack.c.l.b16 %v2667
        %v3245 = vunpack.c.l.b16 %v2668
        %v3246 = vunpack.c.l.b16 %v2669
        %v3247 = vunpack.c.l.b16 %v2670
        %v3248 = vunpack.c.l.b16 %v2671
        %v3249 = vunpack.c.l.b16 %v2672
        %v3250 = vunpack.c.l.b16 %v2673
        %v3251 = vunpack.c.l.b16 %v2674
        %v3252 = vunpack.c.l.b16 %v2675
        %v3253 = vunpack.c.l.b16 %v2676
        %v3254 = vunpack.c.l.b16 %v2677
        %v3255 = vunpack.c.l.b16 %v2678
        %v3256 = vunpack.c.l.b16 %v2679
        %v3257 = vunpack.c.l.b16 %v2680
        %v3258 = vunpack.c.l.b16 %v2681
        %v3259 = vunpack.c.l.b16 %v2682
        %v3260 = vunpack.c.l.b16 %v2683
        %v3261 = vunpack.c.l.b16 %v2684
        %v3262 = vunpack.c.l.b16 %v2685
        %v3263 = vunpack.c.l.b16 %v2686
        %v3264 = vunpack.c.l.b16 %v2687
        %v3265 = vunpack.c.l.b16 %v2688
        %v3266 = vunpack.c.l.b16 %v2689
        %v3267 = vunpack.c.l.b16 %v2690
        %v3268 = vunpack.c.l.b16 %v2691
        %v3269 = vunpack.c.l.b16 %v2692
        %v3270 = vunpack.c.l.b16 %v2693
        %v3271 = vunpack.c.l.b16 %v2694
        %v3272 = vunpack.c.l.b16 %v2695
        %v3273 = vunpack.c.l.b16 %v2696
        %v3274 = vunpack.c.l.b16 %v2697
        %v3275 = vunpack.c.l.b16 %v2698
        %v3276 = vunpack.c.l.b16 %v2699
        %v3277 = vunpack.c.l.b16 %v2700
        %v3278 = vunpack.c.l.b16 %v2701
        %v3279 = vunpack.c.l.b16 %v2702
        %v3280 = vunpack.c.l.b16 %v2703
        %v3281 = vpack.c.b16 %v3218, %v3217
        %v3282 = vpack.c.b16 %v3220, %v3219
        %v3283 = vpack.c.b16 %v3222, %v3221
        %v3284 = vpack.c.b16 %v3224, %v3223
        %v3285 = vpack.c.b16 %v3226, %v3225
        %v3286 = vpack.c.b16 %v3228, %v3227
        %v3287 = vpack.c.b16 %v3230, %v3229
        %v3288 = vpack.c.b16 %v3232, %v3231
        %v3289 = vpack.c.b16 %v3234, %v3233
        %v3290 = vpack.c.b16 %v3236, %v3235
        %v3291 = vpack.c.b16 %v3238, %v3237
        %v3292 = vpack.c.b16 %v3240, %v3239
        %v3293 = vpack.c.b16 %v3242, %v3241
        %v3294 = vpack.c.b16 %v3244, %v3243
        %v3295 = vpack.c.b16 %v3246, %v3245
        %v3296 = vpack.c.b16 %v3248, %v3247
        %v3297 = vpack.c.b16 %v3250, %v3249
        %v3298 = vpack.c.b16 %v3252, %v3251
        %v3299 = vpack.c.b16 %v3254, %v3253
        %v3300 = vpack.c.b16 %v3256, %v3255
        %v3301 = vpack.c.b16 %v3258, %v3257
        %v3302 = vpack.c.b16 %v3260, %v3259
        %v3303 = vpack.c.b16 %v3262, %v3261
        %v3304 = vpack.c.b16 %v3264, %v3263
        %v3305 = vpack.c.b16 %v3266, %v3265
        %v3306 = vpack.c.b16 %v3268, %v3267
        %v3307 = vpack.c.b16 %v3270, %v3269
        %v3308 = vpack.c.b16 %v3272, %v3271
        %v3309 = vpack.c.b16 %v3274, %v3273
        %v3310 = vpack.c.b16 %v3276, %v3275
        %v3311 = vpack.c.b16 %v3278, %v3277
        %v3312 = vpack.c.b16 %v3280, %v3279
        %3345 = vmatprep.subr.bf16.mxu0 0
        %3346 = vmatpush1.bf16.msra.mxu0 %v3281
        %3347 = vmatprep.subr.bf16.mxu0 0
        %3348 = vmatpush1.bf16.msra.mxu0 %v3282
        %3349 = vmatprep.subr.bf16.mxu0 0
        %3350 = vmatpush1.bf16.msra.mxu0 %v3283
        %3351 = vmatprep.subr.bf16.mxu0 0
        %3352 = vmatpush1.bf16.msra.mxu0 %v3284
        %3353 = vmatprep.subr.bf16.mxu0 0
        %3354 = vmatpush1.bf16.msra.mxu0 %v3285
        %3355 = vmatprep.subr.bf16.mxu0 0
        %3356 = vmatpush1.bf16.msra.mxu0 %v3286
        %3357 = vmatprep.subr.bf16.mxu0 0
        %3358 = vmatpush1.bf16.msra.mxu0 %v3287
        %3359 = vmatprep.subr.bf16.mxu0 0
        %3360 = vmatpush1.bf16.msra.mxu0 %v3288
        %3361 = vmatprep.subr.bf16.mxu0 0
        %3362 = vmatpush1.bf16.msra.mxu0 %v3289
        %3363 = vmatprep.subr.bf16.mxu0 0
        %3364 = vmatpush1.bf16.msra.mxu0 %v3290
        %3365 = vmatprep.subr.bf16.mxu0 0
        %3366 = vmatpush1.bf16.msra.mxu0 %v3291
        %3367 = vmatprep.subr.bf16.mxu0 0
        %3368 = vmatpush1.bf16.msra.mxu0 %v3292
        %3369 = vmatprep.subr.bf16.mxu0 0
        %3370 = vmatpush1.bf16.msra.mxu0 %v3293
        %3371 = vmatprep.subr.bf16.mxu0 0
        %3372 = vmatpush1.bf16.msra.mxu0 %v3294
        %3373 = vmatprep.subr.bf16.mxu0 0
        %3374 = vmatpush1.bf16.msra.mxu0 %v3295
        %3375 = vmatprep.subr.bf16.mxu0 0
        %3376 = vmatpush1.bf16.msra.mxu0 %v3296
        %3377 = vmatprep.mubr.bf16.mxu0 %v3140
        %3378 = vmatmul.mubr.bf16.gmra.mrb[0].mxu0 %v3139
        %v3379 = vpop.f32.mrb[0].mxu0
        %v3380 = vadd.f32 %v3151, %v3379
        %v3381 = vpop.f32.mrb[0].mxu0
        %v3382 = vpop.f32.mrb[0].mxu0
        %v3383 = vadd.f32 %v3151, %v3382
        %v3384 = vpop.f32.mrb[0].mxu0
        %3385 = vmatprep.mubr.bf16.mxu0 %v3144
        %3386 = vmatmul.mubr.bf16.gmra.mrb[0].mxu0 %v3143
        %v3387 = vpop.f32.mrb[0].mxu0
        %v3388 = vadd.f32 %v3151, %v3387
        %v3389 = vpop.f32.mrb[0].mxu0
        %v3390 = vpop.f32.mrb[0].mxu0
        %v3391 = vadd.f32 %v3151, %v3390
        %v3392 = vpop.f32.mrb[0].mxu0
        %3393 = vdwg.mxu0
        %3394 = vmatprep.subr.bf16.mxu0 0
        %3395 = vmatpush1.bf16.msra.mxu0 %v3297
        %3396 = vmatprep.subr.bf16.mxu0 0
        %3397 = vmatpush1.bf16.msra.mxu0 %v3298
        %3398 = vmatprep.subr.bf16.mxu0 0
        %3399 = vmatpush1.bf16.msra.mxu0 %v3299
        %3400 = vmatprep.subr.bf16.mxu0 0
        %3401 = vmatpush1.bf16.msra.mxu0 %v3300
        %3402 = vmatprep.subr.bf16.mxu0 0
        %3403 = vmatpush1.bf16.msra.mxu0 %v3301
        %3404 = vmatprep.subr.bf16.mxu0 0
        %3405 = vmatpush1.bf16.msra.mxu0 %v3302
        %3406 = vmatprep.subr.bf16.mxu0 0
        %3407 = vmatpush1.bf16.msra.mxu0 %v3303
        %3408 = vmatprep.subr.bf16.mxu0 0
        %3409 = vmatpush1.bf16.msra.mxu0 %v3304
        %3410 = vmatprep.subr.bf16.mxu0 0
        %3411 = vmatpush1.bf16.msra.mxu0 %v3305
        %3412 = vmatprep.subr.bf16.mxu0 0
        %3413 = vmatpush1.bf16.msra.mxu0 %v3306
        %3414 = vmatprep.subr.bf16.mxu0 0
        %3415 = vmatpush1.bf16.msra.mxu0 %v3307
        %3416 = vmatprep.subr.bf16.mxu0 0
        %3417 = vmatpush1.bf16.msra.mxu0 %v3308
        %3418 = vmatprep.subr.bf16.mxu0 0
        %3419 = vmatpush1.bf16.msra.mxu0 %v3309
        %3420 = vmatprep.subr.bf16.mxu0 0
        %3421 = vmatpush1.bf16.msra.mxu0 %v3310
        %3422 = vmatprep.subr.bf16.mxu0 0
        %3423 = vmatpush1.bf16.msra.mxu0 %v3311
        %3424 = vmatprep.subr.bf16.mxu0 0
        %3425 = vmatpush1.bf16.msra.mxu0 %v3312
        %3426 = vmatprep.mubr.bf16.mxu0 %v3142
        %3427 = vmatmul.mubr.bf16.gmra.mrb[0].mxu0 %v3141
        %v3428 = vpop.f32.mrb[0].mxu0
        %v3429 = vadd.f32 %v3380, %v3428
        %v3430 = vpop.f32.mrb[0].mxu0
        %v3431 = vpop.f32.mrb[0].mxu0
        %v3432 = vadd.f32 %v3383, %v3431
        %v3433 = vpop.f32.mrb[0].mxu0
        %3434 = vmatprep.mubr.bf16.mxu0 %v3146
        %3435 = vmatmul.mubr.bf16.gmra.mrb[0].mxu0 %v3145
        %v3436 = vpop.f32.mrb[0].mxu0
        %v3437 = vadd.f32 %v3388, %v3436
        %v3438 = vpop.f32.mrb[0].mxu0
        %v3439 = vpop.f32.mrb[0].mxu0
        %v3440 = vadd.f32 %v3391, %v3439
        %v3441 = vpop.f32.mrb[0].mxu0
        %3442 = vdwg.mxu0
        %v3443 = vmul.f32 %v3429, 0.5
        %v3444 = vmul.f32 %v3432, 0.5
        %v3445 = vmul.f32 %v3437, 0.5
        %v3446 = vmul.f32 %v3440, 0.5
        %v3447 = vadd.f32 %v2601, %v3443
        %v3448 = vadd.f32 %v2602, %v3444
        %v3449 = vadd.f32 %v2603, %v3445
        %v3450 = vadd.f32 %v2604, %v3446
        %v3451 = vld [vmem:[#allocation10] sm:$0x1]
        %v3452 = vld [vmem:[#allocation10 + $0x1] sm:$0x1]
        %v3453 = vld [vmem:[%s2098] sm:$0x1]
        %v3454 = vld [vmem:[%s2106] sm:$0x1]
        %v3455 = vld [vmem:[%s2115] sm:$0xf]
        %v3456 = vld [vmem:[%s2115 + $0x4] sm:$0xf]
        %v3457 = vld [vmem:[%s2115 + $0x8] sm:$0xf]
        %v3458 = vld [vmem:[%s2115 + $0xc] sm:$0xf]
        %v3459 = vld [vmem:[%s2115 + $0x10] sm:$0xf]
        %v3460 = vld [vmem:[%s2115 + $0x14] sm:$0xf]
        %v3461 = vld [vmem:[%s2115 + $0x18] sm:$0xf]
        %v3462 = vld [vmem:[%s2115 + $0x1c] sm:$0xf]
        %v3463 = vld [vmem:[%s2115 + $0x20] sm:$0xf]
        %v3464 = vld [vmem:[%s2115 + $0x24] sm:$0xf]
        %v3465 = vld [vmem:[%s2115 + $0x28] sm:$0xf]
        %v3466 = vld [vmem:[%s2115 + $0x2c] sm:$0xf]
        %v3467 = vld [vmem:[%s2115 + $0x30] sm:$0xf]
        %v3468 = vld [vmem:[%s2115 + $0x34] sm:$0xf]
        %v3469 = vld [vmem:[%s2115 + $0x38] sm:$0xf]
        %v3470 = vld [vmem:[%s2115 + $0x3c] sm:$0xf]
        %v3471 = vld [vmem:[%s2123] sm:$0x1]
        %v3472 = vld [vmem:[%s2132] sm:$0xf]
        %v3473 = vld [vmem:[%s2132 + $0x4] sm:$0xf]
        %v3474 = vld [vmem:[%s2132 + $0x8] sm:$0xf]
        %v3475 = vld [vmem:[%s2132 + $0xc] sm:$0xf]
        %v3476 = vld [vmem:[%s2132 + $0x10] sm:$0xf]
        %v3477 = vld [vmem:[%s2132 + $0x14] sm:$0xf]
        %v3478 = vld [vmem:[%s2132 + $0x18] sm:$0xf]
        %v3479 = vld [vmem:[%s2132 + $0x1c] sm:$0xf]
        %v3480 = vld [vmem:[%s2132 + $0x20] sm:$0xf]
        %v3481 = vld [vmem:[%s2132 + $0x24] sm:$0xf]
        %v3482 = vld [vmem:[%s2132 + $0x28] sm:$0xf]
        %v3483 = vld [vmem:[%s2132 + $0x2c] sm:$0xf]
        %v3484 = vld [vmem:[%s2132 + $0x30] sm:$0xf]
        %v3485 = vld [vmem:[%s2132 + $0x34] sm:$0xf]
        %v3486 = vld [vmem:[%s2132 + $0x38] sm:$0xf]
        %v3487 = vld [vmem:[%s2132 + $0x3c] sm:$0xf]
        %v3488 = vld [vmem:[%s2140] sm:$0x1]
        %v3489 = vld [vmem:[%s2149] sm:$0xf]
        %v3490 = vld [vmem:[%s2149 + $0x4] sm:$0xf]
        %v3491 = vld [vmem:[%s2149 + $0x8] sm:$0xf]
        %v3492 = vld [vmem:[%s2149 + $0xc] sm:$0xf]
        %v3493 = vld [vmem:[%s2149 + $0x10] sm:$0xf]
        %v3494 = vld [vmem:[%s2149 + $0x14] sm:$0xf]
        %v3495 = vld [vmem:[%s2149 + $0x18] sm:$0xf]
        %v3496 = vld [vmem:[%s2149 + $0x1c] sm:$0xf]
        %v3497 = vld [vmem:[%s2149 + $0x20] sm:$0xf]
        %v3498 = vld [vmem:[%s2149 + $0x24] sm:$0xf]
        %v3499 = vld [vmem:[%s2149 + $0x28] sm:$0xf]
        %v3500 = vld [vmem:[%s2149 + $0x2c] sm:$0xf]
        %v3501 = vld [vmem:[%s2149 + $0x30] sm:$0xf]
        %v3502 = vld [vmem:[%s2149 + $0x34] sm:$0xf]
        %v3503 = vld [vmem:[%s2149 + $0x38] sm:$0xf]
        %v3504 = vld [vmem:[%s2149 + $0x3c] sm:$0xf]
        %v3505 = vld [vmem:[%s2157] sm:$0x1]
        %v3506 = vld [vmem:[%s2166] sm:$0xf]
        %v3507 = vld [vmem:[%s2166 + $0x4] sm:$0xf]
        %v3508 = vld [vmem:[%s2166 + $0x8] sm:$0xf]
        %v3509 = vld [vmem:[%s2166 + $0xc] sm:$0xf]
        %v3510 = vld [vmem:[%s2166 + $0x10] sm:$0xf]
        %v3511 = vld [vmem:[%s2166 + $0x14] sm:$0xf]
        %v3512 = vld [vmem:[%s2166 + $0x18] sm:$0xf]
        %v3513 = vld [vmem:[%s2166 + $0x1c] sm:$0xf]
        %v3514 = vld [vmem:[%s2166 + $0x20] sm:$0xf]
        %v3515 = vld [vmem:[%s2166 + $0x24] sm:$0xf]
        %v3516 = vld [vmem:[%s2166 + $0x28] sm:$0xf]
        %v3517 = vld [vmem:[%s2166 + $0x2c] sm:$0xf]
        %v3518 = vld [vmem:[%s2166 + $0x30] sm:$0xf]
        %v3519 = vld [vmem:[%s2166 + $0x34] sm:$0xf]
        %v3520 = vld [vmem:[%s2166 + $0x38] sm:$0xf]
        %v3521 = vld [vmem:[%s2166 + $0x3c] sm:$0xf]
        %v3522 = vld [vmem:[%s2174] sm:$0x1]
        %3523 = vadd.xlane.f32.xlu0 %v3447
        %v3524 = vpop.xlane.xlu0 %3523
        %3525 = vadd.xlane.f32.xlu0 %v3448
        %v3526 = vpop.xlane.xlu0 %3525
        %3527 = vadd.xlane.f32.xlu0 %v3449
        %v3528 = vpop.xlane.xlu0 %3527
        %3529 = vadd.xlane.f32.xlu0 %v3450
        %v3530 = vpop.xlane.xlu0 %3529
        %v3531 = vmul.f32 %v3524, %v2713
        %v3532 = vmul.f32 %v3526, %v2713
        %v3533 = vmul.f32 %v3528, %v2713
        %v3534 = vmul.f32 %v3530, %v2713
        %v3535 = vsub.f32 %v3447, %v3531
        %v3536 = vsub.f32 %v3448, %v3532
        %v3537 = vsub.f32 %v3449, %v3533
        %v3538 = vsub.f32 %v3450, %v3534
        %v3539 = vmul.f32 %v3535, %v3535
        %v3540 = vmul.f32 %v3536, %v3536
        %v3541 = vmul.f32 %v3537, %v3537
        %v3542 = vmul.f32 %v3538, %v3538
        %3543 = vadd.xlane.f32.xlu0 %v3539
        %v3544 = vpop.xlane.xlu0 %3543
        %3545 = vadd.xlane.f32.xlu0 %v3540
        %v3546 = vpop.xlane.xlu0 %3545
        %3547 = vadd.xlane.f32.xlu0 %v3541
        %v3548 = vpop.xlane.xlu0 %3547
        %3549 = vadd.xlane.f32.xlu0 %v3542
        %v3550 = vpop.xlane.xlu0 %3549
        %v3551 = vmul.f32 %v3544, %v2713
        %v3552 = vmul.f32 %v3546, %v2713
        %v3553 = vmul.f32 %v3548, %v2713
        %v3554 = vmul.f32 %v3550, %v2713
        %v3555 = vadd.f32 %v3551, 1e-05
        %v3556 = vadd.f32 %v3552, 1e-05
        %v3557 = vadd.f32 %v3553, 1e-05
        %v3558 = vadd.f32 %v3554, 1e-05
        %v3559 = vrsqrt.pop %v3555
        %v3560 = vrsqrt.pop %v3556
        %v3561 = vrsqrt.pop %v3557
        %v3562 = vrsqrt.pop %v3558
        %v3563 = vmul.f32 %v3535, %v3559
        %v3564 = vmul.f32 %v3536, %v3560
        %v3565 = vmul.f32 %v3537, %v3561
        %v3566 = vmul.f32 %v3538, %v3562
        %v3568 = vlaneseq
        %v3569 = vshrl.u32 %v3568, 7
        %v3570 = vsub.s32 0, %v3569
        %v3571 = vrot.slane %v3453, %v3570
        %v3573 = vmul.f32 %v3563, %v3571
        %v3574 = vmul.f32 %v3564, %v3571
        %v3575 = vmul.f32 %v3565, %v3571
        %v3576 = vmul.f32 %v3566, %v3571
        %v3578 = vlaneseq
        %v3579 = vshrl.u32 %v3578, 7
        %v3580 = vsub.s32 0, %v3579
        %v3581 = vrot.slane %v3454, %v3580
        %v3583 = vadd.f32 %v3573, %v3581
        %v3584 = vadd.f32 %v3574, %v3581
        %v3585 = vadd.f32 %v3575, %v3581
        %v3586 = vadd.f32 %v3576, %v3581
        %v3587 = vpack.c.bf16 %v3584, %v3583
        %v3588 = vpack.c.bf16 %v3586, %v3585
        %v3590 = vlaneseq
        %v3591 = vshrl.u32 %v3590, 7
        %v3592 = vsub.s32 0, %v3591
        %v3593 = vrot.slane %v3471, %v3592
        %v3611 = vunpack.c.l.b16 %v3455
        %v3612 = vunpack.c.l.b16 %v3456
        %v3613 = vunpack.c.l.b16 %v3457
        %v3614 = vunpack.c.l.b16 %v3458
        %v3615 = vunpack.c.l.b16 %v3459
        %v3616 = vunpack.c.l.b16 %v3460
        %v3617 = vunpack.c.l.b16 %v3461
        %v3618 = vunpack.c.l.b16 %v3462
        %v3619 = vunpack.c.l.b16 %v3463
        %v3620 = vunpack.c.l.b16 %v3464
        %v3621 = vunpack.c.l.b16 %v3465
        %v3622 = vunpack.c.l.b16 %v3466
        %v3623 = vunpack.c.l.b16 %v3467
        %v3624 = vunpack.c.l.b16 %v3468
        %v3625 = vunpack.c.l.b16 %v3469
        %v3626 = vunpack.c.l.b16 %v3470
        %v3627 = vpack.c.b16 %v3612, %v3611
        %v3628 = vpack.c.b16 %v3614, %v3613
        %v3629 = vpack.c.b16 %v3616, %v3615
        %v3630 = vpack.c.b16 %v3618, %v3617
        %v3631 = vpack.c.b16 %v3620, %v3619
        %v3632 = vpack.c.b16 %v3622, %v3621
        %v3633 = vpack.c.b16 %v3624, %v3623
        %v3634 = vpack.c.b16 %v3626, %v3625
        %3643 = vmatprep.subr.bf16.mxu0 0
        %3644 = vmatpush1.bf16.msra.mxu0 %v3627
        %3645 = vmatprep.subr.bf16.mxu0 0
        %3646 = vmatpush1.bf16.msra.mxu0 %v3628
        %3647 = vmatprep.subr.bf16.mxu0 0
        %3648 = vmatpush1.bf16.msra.mxu0 %v3629
        %3649 = vmatprep.subr.bf16.mxu0 0
        %3650 = vmatpush1.bf16.msra.mxu0 %v3630
        %3651 = vmatprep.subr.bf16.mxu0 0
        %3652 = vmatpush1.bf16.msra.mxu0 %v3631
        %3653 = vmatprep.subr.bf16.mxu0 0
        %3654 = vmatpush1.bf16.msra.mxu0 %v3632
        %3655 = vmatprep.subr.bf16.mxu0 0
        %3656 = vmatpush1.bf16.msra.mxu0 %v3633
        %3657 = vmatprep.subr.bf16.mxu0 0
        %3658 = vmatpush1.bf16.msra.mxu0 %v3634
        %3659 = vmatprep.subr.bf16.mxu0 0
        %3660 = vmatpush1.bf16.msra.mxu0 0
        %3661 = vmatprep.subr.bf16.mxu0 0
        %3662 = vmatpush1.bf16.msra.mxu0 0
        %3663 = vmatprep.subr.bf16.mxu0 0
        %3664 = vmatpush1.bf16.msra.mxu0 0
        %3665 = vmatprep.subr.bf16.mxu0 0
        %3666 = vmatpush1.bf16.msra.mxu0 0
        %3667 = vmatprep.subr.bf16.mxu0 0
        %3668 = vmatpush1.bf16.msra.mxu0 0
        %3669 = vmatprep.subr.bf16.mxu0 0
        %3670 = vmatpush1.bf16.msra.mxu0 0
        %3671 = vmatprep.subr.bf16.mxu0 0
        %3672 = vmatpush1.bf16.msra.mxu0 0
        %3673 = vmatprep.subr.bf16.mxu0 0
        %3674 = vmatpush1.bf16.msra.mxu0 0
        %3675 = vmatprep.mubr.bf16.mxu0 0
        %3676 = vmatmul.mubr.bf16.gmra.mrb[0].mxu0 %v3587
        %v3677 = vpop.f32.mrb[0].mxu0
        %v3678 = vadd.f32 %v3593, %v3677
        %v3679 = vpop.f32.mrb[0].mxu0
        %v3680 = vpop.f32.mrb[0].mxu0
        %v3681 = vadd.f32 %v3593, %v3680
        %v3682 = vpop.f32.mrb[0].mxu0
        %3683 = vmatprep.mubr.bf16.mxu0 0
        %3684 = vmatmul.mubr.bf16.gmra.mrb[0].mxu0 %v3588
        %v3685 = vpop.f32.mrb[0].mxu0
        %v3686 = vadd.f32 %v3593, %v3685
        %v3687 = vpop.f32.mrb[0].mxu0
        %v3688 = vpop.f32.mrb[0].mxu0
        %v3689 = vadd.f32 %v3593, %v3688
        %v3690 = vpop.f32.mrb[0].mxu0
        %3691 = vdwg.mxu0
        %v3693 = vlaneseq
        %v3694 = vshrl.u32 %v3693, 7
        %v3695 = vsub.s32 0, %v3694
        %v3696 = vrot.slane %v3488, %v3695
        %v3714 = vunpack.c.l.b16 %v3472
        %v3715 = vunpack.c.l.b16 %v3473
        %v3716 = vunpack.c.l.b16 %v3474
        %v3717 = vunpack.c.l.b16 %v3475
        %v3718 = vunpack.c.l.b16 %v3476
        %v3719 = vunpack.c.l.b16 %v3477
        %v3720 = vunpack.c.l.b16 %v3478
        %v3721 = vunpack.c.l.b16 %v3479
        %v3722 = vunpack.c.l.b16 %v3480
        %v3723 = vunpack.c.l.b16 %v3481
        %v3724 = vunpack.c.l.b16 %v3482
        %v3725 = vunpack.c.l.b16 %v3483
        %v3726 = vunpack.c.l.b16 %v3484
        %v3727 = vunpack.c.l.b16 %v3485
        %v3728 = vunpack.c.l.b16 %v3486
        %v3729 = vunpack.c.l.b16 %v3487
        %v3730 = vpack.c.b16 %v3715, %v3714
        %v3731 = vpack.c.b16 %v3717, %v3716
        %v3732 = vpack.c.b16 %v3719, %v3718
        %v3733 = vpack.c.b16 %v3721, %v3720
        %v3734 = vpack.c.b16 %v3723, %v3722
        %v3735 = vpack.c.b16 %v3725, %v3724
        %v3736 = vpack.c.b16 %v3727, %v3726
        %v3737 = vpack.c.b16 %v3729, %v3728
        %3746 = vmatprep.subr.bf16.mxu0 0
        %3747 = vmatpush1.bf16.msra.mxu0 %v3730
        %3748 = vmatprep.subr.bf16.mxu0 0
        %3749 = vmatpush1.bf16.msra.mxu0 %v3731
        %3750 = vmatprep.subr.bf16.mxu0 0
        %3751 = vmatpush1.bf16.msra.mxu0 %v3732
        %3752 = vmatprep.subr.bf16.mxu0 0
        %3753 = vmatpush1.bf16.msra.mxu0 %v3733
        %3754 = vmatprep.subr.bf16.mxu0 0
        %3755 = vmatpush1.bf16.msra.mxu0 %v3734
        %3756 = vmatprep.subr.bf16.mxu0 0
        %3757 = vmatpush1.bf16.msra.mxu0 %v3735
        %3758 = vmatprep.subr.bf16.mxu0 0
        %3759 = vmatpush1.bf16.msra.mxu0 %v3736
        %3760 = vmatprep.subr.bf16.mxu0 0
        %3761 = vmatpush1.bf16.msra.mxu0 %v3737
        %3762 = vmatprep.subr.bf16.mxu0 0
        %3763 = vmatpush1.bf16.msra.mxu0 0
        %3764 = vmatprep.subr.bf16.mxu0 0
        %3765 = vmatpush1.bf16.msra.mxu0 0
        %3766 = vmatprep.subr.bf16.mxu0 0
        %3767 = vmatpush1.bf16.msra.mxu0 0
        %3768 = vmatprep.subr.bf16.mxu0 0
        %3769 = vmatpush1.bf16.msra.mxu0 0
        %3770 = vmatprep.subr.bf16.mxu0 0
        %3771 = vmatpush1.bf16.msra.mxu0 0
        %3772 = vmatprep.subr.bf16.mxu0 0
        %3773 = vmatpush1.bf16.msra.mxu0 0
        %3774 = vmatprep.subr.bf16.mxu0 0
        %3775 = vmatpush1.bf16.msra.mxu0 0
        %3776 = vmatprep.subr.bf16.mxu0 0
        %3777 = vmatpush1.bf16.msra.mxu0 0
        %3778 = vmatprep.mubr.bf16.mxu0 0
        %3779 = vmatmul.mubr.bf16.gmra.mrb[0].mxu0 %v3587
        %v3780 = vpop.f32.mrb[0].mxu0
        %v3781 = vadd.f32 %v3696, %v3780
        %v3782 = vpop.f32.mrb[0].mxu0
        %v3783 = vpop.f32.mrb[0].mxu0
        %v3784 = vadd.f32 %v3696, %v3783
        %v3785 = vpop.f32.mrb[0].mxu0
        %3786 = vmatprep.mubr.bf16.mxu0 0
        %3787 = vmatmul.mubr.bf16.gmra.mrb[0].mxu0 %v3588
        %v3788 = vpop.f32.mrb[0].mxu0
        %v3789 = vadd.f32 %v3696, %v3788
        %v3790 = vpop.f32.mrb[0].mxu0
        %v3791 = vpop.f32.mrb[0].mxu0
        %v3792 = vadd.f32 %v3696, %v3791
        %v3793 = vpop.f32.mrb[0].mxu0
        %3794 = vdwg.mxu0
        %v3796 = vlaneseq
        %v3797 = vshrl.u32 %v3796, 7
        %v3798 = vsub.s32 0, %v3797
        %v3799 = vrot.slane %v3505, %v3798
        %v3817 = vunpack.c.l.b16 %v3489
        %v3818 = vunpack.c.l.b16 %v3490
        %v3819 = vunpack.c.l.b16 %v3491
        %v3820 = vunpack.c.l.b16 %v3492
        %v3821 = vunpack.c.l.b16 %v3493
        %v3822 = vunpack.c.l.b16 %v3494
        %v3823 = vunpack.c.l.b16 %v3495
        %v3824 = vunpack.c.l.b16 %v3496
        %v3825 = vunpack.c.l.b16 %v3497
        %v3826 = vunpack.c.l.b16 %v3498
        %v3827 = vunpack.c.l.b16 %v3499
        %v3828 = vunpack.c.l.b16 %v3500
        %v3829 = vunpack.c.l.b16 %v3501
        %v3830 = vunpack.c.l.b16 %v3502
        %v3831 = vunpack.c.l.b16 %v3503
        %v3832 = vunpack.c.l.b16 %v3504
        %v3833 = vpack.c.b16 %v3818, %v3817
        %v3834 = vpack.c.b16 %v3820, %v3819
        %v3835 = vpack.c.b16 %v3822, %v3821
        %v3836 = vpack.c.b16 %v3824, %v3823
        %v3837 = vpack.c.b16 %v3826, %v3825
        %v3838 = vpack.c.b16 %v3828, %v3827
        %v3839 = vpack.c.b16 %v3830, %v3829
        %v3840 = vpack.c.b16 %v3832, %v3831
        %3849 = vmatprep.subr.bf16.mxu0 0
        %3850 = vmatpush1.bf16.msra.mxu0 %v3833
        %3851 = vmatprep.subr.bf16.mxu0 0
        %3852 = vmatpush1.bf16.msra.mxu0 %v3834
        %3853 = vmatprep.subr.bf16.mxu0 0
        %3854 = vmatpush1.bf16.msra.mxu0 %v3835
        %3855 = vmatprep.subr.bf16.mxu0 0
        %3856 = vmatpush1.bf16.msra.mxu0 %v3836
        %3857 = vmatprep.subr.bf16.mxu0 0
        %3858 = vmatpush1.bf16.msra.mxu0 %v3837
        %3859 = vmatprep.subr.bf16.mxu0 0
        %3860 = vmatpush1.bf16.msra.mxu0 %v3838
        %3861 = vmatprep.subr.bf16.mxu0 0
        %3862 = vmatpush1.bf16.msra.mxu0 %v3839
        %3863 = vmatprep.subr.bf16.mxu0 0
        %3864 = vmatpush1.bf16.msra.mxu0 %v3840
        %3865 = vmatprep.subr.bf16.mxu0 0
        %3866 = vmatpush1.bf16.msra.mxu0 0
        %3867 = vmatprep.subr.bf16.mxu0 0
        %3868 = vmatpush1.bf16.msra.mxu0 0
        %3869 = vmatprep.subr.bf16.mxu0 0
        %3870 = vmatpush1.bf16.msra.mxu0 0
        %3871 = vmatprep.subr.bf16.mxu0 0
        %3872 = vmatpush1.bf16.msra.mxu0 0
        %3873 = vmatprep.subr.bf16.mxu0 0
        %3874 = vmatpush1.bf16.msra.mxu0 0
        %3875 = vmatprep.subr.bf16.mxu0 0
        %3876 = vmatpush1.bf16.msra.mxu0 0
        %3877 = vmatprep.subr.bf16.mxu0 0
        %3878 = vmatpush1.bf16.msra.mxu0 0
        %3879 = vmatprep.subr.bf16.mxu0 0
        %3880 = vmatpush1.bf16.msra.mxu0 0
        %3881 = vmatprep.mubr.bf16.mxu0 0
        %3882 = vmatmul.mubr.bf16.gmra.mrb[0].mxu0 %v3587
        %v3883 = vpop.f32.mrb[0].mxu0
        %v3884 = vadd.f32 %v3799, %v3883
        %v3885 = vpop.f32.mrb[0].mxu0
        %v3886 = vpop.f32.mrb[0].mxu0
        %v3887 = vadd.f32 %v3799, %v3886
        %v3888 = vpop.f32.mrb[0].mxu0
        %3889 = vmatprep.mubr.bf16.mxu0 0
        %3890 = vmatmul.mubr.bf16.gmra.mrb[0].mxu0 %v3588
        %v3891 = vpop.f32.mrb[0].mxu0
        %v3892 = vadd.f32 %v3799, %v3891
        %v3893 = vpop.f32.mrb[0].mxu0
        %v3894 = vpop.f32.mrb[0].mxu0
        %v3895 = vadd.f32 %v3799, %v3894
        %v3896 = vpop.f32.mrb[0].mxu0
        %3897 = vdwg.mxu0
        %3902 = vrot.lane.b32.xlu0 %v3678, 96
        %v3903 = vpop.permute.xlu0 %3902
        %3904 = vrot.lane.b32.xlu0 %v3681, 96
        %v3905 = vpop.permute.xlu0 %3904
        %3906 = vrot.lane.b32.xlu0 %v3686, 96
        %v3907 = vpop.permute.xlu0 %3906
        %3908 = vrot.lane.b32.xlu0 %v3689, 96
        %v3909 = vpop.permute.xlu0 %3908
        %3914 = vrot.lane.b32.xlu0 %v3678, 64
        %v3915 = vpop.permute.xlu0 %3914
        %3916 = vrot.lane.b32.xlu0 %v3681, 64
        %v3917 = vpop.permute.xlu0 %3916
        %3918 = vrot.lane.b32.xlu0 %v3686, 64
        %v3919 = vpop.permute.xlu0 %3918
        %3920 = vrot.lane.b32.xlu0 %v3689, 64
        %v3921 = vpop.permute.xlu0 %3920
        %3926 = vrot.lane.b32.xlu0 %v3678, 32
        %v3927 = vpop.permute.xlu0 %3926
        %3928 = vrot.lane.b32.xlu0 %v3681, 32
        %v3929 = vpop.permute.xlu0 %3928
        %3930 = vrot.lane.b32.xlu0 %v3686, 32
        %v3931 = vpop.permute.xlu0 %3930
        %3932 = vrot.lane.b32.xlu0 %v3689, 32
        %v3933 = vpop.permute.xlu0 %3932
        %v3938 = vpack.c.bf16 %v3681, %v3678
        %v3939 = vpack.c.bf16 %v3689, %v3686
        %v3940 = vpack.c.bf16 %v3905, %v3903
        %v3941 = vpack.c.bf16 %v3909, %v3907
        %v3942 = vpack.c.bf16 %v3917, %v3915
        %v3943 = vpack.c.bf16 %v3921, %v3919
        %v3944 = vpack.c.bf16 %v3929, %v3927
        %v3945 = vpack.c.bf16 %v3933, %v3931
        %3950 = vrot.lane.b32.xlu0 %v3781, 96
        %v3951 = vpop.permute.xlu0 %3950
        %3952 = vrot.lane.b32.xlu0 %v3784, 96
        %v3953 = vpop.permute.xlu0 %3952
        %3954 = vrot.lane.b32.xlu0 %v3789, 96
        %v3955 = vpop.permute.xlu0 %3954
        %3956 = vrot.lane.b32.xlu0 %v3792, 96
        %v3957 = vpop.permute.xlu0 %3956
        %3962 = vrot.lane.b32.xlu0 %v3781, 64
        %v3963 = vpop.permute.xlu0 %3962
        %3964 = vrot.lane.b32.xlu0 %v3784, 64
        %v3965 = vpop.permute.xlu0 %3964
        %3966 = vrot.lane.b32.xlu0 %v3789, 64
        %v3967 = vpop.permute.xlu0 %3966
        %3968 = vrot.lane.b32.xlu0 %v3792, 64
        %v3969 = vpop.permute.xlu0 %3968
        %3974 = vrot.lane.b32.xlu0 %v3781, 32
        %v3975 = vpop.permute.xlu0 %3974
        %3976 = vrot.lane.b32.xlu0 %v3784, 32
        %v3977 = vpop.permute.xlu0 %3976
        %3978 = vrot.lane.b32.xlu0 %v3789, 32
        %v3979 = vpop.permute.xlu0 %3978
        %3980 = vrot.lane.b32.xlu0 %v3792, 32
        %v3981 = vpop.permute.xlu0 %3980
        %v3986 = vpack.c.bf16 %v3784, %v3781
        %v3987 = vpack.c.bf16 %v3792, %v3789
        %v3988 = vpack.c.bf16 %v3953, %v3951
        %v3989 = vpack.c.bf16 %v3957, %v3955
        %v3990 = vpack.c.bf16 %v3965, %v3963
        %v3991 = vpack.c.bf16 %v3969, %v3967
        %v3992 = vpack.c.bf16 %v3977, %v3975
        %v3993 = vpack.c.bf16 %v3981, %v3979
        %3998 = vrot.lane.b32.xlu0 %v3884, 96
        %v3999 = vpop.permute.xlu0 %3998
        %4000 = vrot.lane.b32.xlu0 %v3887, 96
        %v4001 = vpop.permute.xlu0 %4000
        %4002 = vrot.lane.b32.xlu0 %v3892, 96
        %v4003 = vpop.permute.xlu0 %4002
        %4004 = vrot.lane.b32.xlu0 %v3895, 96
        %v4005 = vpop.permute.xlu0 %4004
        %4010 = vrot.lane.b32.xlu0 %v3884, 64
        %v4011 = vpop.permute.xlu0 %4010
        %4012 = vrot.lane.b32.xlu0 %v3887, 64
        %v4013 = vpop.permute.xlu0 %4012
        %4014 = vrot.lane.b32.xlu0 %v3892, 64
        %v4015 = vpop.permute.xlu0 %4014
        %4016 = vrot.lane.b32.xlu0 %v3895, 64
        %v4017 = vpop.permute.xlu0 %4016
        %4022 = vrot.lane.b32.xlu0 %v3884, 32
        %v4023 = vpop.permute.xlu0 %4022
        %4024 = vrot.lane.b32.xlu0 %v3887, 32
        %v4025 = vpop.permute.xlu0 %4024
        %4026 = vrot.lane.b32.xlu0 %v3892, 32
        %v4027 = vpop.permute.xlu0 %4026
        %4028 = vrot.lane.b32.xlu0 %v3895, 32
        %v4029 = vpop.permute.xlu0 %4028
        %v4034 = vpack.c.bf16 %v3887, %v3884
        %v4035 = vpack.c.bf16 %v3895, %v3892
        %v4036 = vpack.c.bf16 %v4001, %v3999
        %v4037 = vpack.c.bf16 %v4005, %v4003
        %v4038 = vpack.c.bf16 %v4013, %v4011
        %v4039 = vpack.c.bf16 %v4017, %v4015
        %v4040 = vpack.c.bf16 %v4025, %v4023
        %v4041 = vpack.c.bf16 %v4029, %v4027
        %vm4042 = vcmask 261120
        %v4044 = vsel %vm4042, %v3938, 0
        %v4047 = vsel %vm4042, %v3986, 0
        %4049 = vmatprep.subr.bf16.mxu0 0
        %4050 = vmatpush1.bf16.xpose.msra.mxu0 %v4047
        %4051 = vmatprep.subr.bf16.mxu0 0
        %4052 = vmatpush1.bf16.xpose.msra.mxu0 0
        %4053 = vmatprep.subr.bf16.mxu0 0
        %4054 = vmatpush1.bf16.xpose.msra.mxu0 0
        %4055 = vmatprep.subr.bf16.mxu0 0
        %4056 = vmatpush1.bf16.xpose.msra.mxu0 0
        %4057 = vmatprep.subr.bf16.mxu0 0
        %4058 = vmatpush1.bf16.xpose.msra.mxu0 0
        %4059 = vmatprep.subr.bf16.mxu0 0
        %4060 = vmatpush1.bf16.xpose.msra.mxu0 0
        %4061 = vmatprep.subr.bf16.mxu0 0
        %4062 = vmatpush1.bf16.xpose.msra.mxu0 0
        %4063 = vmatprep.subr.bf16.mxu0 0
        %4064 = vmatpush1.bf16.xpose.msra.mxu0 0
        %4065 = vmatprep.subr.bf16.mxu0 0
        %4066 = vmatpush1.bf16.xpose.msra.mxu0 0
        %4067 = vmatprep.subr.bf16.mxu0 0
        %4068 = vmatpush1.bf16.xpose.msra.mxu0 0
        %4069 = vmatprep.subr.bf16.mxu0 0
        %4070 = vmatpush1.bf16.xpose.msra.mxu0 0
        %4071 = vmatprep.subr.bf16.mxu0 0
        %4072 = vmatpush1.bf16.xpose.msra.mxu0 0
        %4073 = vmatprep.subr.bf16.mxu0 0
        %4074 = vmatpush1.bf16.xpose.msra.mxu0 0
        %4075 = vmatprep.subr.bf16.mxu0 0
        %4076 = vmatpush1.bf16.xpose.msra.mxu0 0
        %4077 = vmatprep.subr.bf16.mxu0 0
        %4078 = vmatpush1.bf16.xpose.msra.mxu0 0
        %4079 = vmatprep.subr.bf16.mxu0 0
        %4080 = vmatpush1.bf16.xpose.msra.mxu0 0
        %4081 = vmatprep.mubr.bf16.mxu0 0
        %4082 = vmatmul.mubr.bf16.gmra.mrb[0].mxu0 %v4044
        %v4083 = vpop.f32.mrb[0].mxu0
        %v4084 = vadd.f32 0.0, %v4083
        %v4085 = vpop.f32.mrb[0].mxu0
        %v4086 = vpop.f32.mrb[0].mxu0
        %v4087 = vadd.f32 0.0, %v4086
        %v4088 = vpop.f32.mrb[0].mxu0
        %4089 = vdwg.mxu0
        %v4091 = vsel %vm4042, %v3939, 0
        %v4094 = vsel %vm4042, %v3987, 0
        %4096 = vmatprep.subr.bf16.mxu0 0
        %4097 = vmatpush1.bf16.xpose.msra.mxu0 %v4094
        %4098 = vmatprep.subr.bf16.mxu0 0
        %4099 = vmatpush1.bf16.xpose.msra.mxu0 0
        %4100 = vmatprep.subr.bf16.mxu0 0
        %4101 = vmatpush1.bf16.xpose.msra.mxu0 0
        %4102 = vmatprep.subr.bf16.mxu0 0
        %4103 = vmatpush1.bf16.xpose.msra.mxu0 0
        %4104 = vmatprep.subr.bf16.mxu0 0
        %4105 = vmatpush1.bf16.xpose.msra.mxu0 0
        %4106 = vmatprep.subr.bf16.mxu0 0
        %4107 = vmatpush1.bf16.xpose.msra.mxu0 0
        %4108 = vmatprep.subr.bf16.mxu0 0
        %4109 = vmatpush1.bf16.xpose.msra.mxu0 0
        %4110 = vmatprep.subr.bf16.mxu0 0
        %4111 = vmatpush1.bf16.xpose.msra.mxu0 0
        %4112 = vmatprep.subr.bf16.mxu0 0
        %4113 = vmatpush1.bf16.xpose.msra.mxu0 0
        %4114 = vmatprep.subr.bf16.mxu0 0
        %4115 = vmatpush1.bf16.xpose.msra.mxu0 0
        %4116 = vmatprep.subr.bf16.mxu0 0
        %4117 = vmatpush1.bf16.xpose.msra.mxu0 0
        %4118 = vmatprep.subr.bf16.mxu0 0
        %4119 = vmatpush1.bf16.xpose.msra.mxu0 0
        %4120 = vmatprep.subr.bf16.mxu0 0
        %4121 = vmatpush1.bf16.xpose.msra.mxu0 0
        %4122 = vmatprep.subr.bf16.mxu0 0
        %4123 = vmatpush1.bf16.xpose.msra.mxu0 0
        %4124 = vmatprep.subr.bf16.mxu0 0
        %4125 = vmatpush1.bf16.xpose.msra.mxu0 0
        %4126 = vmatprep.subr.bf16.mxu0 0
        %4127 = vmatpush1.bf16.xpose.msra.mxu0 0
        %4128 = vmatprep.mubr.bf16.mxu0 0
        %4129 = vmatmul.mubr.bf16.gmra.mrb[0].mxu0 %v4091
        %v4130 = vpop.f32.mrb[0].mxu0
        %v4131 = vadd.f32 0.0, %v4130
        %v4132 = vpop.f32.mrb[0].mxu0
        %v4133 = vpop.f32.mrb[0].mxu0
        %v4134 = vadd.f32 0.0, %v4133
        %v4135 = vpop.f32.mrb[0].mxu0
        %4136 = vdwg.mxu0
        %v4138 = vsel %vm4042, %v3940, 0
        %v4141 = vsel %vm4042, %v3988, 0
        %4143 = vmatprep.subr.bf16.mxu0 0
        %4144 = vmatpush1.bf16.xpose.msra.mxu0 %v4141
        %4145 = vmatprep.subr.bf16.mxu0 0
        %4146 = vmatpush1.bf16.xpose.msra.mxu0 0
        %4147 = vmatprep.subr.bf16.mxu0 0
        %4148 = vmatpush1.bf16.xpose.msra.mxu0 0
        %4149 = vmatprep.subr.bf16.mxu0 0
        %4150 = vmatpush1.bf16.xpose.msra.mxu0 0
        %4151 = vmatprep.subr.bf16.mxu0 0
        %4152 = vmatpush1.bf16.xpose.msra.mxu0 0
        %4153 = vmatprep.subr.bf16.mxu0 0
        %4154 = vmatpush1.bf16.xpose.msra.mxu0 0
        %4155 = vmatprep.subr.bf16.mxu0 0
        %4156 = vmatpush1.bf16.xpose.msra.mxu0 0
        %4157 = vmatprep.subr.bf16.mxu0 0
        %4158 = vmatpush1.bf16.xpose.msra.mxu0 0
        %4159 = vmatprep.subr.bf16.mxu0 0
        %4160 = vmatpush1.bf16.xpose.msra.mxu0 0
        %4161 = vmatprep.subr.bf16.mxu0 0
        %4162 = vmatpush1.bf16.xpose.msra.mxu0 0
        %4163 = vmatprep.subr.bf16.mxu0 0
        %4164 = vmatpush1.bf16.xpose.msra.mxu0 0
        %4165 = vmatprep.subr.bf16.mxu0 0
        %4166 = vmatpush1.bf16.xpose.msra.mxu0 0
        %4167 = vmatprep.subr.bf16.mxu0 0
        %4168 = vmatpush1.bf16.xpose.msra.mxu0 0
        %4169 = vmatprep.subr.bf16.mxu0 0
        %4170 = vmatpush1.bf16.xpose.msra.mxu0 0
        %4171 = vmatprep.subr.bf16.mxu0 0
        %4172 = vmatpush1.bf16.xpose.msra.mxu0 0
        %4173 = vmatprep.subr.bf16.mxu0 0
        %4174 = vmatpush1.bf16.xpose.msra.mxu0 0
        %4175 = vmatprep.mubr.bf16.mxu0 0
        %4176 = vmatmul.mubr.bf16.gmra.mrb[0].mxu0 %v4138
        %v4177 = vpop.f32.mrb[0].mxu0
        %v4178 = vadd.f32 0.0, %v4177
        %v4179 = vpop.f32.mrb[0].mxu0
        %v4180 = vpop.f32.mrb[0].mxu0
        %v4181 = vadd.f32 0.0, %v4180
        %v4182 = vpop.f32.mrb[0].mxu0
        %4183 = vdwg.mxu0
        %v4185 = vsel %vm4042, %v3941, 0
        %v4188 = vsel %vm4042, %v3989, 0
        %4190 = vmatprep.subr.bf16.mxu0 0
        %4191 = vmatpush1.bf16.xpose.msra.mxu0 %v4188
        %4192 = vmatprep.subr.bf16.mxu0 0
        %4193 = vmatpush1.bf16.xpose.msra.mxu0 0
        %4194 = vmatprep.subr.bf16.mxu0 0
        %4195 = vmatpush1.bf16.xpose.msra.mxu0 0
        %4196 = vmatprep.subr.bf16.mxu0 0
        %4197 = vmatpush1.bf16.xpose.msra.mxu0 0
        %4198 = vmatprep.subr.bf16.mxu0 0
        %4199 = vmatpush1.bf16.xpose.msra.mxu0 0
        %4200 = vmatprep.subr.bf16.mxu0 0
        %4201 = vmatpush1.bf16.xpose.msra.mxu0 0
        %4202 = vmatprep.subr.bf16.mxu0 0
        %4203 = vmatpush1.bf16.xpose.msra.mxu0 0
        %4204 = vmatprep.subr.bf16.mxu0 0
        %4205 = vmatpush1.bf16.xpose.msra.mxu0 0
        %4206 = vmatprep.subr.bf16.mxu0 0
        %4207 = vmatpush1.bf16.xpose.msra.mxu0 0
        %4208 = vmatprep.subr.bf16.mxu0 0
        %4209 = vmatpush1.bf16.xpose.msra.mxu0 0
        %4210 = vmatprep.subr.bf16.mxu0 0
        %4211 = vmatpush1.bf16.xpose.msra.mxu0 0
        %4212 = vmatprep.subr.bf16.mxu0 0
        %4213 = vmatpush1.bf16.xpose.msra.mxu0 0
        %4214 = vmatprep.subr.bf16.mxu0 0
        %4215 = vmatpush1.bf16.xpose.msra.mxu0 0
        %4216 = vmatprep.subr.bf16.mxu0 0
        %4217 = vmatpush1.bf16.xpose.msra.mxu0 0
        %4218 = vmatprep.subr.bf16.mxu0 0
        %4219 = vmatpush1.bf16.xpose.msra.mxu0 0
        %4220 = vmatprep.subr.bf16.mxu0 0
        %4221 = vmatpush1.bf16.xpose.msra.mxu0 0
        %4222 = vmatprep.mubr.bf16.mxu0 0
        %4223 = vmatmul.mubr.bf16.gmra.mrb[0].mxu0 %v4185
        %v4224 = vpop.f32.mrb[0].mxu0
        %v4225 = vadd.f32 0.0, %v4224
        %v4226 = vpop.f32.mrb[0].mxu0
        %v4227 = vpop.f32.mrb[0].mxu0
        %v4228 = vadd.f32 0.0, %v4227
        %v4229 = vpop.f32.mrb[0].mxu0
        %4230 = vdwg.mxu0
        %v4232 = vsel %vm4042, %v3942, 0
        %v4235 = vsel %vm4042, %v3990, 0
        %4237 = vmatprep.subr.bf16.mxu0 0
        %4238 = vmatpush1.bf16.xpose.msra.mxu0 %v4235
        %4239 = vmatprep.subr.bf16.mxu0 0
        %4240 = vmatpush1.bf16.xpose.msra.mxu0 0
        %4241 = vmatprep.subr.bf16.mxu0 0
        %4242 = vmatpush1.bf16.xpose.msra.mxu0 0
        %4243 = vmatprep.subr.bf16.mxu0 0
        %4244 = vmatpush1.bf16.xpose.msra.mxu0 0
        %4245 = vmatprep.subr.bf16.mxu0 0
        %4246 = vmatpush1.bf16.xpose.msra.mxu0 0
        %4247 = vmatprep.subr.bf16.mxu0 0
        %4248 = vmatpush1.bf16.xpose.msra.mxu0 0
        %4249 = vmatprep.subr.bf16.mxu0 0
        %4250 = vmatpush1.bf16.xpose.msra.mxu0 0
        %4251 = vmatprep.subr.bf16.mxu0 0
        %4252 = vmatpush1.bf16.xpose.msra.mxu0 0
        %4253 = vmatprep.subr.bf16.mxu0 0
        %4254 = vmatpush1.bf16.xpose.msra.mxu0 0
        %4255 = vmatprep.subr.bf16.mxu0 0
        %4256 = vmatpush1.bf16.xpose.msra.mxu0 0
        %4257 = vmatprep.subr.bf16.mxu0 0
        %4258 = vmatpush1.bf16.xpose.msra.mxu0 0
        %4259 = vmatprep.subr.bf16.mxu0 0
        %4260 = vmatpush1.bf16.xpose.msra.mxu0 0
        %4261 = vmatprep.subr.bf16.mxu0 0
        %4262 = vmatpush1.bf16.xpose.msra.mxu0 0
        %4263 = vmatprep.subr.bf16.mxu0 0
        %4264 = vmatpush1.bf16.xpose.msra.mxu0 0
        %4265 = vmatprep.subr.bf16.mxu0 0
        %4266 = vmatpush1.bf16.xpose.msra.mxu0 0
        %4267 = vmatprep.subr.bf16.mxu0 0
        %4268 = vmatpush1.bf16.xpose.msra.mxu0 0
        %4269 = vmatprep.mubr.bf16.mxu0 0
        %4270 = vmatmul.mubr.bf16.gmra.mrb[0].mxu0 %v4232
        %v4271 = vpop.f32.mrb[0].mxu0
        %v4272 = vadd.f32 0.0, %v4271
        %v4273 = vpop.f32.mrb[0].mxu0
        %v4274 = vpop.f32.mrb[0].mxu0
        %v4275 = vadd.f32 0.0, %v4274
        %v4276 = vpop.f32.mrb[0].mxu0
        %4277 = vdwg.mxu0
        %v4279 = vsel %vm4042, %v3943, 0
        %v4282 = vsel %vm4042, %v3991, 0
        %4284 = vmatprep.subr.bf16.mxu0 0
        %4285 = vmatpush1.bf16.xpose.msra.mxu0 %v4282
        %4286 = vmatprep.subr.bf16.mxu0 0
        %4287 = vmatpush1.bf16.xpose.msra.mxu0 0
        %4288 = vmatprep.subr.bf16.mxu0 0
        %4289 = vmatpush1.bf16.xpose.msra.mxu0 0
        %4290 = vmatprep.subr.bf16.mxu0 0
        %4291 = vmatpush1.bf16.xpose.msra.mxu0 0
        %4292 = vmatprep.subr.bf16.mxu0 0
        %4293 = vmatpush1.bf16.xpose.msra.mxu0 0
        %4294 = vmatprep.subr.bf16.mxu0 0
        %4295 = vmatpush1.bf16.xpose.msra.mxu0 0
        %4296 = vmatprep.subr.bf16.mxu0 0
        %4297 = vmatpush1.bf16.xpose.msra.mxu0 0
        %4298 = vmatprep.subr.bf16.mxu0 0
        %4299 = vmatpush1.bf16.xpose.msra.mxu0 0
        %4300 = vmatprep.subr.bf16.mxu0 0
        %4301 = vmatpush1.bf16.xpose.msra.mxu0 0
        %4302 = vmatprep.subr.bf16.mxu0 0
        %4303 = vmatpush1.bf16.xpose.msra.mxu0 0
        %4304 = vmatprep.subr.bf16.mxu0 0
        %4305 = vmatpush1.bf16.xpose.msra.mxu0 0
        %4306 = vmatprep.subr.bf16.mxu0 0
        %4307 = vmatpush1.bf16.xpose.msra.mxu0 0
        %4308 = vmatprep.subr.bf16.mxu0 0
        %4309 = vmatpush1.bf16.xpose.msra.mxu0 0
        %4310 = vmatprep.subr.bf16.mxu0 0
        %4311 = vmatpush1.bf16.xpose.msra.mxu0 0
        %4312 = vmatprep.subr.bf16.mxu0 0
        %4313 = vmatpush1.bf16.xpose.msra.mxu0 0
        %4314 = vmatprep.subr.bf16.mxu0 0
        %4315 = vmatpush1.bf16.xpose.msra.mxu0 0
        %4316 = vmatprep.mubr.bf16.mxu0 0
        %4317 = vmatmul.mubr.bf16.gmra.mrb[0].mxu0 %v4279
        %v4318 = vpop.f32.mrb[0].mxu0
        %v4319 = vadd.f32 0.0, %v4318
        %v4320 = vpop.f32.mrb[0].mxu0
        %v4321 = vpop.f32.mrb[0].mxu0
        %v4322 = vadd.f32 0.0, %v4321
        %v4323 = vpop.f32.mrb[0].mxu0
        %4324 = vdwg.mxu0
        %v4326 = vsel %vm4042, %v3944, 0
        %v4329 = vsel %vm4042, %v3992, 0
        %4331 = vmatprep.subr.bf16.mxu0 0
        %4332 = vmatpush1.bf16.xpose.msra.mxu0 %v4329
        %4333 = vmatprep.subr.bf16.mxu0 0
        %4334 = vmatpush1.bf16.xpose.msra.mxu0 0
        %4335 = vmatprep.subr.bf16.mxu0 0
        %4336 = vmatpush1.bf16.xpose.msra.mxu0 0
        %4337 = vmatprep.subr.bf16.mxu0 0
        %4338 = vmatpush1.bf16.xpose.msra.mxu0 0
        %4339 = vmatprep.subr.bf16.mxu0 0
        %4340 = vmatpush1.bf16.xpose.msra.mxu0 0
        %4341 = vmatprep.subr.bf16.mxu0 0
        %4342 = vmatpush1.bf16.xpose.msra.mxu0 0
        %4343 = vmatprep.subr.bf16.mxu0 0
        %4344 = vmatpush1.bf16.xpose.msra.mxu0 0
        %4345 = vmatprep.subr.bf16.mxu0 0
        %4346 = vmatpush1.bf16.xpose.msra.mxu0 0
        %4347 = vmatprep.subr.bf16.mxu0 0
        %4348 = vmatpush1.bf16.xpose.msra.mxu0 0
        %4349 = vmatprep.subr.bf16.mxu0 0
        %4350 = vmatpush1.bf16.xpose.msra.mxu0 0
        %4351 = vmatprep.subr.bf16.mxu0 0
        %4352 = vmatpush1.bf16.xpose.msra.mxu0 0
        %4353 = vmatprep.subr.bf16.mxu0 0
        %4354 = vmatpush1.bf16.xpose.msra.mxu0 0
        %4355 = vmatprep.subr.bf16.mxu0 0
        %4356 = vmatpush1.bf16.xpose.msra.mxu0 0
        %4357 = vmatprep.subr.bf16.mxu0 0
        %4358 = vmatpush1.bf16.xpose.msra.mxu0 0
        %4359 = vmatprep.subr.bf16.mxu0 0
        %4360 = vmatpush1.bf16.xpose.msra.mxu0 0
        %4361 = vmatprep.subr.bf16.mxu0 0
        %4362 = vmatpush1.bf16.xpose.msra.mxu0 0
        %4363 = vmatprep.mubr.bf16.mxu0 0
        %4364 = vmatmul.mubr.bf16.gmra.mrb[0].mxu0 %v4326
        %v4365 = vpop.f32.mrb[0].mxu0
        %v4366 = vadd.f32 0.0, %v4365
        %v4367 = vpop.f32.mrb[0].mxu0
        %v4368 = vpop.f32.mrb[0].mxu0
        %v4369 = vadd.f32 0.0, %v4368
        %v4370 = vpop.f32.mrb[0].mxu0
        %4371 = vdwg.mxu0
        %v4373 = vsel %vm4042, %v3945, 0
        %v4376 = vsel %vm4042, %v3993, 0
        %4378 = vmatprep.subr.bf16.mxu0 0
        %4379 = vmatpush1.bf16.xpose.msra.mxu0 %v4376
        %4380 = vmatprep.subr.bf16.mxu0 0
        %4381 = vmatpush1.bf16.xpose.msra.mxu0 0
        %4382 = vmatprep.subr.bf16.mxu0 0
        %4383 = vmatpush1.bf16.xpose.msra.mxu0 0
        %4384 = vmatprep.subr.bf16.mxu0 0
        %4385 = vmatpush1.bf16.xpose.msra.mxu0 0
        %4386 = vmatprep.subr.bf16.mxu0 0
        %4387 = vmatpush1.bf16.xpose.msra.mxu0 0
        %4388 = vmatprep.subr.bf16.mxu0 0
        %4389 = vmatpush1.bf16.xpose.msra.mxu0 0
        %4390 = vmatprep.subr.bf16.mxu0 0
        %4391 = vmatpush1.bf16.xpose.msra.mxu0 0
        %4392 = vmatprep.subr.bf16.mxu0 0
        %4393 = vmatpush1.bf16.xpose.msra.mxu0 0
        %4394 = vmatprep.subr.bf16.mxu0 0
        %4395 = vmatpush1.bf16.xpose.msra.mxu0 0
        %4396 = vmatprep.subr.bf16.mxu0 0
        %4397 = vmatpush1.bf16.xpose.msra.mxu0 0
        %4398 = vmatprep.subr.bf16.mxu0 0
        %4399 = vmatpush1.bf16.xpose.msra.mxu0 0
        %4400 = vmatprep.subr.bf16.mxu0 0
        %4401 = vmatpush1.bf16.xpose.msra.mxu0 0
        %4402 = vmatprep.subr.bf16.mxu0 0
        %4403 = vmatpush1.bf16.xpose.msra.mxu0 0
        %4404 = vmatprep.subr.bf16.mxu0 0
        %4405 = vmatpush1.bf16.xpose.msra.mxu0 0
        %4406 = vmatprep.subr.bf16.mxu0 0
        %4407 = vmatpush1.bf16.xpose.msra.mxu0 0
        %4408 = vmatprep.subr.bf16.mxu0 0
        %4409 = vmatpush1.bf16.xpose.msra.mxu0 0
        %4410 = vmatprep.mubr.bf16.mxu0 0
        %4411 = vmatmul.mubr.bf16.gmra.mrb[0].mxu0 %v4373
        %v4412 = vpop.f32.mrb[0].mxu0
        %v4413 = vadd.f32 0.0, %v4412
        %v4414 = vpop.f32.mrb[0].mxu0
        %v4415 = vpop.f32.mrb[0].mxu0
        %v4416 = vadd.f32 0.0, %v4415
        %v4417 = vpop.f32.mrb[0].mxu0
        %4418 = vdwg.mxu0
        %v4419 = vmul.f32 %v4084, 0.17677669
        %v4420 = vmul.f32 %v4087, 0.17677669
        %v4421 = vmul.f32 %v4131, 0.17677669
        %v4422 = vmul.f32 %v4134, 0.17677669
        %v4423 = vmul.f32 %v4178, 0.17677669
        %v4424 = vmul.f32 %v4181, 0.17677669
        %v4425 = vmul.f32 %v4225, 0.17677669
        %v4426 = vmul.f32 %v4228, 0.17677669
        %v4427 = vmul.f32 %v4272, 0.17677669
        %v4428 = vmul.f32 %v4275, 0.17677669
        %v4429 = vmul.f32 %v4319, 0.17677669
        %v4430 = vmul.f32 %v4322, 0.17677669
        %v4431 = vmul.f32 %v4366, 0.17677669
        %v4432 = vmul.f32 %v4369, 0.17677669
        %v4433 = vmul.f32 %v4413, 0.17677669
        %v4434 = vmul.f32 %v4416, 0.17677669
        %v4437 = vlaneseq
        %v4438 = vshrl.u32 %v4437, 7
        %v4439 = vsub.s32 0, %v4438
        %v4440 = vrot.slane %v3451, %v4439
        %v4441 = vlaneseq
        %v4442 = vshrl.u32 %v4441, 7
        %v4443 = vsub.s32 0, %v4442
        %v4444 = vrot.slane %v3452, %v4443
        %v4447 = vadd.f32 %v4419, %v4440
        %v4448 = vadd.f32 %v4420, %v4440
        %v4449 = vadd.f32 %v4421, %v4444
        %v4450 = vadd.f32 %v4422, %v4444
        %v4451 = vadd.f32 %v4423, %v4440
        %v4452 = vadd.f32 %v4424, %v4440
        %v4453 = vadd.f32 %v4425, %v4444
        %v4454 = vadd.f32 %v4426, %v4444
        %v4455 = vadd.f32 %v4427, %v4440
        %v4456 = vadd.f32 %v4428, %v4440
        %v4457 = vadd.f32 %v4429, %v4444
        %v4458 = vadd.f32 %v4430, %v4444
        %v4459 = vadd.f32 %v4431, %v4440
        %v4460 = vadd.f32 %v4432, %v4440
        %v4461 = vadd.f32 %v4433, %v4444
        %v4462 = vadd.f32 %v4434, %v4444
        %vm4463 = vcmask 130048
        %v4464 = vsel %vm4463, %v4447, -inf
        %4465 = vmax.xlane.f32.xlu0 %v4464
        %v4466 = vpop.xlane.xlu0 %4465
        %v4467 = vsel %vm4463, %v4448, -inf
        %4468 = vmax.xlane.f32.xlu0 %v4467
        %v4469 = vpop.xlane.xlu0 %4468
        %v4470 = vsel %vm4463, %v4449, -inf
        %4471 = vmax.xlane.f32.xlu0 %v4470
        %v4472 = vpop.xlane.xlu0 %4471
        %v4473 = vsel %vm4463, %v4450, -inf
        %4474 = vmax.xlane.f32.xlu0 %v4473
        %v4475 = vpop.xlane.xlu0 %4474
        %v4476 = vsel %vm4463, %v4451, -inf
        %4477 = vmax.xlane.f32.xlu0 %v4476
        %v4478 = vpop.xlane.xlu0 %4477
        %v4479 = vsel %vm4463, %v4452, -inf
        %4480 = vmax.xlane.f32.xlu0 %v4479
        %v4481 = vpop.xlane.xlu0 %4480
        %v4482 = vsel %vm4463, %v4453, -inf
        %4483 = vmax.xlane.f32.xlu0 %v4482
        %v4484 = vpop.xlane.xlu0 %4483
        %v4485 = vsel %vm4463, %v4454, -inf
        %4486 = vmax.xlane.f32.xlu0 %v4485
        %v4487 = vpop.xlane.xlu0 %4486
        %v4488 = vsel %vm4463, %v4455, -inf
        %4489 = vmax.xlane.f32.xlu0 %v4488
        %v4490 = vpop.xlane.xlu0 %4489
        %v4491 = vsel %vm4463, %v4456, -inf
        %4492 = vmax.xlane.f32.xlu0 %v4491
        %v4493 = vpop.xlane.xlu0 %4492
        %v4494 = vsel %vm4463, %v4457, -inf
        %4495 = vmax.xlane.f32.xlu0 %v4494
        %v4496 = vpop.xlane.xlu0 %4495
        %v4497 = vsel %vm4463, %v4458, -inf
        %4498 = vmax.xlane.f32.xlu0 %v4497
        %v4499 = vpop.xlane.xlu0 %4498
        %v4500 = vsel %vm4463, %v4459, -inf
        %4501 = vmax.xlane.f32.xlu0 %v4500
        %v4502 = vpop.xlane.xlu0 %4501
        %v4503 = vsel %vm4463, %v4460, -inf
        %4504 = vmax.xlane.f32.xlu0 %v4503
        %v4505 = vpop.xlane.xlu0 %4504
        %v4506 = vsel %vm4463, %v4461, -inf
        %4507 = vmax.xlane.f32.xlu0 %v4506
        %v4508 = vpop.xlane.xlu0 %4507
        %v4509 = vsel %vm4463, %v4462, -inf
        %4510 = vmax.xlane.f32.xlu0 %v4509
        %v4511 = vpop.xlane.xlu0 %4510
        %v4512 = vsub.f32 %v4447, %v4466
        %v4513 = vsub.f32 %v4448, %v4469
        %v4514 = vsub.f32 %v4449, %v4472
        %v4515 = vsub.f32 %v4450, %v4475
        %v4516 = vsub.f32 %v4451, %v4478
        %v4517 = vsub.f32 %v4452, %v4481
        %v4518 = vsub.f32 %v4453, %v4484
        %v4519 = vsub.f32 %v4454, %v4487
        %v4520 = vsub.f32 %v4455, %v4490
        %v4521 = vsub.f32 %v4456, %v4493
        %v4522 = vsub.f32 %v4457, %v4496
        %v4523 = vsub.f32 %v4458, %v4499
        %v4524 = vsub.f32 %v4459, %v4502
        %v4525 = vsub.f32 %v4460, %v4505
        %v4526 = vsub.f32 %v4461, %v4508
        %v4527 = vsub.f32 %v4462, %v4511
        %v4528 = vmul.f32 %v4512, 1.442695
        %v4529 = vpow.pop %v4528
        %v4530 = vmul.f32 %v4513, 1.442695
        %v4531 = vpow.pop %v4530
        %v4532 = vmul.f32 %v4514, 1.442695
        %v4533 = vpow.pop %v4532
        %v4534 = vmul.f32 %v4515, 1.442695
        %v4535 = vpow.pop %v4534
        %v4536 = vmul.f32 %v4516, 1.442695
        %v4537 = vpow.pop %v4536
        %v4538 = vmul.f32 %v4517, 1.442695
        %v4539 = vpow.pop %v4538
        %v4540 = vmul.f32 %v4518, 1.442695
        %v4541 = vpow.pop %v4540
        %v4542 = vmul.f32 %v4519, 1.442695
        %v4543 = vpow.pop %v4542
        %v4544 = vmul.f32 %v4520, 1.442695
        %v4545 = vpow.pop %v4544
        %v4546 = vmul.f32 %v4521, 1.442695
        %v4547 = vpow.pop %v4546
        %v4548 = vmul.f32 %v4522, 1.442695
        %v4549 = vpow.pop %v4548
        %v4550 = vmul.f32 %v4523, 1.442695
        %v4551 = vpow.pop %v4550
        %v4552 = vmul.f32 %v4524, 1.442695
        %v4553 = vpow.pop %v4552
        %v4554 = vmul.f32 %v4525, 1.442695
        %v4555 = vpow.pop %v4554
        %v4556 = vmul.f32 %v4526, 1.442695
        %v4557 = vpow.pop %v4556
        %v4558 = vmul.f32 %v4527, 1.442695
        %v4559 = vpow.pop %v4558
        %v4560 = vsel %vm4463, %v4529, 0.0
        %4561 = vadd.xlane.f32.xlu0 %v4560
        %v4562 = vpop.xlane.xlu0 %4561
        %v4563 = vsel %vm4463, %v4531, 0.0
        %4564 = vadd.xlane.f32.xlu0 %v4563
        %v4565 = vpop.xlane.xlu0 %4564
        %v4566 = vsel %vm4463, %v4533, 0.0
        %4567 = vadd.xlane.f32.xlu0 %v4566
        %v4568 = vpop.xlane.xlu0 %4567
        %v4569 = vsel %vm4463, %v4535, 0.0
        %4570 = vadd.xlane.f32.xlu0 %v4569
        %v4571 = vpop.xlane.xlu0 %4570
        %v4572 = vsel %vm4463, %v4537, 0.0
        %4573 = vadd.xlane.f32.xlu0 %v4572
        %v4574 = vpop.xlane.xlu0 %4573
        %v4575 = vsel %vm4463, %v4539, 0.0
        %4576 = vadd.xlane.f32.xlu0 %v4575
        %v4577 = vpop.xlane.xlu0 %4576
        %v4578 = vsel %vm4463, %v4541, 0.0
        %4579 = vadd.xlane.f32.xlu0 %v4578
        %v4580 = vpop.xlane.xlu0 %4579
        %v4581 = vsel %vm4463, %v4543, 0.0
        %4582 = vadd.xlane.f32.xlu0 %v4581
        %v4583 = vpop.xlane.xlu0 %4582
        %v4584 = vsel %vm4463, %v4545, 0.0
        %4585 = vadd.xlane.f32.xlu0 %v4584
        %v4586 = vpop.xlane.xlu0 %4585
        %v4587 = vsel %vm4463, %v4547, 0.0
        %4588 = vadd.xlane.f32.xlu0 %v4587
        %v4589 = vpop.xlane.xlu0 %4588
        %v4590 = vsel %vm4463, %v4549, 0.0
        %4591 = vadd.xlane.f32.xlu0 %v4590
        %v4592 = vpop.xlane.xlu0 %4591
        %v4593 = vsel %vm4463, %v4551, 0.0
        %4594 = vadd.xlane.f32.xlu0 %v4593
        %v4595 = vpop.xlane.xlu0 %4594
        %v4596 = vsel %vm4463, %v4553, 0.0
        %4597 = vadd.xlane.f32.xlu0 %v4596
        %v4598 = vpop.xlane.xlu0 %4597
        %v4599 = vsel %vm4463, %v4555, 0.0
        %4600 = vadd.xlane.f32.xlu0 %v4599
        %v4601 = vpop.xlane.xlu0 %4600
        %v4602 = vsel %vm4463, %v4557, 0.0
        %4603 = vadd.xlane.f32.xlu0 %v4602
        %v4604 = vpop.xlane.xlu0 %4603
        %v4605 = vsel %vm4463, %v4559, 0.0
        %4606 = vadd.xlane.f32.xlu0 %v4605
        %v4607 = vpop.xlane.xlu0 %4606
        %v4608 = vrcp.pop %v4562
        %v4609 = vrcp.pop %v4565
        %v4610 = vrcp.pop %v4568
        %v4611 = vrcp.pop %v4571
        %v4612 = vrcp.pop %v4574
        %v4613 = vrcp.pop %v4577
        %v4614 = vrcp.pop %v4580
        %v4615 = vrcp.pop %v4583
        %v4616 = vrcp.pop %v4586
        %v4617 = vrcp.pop %v4589
        %v4618 = vrcp.pop %v4592
        %v4619 = vrcp.pop %v4595
        %v4620 = vrcp.pop %v4598
        %v4621 = vrcp.pop %v4601
        %v4622 = vrcp.pop %v4604
        %v4623 = vrcp.pop %v4607
        %v4624 = vmul.f32 %v4529, %v4608
        %v4625 = vmul.f32 %v4531, %v4609
        %v4626 = vmul.f32 %v4533, %v4610
        %v4627 = vmul.f32 %v4535, %v4611
        %v4628 = vmul.f32 %v4537, %v4612
        %v4629 = vmul.f32 %v4539, %v4613
        %v4630 = vmul.f32 %v4541, %v4614
        %v4631 = vmul.f32 %v4543, %v4615
        %v4632 = vmul.f32 %v4545, %v4616
        %v4633 = vmul.f32 %v4547, %v4617
        %v4634 = vmul.f32 %v4549, %v4618
        %v4635 = vmul.f32 %v4551, %v4619
        %v4636 = vmul.f32 %v4553, %v4620
        %v4637 = vmul.f32 %v4555, %v4621
        %v4638 = vmul.f32 %v4557, %v4622
        %v4639 = vmul.f32 %v4559, %v4623
        %v4640 = vpack.c.bf16 %v4625, %v4624
        %v4641 = vpack.c.bf16 %v4627, %v4626
        %v4642 = vpack.c.bf16 %v4629, %v4628
        %v4643 = vpack.c.bf16 %v4631, %v4630
        %v4644 = vpack.c.bf16 %v4633, %v4632
        %v4645 = vpack.c.bf16 %v4635, %v4634
        %v4646 = vpack.c.bf16 %v4637, %v4636
        %v4647 = vpack.c.bf16 %v4639, %v4638
        %v4649 = vsel %vm4463, %v4640, 0
        %4651 = vmatprep.subr.bf16.mxu0 0
        %4652 = vmatpush1.bf16.msra.mxu0 %v4034
        %4653 = vmatprep.subr.bf16.mxu0 0
        %4654 = vmatpush1.bf16.msra.mxu0 0
        %4655 = vmatprep.subr.bf16.mxu0 0
        %4656 = vmatpush1.bf16.msra.mxu0 0
        %4657 = vmatprep.subr.bf16.mxu0 0
        %4658 = vmatpush1.bf16.msra.mxu0 0
        %4659 = vmatprep.subr.bf16.mxu0 0
        %4660 = vmatpush1.bf16.msra.mxu0 0
        %4661 = vmatprep.subr.bf16.mxu0 0
        %4662 = vmatpush1.bf16.msra.mxu0 0
        %4663 = vmatprep.subr.bf16.mxu0 0
        %4664 = vmatpush1.bf16.msra.mxu0 0
        %4665 = vmatprep.subr.bf16.mxu0 0
        %4666 = vmatpush1.bf16.msra.mxu0 0
        %4667 = vmatprep.subr.bf16.mxu0 0
        %4668 = vmatpush1.bf16.msra.mxu0 0
        %4669 = vmatprep.subr.bf16.mxu0 0
        %4670 = vmatpush1.bf16.msra.mxu0 0
        %4671 = vmatprep.subr.bf16.mxu0 0
        %4672 = vmatpush1.bf16.msra.mxu0 0
        %4673 = vmatprep.subr.bf16.mxu0 0
        %4674 = vmatpush1.bf16.msra.mxu0 0
        %4675 = vmatprep.subr.bf16.mxu0 0
        %4676 = vmatpush1.bf16.msra.mxu0 0
        %4677 = vmatprep.subr.bf16.mxu0 0
        %4678 = vmatpush1.bf16.msra.mxu0 0
        %4679 = vmatprep.subr.bf16.mxu0 0
        %4680 = vmatpush1.bf16.msra.mxu0 0
        %4681 = vmatprep.subr.bf16.mxu0 0
        %4682 = vmatpush1.bf16.msra.mxu0 0
        %4683 = vmatprep.mubr.bf16.mxu0 0
        %4684 = vmatmul.mubr.bf16.gmra.mrb[0].mxu0 %v4649
        %v4685 = vpop.f32.mrb[0].mxu0
        %v4686 = vadd.f32 0.0, %v4685
        %v4687 = vpop.f32.mrb[0].mxu0
        %v4688 = vpop.f32.mrb[0].mxu0
        %v4689 = vadd.f32 0.0, %v4688
        %v4690 = vpop.f32.mrb[0].mxu0
        %4691 = vdwg.mxu0
        %v4693 = vsel %vm4463, %v4641, 0
        %4695 = vmatprep.subr.bf16.mxu0 0
        %4696 = vmatpush1.bf16.msra.mxu0 %v4035
        %4697 = vmatprep.subr.bf16.mxu0 0
        %4698 = vmatpush1.bf16.msra.mxu0 0
        %4699 = vmatprep.subr.bf16.mxu0 0
        %4700 = vmatpush1.bf16.msra.mxu0 0
        %4701 = vmatprep.subr.bf16.mxu0 0
        %4702 = vmatpush1.bf16.msra.mxu0 0
        %4703 = vmatprep.subr.bf16.mxu0 0
        %4704 = vmatpush1.bf16.msra.mxu0 0
        %4705 = vmatprep.subr.bf16.mxu0 0
        %4706 = vmatpush1.bf16.msra.mxu0 0
        %4707 = vmatprep.subr.bf16.mxu0 0
        %4708 = vmatpush1.bf16.msra.mxu0 0
        %4709 = vmatprep.subr.bf16.mxu0 0
        %4710 = vmatpush1.bf16.msra.mxu0 0
        %4711 = vmatprep.subr.bf16.mxu0 0
        %4712 = vmatpush1.bf16.msra.mxu0 0
        %4713 = vmatprep.subr.bf16.mxu0 0
        %4714 = vmatpush1.bf16.msra.mxu0 0
        %4715 = vmatprep.subr.bf16.mxu0 0
        %4716 = vmatpush1.bf16.msra.mxu0 0
        %4717 = vmatprep.subr.bf16.mxu0 0
        %4718 = vmatpush1.bf16.msra.mxu0 0
        %4719 = vmatprep.subr.bf16.mxu0 0
        %4720 = vmatpush1.bf16.msra.mxu0 0
        %4721 = vmatprep.subr.bf16.mxu0 0
        %4722 = vmatpush1.bf16.msra.mxu0 0
        %4723 = vmatprep.subr.bf16.mxu0 0
        %4724 = vmatpush1.bf16.msra.mxu0 0
        %4725 = vmatprep.subr.bf16.mxu0 0
        %4726 = vmatpush1.bf16.msra.mxu0 0
        %4727 = vmatprep.mubr.bf16.mxu0 0
        %4728 = vmatmul.mubr.bf16.gmra.mrb[0].mxu0 %v4693
        %v4729 = vpop.f32.mrb[0].mxu0
        %v4730 = vadd.f32 0.0, %v4729
        %v4731 = vpop.f32.mrb[0].mxu0
        %v4732 = vpop.f32.mrb[0].mxu0
        %v4733 = vadd.f32 0.0, %v4732
        %v4734 = vpop.f32.mrb[0].mxu0
        %4735 = vdwg.mxu0
        %v4737 = vsel %vm4463, %v4642, 0
        %4739 = vmatprep.subr.bf16.mxu0 0
        %4740 = vmatpush1.bf16.msra.mxu0 %v4036
        %4741 = vmatprep.subr.bf16.mxu0 0
        %4742 = vmatpush1.bf16.msra.mxu0 0
        %4743 = vmatprep.subr.bf16.mxu0 0
        %4744 = vmatpush1.bf16.msra.mxu0 0
        %4745 = vmatprep.subr.bf16.mxu0 0
        %4746 = vmatpush1.bf16.msra.mxu0 0
        %4747 = vmatprep.subr.bf16.mxu0 0
        %4748 = vmatpush1.bf16.msra.mxu0 0
        %4749 = vmatprep.subr.bf16.mxu0 0
        %4750 = vmatpush1.bf16.msra.mxu0 0
        %4751 = vmatprep.subr.bf16.mxu0 0
        %4752 = vmatpush1.bf16.msra.mxu0 0
        %4753 = vmatprep.subr.bf16.mxu0 0
        %4754 = vmatpush1.bf16.msra.mxu0 0
        %4755 = vmatprep.subr.bf16.mxu0 0
        %4756 = vmatpush1.bf16.msra.mxu0 0
        %4757 = vmatprep.subr.bf16.mxu0 0
        %4758 = vmatpush1.bf16.msra.mxu0 0
        %4759 = vmatprep.subr.bf16.mxu0 0
        %4760 = vmatpush1.bf16.msra.mxu0 0
        %4761 = vmatprep.subr.bf16.mxu0 0
        %4762 = vmatpush1.bf16.msra.mxu0 0
        %4763 = vmatprep.subr.bf16.mxu0 0
        %4764 = vmatpush1.bf16.msra.mxu0 0
        %4765 = vmatprep.subr.bf16.mxu0 0
        %4766 = vmatpush1.bf16.msra.mxu0 0
        %4767 = vmatprep.subr.bf16.mxu0 0
        %4768 = vmatpush1.bf16.msra.mxu0 0
        %4769 = vmatprep.subr.bf16.mxu0 0
        %4770 = vmatpush1.bf16.msra.mxu0 0
        %4771 = vmatprep.mubr.bf16.mxu0 0
        %4772 = vmatmul.mubr.bf16.gmra.mrb[0].mxu0 %v4737
        %v4773 = vpop.f32.mrb[0].mxu0
        %v4774 = vadd.f32 0.0, %v4773
        %v4775 = vpop.f32.mrb[0].mxu0
        %v4776 = vpop.f32.mrb[0].mxu0
        %v4777 = vadd.f32 0.0, %v4776
        %v4778 = vpop.f32.mrb[0].mxu0
        %4779 = vdwg.mxu0
        %v4781 = vsel %vm4463, %v4643, 0
        %4783 = vmatprep.subr.bf16.mxu0 0
        %4784 = vmatpush1.bf16.msra.mxu0 %v4037
        %4785 = vmatprep.subr.bf16.mxu0 0
        %4786 = vmatpush1.bf16.msra.mxu0 0
        %4787 = vmatprep.subr.bf16.mxu0 0
        %4788 = vmatpush1.bf16.msra.mxu0 0
        %4789 = vmatprep.subr.bf16.mxu0 0
        %4790 = vmatpush1.bf16.msra.mxu0 0
        %4791 = vmatprep.subr.bf16.mxu0 0
        %4792 = vmatpush1.bf16.msra.mxu0 0
        %4793 = vmatprep.subr.bf16.mxu0 0
        %4794 = vmatpush1.bf16.msra.mxu0 0
        %4795 = vmatprep.subr.bf16.mxu0 0
        %4796 = vmatpush1.bf16.msra.mxu0 0
        %4797 = vmatprep.subr.bf16.mxu0 0
        %4798 = vmatpush1.bf16.msra.mxu0 0
        %4799 = vmatprep.subr.bf16.mxu0 0
        %4800 = vmatpush1.bf16.msra.mxu0 0
        %4801 = vmatprep.subr.bf16.mxu0 0
        %4802 = vmatpush1.bf16.msra.mxu0 0
        %4803 = vmatprep.subr.bf16.mxu0 0
        %4804 = vmatpush1.bf16.msra.mxu0 0
        %4805 = vmatprep.subr.bf16.mxu0 0
        %4806 = vmatpush1.bf16.msra.mxu0 0
        %4807 = vmatprep.subr.bf16.mxu0 0
        %4808 = vmatpush1.bf16.msra.mxu0 0
        %4809 = vmatprep.subr.bf16.mxu0 0
        %4810 = vmatpush1.bf16.msra.mxu0 0
        %4811 = vmatprep.subr.bf16.mxu0 0
        %4812 = vmatpush1.bf16.msra.mxu0 0
        %4813 = vmatprep.subr.bf16.mxu0 0
        %4814 = vmatpush1.bf16.msra.mxu0 0
        %4815 = vmatprep.mubr.bf16.mxu0 0
        %4816 = vmatmul.mubr.bf16.gmra.mrb[0].mxu0 %v4781
        %v4817 = vpop.f32.mrb[0].mxu0
        %v4818 = vadd.f32 0.0, %v4817
        %v4819 = vpop.f32.mrb[0].mxu0
        %v4820 = vpop.f32.mrb[0].mxu0
        %v4821 = vadd.f32 0.0, %v4820
        %v4822 = vpop.f32.mrb[0].mxu0
        %4823 = vdwg.mxu0
        %v4825 = vsel %vm4463, %v4644, 0
        %4827 = vmatprep.subr.bf16.mxu0 0
        %4828 = vmatpush1.bf16.msra.mxu0 %v4038
        %4829 = vmatprep.subr.bf16.mxu0 0
        %4830 = vmatpush1.bf16.msra.mxu0 0
        %4831 = vmatprep.subr.bf16.mxu0 0
        %4832 = vmatpush1.bf16.msra.mxu0 0
        %4833 = vmatprep.subr.bf16.mxu0 0
        %4834 = vmatpush1.bf16.msra.mxu0 0
        %4835 = vmatprep.subr.bf16.mxu0 0
        %4836 = vmatpush1.bf16.msra.mxu0 0
        %4837 = vmatprep.subr.bf16.mxu0 0
        %4838 = vmatpush1.bf16.msra.mxu0 0
        %4839 = vmatprep.subr.bf16.mxu0 0
        %4840 = vmatpush1.bf16.msra.mxu0 0
        %4841 = vmatprep.subr.bf16.mxu0 0
        %4842 = vmatpush1.bf16.msra.mxu0 0
        %4843 = vmatprep.subr.bf16.mxu0 0
        %4844 = vmatpush1.bf16.msra.mxu0 0
        %4845 = vmatprep.subr.bf16.mxu0 0
        %4846 = vmatpush1.bf16.msra.mxu0 0
        %4847 = vmatprep.subr.bf16.mxu0 0
        %4848 = vmatpush1.bf16.msra.mxu0 0
        %4849 = vmatprep.subr.bf16.mxu0 0
        %4850 = vmatpush1.bf16.msra.mxu0 0
        %4851 = vmatprep.subr.bf16.mxu0 0
        %4852 = vmatpush1.bf16.msra.mxu0 0
        %4853 = vmatprep.subr.bf16.mxu0 0
        %4854 = vmatpush1.bf16.msra.mxu0 0
        %4855 = vmatprep.subr.bf16.mxu0 0
        %4856 = vmatpush1.bf16.msra.mxu0 0
        %4857 = vmatprep.subr.bf16.mxu0 0
        %4858 = vmatpush1.bf16.msra.mxu0 0
        %4859 = vmatprep.mubr.bf16.mxu0 0
        %4860 = vmatmul.mubr.bf16.gmra.mrb[0].mxu0 %v4825
        %v4861 = vpop.f32.mrb[0].mxu0
        %v4862 = vadd.f32 0.0, %v4861
        %v4863 = vpop.f32.mrb[0].mxu0
        %v4864 = vpop.f32.mrb[0].mxu0
        %v4865 = vadd.f32 0.0, %v4864
        %v4866 = vpop.f32.mrb[0].mxu0
        %4867 = vdwg.mxu0
        %v4869 = vsel %vm4463, %v4645, 0
        %4871 = vmatprep.subr.bf16.mxu0 0
        %4872 = vmatpush1.bf16.msra.mxu0 %v4039
        %4873 = vmatprep.subr.bf16.mxu0 0
        %4874 = vmatpush1.bf16.msra.mxu0 0
        %4875 = vmatprep.subr.bf16.mxu0 0
        %4876 = vmatpush1.bf16.msra.mxu0 0
        %4877 = vmatprep.subr.bf16.mxu0 0
        %4878 = vmatpush1.bf16.msra.mxu0 0
        %4879 = vmatprep.subr.bf16.mxu0 0
        %4880 = vmatpush1.bf16.msra.mxu0 0
        %4881 = vmatprep.subr.bf16.mxu0 0
        %4882 = vmatpush1.bf16.msra.mxu0 0
        %4883 = vmatprep.subr.bf16.mxu0 0
        %4884 = vmatpush1.bf16.msra.mxu0 0
        %4885 = vmatprep.subr.bf16.mxu0 0
        %4886 = vmatpush1.bf16.msra.mxu0 0
        %4887 = vmatprep.subr.bf16.mxu0 0
        %4888 = vmatpush1.bf16.msra.mxu0 0
        %4889 = vmatprep.subr.bf16.mxu0 0
        %4890 = vmatpush1.bf16.msra.mxu0 0
        %4891 = vmatprep.subr.bf16.mxu0 0
        %4892 = vmatpush1.bf16.msra.mxu0 0
        %4893 = vmatprep.subr.bf16.mxu0 0
        %4894 = vmatpush1.bf16.msra.mxu0 0
        %4895 = vmatprep.subr.bf16.mxu0 0
        %4896 = vmatpush1.bf16.msra.mxu0 0
        %4897 = vmatprep.subr.bf16.mxu0 0
        %4898 = vmatpush1.bf16.msra.mxu0 0
        %4899 = vmatprep.subr.bf16.mxu0 0
        %4900 = vmatpush1.bf16.msra.mxu0 0
        %4901 = vmatprep.subr.bf16.mxu0 0
        %4902 = vmatpush1.bf16.msra.mxu0 0
        %4903 = vmatprep.mubr.bf16.mxu0 0
        %4904 = vmatmul.mubr.bf16.gmra.mrb[0].mxu0 %v4869
        %v4905 = vpop.f32.mrb[0].mxu0
        %v4906 = vadd.f32 0.0, %v4905
        %v4907 = vpop.f32.mrb[0].mxu0
        %v4908 = vpop.f32.mrb[0].mxu0
        %v4909 = vadd.f32 0.0, %v4908
        %v4910 = vpop.f32.mrb[0].mxu0
        %4911 = vdwg.mxu0
        %v4913 = vsel %vm4463, %v4646, 0
        %4915 = vmatprep.subr.bf16.mxu0 0
        %4916 = vmatpush1.bf16.msra.mxu0 %v4040
        %4917 = vmatprep.subr.bf16.mxu0 0
        %4918 = vmatpush1.bf16.msra.mxu0 0
        %4919 = vmatprep.subr.bf16.mxu0 0
        %4920 = vmatpush1.bf16.msra.mxu0 0
        %4921 = vmatprep.subr.bf16.mxu0 0
        %4922 = vmatpush1.bf16.msra.mxu0 0
        %4923 = vmatprep.subr.bf16.mxu0 0
        %4924 = vmatpush1.bf16.msra.mxu0 0
        %4925 = vmatprep.subr.bf16.mxu0 0
        %4926 = vmatpush1.bf16.msra.mxu0 0
        %4927 = vmatprep.subr.bf16.mxu0 0
        %4928 = vmatpush1.bf16.msra.mxu0 0
        %4929 = vmatprep.subr.bf16.mxu0 0
        %4930 = vmatpush1.bf16.msra.mxu0 0
        %4931 = vmatprep.subr.bf16.mxu0 0
        %4932 = vmatpush1.bf16.msra.mxu0 0
        %4933 = vmatprep.subr.bf16.mxu0 0
        %4934 = vmatpush1.bf16.msra.mxu0 0
        %4935 = vmatprep.subr.bf16.mxu0 0
        %4936 = vmatpush1.bf16.msra.mxu0 0
        %4937 = vmatprep.subr.bf16.mxu0 0
        %4938 = vmatpush1.bf16.msra.mxu0 0
        %4939 = vmatprep.subr.bf16.mxu0 0
        %4940 = vmatpush1.bf16.msra.mxu0 0
        %4941 = vmatprep.subr.bf16.mxu0 0
        %4942 = vmatpush1.bf16.msra.mxu0 0
        %4943 = vmatprep.subr.bf16.mxu0 0
        %4944 = vmatpush1.bf16.msra.mxu0 0
        %4945 = vmatprep.subr.bf16.mxu0 0
        %4946 = vmatpush1.bf16.msra.mxu0 0
        %4947 = vmatprep.mubr.bf16.mxu0 0
        %4948 = vmatmul.mubr.bf16.gmra.mrb[0].mxu0 %v4913
        %v4949 = vpop.f32.mrb[0].mxu0
        %v4950 = vadd.f32 0.0, %v4949
        %v4951 = vpop.f32.mrb[0].mxu0
        %v4952 = vpop.f32.mrb[0].mxu0
        %v4953 = vadd.f32 0.0, %v4952
        %v4954 = vpop.f32.mrb[0].mxu0
        %4955 = vdwg.mxu0
        %v4957 = vsel %vm4463, %v4647, 0
        %4959 = vmatprep.subr.bf16.mxu0 0
        %4960 = vmatpush1.bf16.msra.mxu0 %v4041
        %4961 = vmatprep.subr.bf16.mxu0 0
        %4962 = vmatpush1.bf16.msra.mxu0 0
        %4963 = vmatprep.subr.bf16.mxu0 0
        %4964 = vmatpush1.bf16.msra.mxu0 0
        %4965 = vmatprep.subr.bf16.mxu0 0
        %4966 = vmatpush1.bf16.msra.mxu0 0
        %4967 = vmatprep.subr.bf16.mxu0 0
        %4968 = vmatpush1.bf16.msra.mxu0 0
        %4969 = vmatprep.subr.bf16.mxu0 0
        %4970 = vmatpush1.bf16.msra.mxu0 0
        %4971 = vmatprep.subr.bf16.mxu0 0
        %4972 = vmatpush1.bf16.msra.mxu0 0
        %4973 = vmatprep.subr.bf16.mxu0 0
        %4974 = vmatpush1.bf16.msra.mxu0 0
        %4975 = vmatprep.subr.bf16.mxu0 0
        %4976 = vmatpush1.bf16.msra.mxu0 0
        %4977 = vmatprep.subr.bf16.mxu0 0
        %4978 = vmatpush1.bf16.msra.mxu0 0
        %4979 = vmatprep.subr.bf16.mxu0 0
        %4980 = vmatpush1.bf16.msra.mxu0 0
        %4981 = vmatprep.subr.bf16.mxu0 0
        %4982 = vmatpush1.bf16.msra.mxu0 0
        %4983 = vmatprep.subr.bf16.mxu0 0
        %4984 = vmatpush1.bf16.msra.mxu0 0
        %4985 = vmatprep.subr.bf16.mxu0 0
        %4986 = vmatpush1.bf16.msra.mxu0 0
        %4987 = vmatprep.subr.bf16.mxu0 0
        %4988 = vmatpush1.bf16.msra.mxu0 0
        %4989 = vmatprep.subr.bf16.mxu0 0
        %4990 = vmatpush1.bf16.msra.mxu0 0
        %4991 = vmatprep.mubr.bf16.mxu0 0
        %4992 = vmatmul.mubr.bf16.gmra.mrb[0].mxu0 %v4957
        %v4993 = vpop.f32.mrb[0].mxu0
        %v4994 = vadd.f32 0.0, %v4993
        %v4995 = vpop.f32.mrb[0].mxu0
        %v4996 = vpop.f32.mrb[0].mxu0
        %v4997 = vadd.f32 0.0, %v4996
        %v4998 = vpop.f32.mrb[0].mxu0
        %4999 = vdwg.mxu0
        %5004 = vrot.lane.b32.xlu0 %v4774, 32
        %v5005 = vpop.permute.xlu0 %5004
        %5006 = vrot.lane.b32.xlu0 %v4777, 32
        %v5007 = vpop.permute.xlu0 %5006
        %5008 = vrot.lane.b32.xlu0 %v4818, 32
        %v5009 = vpop.permute.xlu0 %5008
        %5010 = vrot.lane.b32.xlu0 %v4821, 32
        %v5011 = vpop.permute.xlu0 %5010
        %5020 = vrot.lane.b32.xlu0 %v4862, 64
        %v5021 = vpop.permute.xlu0 %5020
        %5022 = vrot.lane.b32.xlu0 %v4865, 64
        %v5023 = vpop.permute.xlu0 %5022
        %5024 = vrot.lane.b32.xlu0 %v4906, 64
        %v5025 = vpop.permute.xlu0 %5024
        %5026 = vrot.lane.b32.xlu0 %v4909, 64
        %v5027 = vpop.permute.xlu0 %5026
        %5036 = vrot.lane.b32.xlu0 %v4950, 96
        %v5037 = vpop.permute.xlu0 %5036
        %5038 = vrot.lane.b32.xlu0 %v4953, 96
        %v5039 = vpop.permute.xlu0 %5038
        %5040 = vrot.lane.b32.xlu0 %v4994, 96
        %v5041 = vpop.permute.xlu0 %5040
        %5042 = vrot.lane.b32.xlu0 %v4997, 96
        %v5043 = vpop.permute.xlu0 %5042
        %v5048 = vsel %vm4042, %v4686, %v5005
        %v5049 = vsel %vm4042, %v4689, %v5007
        %v5050 = vsel %vm4042, %v4730, %v5009
        %v5051 = vsel %vm4042, %v4733, %v5011
        %vm5052 = vcmask 523264
        %v5053 = vsel %vm5052, %v5048, %v5021
        %v5054 = vsel %vm5052, %v5049, %v5023
        %v5055 = vsel %vm5052, %v5050, %v5025
        %v5056 = vsel %vm5052, %v5051, %v5027
        %vm5057 = vcmask 785408
        %v5058 = vsel %vm5057, %v5053, %v5037
        %v5059 = vsel %vm5057, %v5054, %v5039
        %v5060 = vsel %vm5057, %v5055, %v5041
        %v5061 = vsel %vm5057, %v5056, %v5043
        %v5062 = vpack.c.bf16 %v5059, %v5058
        %v5063 = vpack.c.bf16 %v5061, %v5060
        %v5065 = vlaneseq
        %v5066 = vshrl.u32 %v5065, 7
        %v5067 = vsub.s32 0, %v5066
        %v5068 = vrot.slane %v3522, %v5067
        %v5086 = vunpack.c.l.b16 %v3506
        %v5087 = vunpack.c.l.b16 %v3507
        %v5088 = vunpack.c.l.b16 %v3508
        %v5089 = vunpack.c.l.b16 %v3509
        %v5090 = vunpack.c.l.b16 %v3510
        %v5091 = vunpack.c.l.b16 %v3511
        %v5092 = vunpack.c.l.b16 %v3512
        %v5093 = vunpack.c.l.b16 %v3513
        %v5094 = vunpack.c.l.b16 %v3514
        %v5095 = vunpack.c.l.b16 %v3515
        %v5096 = vunpack.c.l.b16 %v3516
        %v5097 = vunpack.c.l.b16 %v3517
        %v5098 = vunpack.c.l.b16 %v3518
        %v5099 = vunpack.c.l.b16 %v3519
        %v5100 = vunpack.c.l.b16 %v3520
        %v5101 = vunpack.c.l.b16 %v3521
        %v5102 = vpack.c.b16 %v5087, %v5086
        %v5103 = vpack.c.b16 %v5089, %v5088
        %v5104 = vpack.c.b16 %v5091, %v5090
        %v5105 = vpack.c.b16 %v5093, %v5092
        %v5106 = vpack.c.b16 %v5095, %v5094
        %v5107 = vpack.c.b16 %v5097, %v5096
        %v5108 = vpack.c.b16 %v5099, %v5098
        %v5109 = vpack.c.b16 %v5101, %v5100
        %5118 = vmatprep.subr.bf16.mxu0 0
        %5119 = vmatpush1.bf16.msra.mxu0 %v5102
        %5120 = vmatprep.subr.bf16.mxu0 0
        %5121 = vmatpush1.bf16.msra.mxu0 %v5103
        %5122 = vmatprep.subr.bf16.mxu0 0
        %5123 = vmatpush1.bf16.msra.mxu0 %v5104
        %5124 = vmatprep.subr.bf16.mxu0 0
        %5125 = vmatpush1.bf16.msra.mxu0 %v5105
        %5126 = vmatprep.subr.bf16.mxu0 0
        %5127 = vmatpush1.bf16.msra.mxu0 %v5106
        %5128 = vmatprep.subr.bf16.mxu0 0
        %5129 = vmatpush1.bf16.msra.mxu0 %v5107
        %5130 = vmatprep.subr.bf16.mxu0 0
        %5131 = vmatpush1.bf16.msra.mxu0 %v5108
        %5132 = vmatprep.subr.bf16.mxu0 0
        %5133 = vmatpush1.bf16.msra.mxu0 %v5109
        %5134 = vmatprep.subr.bf16.mxu0 0
        %5135 = vmatpush1.bf16.msra.mxu0 0
        %5136 = vmatprep.subr.bf16.mxu0 0
        %5137 = vmatpush1.bf16.msra.mxu0 0
        %5138 = vmatprep.subr.bf16.mxu0 0
        %5139 = vmatpush1.bf16.msra.mxu0 0
        %5140 = vmatprep.subr.bf16.mxu0 0
        %5141 = vmatpush1.bf16.msra.mxu0 0
        %5142 = vmatprep.subr.bf16.mxu0 0
        %5143 = vmatpush1.bf16.msra.mxu0 0
        %5144 = vmatprep.subr.bf16.mxu0 0
        %5145 = vmatpush1.bf16.msra.mxu0 0
        %5146 = vmatprep.subr.bf16.mxu0 0
        %5147 = vmatpush1.bf16.msra.mxu0 0
        %5148 = vmatprep.subr.bf16.mxu0 0
        %5149 = vmatpush1.bf16.msra.mxu0 0
        %5150 = vmatprep.mubr.bf16.mxu0 0
        %5151 = vmatmul.mubr.bf16.gmra.mrb[0].mxu0 %v5062
        %v5152 = vpop.f32.mrb[0].mxu0
        %v5153 = vadd.f32 %v5068, %v5152
        %v5154 = vpop.f32.mrb[0].mxu0
        %v5155 = vpop.f32.mrb[0].mxu0
        %v5156 = vadd.f32 %v5068, %v5155
        %v5157 = vpop.f32.mrb[0].mxu0
        %5158 = vmatprep.mubr.bf16.mxu0 0
        %5159 = vmatmul.mubr.bf16.gmra.mrb[0].mxu0 %v5063
        %v5160 = vpop.f32.mrb[0].mxu0
        %v5161 = vadd.f32 %v5068, %v5160
        %v5162 = vpop.f32.mrb[0].mxu0
        %v5163 = vpop.f32.mrb[0].mxu0
        %v5164 = vadd.f32 %v5068, %v5163
        %v5165 = vpop.f32.mrb[0].mxu0
        %5166 = vdwg.mxu0
        %v5167 = vadd.f32 %v3447, %v5153
        %v5168 = vadd.f32 %v3448, %v5156
        %v5169 = vadd.f32 %v3449, %v5161
        %v5170 = vadd.f32 %v3450, %v5164
        %v5171 = vld [vmem:[%s2182] sm:$0x1]
        %v5172 = vld [vmem:[%s2190] sm:$0x1]
        %v5173 = vld [vmem:[%s2199] sm:$0xff]
        %v5174 = vld [vmem:[%s2199 + $0x8] sm:$0xff]
        %v5175 = vld [vmem:[%s2199 + $0x10] sm:$0xff]
        %v5176 = vld [vmem:[%s2199 + $0x18] sm:$0xff]
        %v5177 = vld [vmem:[%s2199 + $0x20] sm:$0xff]
        %v5178 = vld [vmem:[%s2199 + $0x28] sm:$0xff]
        %v5179 = vld [vmem:[%s2199 + $0x30] sm:$0xff]
        %v5180 = vld [vmem:[%s2199 + $0x38] sm:$0xff]
        %v5181 = vld [vmem:[%s2199 + $0x40] sm:$0xff]
        %v5182 = vld [vmem:[%s2199 + $0x48] sm:$0xff]
        %v5183 = vld [vmem:[%s2199 + $0x50] sm:$0xff]
        %v5184 = vld [vmem:[%s2199 + $0x58] sm:$0xff]
        %v5185 = vld [vmem:[%s2199 + $0x60] sm:$0xff]
        %v5186 = vld [vmem:[%s2199 + $0x68] sm:$0xff]
        %v5187 = vld [vmem:[%s2199 + $0x70] sm:$0xff]
        %v5188 = vld [vmem:[%s2199 + $0x78] sm:$0xff]
        %v5189 = vld [vmem:[%s2208] sm:$0x3]
        %5190 = vadd.xlane.f32.xlu0 %v5167
        %v5191 = vpop.xlane.xlu0 %5190
        %5192 = vadd.xlane.f32.xlu0 %v5168
        %v5193 = vpop.xlane.xlu0 %5192
        %5194 = vadd.xlane.f32.xlu0 %v5169
        %v5195 = vpop.xlane.xlu0 %5194
        %5196 = vadd.xlane.f32.xlu0 %v5170
        %v5197 = vpop.xlane.xlu0 %5196
        %v5198 = vmul.f32 %v5191, %v2713
        %v5199 = vmul.f32 %v5193, %v2713
        %v5200 = vmul.f32 %v5195, %v2713
        %v5201 = vmul.f32 %v5197, %v2713
        %v5202 = vsub.f32 %v5167, %v5198
        %v5203 = vsub.f32 %v5168, %v5199
        %v5204 = vsub.f32 %v5169, %v5200
        %v5205 = vsub.f32 %v5170, %v5201
        %v5206 = vmul.f32 %v5202, %v5202
        %v5207 = vmul.f32 %v5203, %v5203
        %v5208 = vmul.f32 %v5204, %v5204
        %v5209 = vmul.f32 %v5205, %v5205
        %5210 = vadd.xlane.f32.xlu0 %v5206
        %v5211 = vpop.xlane.xlu0 %5210
        %5212 = vadd.xlane.f32.xlu0 %v5207
        %v5213 = vpop.xlane.xlu0 %5212
        %5214 = vadd.xlane.f32.xlu0 %v5208
        %v5215 = vpop.xlane.xlu0 %5214
        %5216 = vadd.xlane.f32.xlu0 %v5209
        %v5217 = vpop.xlane.xlu0 %5216
        %v5218 = vmul.f32 %v5211, %v2713
        %v5219 = vmul.f32 %v5213, %v2713
        %v5220 = vmul.f32 %v5215, %v2713
        %v5221 = vmul.f32 %v5217, %v2713
        %v5222 = vadd.f32 %v5218, 1e-05
        %v5223 = vadd.f32 %v5219, 1e-05
        %v5224 = vadd.f32 %v5220, 1e-05
        %v5225 = vadd.f32 %v5221, 1e-05
        %v5226 = vrsqrt.pop %v5222
        %v5227 = vrsqrt.pop %v5223
        %v5228 = vrsqrt.pop %v5224
        %v5229 = vrsqrt.pop %v5225
        %v5230 = vmul.f32 %v5202, %v5226
        %v5231 = vmul.f32 %v5203, %v5227
        %v5232 = vmul.f32 %v5204, %v5228
        %v5233 = vmul.f32 %v5205, %v5229
        %v5235 = vlaneseq
        %v5236 = vshrl.u32 %v5235, 7
        %v5237 = vsub.s32 0, %v5236
        %v5238 = vrot.slane %v5171, %v5237
        %v5240 = vmul.f32 %v5230, %v5238
        %v5241 = vmul.f32 %v5231, %v5238
        %v5242 = vmul.f32 %v5232, %v5238
        %v5243 = vmul.f32 %v5233, %v5238
        %v5245 = vlaneseq
        %v5246 = vshrl.u32 %v5245, 7
        %v5247 = vsub.s32 0, %v5246
        %v5248 = vrot.slane %v5172, %v5247
        %v5250 = vadd.f32 %v5240, %v5248
        %v5251 = vadd.f32 %v5241, %v5248
        %v5252 = vadd.f32 %v5242, %v5248
        %v5253 = vadd.f32 %v5243, %v5248
        %v5254 = vpack.c.bf16 %v5251, %v5250
        %v5255 = vpack.c.bf16 %v5253, %v5252
        %v5257 = vlaneseq
        %v5258 = vshrl.u32 %v5257, 7
        %v5259 = vsub.s32 0, %v5258
        %v5260 = vrot.slane %v5189, %v5259
        %v5261 = vlaneseq
        %v5262 = vshrl.u32 %v5261, 7
        %v5263 = vsub.s32 1, %v5262
        %v5264 = vrot.slane %v5189, %v5263
        %v5283 = vunpack.c.l.b16 %v5173
        %v5284 = vunpack.c.h.b16 %v5173
        %v5285 = vunpack.c.l.b16 %v5174
        %v5286 = vunpack.c.h.b16 %v5174
        %v5287 = vunpack.c.l.b16 %v5175
        %v5288 = vunpack.c.h.b16 %v5175
        %v5289 = vunpack.c.l.b16 %v5176
        %v5290 = vunpack.c.h.b16 %v5176
        %v5291 = vunpack.c.l.b16 %v5177
        %v5292 = vunpack.c.h.b16 %v5177
        %v5293 = vunpack.c.l.b16 %v5178
        %v5294 = vunpack.c.h.b16 %v5178
        %v5295 = vunpack.c.l.b16 %v5179
        %v5296 = vunpack.c.h.b16 %v5179
        %v5297 = vunpack.c.l.b16 %v5180
        %v5298 = vunpack.c.h.b16 %v5180
        %v5299 = vunpack.c.l.b16 %v5181
        %v5300 = vunpack.c.h.b16 %v5181
        %v5301 = vunpack.c.l.b16 %v5182
        %v5302 = vunpack.c.h.b16 %v5182
        %v5303 = vunpack.c.l.b16 %v5183
        %v5304 = vunpack.c.h.b16 %v5183
        %v5305 = vunpack.c.l.b16 %v5184
        %v5306 = vunpack.c.h.b16 %v5184
        %v5307 = vunpack.c.l.b16 %v5185
        %v5308 = vunpack.c.h.b16 %v5185
        %v5309 = vunpack.c.l.b16 %v5186
        %v5310 = vunpack.c.h.b16 %v5186
        %v5311 = vunpack.c.l.b16 %v5187
        %v5312 = vunpack.c.h.b16 %v5187
        %v5313 = vunpack.c.l.b16 %v5188
        %v5314 = vunpack.c.h.b16 %v5188
        %v5315 = vpack.c.b16 %v5285, %v5283
        %v5316 = vpack.c.b16 %v5286, %v5284
        %v5317 = vpack.c.b16 %v5289, %v5287
        %v5318 = vpack.c.b16 %v5290, %v5288
        %v5319 = vpack.c.b16 %v5293, %v5291
        %v5320 = vpack.c.b16 %v5294, %v5292
        %v5321 = vpack.c.b16 %v5297, %v5295
        %v5322 = vpack.c.b16 %v5298, %v5296
        %v5323 = vpack.c.b16 %v5301, %v5299
        %v5324 = vpack.c.b16 %v5302, %v5300
        %v5325 = vpack.c.b16 %v5305, %v5303
        %v5326 = vpack.c.b16 %v5306, %v5304
        %v5327 = vpack.c.b16 %v5309, %v5307
        %v5328 = vpack.c.b16 %v5310, %v5308
        %v5329 = vpack.c.b16 %v5313, %v5311
        %v5330 = vpack.c.b16 %v5314, %v5312
        %5347 = vmatprep.subr.bf16.mxu0 %v5316
        %5348 = vmatpush1.bf16.msra.mxu0 %v5315
        %5349 = vmatprep.subr.bf16.mxu0 %v5318
        %5350 = vmatpush1.bf16.msra.mxu0 %v5317
        %5351 = vmatprep.subr.bf16.mxu0 %v5320
        %5352 = vmatpush1.bf16.msra.mxu0 %v5319
        %5353 = vmatprep.subr.bf16.mxu0 %v5322
        %5354 = vmatpush1.bf16.msra.mxu0 %v5321
        %5355 = vmatprep.subr.bf16.mxu0 %v5324
        %5356 = vmatpush1.bf16.msra.mxu0 %v5323
        %5357 = vmatprep.subr.bf16.mxu0 %v5326
        %5358 = vmatpush1.bf16.msra.mxu0 %v5325
        %5359 = vmatprep.subr.bf16.mxu0 %v5328
        %5360 = vmatpush1.bf16.msra.mxu0 %v5327
        %5361 = vmatprep.subr.bf16.mxu0 %v5330
        %5362 = vmatpush1.bf16.msra.mxu0 %v5329
        %5363 = vmatprep.subr.bf16.mxu0 0
        %5364 = vmatpush1.bf16.msra.mxu0 0
        %5365 = vmatprep.subr.bf16.mxu0 0
        %5366 = vmatpush1.bf16.msra.mxu0 0
        %5367 = vmatprep.subr.bf16.mxu0 0
        %5368 = vmatpush1.bf16.msra.mxu0 0
        %5369 = vmatprep.subr.bf16.mxu0 0
        %5370 = vmatpush1.bf16.msra.mxu0 0
        %5371 = vmatprep.subr.bf16.mxu0 0
        %5372 = vmatpush1.bf16.msra.mxu0 0
        %5373 = vmatprep.subr.bf16.mxu0 0
        %5374 = vmatpush1.bf16.msra.mxu0 0
        %5375 = vmatprep.subr.bf16.mxu0 0
        %5376 = vmatpush1.bf16.msra.mxu0 0
        %5377 = vmatprep.subr.bf16.mxu0 0
        %5378 = vmatpush1.bf16.msra.mxu0 0
        %5379 = vmatprep.mubr.bf16.mxu0 0
        %5380 = vmatmul.mubr.bf16.gmra.mrb[0].mxu0 %v5254
        %v5381 = vpop.f32.mrb[0].mxu0
        %v5382 = vadd.f32 %v5260, %v5381
        %v5383 = vpop.f32.mrb[0].mxu0
        %v5384 = vadd.f32 %v5264, %v5383
        %v5385 = vpop.f32.mrb[0].mxu0
        %v5386 = vadd.f32 %v5260, %v5385
        %v5387 = vpop.f32.mrb[0].mxu0
        %v5388 = vadd.f32 %v5264, %v5387
        %5389 = vmatprep.mubr.bf16.mxu0 0
        %5390 = vmatmul.mubr.bf16.gmra.mrb[0].mxu0 %v5255
        %v5391 = vpop.f32.mrb[0].mxu0
        %v5392 = vadd.f32 %v5260, %v5391
        %v5393 = vpop.f32.mrb[0].mxu0
        %v5394 = vadd.f32 %v5264, %v5393
        %v5395 = vpop.f32.mrb[0].mxu0
        %v5396 = vadd.f32 %v5260, %v5395
        %v5397 = vpop.f32.mrb[0].mxu0
        %v5398 = vadd.f32 %v5264, %v5397
        %5399 = vdwg.mxu0
        %v5400 = vmul.f32 %v5384, 0.5
        %v5401 = vmul.f32 %v5388, 0.5
        %v5402 = vmul.f32 %v5394, 0.5
        %v5403 = vmul.f32 %v5398, 0.5
        %v5404 = vtanh.pop %v5400
        %v5405 = vtanh.pop %v5401
        %v5406 = vtanh.pop %v5402
        %v5407 = vtanh.pop %v5403
        %v5408 = vadd.f32 %v5404, 1.0
        %v5409 = vadd.f32 %v5405, 1.0
        %v5410 = vadd.f32 %v5406, 1.0
        %v5411 = vadd.f32 %v5407, 1.0
        %v5412 = vmul.f32 %v5408, 0.5
        %v5413 = vmul.f32 %v5409, 0.5
        %v5414 = vmul.f32 %v5410, 0.5
        %v5415 = vmul.f32 %v5411, 0.5
        %v5416 = vmul.f32 %v5382, %v5412
        %v5417 = vmul.f32 %v5386, %v5413
        %v5418 = vmul.f32 %v5392, %v5414
        %v5419 = vmul.f32 %v5396, %v5415
        %5420 = vst [vmem:[#allocation3 + $0x3] sm:$0xff] %v5416
        %5421 = vst [vmem:[#allocation3 + $0xb] sm:$0xff] %v5417
        %5422 = vst [vmem:[#allocation3 + $0x1b] sm:$0xff] %v5418
        %5423 = vst [vmem:[#allocation3 + $0x23] sm:$0xff] %v5419
        %v5424 = vld [vmem:[%s2217] sm:$0x7f]
        %v5425 = vld [vmem:[#allocation3] sm:$0xff]
        %v5426 = vld [vmem:[#allocation3 + $0x8] sm:$0xff]
        %v5427 = vld [vmem:[#allocation3 + $0x18] sm:$0xff]
        %v5428 = vld [vmem:[#allocation3 + $0x20] sm:$0xff]
        %v5429 = vlaneseq
        %v5430 = vshrl.u32 %v5429, 7
        %v5431 = vsub.s32 0, %v5430
        %v5432 = vrot.slane %v5424, %v5431
        %v5433 = vmul.f32 %v5425, %v5432
        %v5434 = vmul.f32 %v5426, %v5432
        %v5435 = vmul.f32 %v5427, %v5432
        %v5436 = vmul.f32 %v5428, %v5432
        %v5437 = vadd.f32 %v5433, 0.0
        %v5438 = vadd.f32 %v5434, 0.0
        %v5439 = vadd.f32 %v5435, 0.0
        %v5440 = vadd.f32 %v5436, 0.0
        %v5441 = vld [vmem:[#allocation3 + $0x1] sm:$0xff]
        %v5442 = vld [vmem:[#allocation3 + $0x9] sm:$0xff]
        %v5443 = vld [vmem:[#allocation3 + $0x19] sm:$0xff]
        %v5444 = vld [vmem:[#allocation3 + $0x21] sm:$0xff]
        %v5445 = vlaneseq
        %v5446 = vshrl.u32 %v5445, 7
        %v5447 = vsub.s32 1, %v5446
        %v5448 = vrot.slane %v5424, %v5447
        %v5449 = vmul.f32 %v5441, %v5448
        %v5450 = vmul.f32 %v5442, %v5448
        %v5451 = vmul.f32 %v5443, %v5448
        %v5452 = vmul.f32 %v5444, %v5448
        %v5453 = vadd.f32 %v5437, %v5449
        %v5454 = vadd.f32 %v5438, %v5450
        %v5455 = vadd.f32 %v5439, %v5451
        %v5456 = vadd.f32 %v5440, %v5452
        %v5457 = vld [vmem:[#allocation3 + $0x2] sm:$0xff]
        %v5458 = vld [vmem:[#allocation3 + $0xa] sm:$0xff]
        %v5459 = vld [vmem:[#allocation3 + $0x1a] sm:$0xff]
        %v5460 = vld [vmem:[#allocation3 + $0x22] sm:$0xff]
        %v5461 = vlaneseq
        %v5462 = vshrl.u32 %v5461, 7
        %v5463 = vsub.s32 2, %v5462
        %v5464 = vrot.slane %v5424, %v5463
        %v5465 = vmul.f32 %v5457, %v5464
        %v5466 = vmul.f32 %v5458, %v5464
        %v5467 = vmul.f32 %v5459, %v5464
        %v5468 = vmul.f32 %v5460, %v5464
        %v5469 = vadd.f32 %v5453, %v5465
        %v5470 = vadd.f32 %v5454, %v5466
        %v5471 = vadd.f32 %v5455, %v5467
        %v5472 = vadd.f32 %v5456, %v5468
        %v5473 = vld [vmem:[#allocation3 + $0x3] sm:$0xff]
        %v5474 = vld [vmem:[#allocation3 + $0xb] sm:$0xff]
        %v5475 = vld [vmem:[#allocation3 + $0x1b] sm:$0xff]
        %v5476 = vld [vmem:[#allocation3 + $0x23] sm:$0xff]
        %v5477 = vlaneseq
        %v5478 = vshrl.u32 %v5477, 7
        %v5479 = vsub.s32 3, %v5478
        %v5480 = vrot.slane %v5424, %v5479
        %v5481 = vmul.f32 %v5473, %v5480
        %v5482 = vmul.f32 %v5474, %v5480
        %v5483 = vmul.f32 %v5475, %v5480
        %v5484 = vmul.f32 %v5476, %v5480
        %v5485 = vadd.f32 %v5469, %v5481
        %v5486 = vadd.f32 %v5470, %v5482
        %v5487 = vadd.f32 %v5471, %v5483
        %v5488 = vadd.f32 %v5472, %v5484
        %v5489 = vld [vmem:[#allocation3 + $0x4] sm:$0xff]
        %v5490 = vld [vmem:[#allocation3 + $0xc] sm:$0xff]
        %v5491 = vld [vmem:[#allocation3 + $0x1c] sm:$0xff]
        %v5492 = vld [vmem:[#allocation3 + $0x24] sm:$0xff]
        %v5493 = vlaneseq
        %v5494 = vshrl.u32 %v5493, 7
        %v5495 = vsub.s32 4, %v5494
        %v5496 = vrot.slane %v5424, %v5495
        %v5497 = vmul.f32 %v5489, %v5496
        %v5498 = vmul.f32 %v5490, %v5496
        %v5499 = vmul.f32 %v5491, %v5496
        %v5500 = vmul.f32 %v5492, %v5496
        %v5501 = vadd.f32 %v5485, %v5497
        %v5502 = vadd.f32 %v5486, %v5498
        %v5503 = vadd.f32 %v5487, %v5499
        %v5504 = vadd.f32 %v5488, %v5500
        %v5505 = vld [vmem:[#allocation3 + $0x5] sm:$0xff]
        %v5506 = vld [vmem:[#allocation3 + $0xd] sm:$0xff]
        %v5507 = vld [vmem:[#allocation3 + $0x1d] sm:$0xff]
        %v5508 = vld [vmem:[#allocation3 + $0x25] sm:$0xff]
        %v5509 = vlaneseq
        %v5510 = vshrl.u32 %v5509, 7
        %v5511 = vsub.s32 5, %v5510
        %v5512 = vrot.slane %v5424, %v5511
        %v5513 = vmul.f32 %v5505, %v5512
        %v5514 = vmul.f32 %v5506, %v5512
        %v5515 = vmul.f32 %v5507, %v5512
        %v5516 = vmul.f32 %v5508, %v5512
        %v5517 = vadd.f32 %v5501, %v5513
        %v5518 = vadd.f32 %v5502, %v5514
        %v5519 = vadd.f32 %v5503, %v5515
        %v5520 = vadd.f32 %v5504, %v5516
        %v5521 = vld [vmem:[#allocation3 + $0x6] sm:$0xff]
        %v5522 = vld [vmem:[#allocation3 + $0xe] sm:$0xff]
        %v5523 = vld [vmem:[#allocation3 + $0x1e] sm:$0xff]
        %v5524 = vld [vmem:[#allocation3 + $0x26] sm:$0xff]
        %v5525 = vlaneseq
        %v5526 = vshrl.u32 %v5525, 7
        %v5527 = vsub.s32 6, %v5526
        %v5528 = vrot.slane %v5424, %v5527
        %v5529 = vmul.f32 %v5521, %v5528
        %v5530 = vmul.f32 %v5522, %v5528
        %v5531 = vmul.f32 %v5523, %v5528
        %v5532 = vmul.f32 %v5524, %v5528
        %v5533 = vadd.f32 %v5517, %v5529
        %v5534 = vadd.f32 %v5518, %v5530
        %v5535 = vadd.f32 %v5519, %v5531
        %v5536 = vadd.f32 %v5520, %v5532
        %v5537 = vld [vmem:[%s2225] sm:$0x1]
        %v5538 = vld [vmem:[%s2233] sm:$0x1]
        %v5539 = vld [vmem:[%s2241] sm:$0x1]
        %v5540 = vld [vmem:[%s2250] sm:$0xf]
        %v5541 = vld [vmem:[%s2250 + $0x4] sm:$0xf]
        %v5542 = vld [vmem:[%s2250 + $0x8] sm:$0xf]
        %v5543 = vld [vmem:[%s2250 + $0xc] sm:$0xf]
        %v5544 = vld [vmem:[%s2250 + $0x10] sm:$0xf]
        %v5545 = vld [vmem:[%s2250 + $0x14] sm:$0xf]
        %v5546 = vld [vmem:[%s2250 + $0x18] sm:$0xf]
        %v5547 = vld [vmem:[%s2250 + $0x1c] sm:$0xf]
        %v5548 = vld [vmem:[%s2250 + $0x20] sm:$0xf]
        %v5549 = vld [vmem:[%s2250 + $0x24] sm:$0xf]
        %v5550 = vld [vmem:[%s2250 + $0x28] sm:$0xf]
        %v5551 = vld [vmem:[%s2250 + $0x2c] sm:$0xf]
        %v5552 = vld [vmem:[%s2250 + $0x30] sm:$0xf]
        %v5553 = vld [vmem:[%s2250 + $0x34] sm:$0xf]
        %v5554 = vld [vmem:[%s2250 + $0x38] sm:$0xf]
        %v5555 = vld [vmem:[%s2250 + $0x3c] sm:$0xf]
        %v5556 = vld [vmem:[%s2258] sm:$0x1]
        %v5558 = vlaneseq
        %v5559 = vshrl.u32 %v5558, 7
        %v5560 = vsub.s32 0, %v5559
        %v5561 = vrot.slane %v5537, %v5560
        %v5563 = vadd.f32 %v5533, %v5561
        %v5564 = vadd.f32 %v5534, %v5561
        %v5565 = vadd.f32 %v5535, %v5561
        %v5566 = vadd.f32 %v5536, %v5561
        %v5568 = vlaneseq
        %v5569 = vshrl.u32 %v5568, 7
        %v5570 = vsub.s32 0, %v5569
        %v5571 = vrot.slane %v5538, %v5570
        %v5573 = vmul.f32 %v5563, %v5571
        %v5574 = vmul.f32 %v5564, %v5571
        %v5575 = vmul.f32 %v5565, %v5571
        %v5576 = vmul.f32 %v5566, %v5571
        %v5578 = vlaneseq
        %v5579 = vshrl.u32 %v5578, 7
        %v5580 = vsub.s32 0, %v5579
        %v5581 = vrot.slane %v5539, %v5580
        %v5583 = vadd.f32 %v5573, %v5581
        %v5584 = vadd.f32 %v5574, %v5581
        %v5585 = vadd.f32 %v5575, %v5581
        %v5586 = vadd.f32 %v5576, %v5581
        %v5587 = vmul.f32 %v5583, 0.5
        %v5588 = vmul.f32 %v5584, 0.5
        %v5589 = vmul.f32 %v5585, 0.5
        %v5590 = vmul.f32 %v5586, 0.5
        %v5591 = vtanh.pop %v5587
        %v5592 = vtanh.pop %v5588
        %v5593 = vtanh.pop %v5589
        %v5594 = vtanh.pop %v5590
        %v5595 = vadd.f32 %v5591, 1.0
        %v5596 = vadd.f32 %v5592, 1.0
        %v5597 = vadd.f32 %v5593, 1.0
        %v5598 = vadd.f32 %v5594, 1.0
        %v5599 = vmul.f32 %v5595, 0.5
        %v5600 = vmul.f32 %v5596, 0.5
        %v5601 = vmul.f32 %v5597, 0.5
        %v5602 = vmul.f32 %v5598, 0.5
        %v5603 = vmul.f32 %v5583, %v5599
        %v5604 = vmul.f32 %v5584, %v5600
        %v5605 = vmul.f32 %v5585, %v5601
        %v5606 = vmul.f32 %v5586, %v5602
        %v5607 = vpack.c.bf16 %v5604, %v5603
        %v5608 = vpack.c.bf16 %v5606, %v5605
        %v5610 = vlaneseq
        %v5611 = vshrl.u32 %v5610, 7
        %v5612 = vsub.s32 0, %v5611
        %v5613 = vrot.slane %v5556, %v5612
        %v5631 = vunpack.c.l.b16 %v5540
        %v5632 = vunpack.c.l.b16 %v5541
        %v5633 = vunpack.c.l.b16 %v5542
        %v5634 = vunpack.c.l.b16 %v5543
        %v5635 = vunpack.c.l.b16 %v5544
        %v5636 = vunpack.c.l.b16 %v5545
        %v5637 = vunpack.c.l.b16 %v5546
        %v5638 = vunpack.c.l.b16 %v5547
        %v5639 = vunpack.c.l.b16 %v5548
        %v5640 = vunpack.c.l.b16 %v5549
        %v5641 = vunpack.c.l.b16 %v5550
        %v5642 = vunpack.c.l.b16 %v5551
        %v5643 = vunpack.c.l.b16 %v5552
        %v5644 = vunpack.c.l.b16 %v5553
        %v5645 = vunpack.c.l.b16 %v5554
        %v5646 = vunpack.c.l.b16 %v5555
        %v5647 = vpack.c.b16 %v5632, %v5631
        %v5648 = vpack.c.b16 %v5634, %v5633
        %v5649 = vpack.c.b16 %v5636, %v5635
        %v5650 = vpack.c.b16 %v5638, %v5637
        %v5651 = vpack.c.b16 %v5640, %v5639
        %v5652 = vpack.c.b16 %v5642, %v5641
        %v5653 = vpack.c.b16 %v5644, %v5643
        %v5654 = vpack.c.b16 %v5646, %v5645
        %5663 = vmatprep.subr.bf16.mxu0 0
        %5664 = vmatpush1.bf16.msra.mxu0 %v5647
        %5665 = vmatprep.subr.bf16.mxu0 0
        %5666 = vmatpush1.bf16.msra.mxu0 %v5648
        %5667 = vmatprep.subr.bf16.mxu0 0
        %5668 = vmatpush1.bf16.msra.mxu0 %v5649
        %5669 = vmatprep.subr.bf16.mxu0 0
        %5670 = vmatpush1.bf16.msra.mxu0 %v5650
        %5671 = vmatprep.subr.bf16.mxu0 0
        %5672 = vmatpush1.bf16.msra.mxu0 %v5651
        %5673 = vmatprep.subr.bf16.mxu0 0
        %5674 = vmatpush1.bf16.msra.mxu0 %v5652
        %5675 = vmatprep.subr.bf16.mxu0 0
        %5676 = vmatpush1.bf16.msra.mxu0 %v5653
        %5677 = vmatprep.subr.bf16.mxu0 0
        %5678 = vmatpush1.bf16.msra.mxu0 %v5654
        %5679 = vmatprep.subr.bf16.mxu0 0
        %5680 = vmatpush1.bf16.msra.mxu0 0
        %5681 = vmatprep.subr.bf16.mxu0 0
        %5682 = vmatpush1.bf16.msra.mxu0 0
        %5683 = vmatprep.subr.bf16.mxu0 0
        %5684 = vmatpush1.bf16.msra.mxu0 0
        %5685 = vmatprep.subr.bf16.mxu0 0
        %5686 = vmatpush1.bf16.msra.mxu0 0
        %5687 = vmatprep.subr.bf16.mxu0 0
        %5688 = vmatpush1.bf16.msra.mxu0 0
        %5689 = vmatprep.subr.bf16.mxu0 0
        %5690 = vmatpush1.bf16.msra.mxu0 0
        %5691 = vmatprep.subr.bf16.mxu0 0
        %5692 = vmatpush1.bf16.msra.mxu0 0
        %5693 = vmatprep.subr.bf16.mxu0 0
        %5694 = vmatpush1.bf16.msra.mxu0 0
        %5695 = vmatprep.mubr.bf16.mxu0 0
        %5696 = vmatmul.mubr.bf16.gmra.mrb[0].mxu0 %v5607
        %v5697 = vpop.f32.mrb[0].mxu0
        %v5698 = vadd.f32 %v5613, %v5697
        %v5699 = vpop.f32.mrb[0].mxu0
        %v5700 = vpop.f32.mrb[0].mxu0
        %v5701 = vadd.f32 %v5613, %v5700
        %v5702 = vpop.f32.mrb[0].mxu0
        %5703 = vmatprep.mubr.bf16.mxu0 0
        %5704 = vmatmul.mubr.bf16.gmra.mrb[0].mxu0 %v5608
        %v5705 = vpop.f32.mrb[0].mxu0
        %v5706 = vadd.f32 %v5613, %v5705
        %v5707 = vpop.f32.mrb[0].mxu0
        %v5708 = vpop.f32.mrb[0].mxu0
        %v5709 = vadd.f32 %v5613, %v5708
        %v5710 = vpop.f32.mrb[0].mxu0
        %5711 = vdwg.mxu0
        %v5712 = vadd.f32 %v5167, %v5698
        %v5713 = vadd.f32 %v5168, %v5701
        %v5714 = vadd.f32 %v5169, %v5706
        %v5715 = vadd.f32 %v5170, %v5709
        %v5716 = vld [vmem:[%s2266] sm:$0x1]
        %v5717 = vld [vmem:[%s2274] sm:$0x1]
        %v5718 = vld [vmem:[%s2283] sm:$0xff]
        %v5719 = vld [vmem:[%s2283 + $0x8] sm:$0xff]
        %v5720 = vld [vmem:[%s2283 + $0x10] sm:$0xff]
        %v5721 = vld [vmem:[%s2283 + $0x18] sm:$0xff]
        %v5722 = vld [vmem:[%s2283 + $0x20] sm:$0xff]
        %v5723 = vld [vmem:[%s2283 + $0x28] sm:$0xff]
        %v5724 = vld [vmem:[%s2283 + $0x30] sm:$0xff]
        %v5725 = vld [vmem:[%s2283 + $0x38] sm:$0xff]
        %v5726 = vld [vmem:[%s2283 + $0x40] sm:$0xff]
        %v5727 = vld [vmem:[%s2283 + $0x48] sm:$0xff]
        %v5728 = vld [vmem:[%s2283 + $0x50] sm:$0xff]
        %v5729 = vld [vmem:[%s2283 + $0x58] sm:$0xff]
        %v5730 = vld [vmem:[%s2283 + $0x60] sm:$0xff]
        %v5731 = vld [vmem:[%s2283 + $0x68] sm:$0xff]
        %v5732 = vld [vmem:[%s2283 + $0x70] sm:$0xff]
        %v5733 = vld [vmem:[%s2283 + $0x78] sm:$0xff]
        %v5734 = vld [vmem:[%s2283 + $0x80] sm:$0xff]
        %v5735 = vld [vmem:[%s2283 + $0x88] sm:$0xff]
        %v5736 = vld [vmem:[%s2283 + $0x90] sm:$0xff]
        %v5737 = vld [vmem:[%s2283 + $0x98] sm:$0xff]
        %v5738 = vld [vmem:[%s2283 + $0xa0] sm:$0xff]
        %v5739 = vld [vmem:[%s2283 + $0xa8] sm:$0xff]
        %v5740 = vld [vmem:[%s2283 + $0xb0] sm:$0xff]
        %v5741 = vld [vmem:[%s2283 + $0xb8] sm:$0xff]
        %v5742 = vld [vmem:[%s2283 + $0xc0] sm:$0xff]
        %v5743 = vld [vmem:[%s2283 + $0xc8] sm:$0xff]
        %v5744 = vld [vmem:[%s2283 + $0xd0] sm:$0xff]
        %v5745 = vld [vmem:[%s2283 + $0xd8] sm:$0xff]
        %v5746 = vld [vmem:[%s2283 + $0xe0] sm:$0xff]
        %v5747 = vld [vmem:[%s2283 + $0xe8] sm:$0xff]
        %v5748 = vld [vmem:[%s2283 + $0xf0] sm:$0xff]
        %v5749 = vld [vmem:[%s2283 + $0xf8] sm:$0xff]
        %v5750 = vld [vmem:[%s2292] sm:$0xf]
        %v5751 = vld [vmem:[%s2301] sm:$0xf]
        %v5752 = vld [vmem:[%s2301 + $0x4] sm:$0xf]
        %v5753 = vld [vmem:[%s2301 + $0x8] sm:$0xf]
        %v5754 = vld [vmem:[%s2301 + $0xc] sm:$0xf]
        %v5755 = vld [vmem:[%s2301 + $0x10] sm:$0xf]
        %v5756 = vld [vmem:[%s2301 + $0x14] sm:$0xf]
        %v5757 = vld [vmem:[%s2301 + $0x18] sm:$0xf]
        %v5758 = vld [vmem:[%s2301 + $0x1c] sm:$0xf]
        %v5759 = vld [vmem:[%s2301 + $0x20] sm:$0xf]
        %v5760 = vld [vmem:[%s2301 + $0x24] sm:$0xf]
        %v5761 = vld [vmem:[%s2301 + $0x28] sm:$0xf]
        %v5762 = vld [vmem:[%s2301 + $0x2c] sm:$0xf]
        %v5763 = vld [vmem:[%s2301 + $0x30] sm:$0xf]
        %v5764 = vld [vmem:[%s2301 + $0x34] sm:$0xf]
        %v5765 = vld [vmem:[%s2301 + $0x38] sm:$0xf]
        %v5766 = vld [vmem:[%s2301 + $0x3c] sm:$0xf]
        %v5767 = vld [vmem:[%s2301 + $0x40] sm:$0xf]
        %v5768 = vld [vmem:[%s2301 + $0x44] sm:$0xf]
        %v5769 = vld [vmem:[%s2301 + $0x48] sm:$0xf]
        %v5770 = vld [vmem:[%s2301 + $0x4c] sm:$0xf]
        %v5771 = vld [vmem:[%s2301 + $0x50] sm:$0xf]
        %v5772 = vld [vmem:[%s2301 + $0x54] sm:$0xf]
        %v5773 = vld [vmem:[%s2301 + $0x58] sm:$0xf]
        %v5774 = vld [vmem:[%s2301 + $0x5c] sm:$0xf]
        %v5775 = vld [vmem:[%s2301 + $0x60] sm:$0xf]
        %v5776 = vld [vmem:[%s2301 + $0x64] sm:$0xf]
        %v5777 = vld [vmem:[%s2301 + $0x68] sm:$0xf]
        %v5778 = vld [vmem:[%s2301 + $0x6c] sm:$0xf]
        %v5779 = vld [vmem:[%s2301 + $0x70] sm:$0xf]
        %v5780 = vld [vmem:[%s2301 + $0x74] sm:$0xf]
        %v5781 = vld [vmem:[%s2301 + $0x78] sm:$0xf]
        %v5782 = vld [vmem:[%s2301 + $0x7c] sm:$0xf]
        %v5783 = vld [vmem:[%s2301 + $0x80] sm:$0xf]
        %v5784 = vld [vmem:[%s2301 + $0x84] sm:$0xf]
        %v5785 = vld [vmem:[%s2301 + $0x88] sm:$0xf]
        %v5786 = vld [vmem:[%s2301 + $0x8c] sm:$0xf]
        %v5787 = vld [vmem:[%s2301 + $0x90] sm:$0xf]
        %v5788 = vld [vmem:[%s2301 + $0x94] sm:$0xf]
        %v5789 = vld [vmem:[%s2301 + $0x98] sm:$0xf]
        %v5790 = vld [vmem:[%s2301 + $0x9c] sm:$0xf]
        %v5791 = vld [vmem:[%s2301 + $0xa0] sm:$0xf]
        %v5792 = vld [vmem:[%s2301 + $0xa4] sm:$0xf]
        %v5793 = vld [vmem:[%s2301 + $0xa8] sm:$0xf]
        %v5794 = vld [vmem:[%s2301 + $0xac] sm:$0xf]
        %v5795 = vld [vmem:[%s2301 + $0xb0] sm:$0xf]
        %v5796 = vld [vmem:[%s2301 + $0xb4] sm:$0xf]
        %v5797 = vld [vmem:[%s2301 + $0xb8] sm:$0xf]
        %v5798 = vld [vmem:[%s2301 + $0xbc] sm:$0xf]
        %v5799 = vld [vmem:[%s2301 + $0xc0] sm:$0xf]
        %v5800 = vld [vmem:[%s2301 + $0xc4] sm:$0xf]
        %v5801 = vld [vmem:[%s2301 + $0xc8] sm:$0xf]
        %v5802 = vld [vmem:[%s2301 + $0xcc] sm:$0xf]
        %v5803 = vld [vmem:[%s2301 + $0xd0] sm:$0xf]
        %v5804 = vld [vmem:[%s2301 + $0xd4] sm:$0xf]
        %v5805 = vld [vmem:[%s2301 + $0xd8] sm:$0xf]
        %v5806 = vld [vmem:[%s2301 + $0xdc] sm:$0xf]
        %v5807 = vld [vmem:[%s2301 + $0xe0] sm:$0xf]
        %v5808 = vld [vmem:[%s2301 + $0xe4] sm:$0xf]
        %v5809 = vld [vmem:[%s2301 + $0xe8] sm:$0xf]
        %v5810 = vld [vmem:[%s2301 + $0xec] sm:$0xf]
        %v5811 = vld [vmem:[%s2301 + $0xf0] sm:$0xf]
        %v5812 = vld [vmem:[%s2301 + $0xf4] sm:$0xf]
        %v5813 = vld [vmem:[%s2301 + $0xf8] sm:$0xf]
        %v5814 = vld [vmem:[%s2301 + $0xfc] sm:$0xf]
        %v5815 = vld [vmem:[%s2571] sm:$0x1]
        %5816 = vadd.xlane.f32.xlu0 %v5712
        %v5817 = vpop.xlane.xlu0 %5816
        %5818 = vadd.xlane.f32.xlu0 %v5713
        %v5819 = vpop.xlane.xlu0 %5818
        %5820 = vadd.xlane.f32.xlu0 %v5714
        %v5821 = vpop.xlane.xlu0 %5820
        %5822 = vadd.xlane.f32.xlu0 %v5715
        %v5823 = vpop.xlane.xlu0 %5822
        %v5824 = vmul.f32 %v5817, %v2713
        %v5825 = vmul.f32 %v5819, %v2713
        %v5826 = vmul.f32 %v5821, %v2713
        %v5827 = vmul.f32 %v5823, %v2713
        %v5828 = vsub.f32 %v5712, %v5824
        %v5829 = vsub.f32 %v5713, %v5825
        %v5830 = vsub.f32 %v5714, %v5826
        %v5831 = vsub.f32 %v5715, %v5827
        %v5832 = vmul.f32 %v5828, %v5828
        %v5833 = vmul.f32 %v5829, %v5829
        %v5834 = vmul.f32 %v5830, %v5830
        %v5835 = vmul.f32 %v5831, %v5831
        %5836 = vadd.xlane.f32.xlu0 %v5832
        %v5837 = vpop.xlane.xlu0 %5836
        %5838 = vadd.xlane.f32.xlu0 %v5833
        %v5839 = vpop.xlane.xlu0 %5838
        %5840 = vadd.xlane.f32.xlu0 %v5834
        %v5841 = vpop.xlane.xlu0 %5840
        %5842 = vadd.xlane.f32.xlu0 %v5835
        %v5843 = vpop.xlane.xlu0 %5842
        %v5844 = vmul.f32 %v5837, %v2713
        %v5845 = vmul.f32 %v5839, %v2713
        %v5846 = vmul.f32 %v5841, %v2713
        %v5847 = vmul.f32 %v5843, %v2713
        %v5848 = vadd.f32 %v5844, 1e-05
        %v5849 = vadd.f32 %v5845, 1e-05
        %v5850 = vadd.f32 %v5846, 1e-05
        %v5851 = vadd.f32 %v5847, 1e-05
        %v5852 = vrsqrt.pop %v5848
        %v5853 = vrsqrt.pop %v5849
        %v5854 = vrsqrt.pop %v5850
        %v5855 = vrsqrt.pop %v5851
        %v5856 = vmul.f32 %v5828, %v5852
        %v5857 = vmul.f32 %v5829, %v5853
        %v5858 = vmul.f32 %v5830, %v5854
        %v5859 = vmul.f32 %v5831, %v5855
        %v5861 = vlaneseq
        %v5862 = vshrl.u32 %v5861, 7
        %v5863 = vsub.s32 0, %v5862
        %v5864 = vrot.slane %v5716, %v5863
        %v5866 = vmul.f32 %v5856, %v5864
        %v5867 = vmul.f32 %v5857, %v5864
        %v5868 = vmul.f32 %v5858, %v5864
        %v5869 = vmul.f32 %v5859, %v5864
        %v5871 = vlaneseq
        %v5872 = vshrl.u32 %v5871, 7
        %v5873 = vsub.s32 0, %v5872
        %v5874 = vrot.slane %v5717, %v5873
        %v5876 = vadd.f32 %v5866, %v5874
        %v5877 = vadd.f32 %v5867, %v5874
        %v5878 = vadd.f32 %v5868, %v5874
        %v5879 = vadd.f32 %v5869, %v5874
        %v5880 = vpack.c.bf16 %v5877, %v5876
        %v5881 = vpack.c.bf16 %v5879, %v5878
        %v5883 = vlaneseq
        %v5884 = vshrl.u32 %v5883, 7
        %v5885 = vsub.s32 0, %v5884
        %v5886 = vrot.slane %v5750, %v5885
        %v5887 = vlaneseq
        %v5888 = vshrl.u32 %v5887, 7
        %v5889 = vsub.s32 1, %v5888
        %v5890 = vrot.slane %v5750, %v5889
        %v5891 = vlaneseq
        %v5892 = vshrl.u32 %v5891, 7
        %v5893 = vsub.s32 2, %v5892
        %v5894 = vrot.slane %v5750, %v5893
        %v5895 = vlaneseq
        %v5896 = vshrl.u32 %v5895, 7
        %v5897 = vsub.s32 3, %v5896
        %v5898 = vrot.slane %v5750, %v5897
        %v5935 = vunpack.c.l.b16 %v5718
        %v5936 = vunpack.c.h.b16 %v5718
        %v5937 = vunpack.c.l.b16 %v5719
        %v5938 = vunpack.c.h.b16 %v5719
        %v5939 = vunpack.c.l.b16 %v5720
        %v5940 = vunpack.c.h.b16 %v5720
        %v5941 = vunpack.c.l.b16 %v5721
        %v5942 = vunpack.c.h.b16 %v5721
        %v5943 = vunpack.c.l.b16 %v5722
        %v5944 = vunpack.c.h.b16 %v5722
        %v5945 = vunpack.c.l.b16 %v5723
        %v5946 = vunpack.c.h.b16 %v5723
        %v5947 = vunpack.c.l.b16 %v5724
        %v5948 = vunpack.c.h.b16 %v5724
        %v5949 = vunpack.c.l.b16 %v5725
        %v5950 = vunpack.c.h.b16 %v5725
        %v5951 = vunpack.c.l.b16 %v5726
        %v5952 = vunpack.c.h.b16 %v5726
        %v5953 = vunpack.c.l.b16 %v5727
        %v5954 = vunpack.c.h.b16 %v5727
        %v5955 = vunpack.c.l.b16 %v5728
        %v5956 = vunpack.c.h.b16 %v5728
        %v5957 = vunpack.c.l.b16 %v5729
        %v5958 = vunpack.c.h.b16 %v5729
        %v5959 = vunpack.c.l.b16 %v5730
        %v5960 = vunpack.c.h.b16 %v5730
        %v5961 = vunpack.c.l.b16 %v5731
        %v5962 = vunpack.c.h.b16 %v5731
        %v5963 = vunpack.c.l.b16 %v5732
        %v5964 = vunpack.c.h.b16 %v5732
        %v5965 = vunpack.c.l.b16 %v5733
        %v5966 = vunpack.c.h.b16 %v5733
        %v5967 = vunpack.c.l.b16 %v5734
        %v5968 = vunpack.c.h.b16 %v5734
        %v5969 = vunpack.c.l.b16 %v5735
        %v5970 = vunpack.c.h.b16 %v5735
        %v5971 = vunpack.c.l.b16 %v5736
        %v5972 = vunpack.c.h.b16 %v5736
        %v5973 = vunpack.c.l.b16 %v5737
        %v5974 = vunpack.c.h.b16 %v5737
        %v5975 = vunpack.c.l.b16 %v5738
        %v5976 = vunpack.c.h.b16 %v5738
        %v5977 = vunpack.c.l.b16 %v5739
        %v5978 = vunpack.c.h.b16 %v5739
        %v5979 = vunpack.c.l.b16 %v5740
        %v5980 = vunpack.c.h.b16 %v5740
        %v5981 = vunpack.c.l.b16 %v5741
        %v5982 = vunpack.c.h.b16 %v5741
        %v5983 = vunpack.c.l.b16 %v5742
        %v5984 = vunpack.c.h.b16 %v5742
        %v5985 = vunpack.c.l.b16 %v5743
        %v5986 = vunpack.c.h.b16 %v5743
        %v5987 = vunpack.c.l.b16 %v5744
        %v5988 = vunpack.c.h.b16 %v5744
        %v5989 = vunpack.c.l.b16 %v5745
        %v5990 = vunpack.c.h.b16 %v5745
        %v5991 = vunpack.c.l.b16 %v5746
        %v5992 = vunpack.c.h.b16 %v5746
        %v5993 = vunpack.c.l.b16 %v5747
        %v5994 = vunpack.c.h.b16 %v5747
        %v5995 = vunpack.c.l.b16 %v5748
        %v5996 = vunpack.c.h.b16 %v5748
        %v5997 = vunpack.c.l.b16 %v5749
        %v5998 = vunpack.c.h.b16 %v5749
        %v5999 = vpack.c.b16 %v5939, %v5935
        %v6000 = vpack.c.b16 %v5940, %v5936
        %v6001 = vpack.c.b16 %v5941, %v5937
        %v6002 = vpack.c.b16 %v5942, %v5938
        %v6003 = vpack.c.b16 %v5947, %v5943
        %v6004 = vpack.c.b16 %v5948, %v5944
        %v6005 = vpack.c.b16 %v5949, %v5945
        %v6006 = vpack.c.b16 %v5950, %v5946
        %v6007 = vpack.c.b16 %v5955, %v5951
        %v6008 = vpack.c.b16 %v5956, %v5952
        %v6009 = vpack.c.b16 %v5957, %v5953
        %v6010 = vpack.c.b16 %v5958, %v5954
        %v6011 = vpack.c.b16 %v5963, %v5959
        %v6012 = vpack.c.b16 %v5964, %v5960
        %v6013 = vpack.c.b16 %v5965, %v5961
        %v6014 = vpack.c.b16 %v5966, %v5962
        %v6015 = vpack.c.b16 %v5971, %v5967
        %v6016 = vpack.c.b16 %v5972, %v5968
        %v6017 = vpack.c.b16 %v5973, %v5969
        %v6018 = vpack.c.b16 %v5974, %v5970
        %v6019 = vpack.c.b16 %v5979, %v5975
        %v6020 = vpack.c.b16 %v5980, %v5976
        %v6021 = vpack.c.b16 %v5981, %v5977
        %v6022 = vpack.c.b16 %v5982, %v5978
        %v6023 = vpack.c.b16 %v5987, %v5983
        %v6024 = vpack.c.b16 %v5988, %v5984
        %v6025 = vpack.c.b16 %v5989, %v5985
        %v6026 = vpack.c.b16 %v5990, %v5986
        %v6027 = vpack.c.b16 %v5995, %v5991
        %v6028 = vpack.c.b16 %v5996, %v5992
        %v6029 = vpack.c.b16 %v5997, %v5993
        %v6030 = vpack.c.b16 %v5998, %v5994
        %6063 = vmatprep.subr.bf16.mxu0 %v6000
        %6064 = vmatpush1.bf16.msra.mxu0 %v5999
        %6065 = vmatprep.subr.bf16.mxu0 %v6004
        %6066 = vmatpush1.bf16.msra.mxu0 %v6003
        %6067 = vmatprep.subr.bf16.mxu0 %v6008
        %6068 = vmatpush1.bf16.msra.mxu0 %v6007
        %6069 = vmatprep.subr.bf16.mxu0 %v6012
        %6070 = vmatpush1.bf16.msra.mxu0 %v6011
        %6071 = vmatprep.subr.bf16.mxu0 %v6016
        %6072 = vmatpush1.bf16.msra.mxu0 %v6015
        %6073 = vmatprep.subr.bf16.mxu0 %v6020
        %6074 = vmatpush1.bf16.msra.mxu0 %v6019
        %6075 = vmatprep.subr.bf16.mxu0 %v6024
        %6076 = vmatpush1.bf16.msra.mxu0 %v6023
        %6077 = vmatprep.subr.bf16.mxu0 %v6028
        %6078 = vmatpush1.bf16.msra.mxu0 %v6027
        %6079 = vmatprep.subr.bf16.mxu0 0
        %6080 = vmatpush1.bf16.msra.mxu0 0
        %6081 = vmatprep.subr.bf16.mxu0 0
        %6082 = vmatpush1.bf16.msra.mxu0 0
        %6083 = vmatprep.subr.bf16.mxu0 0
        %6084 = vmatpush1.bf16.msra.mxu0 0
        %6085 = vmatprep.subr.bf16.mxu0 0
        %6086 = vmatpush1.bf16.msra.mxu0 0
        %6087 = vmatprep.subr.bf16.mxu0 0
        %6088 = vmatpush1.bf16.msra.mxu0 0
        %6089 = vmatprep.subr.bf16.mxu0 0
        %6090 = vmatpush1.bf16.msra.mxu0 0
        %6091 = vmatprep.subr.bf16.mxu0 0
        %6092 = vmatpush1.bf16.msra.mxu0 0
        %6093 = vmatprep.subr.bf16.mxu0 0
        %6094 = vmatpush1.bf16.msra.mxu0 0
        %6095 = vmatprep.mubr.bf16.mxu0 0
        %6096 = vmatmul.mubr.bf16.gmra.mrb[0].mxu0 %v5880
        %v6097 = vpop.f32.mrb[0].mxu0
        %v6098 = vadd.f32 %v5886, %v6097
        %v6099 = vpop.f32.mrb[0].mxu0
        %v6100 = vadd.f32 %v5890, %v6099
        %v6101 = vpop.f32.mrb[0].mxu0
        %v6102 = vadd.f32 %v5886, %v6101
        %v6103 = vpop.f32.mrb[0].mxu0
        %v6104 = vadd.f32 %v5890, %v6103
        %6105 = vmatprep.mubr.bf16.mxu0 0
        %6106 = vmatmul.mubr.bf16.gmra.mrb[0].mxu0 %v5881
        %v6107 = vpop.f32.mrb[0].mxu0
        %v6108 = vadd.f32 %v5886, %v6107
        %v6109 = vpop.f32.mrb[0].mxu0
        %v6110 = vadd.f32 %v5890, %v6109
        %v6111 = vpop.f32.mrb[0].mxu0
        %v6112 = vadd.f32 %v5886, %v6111
        %v6113 = vpop.f32.mrb[0].mxu0
        %v6114 = vadd.f32 %v5890, %v6113
        %6115 = vdwg.mxu0
        %6116 = vmatprep.subr.bf16.mxu0 %v6002
        %6117 = vmatpush1.bf16.msra.mxu0 %v6001
        %6118 = vmatprep.subr.bf16.mxu0 %v6006
        %6119 = vmatpush1.bf16.msra.mxu0 %v6005
        %6120 = vmatprep.subr.bf16.mxu0 %v6010
        %6121 = vmatpush1.bf16.msra.mxu0 %v6009
        %6122 = vmatprep.subr.bf16.mxu0 %v6014
        %6123 = vmatpush1.bf16.msra.mxu0 %v6013
        %6124 = vmatprep.subr.bf16.mxu0 %v6018
        %6125 = vmatpush1.bf16.msra.mxu0 %v6017
        %6126 = vmatprep.subr.bf16.mxu0 %v6022
        %6127 = vmatpush1.bf16.msra.mxu0 %v6021
        %6128 = vmatprep.subr.bf16.mxu0 %v6026
        %6129 = vmatpush1.bf16.msra.mxu0 %v6025
        %6130 = vmatprep.subr.bf16.mxu0 %v6030
        %6131 = vmatpush1.bf16.msra.mxu0 %v6029
        %6132 = vmatprep.subr.bf16.mxu0 0
        %6133 = vmatpush1.bf16.msra.mxu0 0
        %6134 = vmatprep.subr.bf16.mxu0 0
        %6135 = vmatpush1.bf16.msra.mxu0 0
        %6136 = vmatprep.subr.bf16.mxu0 0
        %6137 = vmatpush1.bf16.msra.mxu0 0
        %6138 = vmatprep.subr.bf16.mxu0 0
        %6139 = vmatpush1.bf16.msra.mxu0 0
        %6140 = vmatprep.subr.bf16.mxu0 0
        %6141 = vmatpush1.bf16.msra.mxu0 0
        %6142 = vmatprep.subr.bf16.mxu0 0
        %6143 = vmatpush1.bf16.msra.mxu0 0
        %6144 = vmatprep.subr.bf16.mxu0 0
        %6145 = vmatpush1.bf16.msra.mxu0 0
        %6146 = vmatprep.subr.bf16.mxu0 0
        %6147 = vmatpush1.bf16.msra.mxu0 0
        %6148 = vmatprep.mubr.bf16.mxu0 0
        %6149 = vmatmul.mubr.bf16.gmra.mrb[0].mxu0 %v5880
        %v6150 = vpop.f32.mrb[0].mxu0
        %v6151 = vadd.f32 %v5894, %v6150
        %v6152 = vpop.f32.mrb[0].mxu0
        %v6153 = vadd.f32 %v5898, %v6152
        %v6154 = vpop.f32.mrb[0].mxu0
        %v6155 = vadd.f32 %v5894, %v6154
        %v6156 = vpop.f32.mrb[0].mxu0
        %v6157 = vadd.f32 %v5898, %v6156
        %6158 = vmatprep.mubr.bf16.mxu0 0
        %6159 = vmatmul.mubr.bf16.gmra.mrb[0].mxu0 %v5881
        %v6160 = vpop.f32.mrb[0].mxu0
        %v6161 = vadd.f32 %v5894, %v6160
        %v6162 = vpop.f32.mrb[0].mxu0
        %v6163 = vadd.f32 %v5898, %v6162
        %v6164 = vpop.f32.mrb[0].mxu0
        %v6165 = vadd.f32 %v5894, %v6164
        %v6166 = vpop.f32.mrb[0].mxu0
        %v6167 = vadd.f32 %v5898, %v6166
        %6168 = vdwg.mxu0
        %v6169 = vmul.f32 %v6098, 0.5
        %v6170 = vmul.f32 %v6100, 0.5
        %v6171 = vmul.f32 %v6151, 0.5
        %v6172 = vmul.f32 %v6153, 0.5
        %v6173 = vmul.f32 %v6102, 0.5
        %v6174 = vmul.f32 %v6104, 0.5
        %v6175 = vmul.f32 %v6155, 0.5
        %v6176 = vmul.f32 %v6157, 0.5
        %v6177 = vmul.f32 %v6108, 0.5
        %v6178 = vmul.f32 %v6110, 0.5
        %v6179 = vmul.f32 %v6161, 0.5
        %v6180 = vmul.f32 %v6163, 0.5
        %v6181 = vmul.f32 %v6112, 0.5
        %v6182 = vmul.f32 %v6114, 0.5
        %v6183 = vmul.f32 %v6165, 0.5
        %v6184 = vmul.f32 %v6167, 0.5
        %v6185 = vtanh.pop %v6169
        %v6186 = vtanh.pop %v6170
        %v6187 = vtanh.pop %v6171
        %v6188 = vtanh.pop %v6172
        %v6189 = vtanh.pop %v6173
        %v6190 = vtanh.pop %v6174
        %v6191 = vtanh.pop %v6175
        %v6192 = vtanh.pop %v6176
        %v6193 = vtanh.pop %v6177
        %v6194 = vtanh.pop %v6178
        %v6195 = vtanh.pop %v6179
        %v6196 = vtanh.pop %v6180
        %v6197 = vtanh.pop %v6181
        %v6198 = vtanh.pop %v6182
        %v6199 = vtanh.pop %v6183
        %v6200 = vtanh.pop %v6184
        %v6201 = vadd.f32 %v6185, 1.0
        %v6202 = vadd.f32 %v6186, 1.0
        %v6203 = vadd.f32 %v6187, 1.0
        %v6204 = vadd.f32 %v6188, 1.0
        %v6205 = vadd.f32 %v6189, 1.0
        %v6206 = vadd.f32 %v6190, 1.0
        %v6207 = vadd.f32 %v6191, 1.0
        %v6208 = vadd.f32 %v6192, 1.0
        %v6209 = vadd.f32 %v6193, 1.0
        %v6210 = vadd.f32 %v6194, 1.0
        %v6211 = vadd.f32 %v6195, 1.0
        %v6212 = vadd.f32 %v6196, 1.0
        %v6213 = vadd.f32 %v6197, 1.0
        %v6214 = vadd.f32 %v6198, 1.0
        %v6215 = vadd.f32 %v6199, 1.0
        %v6216 = vadd.f32 %v6200, 1.0
        %v6217 = vmul.f32 %v6201, 0.5
        %v6218 = vmul.f32 %v6202, 0.5
        %v6219 = vmul.f32 %v6203, 0.5
        %v6220 = vmul.f32 %v6204, 0.5
        %v6221 = vmul.f32 %v6205, 0.5
        %v6222 = vmul.f32 %v6206, 0.5
        %v6223 = vmul.f32 %v6207, 0.5
        %v6224 = vmul.f32 %v6208, 0.5
        %v6225 = vmul.f32 %v6209, 0.5
        %v6226 = vmul.f32 %v6210, 0.5
        %v6227 = vmul.f32 %v6211, 0.5
        %v6228 = vmul.f32 %v6212, 0.5
        %v6229 = vmul.f32 %v6213, 0.5
        %v6230 = vmul.f32 %v6214, 0.5
        %v6231 = vmul.f32 %v6215, 0.5
        %v6232 = vmul.f32 %v6216, 0.5
        %v6233 = vmul.f32 %v6098, %v6217
        %v6234 = vmul.f32 %v6100, %v6218
        %v6235 = vmul.f32 %v6151, %v6219
        %v6236 = vmul.f32 %v6153, %v6220
        %v6237 = vmul.f32 %v6102, %v6221
        %v6238 = vmul.f32 %v6104, %v6222
        %v6239 = vmul.f32 %v6155, %v6223
        %v6240 = vmul.f32 %v6157, %v6224
        %v6241 = vmul.f32 %v6108, %v6225
        %v6242 = vmul.f32 %v6110, %v6226
        %v6243 = vmul.f32 %v6161, %v6227
        %v6244 = vmul.f32 %v6163, %v6228
        %v6245 = vmul.f32 %v6112, %v6229
        %v6246 = vmul.f32 %v6114, %v6230
        %v6247 = vmul.f32 %v6165, %v6231
        %v6248 = vmul.f32 %v6167, %v6232
        %v6249 = vpack.c.bf16 %v6237, %v6233
        %v6250 = vpack.c.bf16 %v6238, %v6234
        %v6251 = vpack.c.bf16 %v6239, %v6235
        %v6252 = vpack.c.bf16 %v6240, %v6236
        %v6253 = vpack.c.bf16 %v6245, %v6241
        %v6254 = vpack.c.bf16 %v6246, %v6242
        %v6255 = vpack.c.bf16 %v6247, %v6243
        %v6256 = vpack.c.bf16 %v6248, %v6244
        %v6258 = vlaneseq
        %v6259 = vshrl.u32 %v6258, 7
        %v6260 = vsub.s32 0, %v6259
        %v6261 = vrot.slane %v5815, %v6260
        %v6327 = vunpack.c.l.b16 %v5751
        %v6328 = vunpack.c.l.b16 %v5752
        %v6329 = vunpack.c.l.b16 %v5753
        %v6330 = vunpack.c.l.b16 %v5754
        %v6331 = vunpack.c.l.b16 %v5755
        %v6332 = vunpack.c.l.b16 %v5756
        %v6333 = vunpack.c.l.b16 %v5757
        %v6334 = vunpack.c.l.b16 %v5758
        %v6335 = vunpack.c.l.b16 %v5759
        %v6336 = vunpack.c.l.b16 %v5760
        %v6337 = vunpack.c.l.b16 %v5761
        %v6338 = vunpack.c.l.b16 %v5762
        %v6339 = vunpack.c.l.b16 %v5763
        %v6340 = vunpack.c.l.b16 %v5764
        %v6341 = vunpack.c.l.b16 %v5765
        %v6342 = vunpack.c.l.b16 %v5766
        %v6343 = vunpack.c.l.b16 %v5767
        %v6344 = vunpack.c.l.b16 %v5768
        %v6345 = vunpack.c.l.b16 %v5769
        %v6346 = vunpack.c.l.b16 %v5770
        %v6347 = vunpack.c.l.b16 %v5771
        %v6348 = vunpack.c.l.b16 %v5772
        %v6349 = vunpack.c.l.b16 %v5773
        %v6350 = vunpack.c.l.b16 %v5774
        %v6351 = vunpack.c.l.b16 %v5775
        %v6352 = vunpack.c.l.b16 %v5776
        %v6353 = vunpack.c.l.b16 %v5777
        %v6354 = vunpack.c.l.b16 %v5778
        %v6355 = vunpack.c.l.b16 %v5779
        %v6356 = vunpack.c.l.b16 %v5780
        %v6357 = vunpack.c.l.b16 %v5781
        %v6358 = vunpack.c.l.b16 %v5782
        %v6359 = vunpack.c.l.b16 %v5783
        %v6360 = vunpack.c.l.b16 %v5784
        %v6361 = vunpack.c.l.b16 %v5785
        %v6362 = vunpack.c.l.b16 %v5786
        %v6363 = vunpack.c.l.b16 %v5787
        %v6364 = vunpack.c.l.b16 %v5788
        %v6365 = vunpack.c.l.b16 %v5789
        %v6366 = vunpack.c.l.b16 %v5790
        %v6367 = vunpack.c.l.b16 %v5791
        %v6368 = vunpack.c.l.b16 %v5792
        %v6369 = vunpack.c.l.b16 %v5793
        %v6370 = vunpack.c.l.b16 %v5794
        %v6371 = vunpack.c.l.b16 %v5795
        %v6372 = vunpack.c.l.b16 %v5796
        %v6373 = vunpack.c.l.b16 %v5797
        %v6374 = vunpack.c.l.b16 %v5798
        %v6375 = vunpack.c.l.b16 %v5799
        %v6376 = vunpack.c.l.b16 %v5800
        %v6377 = vunpack.c.l.b16 %v5801
        %v6378 = vunpack.c.l.b16 %v5802
        %v6379 = vunpack.c.l.b16 %v5803
        %v6380 = vunpack.c.l.b16 %v5804
        %v6381 = vunpack.c.l.b16 %v5805
        %v6382 = vunpack.c.l.b16 %v5806
        %v6383 = vunpack.c.l.b16 %v5807
        %v6384 = vunpack.c.l.b16 %v5808
        %v6385 = vunpack.c.l.b16 %v5809
        %v6386 = vunpack.c.l.b16 %v5810
        %v6387 = vunpack.c.l.b16 %v5811
        %v6388 = vunpack.c.l.b16 %v5812
        %v6389 = vunpack.c.l.b16 %v5813
        %v6390 = vunpack.c.l.b16 %v5814
        %v6391 = vpack.c.b16 %v6328, %v6327
        %v6392 = vpack.c.b16 %v6330, %v6329
        %v6393 = vpack.c.b16 %v6332, %v6331
        %v6394 = vpack.c.b16 %v6334, %v6333
        %v6395 = vpack.c.b16 %v6336, %v6335
        %v6396 = vpack.c.b16 %v6338, %v6337
        %v6397 = vpack.c.b16 %v6340, %v6339
        %v6398 = vpack.c.b16 %v6342, %v6341
        %v6399 = vpack.c.b16 %v6344, %v6343
        %v6400 = vpack.c.b16 %v6346, %v6345
        %v6401 = vpack.c.b16 %v6348, %v6347
        %v6402 = vpack.c.b16 %v6350, %v6349
        %v6403 = vpack.c.b16 %v6352, %v6351
        %v6404 = vpack.c.b16 %v6354, %v6353
        %v6405 = vpack.c.b16 %v6356, %v6355
        %v6406 = vpack.c.b16 %v6358, %v6357
        %v6407 = vpack.c.b16 %v6360, %v6359
        %v6408 = vpack.c.b16 %v6362, %v6361
        %v6409 = vpack.c.b16 %v6364, %v6363
        %v6410 = vpack.c.b16 %v6366, %v6365
        %v6411 = vpack.c.b16 %v6368, %v6367
        %v6412 = vpack.c.b16 %v6370, %v6369
        %v6413 = vpack.c.b16 %v6372, %v6371
        %v6414 = vpack.c.b16 %v6374, %v6373
        %v6415 = vpack.c.b16 %v6376, %v6375
        %v6416 = vpack.c.b16 %v6378, %v6377
        %v6417 = vpack.c.b16 %v6380, %v6379
        %v6418 = vpack.c.b16 %v6382, %v6381
        %v6419 = vpack.c.b16 %v6384, %v6383
        %v6420 = vpack.c.b16 %v6386, %v6385
        %v6421 = vpack.c.b16 %v6388, %v6387
        %v6422 = vpack.c.b16 %v6390, %v6389
        %6455 = vmatprep.subr.bf16.mxu0 0
        %6456 = vmatpush1.bf16.msra.mxu0 %v6391
        %6457 = vmatprep.subr.bf16.mxu0 0
        %6458 = vmatpush1.bf16.msra.mxu0 %v6392
        %6459 = vmatprep.subr.bf16.mxu0 0
        %6460 = vmatpush1.bf16.msra.mxu0 %v6393
        %6461 = vmatprep.subr.bf16.mxu0 0
        %6462 = vmatpush1.bf16.msra.mxu0 %v6394
        %6463 = vmatprep.subr.bf16.mxu0 0
        %6464 = vmatpush1.bf16.msra.mxu0 %v6395
        %6465 = vmatprep.subr.bf16.mxu0 0
        %6466 = vmatpush1.bf16.msra.mxu0 %v6396
        %6467 = vmatprep.subr.bf16.mxu0 0
        %6468 = vmatpush1.bf16.msra.mxu0 %v6397
        %6469 = vmatprep.subr.bf16.mxu0 0
        %6470 = vmatpush1.bf16.msra.mxu0 %v6398
        %6471 = vmatprep.subr.bf16.mxu0 0
        %6472 = vmatpush1.bf16.msra.mxu0 %v6399
        %6473 = vmatprep.subr.bf16.mxu0 0
        %6474 = vmatpush1.bf16.msra.mxu0 %v6400
        %6475 = vmatprep.subr.bf16.mxu0 0
        %6476 = vmatpush1.bf16.msra.mxu0 %v6401
        %6477 = vmatprep.subr.bf16.mxu0 0
        %6478 = vmatpush1.bf16.msra.mxu0 %v6402
        %6479 = vmatprep.subr.bf16.mxu0 0
        %6480 = vmatpush1.bf16.msra.mxu0 %v6403
        %6481 = vmatprep.subr.bf16.mxu0 0
        %6482 = vmatpush1.bf16.msra.mxu0 %v6404
        %6483 = vmatprep.subr.bf16.mxu0 0
        %6484 = vmatpush1.bf16.msra.mxu0 %v6405
        %6485 = vmatprep.subr.bf16.mxu0 0
        %6486 = vmatpush1.bf16.msra.mxu0 %v6406
        %6487 = vmatprep.mubr.bf16.mxu0 %v6250
        %6488 = vmatmul.mubr.bf16.gmra.mrb[0].mxu0 %v6249
        %v6489 = vpop.f32.mrb[0].mxu0
        %v6490 = vadd.f32 %v6261, %v6489
        %v6491 = vpop.f32.mrb[0].mxu0
        %v6492 = vpop.f32.mrb[0].mxu0
        %v6493 = vadd.f32 %v6261, %v6492
        %v6494 = vpop.f32.mrb[0].mxu0
        %6495 = vmatprep.mubr.bf16.mxu0 %v6254
        %6496 = vmatmul.mubr.bf16.gmra.mrb[0].mxu0 %v6253
        %v6497 = vpop.f32.mrb[0].mxu0
        %v6498 = vadd.f32 %v6261, %v6497
        %v6499 = vpop.f32.mrb[0].mxu0
        %v6500 = vpop.f32.mrb[0].mxu0
        %v6501 = vadd.f32 %v6261, %v6500
        %v6502 = vpop.f32.mrb[0].mxu0
        %6503 = vdwg.mxu0
        %6504 = vmatprep.subr.bf16.mxu0 0
        %6505 = vmatpush1.bf16.msra.mxu0 %v6407
        %6506 = vmatprep.subr.bf16.mxu0 0
        %6507 = vmatpush1.bf16.msra.mxu0 %v6408
        %6508 = vmatprep.subr.bf16.mxu0 0
        %6509 = vmatpush1.bf16.msra.mxu0 %v6409
        %6510 = vmatprep.subr.bf16.mxu0 0
        %6511 = vmatpush1.bf16.msra.mxu0 %v6410
        %6512 = vmatprep.subr.bf16.mxu0 0
        %6513 = vmatpush1.bf16.msra.mxu0 %v6411
        %6514 = vmatprep.subr.bf16.mxu0 0
        %6515 = vmatpush1.bf16.msra.mxu0 %v6412
        %6516 = vmatprep.subr.bf16.mxu0 0
        %6517 = vmatpush1.bf16.msra.mxu0 %v6413
        %6518 = vmatprep.subr.bf16.mxu0 0
        %6519 = vmatpush1.bf16.msra.mxu0 %v6414
        %6520 = vmatprep.subr.bf16.mxu0 0
        %6521 = vmatpush1.bf16.msra.mxu0 %v6415
        %6522 = vmatprep.subr.bf16.mxu0 0
        %6523 = vmatpush1.bf16.msra.mxu0 %v6416
        %6524 = vmatprep.subr.bf16.mxu0 0
        %6525 = vmatpush1.bf16.msra.mxu0 %v6417
        %6526 = vmatprep.subr.bf16.mxu0 0
        %6527 = vmatpush1.bf16.msra.mxu0 %v6418
        %6528 = vmatprep.subr.bf16.mxu0 0
        %6529 = vmatpush1.bf16.msra.mxu0 %v6419
        %6530 = vmatprep.subr.bf16.mxu0 0
        %6531 = vmatpush1.bf16.msra.mxu0 %v6420
        %6532 = vmatprep.subr.bf16.mxu0 0
        %6533 = vmatpush1.bf16.msra.mxu0 %v6421
        %6534 = vmatprep.subr.bf16.mxu0 0
        %6535 = vmatpush1.bf16.msra.mxu0 %v6422
        %6536 = vmatprep.mubr.bf16.mxu0 %v6252
        %6537 = vmatmul.mubr.bf16.gmra.mrb[0].mxu0 %v6251
        %v6538 = vpop.f32.mrb[0].mxu0
        %v6539 = vadd.f32 %v6490, %v6538
        %v6540 = vpop.f32.mrb[0].mxu0
        %v6541 = vpop.f32.mrb[0].mxu0
        %v6542 = vadd.f32 %v6493, %v6541
        %v6543 = vpop.f32.mrb[0].mxu0
        %6544 = vmatprep.mubr.bf16.mxu0 %v6256
        %6545 = vmatmul.mubr.bf16.gmra.mrb[0].mxu0 %v6255
        %v6546 = vpop.f32.mrb[0].mxu0
        %v6547 = vadd.f32 %v6498, %v6546
        %v6548 = vpop.f32.mrb[0].mxu0
        %v6549 = vpop.f32.mrb[0].mxu0
        %v6550 = vadd.f32 %v6501, %v6549
        %v6551 = vpop.f32.mrb[0].mxu0
        %6552 = vdwg.mxu0
        %v6553 = vmul.f32 %v6539, 0.5
        %v6554 = vmul.f32 %v6542, 0.5
        %v6555 = vmul.f32 %v6547, 0.5
        %v6556 = vmul.f32 %v6550, 0.5
        %v6557 = vadd.f32 %v5712, %v6553
        %v6558 = vadd.f32 %v5713, %v6554
        %v6559 = vadd.f32 %v5714, %v6555
        %v6560 = vadd.f32 %v5715, %v6556
        %v6561 = vld [vmem:[%s2574] sm:$0x1]
        %v6562 = vld [vmem:[%s2577] sm:$0x1]
        %6563 = vadd.xlane.f32.xlu0 %v6557
        %v6564 = vpop.xlane.xlu0 %6563
        %6565 = vadd.xlane.f32.xlu0 %v6558
        %v6566 = vpop.xlane.xlu0 %6565
        %6567 = vadd.xlane.f32.xlu0 %v6559
        %v6568 = vpop.xlane.xlu0 %6567
        %6569 = vadd.xlane.f32.xlu0 %v6560
        %v6570 = vpop.xlane.xlu0 %6569
        %v6571 = vmul.f32 %v6564, %v2713
        %v6572 = vmul.f32 %v6566, %v2713
        %v6573 = vmul.f32 %v6568, %v2713
        %v6574 = vmul.f32 %v6570, %v2713
        %v6575 = vsub.f32 %v6557, %v6571
        %v6576 = vsub.f32 %v6558, %v6572
        %v6577 = vsub.f32 %v6559, %v6573
        %v6578 = vsub.f32 %v6560, %v6574
        %v6579 = vmul.f32 %v6575, %v6575
        %v6580 = vmul.f32 %v6576, %v6576
        %v6581 = vmul.f32 %v6577, %v6577
        %v6582 = vmul.f32 %v6578, %v6578
        %6583 = vadd.xlane.f32.xlu0 %v6579
        %v6584 = vpop.xlane.xlu0 %6583
        %6585 = vadd.xlane.f32.xlu0 %v6580
        %v6586 = vpop.xlane.xlu0 %6585
        %6587 = vadd.xlane.f32.xlu0 %v6581
        %v6588 = vpop.xlane.xlu0 %6587
        %6589 = vadd.xlane.f32.xlu0 %v6582
        %v6590 = vpop.xlane.xlu0 %6589
        %v6591 = vmul.f32 %v6584, %v2713
        %v6592 = vmul.f32 %v6586, %v2713
        %v6593 = vmul.f32 %v6588, %v2713
        %v6594 = vmul.f32 %v6590, %v2713
        %v6595 = vadd.f32 %v6591, 1e-05
        %v6596 = vadd.f32 %v6592, 1e-05
        %v6597 = vadd.f32 %v6593, 1e-05
        %v6598 = vadd.f32 %v6594, 1e-05
        %v6599 = vrsqrt.pop %v6595
        %v6600 = vrsqrt.pop %v6596
        %v6601 = vrsqrt.pop %v6597
        %v6602 = vrsqrt.pop %v6598
        %v6603 = vmul.f32 %v6575, %v6599
        %v6604 = vmul.f32 %v6576, %v6600
        %v6605 = vmul.f32 %v6577, %v6601
        %v6606 = vmul.f32 %v6578, %v6602
        %v6608 = vlaneseq
        %v6609 = vshrl.u32 %v6608, 7
        %v6610 = vsub.s32 0, %v6609
        %v6611 = vrot.slane %v6561, %v6610
        %v6613 = vmul.f32 %v6603, %v6611
        %v6614 = vmul.f32 %v6604, %v6611
        %v6615 = vmul.f32 %v6605, %v6611
        %v6616 = vmul.f32 %v6606, %v6611
        %v6618 = vlaneseq
        %v6619 = vshrl.u32 %v6618, 7
        %v6620 = vsub.s32 0, %v6619
        %v6621 = vrot.slane %v6562, %v6620
        %v6623 = vadd.f32 %v6613, %v6621
        %v6624 = vadd.f32 %v6614, %v6621
        %v6625 = vadd.f32 %v6615, %v6621
        %v6626 = vadd.f32 %v6616, %v6621
        %6627 = vst [vmem:[#allocation2] sm:$0xff] %v6623
        %6628 = vst [vmem:[#allocation2 + $0x8] sm:$0xff] %v6624
        %6629 = vst [vmem:[#allocation2 + $0x10] sm:$0xff] %v6625
        %6630 = vst [vmem:[#allocation2 + $0x18] sm:$0xff] %v6626
        %s6631 = sld [smem:[#allocation5 + %s127]]
        %p6632 = scmp.gt.s32.totalorder %s6631, 0
        // Predicated region
        $region341: #{tpu_custom_call.1} parent=195 // pred_check
          %p6633 = pneg %p6632
        $region342: #{tpu_custom_call.1} parent=195 // pred_check_branch
          %6635 = sbr.rel (%p6633) target = $region344
        $region343: #{tpu_custom_call.1} parent=195 // pred_region
          %v6636 = vld [vmem:[#allocation43] sm:$0xf]
          %v6637 = vld [vmem:[#allocation43 + $0x4] sm:$0xf]
          %v6638 = vld [vmem:[#allocation43 + $0x8] sm:$0xf]
          %v6639 = vld [vmem:[#allocation43 + $0xc] sm:$0xf]
          %v6640 = vld [vmem:[#allocation43 + $0x10] sm:$0xf]
          %v6641 = vld [vmem:[#allocation43 + $0x14] sm:$0xf]
          %v6642 = vld [vmem:[#allocation43 + $0x18] sm:$0xf]
          %v6643 = vld [vmem:[#allocation43 + $0x1c] sm:$0xf]
          %v6644 = vld [vmem:[#allocation43 + $0x20] sm:$0xf]
          %v6645 = vld [vmem:[#allocation43 + $0x24] sm:$0xf]
          %v6646 = vld [vmem:[#allocation43 + $0x28] sm:$0xf]
          %v6647 = vld [vmem:[#allocation43 + $0x2c] sm:$0xf]
          %v6648 = vld [vmem:[#allocation43 + $0x30] sm:$0xf]
          %v6649 = vld [vmem:[#allocation43 + $0x34] sm:$0xf]
          %v6650 = vld [vmem:[#allocation43 + $0x38] sm:$0xf]
          %v6651 = vld [vmem:[#allocation43 + $0x3c] sm:$0xf]
          %v6652 = vld [vmem:[%s87] sm:$0x1]
          %v6653 = vpack.c.bf16 %v6624, %v6623
          %v6654 = vpack.c.bf16 %v6626, %v6625
          %v6656 = vlaneseq
          %v6657 = vshrl.u32 %v6656, 7
          %v6658 = vsub.s32 0, %v6657
          %v6659 = vrot.slane %v6652, %v6658
          %v6677 = vunpack.c.l.b16 %v6636
          %v6678 = vunpack.c.l.b16 %v6637
          %v6679 = vunpack.c.l.b16 %v6638
          %v6680 = vunpack.c.l.b16 %v6639
          %v6681 = vunpack.c.l.b16 %v6640
          %v6682 = vunpack.c.l.b16 %v6641
          %v6683 = vunpack.c.l.b16 %v6642
          %v6684 = vunpack.c.l.b16 %v6643
          %v6685 = vunpack.c.l.b16 %v6644
          %v6686 = vunpack.c.l.b16 %v6645
          %v6687 = vunpack.c.l.b16 %v6646
          %v6688 = vunpack.c.l.b16 %v6647
          %v6689 = vunpack.c.l.b16 %v6648
          %v6690 = vunpack.c.l.b16 %v6649
          %v6691 = vunpack.c.l.b16 %v6650
          %v6692 = vunpack.c.l.b16 %v6651
          %v6693 = vpack.c.b16 %v6678, %v6677
          %v6694 = vpack.c.b16 %v6680, %v6679
          %v6695 = vpack.c.b16 %v6682, %v6681
          %v6696 = vpack.c.b16 %v6684, %v6683
          %v6697 = vpack.c.b16 %v6686, %v6685
          %v6698 = vpack.c.b16 %v6688, %v6687
          %v6699 = vpack.c.b16 %v6690, %v6689
          %v6700 = vpack.c.b16 %v6692, %v6691
          %6709 = vmatprep.subr.bf16.mxu0 0
          %6710 = vmatpush1.bf16.msra.mxu0 %v6693
          %6711 = vmatprep.subr.bf16.mxu0 0
          %6712 = vmatpush1.bf16.msra.mxu0 %v6694
          %6713 = vmatprep.subr.bf16.mxu0 0
          %6714 = vmatpush1.bf16.msra.mxu0 %v6695
          %6715 = vmatprep.subr.bf16.mxu0 0
          %6716 = vmatpush1.bf16.msra.mxu0 %v6696
          %6717 = vmatprep.subr.bf16.mxu0 0
          %6718 = vmatpush1.bf16.msra.mxu0 %v6697
          %6719 = vmatprep.subr.bf16.mxu0 0
          %6720 = vmatpush1.bf16.msra.mxu0 %v6698
          %6721 = vmatprep.subr.bf16.mxu0 0
          %6722 = vmatpush1.bf16.msra.mxu0 %v6699
          %6723 = vmatprep.subr.bf16.mxu0 0
          %6724 = vmatpush1.bf16.msra.mxu0 %v6700
          %6725 = vmatprep.subr.bf16.mxu0 0
          %6726 = vmatpush1.bf16.msra.mxu0 0
          %6727 = vmatprep.subr.bf16.mxu0 0
          %6728 = vmatpush1.bf16.msra.mxu0 0
          %6729 = vmatprep.subr.bf16.mxu0 0
          %6730 = vmatpush1.bf16.msra.mxu0 0
          %6731 = vmatprep.subr.bf16.mxu0 0
          %6732 = vmatpush1.bf16.msra.mxu0 0
          %6733 = vmatprep.subr.bf16.mxu0 0
          %6734 = vmatpush1.bf16.msra.mxu0 0
          %6735 = vmatprep.subr.bf16.mxu0 0
          %6736 = vmatpush1.bf16.msra.mxu0 0
          %6737 = vmatprep.subr.bf16.mxu0 0
          %6738 = vmatpush1.bf16.msra.mxu0 0
          %6739 = vmatprep.subr.bf16.mxu0 0
          %6740 = vmatpush1.bf16.msra.mxu0 0
          %6741 = vmatprep.mubr.bf16.mxu0 0
          %6742 = vmatmul.mubr.bf16.gmra.mrb[0].mxu0 %v6653
          %v6743 = vpop.f32.mrb[0].mxu0
          %v6744 = vadd.f32 %v6659, %v6743
          %v6745 = vpop.f32.mrb[0].mxu0
          %v6746 = vpop.f32.mrb[0].mxu0
          %v6747 = vadd.f32 %v6659, %v6746
          %v6748 = vpop.f32.mrb[0].mxu0
          %6749 = vmatprep.mubr.bf16.mxu0 0
          %6750 = vmatmul.mubr.bf16.gmra.mrb[0].mxu0 %v6654
          %v6751 = vpop.f32.mrb[0].mxu0
          %v6752 = vadd.f32 %v6659, %v6751
          %v6753 = vpop.f32.mrb[0].mxu0
          %v6754 = vpop.f32.mrb[0].mxu0
          %v6755 = vadd.f32 %v6659, %v6754
          %v6756 = vpop.f32.mrb[0].mxu0
          %6757 = vdwg.mxu0
          %6758 = vmax.xlane.f32.xlu0 %v6744
          %v6759 = vpop.xlane.xlu0 %6758
          %6760 = vmax.xlane.f32.xlu0 %v6747
          %v6761 = vpop.xlane.xlu0 %6760
          %6762 = vmax.xlane.f32.xlu0 %v6752
          %v6763 = vpop.xlane.xlu0 %6762
          %6764 = vmax.xlane.f32.xlu0 %v6755
          %v6765 = vpop.xlane.xlu0 %6764
          %v6766 = vsub.f32 %v6744, %v6759
          %v6767 = vsub.f32 %v6747, %v6761
          %v6768 = vsub.f32 %v6752, %v6763
          %v6769 = vsub.f32 %v6755, %v6765
          %v6770 = vmul.f32 %v6766, 1.442695
          %v6771 = vpow.pop %v6770
          %v6772 = vmul.f32 %v6767, 1.442695
          %v6773 = vpow.pop %v6772
          %v6774 = vmul.f32 %v6768, 1.442695
          %v6775 = vpow.pop %v6774
          %v6776 = vmul.f32 %v6769, 1.442695
          %v6777 = vpow.pop %v6776
          %6778 = vadd.xlane.f32.xlu0 %v6771
          %v6779 = vpop.xlane.xlu0 %6778
          %6780 = vadd.xlane.f32.xlu0 %v6773
          %v6781 = vpop.xlane.xlu0 %6780
          %6782 = vadd.xlane.f32.xlu0 %v6775
          %v6783 = vpop.xlane.xlu0 %6782
          %6784 = vadd.xlane.f32.xlu0 %v6777
          %v6785 = vpop.xlane.xlu0 %6784
          %v6786 = vlog2.pop %v6779
          %v6787 = vmul.f32 %v6786, 0.6931472
          %v6788 = vlog2.pop %v6781
          %v6789 = vmul.f32 %v6788, 0.6931472
          %v6790 = vlog2.pop %v6783
          %v6791 = vmul.f32 %v6790, 0.6931472
          %v6792 = vlog2.pop %v6785
          %v6793 = vmul.f32 %v6792, 0.6931472
          %v6794 = vsub.f32 %v6766, %v6787
          %v6795 = vsub.f32 %v6767, %v6789
          %v6796 = vsub.f32 %v6768, %v6791
          %v6797 = vsub.f32 %v6769, %v6793
          %6798 = vst [vmem:[%s2566] sm:$0xff] %v6794
          %6799 = vst [vmem:[%s2566 + $0x8] sm:$0xff] %v6795
          %6800 = vst [vmem:[%s2566 + $0x10] sm:$0xff] %v6796
          %6801 = vst [vmem:[%s2566 + $0x18] sm:$0xff] %v6797
          %v6802 = vld [vmem:[#allocation2] sm:$0xff]
          %v6803 = vld [vmem:[#allocation2 + $0x8] sm:$0xff]
          %v6804 = vld [vmem:[#allocation2 + $0x10] sm:$0xff]
          %v6805 = vld [vmem:[#allocation2 + $0x18] sm:$0xff]
          %v6806 = vld [vmem:[#allocation44] sm:$0xf]
          %v6807 = vld [vmem:[#allocation44 + $0x4] sm:$0xf]
          %v6808 = vld [vmem:[#allocation44 + $0x8] sm:$0xf]
          %v6809 = vld [vmem:[#allocation44 + $0xc] sm:$0xf]
          %v6810 = vld [vmem:[#allocation44 + $0x10] sm:$0xf]
          %v6811 = vld [vmem:[#allocation44 + $0x14] sm:$0xf]
          %v6812 = vld [vmem:[#allocation44 + $0x18] sm:$0xf]
          %v6813 = vld [vmem:[#allocation44 + $0x1c] sm:$0xf]
          %v6814 = vld [vmem:[#allocation44 + $0x20] sm:$0xf]
          %v6815 = vld [vmem:[#allocation44 + $0x24] sm:$0xf]
          %v6816 = vld [vmem:[#allocation44 + $0x28] sm:$0xf]
          %v6817 = vld [vmem:[#allocation44 + $0x2c] sm:$0xf]
          %v6818 = vld [vmem:[#allocation44 + $0x30] sm:$0xf]
          %v6819 = vld [vmem:[#allocation44 + $0x34] sm:$0xf]
          %v6820 = vld [vmem:[#allocation44 + $0x38] sm:$0xf]
          %v6821 = vld [vmem:[#allocation44 + $0x3c] sm:$0xf]
          %v6822 = vpack.c.bf16 %v6795, %v6794
          %v6823 = vpack.c.bf16 %v6797, %v6796
          %v6840 = vunpack.c.l.b16 %v6806
          %v6841 = vunpack.c.l.b16 %v6807
          %v6842 = vunpack.c.l.b16 %v6808
          %v6843 = vunpack.c.l.b16 %v6809
          %v6844 = vunpack.c.l.b16 %v6810
          %v6845 = vunpack.c.l.b16 %v6811
          %v6846 = vunpack.c.l.b16 %v6812
          %v6847 = vunpack.c.l.b16 %v6813
          %v6848 = vunpack.c.l.b16 %v6814
          %v6849 = vunpack.c.l.b16 %v6815
          %v6850 = vunpack.c.l.b16 %v6816
          %v6851 = vunpack.c.l.b16 %v6817
          %v6852 = vunpack.c.l.b16 %v6818
          %v6853 = vunpack.c.l.b16 %v6819
          %v6854 = vunpack.c.l.b16 %v6820
          %v6855 = vunpack.c.l.b16 %v6821
          %v6856 = vpack.c.b16 %v6841, %v6840
          %v6857 = vpack.c.b16 %v6843, %v6842
          %v6858 = vpack.c.b16 %v6845, %v6844
          %v6859 = vpack.c.b16 %v6847, %v6846
          %v6860 = vpack.c.b16 %v6849, %v6848
          %v6861 = vpack.c.b16 %v6851, %v6850
          %v6862 = vpack.c.b16 %v6853, %v6852
          %v6863 = vpack.c.b16 %v6855, %v6854
          %6872 = vmatprep.subr.bf16.mxu0 0
          %6873 = vmatpush1.bf16.msra.mxu0 %v6856
          %6874 = vmatprep.subr.bf16.mxu0 0
          %6875 = vmatpush1.bf16.msra.mxu0 %v6857
          %6876 = vmatprep.subr.bf16.mxu0 0
          %6877 = vmatpush1.bf16.msra.mxu0 %v6858
          %6878 = vmatprep.subr.bf16.mxu0 0
          %6879 = vmatpush1.bf16.msra.mxu0 %v6859
          %6880 = vmatprep.subr.bf16.mxu0 0
          %6881 = vmatpush1.bf16.msra.mxu0 %v6860
          %6882 = vmatprep.subr.bf16.mxu0 0
          %6883 = vmatpush1.bf16.msra.mxu0 %v6861
          %6884 = vmatprep.subr.bf16.mxu0 0
          %6885 = vmatpush1.bf16.msra.mxu0 %v6862
          %6886 = vmatprep.subr.bf16.mxu0 0
          %6887 = vmatpush1.bf16.msra.mxu0 %v6863
          %6888 = vmatprep.subr.bf16.mxu0 0
          %6889 = vmatpush1.bf16.msra.mxu0 0
          %6890 = vmatprep.subr.bf16.mxu0 0
          %6891 = vmatpush1.bf16.msra.mxu0 0
          %6892 = vmatprep.subr.bf16.mxu0 0
          %6893 = vmatpush1.bf16.msra.mxu0 0
          %6894 = vmatprep.subr.bf16.mxu0 0
          %6895 = vmatpush1.bf16.msra.mxu0 0
          %6896 = vmatprep.subr.bf16.mxu0 0
          %6897 = vmatpush1.bf16.msra.mxu0 0
          %6898 = vmatprep.subr.bf16.mxu0 0
          %6899 = vmatpush1.bf16.msra.mxu0 0
          %6900 = vmatprep.subr.bf16.mxu0 0
          %6901 = vmatpush1.bf16.msra.mxu0 0
          %6902 = vmatprep.subr.bf16.mxu0 0
          %6903 = vmatpush1.bf16.msra.mxu0 0
          %6904 = vmatprep.mubr.bf16.mxu0 0
          %6905 = vmatmul.mubr.bf16.gmra.mrb[0].mxu0 %v6822
          %v6906 = vpop.f32.mrb[0].mxu0
          %v6907 = vadd.f32 0.0, %v6906
          %v6908 = vpop.f32.mrb[0].mxu0
          %v6909 = vpop.f32.mrb[0].mxu0
          %v6910 = vadd.f32 0.0, %v6909
          %v6911 = vpop.f32.mrb[0].mxu0
          %6912 = vmatprep.mubr.bf16.mxu0 0
          %6913 = vmatmul.mubr.bf16.gmra.mrb[0].mxu0 %v6823
          %v6914 = vpop.f32.mrb[0].mxu0
          %v6915 = vadd.f32 0.0, %v6914
          %v6916 = vpop.f32.mrb[0].mxu0
          %v6917 = vpop.f32.mrb[0].mxu0
          %v6918 = vadd.f32 0.0, %v6917
          %v6919 = vpop.f32.mrb[0].mxu0
          %6920 = vdwg.mxu0
          %v6921 = vadd.f32 %v6802, %v6907
          %v6922 = vadd.f32 %v6803, %v6910
          %v6923 = vadd.f32 %v6804, %v6915
          %v6924 = vadd.f32 %v6805, %v6918
          %v6925 = vld [vmem:[%s91] sm:$0x1]
          %v6927 = vlaneseq
          %v6928 = vshrl.u32 %v6927, 7
          %v6929 = vsub.s32 0, %v6928
          %v6930 = vrot.slane %v6925, %v6929
          %v6932 = vadd.f32 %v6921, %v6930
          %v6933 = vadd.f32 %v6922, %v6930
          %v6934 = vadd.f32 %v6923, %v6930
          %v6935 = vadd.f32 %v6924, %v6930
          %6936 = vst [vmem:[#allocation2] sm:$0xff] %v6932
          %6937 = vst [vmem:[#allocation2 + $0x8] sm:$0xff] %v6933
          %6938 = vst [vmem:[#allocation2 + $0x10] sm:$0xff] %v6934
          %6939 = vst [vmem:[#allocation2 + $0x18] sm:$0xff] %v6935
        $region344: #{tpu_custom_call.1} parent=195 // pred_fallthru
          _
        %s6940 = sld [smem:[#allocation6 + %s127]]
        %p6941 = scmp.gt.s32.totalorder %s6940, 0
        // Predicated region
        $region345: #{tpu_custom_call.1} parent=195 // pred_check
          %p6942 = pneg %p6941
        $region346: #{tpu_custom_call.1} parent=195 // pred_check_branch
          %6944 = sbr.rel (%p6942) target = $region348
        $region347: #{tpu_custom_call.1} parent=195 // pred_region
          %v6945 = vld [vmem:[%s77] sm:$0xf]
          %v6946 = vld [vmem:[%s77 + $0x4] sm:$0xf]
          %v6947 = vld [vmem:[%s77 + $0x8] sm:$0xf]
          %v6948 = vld [vmem:[%s77 + $0xc] sm:$0xf]
          %v6949 = vld [vmem:[%s77 + $0x10] sm:$0xf]
          %v6950 = vld [vmem:[%s77 + $0x14] sm:$0xf]
          %v6951 = vld [vmem:[%s77 + $0x18] sm:$0xf]
          %v6952 = vld [vmem:[%s77 + $0x1c] sm:$0xf]
          %v6953 = vld [vmem:[%s77 + $0x20] sm:$0xf]
          %v6954 = vld [vmem:[%s77 + $0x24] sm:$0xf]
          %v6955 = vld [vmem:[%s77 + $0x28] sm:$0xf]
          %v6956 = vld [vmem:[%s77 + $0x2c] sm:$0xf]
          %v6957 = vld [vmem:[%s77 + $0x30] sm:$0xf]
          %v6958 = vld [vmem:[%s77 + $0x34] sm:$0xf]
          %v6959 = vld [vmem:[%s77 + $0x38] sm:$0xf]
          %v6960 = vld [vmem:[%s77 + $0x3c] sm:$0xf]
          %v6961 = vld [vmem:[%s79] sm:$0x1]
          %v6962 = vpack.c.bf16 %v6624, %v6623
          %v6963 = vpack.c.bf16 %v6626, %v6625
          %v6965 = vlaneseq
          %v6966 = vshrl.u32 %v6965, 7
          %v6967 = vsub.s32 0, %v6966
          %v6968 = vrot.slane %v6961, %v6967
          %v6986 = vunpack.c.l.b16 %v6945
          %v6987 = vunpack.c.l.b16 %v6946
          %v6988 = vunpack.c.l.b16 %v6947
          %v6989 = vunpack.c.l.b16 %v6948
          %v6990 = vunpack.c.l.b16 %v6949
          %v6991 = vunpack.c.l.b16 %v6950
          %v6992 = vunpack.c.l.b16 %v6951
          %v6993 = vunpack.c.l.b16 %v6952
          %v6994 = vunpack.c.l.b16 %v6953
          %v6995 = vunpack.c.l.b16 %v6954
          %v6996 = vunpack.c.l.b16 %v6955
          %v6997 = vunpack.c.l.b16 %v6956
          %v6998 = vunpack.c.l.b16 %v6957
          %v6999 = vunpack.c.l.b16 %v6958
          %v7000 = vunpack.c.l.b16 %v6959
          %v7001 = vunpack.c.l.b16 %v6960
          %v7002 = vpack.c.b16 %v6987, %v6986
          %v7003 = vpack.c.b16 %v6989, %v6988
          %v7004 = vpack.c.b16 %v6991, %v6990
          %v7005 = vpack.c.b16 %v6993, %v6992
          %v7006 = vpack.c.b16 %v6995, %v6994
          %v7007 = vpack.c.b16 %v6997, %v6996
          %v7008 = vpack.c.b16 %v6999, %v6998
          %v7009 = vpack.c.b16 %v7001, %v7000
          %7018 = vmatprep.subr.bf16.mxu0 0
          %7019 = vmatpush1.bf16.msra.mxu0 %v7002
          %7020 = vmatprep.subr.bf16.mxu0 0
          %7021 = vmatpush1.bf16.msra.mxu0 %v7003
          %7022 = vmatprep.subr.bf16.mxu0 0
          %7023 = vmatpush1.bf16.msra.mxu0 %v7004
          %7024 = vmatprep.subr.bf16.mxu0 0
          %7025 = vmatpush1.bf16.msra.mxu0 %v7005
          %7026 = vmatprep.subr.bf16.mxu0 0
          %7027 = vmatpush1.bf16.msra.mxu0 %v7006
          %7028 = vmatprep.subr.bf16.mxu0 0
          %7029 = vmatpush1.bf16.msra.mxu0 %v7007
          %7030 = vmatprep.subr.bf16.mxu0 0
          %7031 = vmatpush1.bf16.msra.mxu0 %v7008
          %7032 = vmatprep.subr.bf16.mxu0 0
          %7033 = vmatpush1.bf16.msra.mxu0 %v7009
          %7034 = vmatprep.subr.bf16.mxu0 0
          %7035 = vmatpush1.bf16.msra.mxu0 0
          %7036 = vmatprep.subr.bf16.mxu0 0
          %7037 = vmatpush1.bf16.msra.mxu0 0
          %7038 = vmatprep.subr.bf16.mxu0 0
          %7039 = vmatpush1.bf16.msra.mxu0 0
          %7040 = vmatprep.subr.bf16.mxu0 0
          %7041 = vmatpush1.bf16.msra.mxu0 0
          %7042 = vmatprep.subr.bf16.mxu0 0
          %7043 = vmatpush1.bf16.msra.mxu0 0
          %7044 = vmatprep.subr.bf16.mxu0 0
          %7045 = vmatpush1.bf16.msra.mxu0 0
          %7046 = vmatprep.subr.bf16.mxu0 0
          %7047 = vmatpush1.bf16.msra.mxu0 0
          %7048 = vmatprep.subr.bf16.mxu0 0
          %7049 = vmatpush1.bf16.msra.mxu0 0
          %7050 = vmatprep.mubr.bf16.mxu0 0
          %7051 = vmatmul.mubr.bf16.gmra.mrb[0].mxu0 %v6962
          %v7052 = vpop.f32.mrb[0].mxu0
          %v7053 = vadd.f32 %v6968, %v7052
          %v7054 = vpop.f32.mrb[0].mxu0
          %v7055 = vpop.f32.mrb[0].mxu0
          %v7056 = vadd.f32 %v6968, %v7055
          %v7057 = vpop.f32.mrb[0].mxu0
          %7058 = vmatprep.mubr.bf16.mxu0 0
          %7059 = vmatmul.mubr.bf16.gmra.mrb[0].mxu0 %v6963
          %v7060 = vpop.f32.mrb[0].mxu0
          %v7061 = vadd.f32 %v6968, %v7060
          %v7062 = vpop.f32.mrb[0].mxu0
          %v7063 = vpop.f32.mrb[0].mxu0
          %v7064 = vadd.f32 %v6968, %v7063
          %v7065 = vpop.f32.mrb[0].mxu0
          %7066 = vdwg.mxu0
          %7067 = vmax.xlane.f32.xlu0 %v7053
          %v7068 = vpop.xlane.xlu0 %7067
          %7069 = vmax.xlane.f32.xlu0 %v7056
          %v7070 = vpop.xlane.xlu0 %7069
          %7071 = vmax.xlane.f32.xlu0 %v7061
          %v7072 = vpop.xlane.xlu0 %7071
          %7073 = vmax.xlane.f32.xlu0 %v7064
          %v7074 = vpop.xlane.xlu0 %7073
          %v7075 = vsub.f32 %v7053, %v7068
          %v7076 = vsub.f32 %v7056, %v7070
          %v7077 = vsub.f32 %v7061, %v7072
          %v7078 = vsub.f32 %v7064, %v7074
          %v7079 = vmul.f32 %v7075, 1.442695
          %v7080 = vpow.pop %v7079
          %v7081 = vmul.f32 %v7076, 1.442695
          %v7082 = vpow.pop %v7081
          %v7083 = vmul.f32 %v7077, 1.442695
          %v7084 = vpow.pop %v7083
          %v7085 = vmul.f32 %v7078, 1.442695
          %v7086 = vpow.pop %v7085
          %7087 = vadd.xlane.f32.xlu0 %v7080
          %v7088 = vpop.xlane.xlu0 %7087
          %7089 = vadd.xlane.f32.xlu0 %v7082
          %v7090 = vpop.xlane.xlu0 %7089
          %7091 = vadd.xlane.f32.xlu0 %v7084
          %v7092 = vpop.xlane.xlu0 %7091
          %7093 = vadd.xlane.f32.xlu0 %v7086
          %v7094 = vpop.xlane.xlu0 %7093
          %v7095 = vlog2.pop %v7088
          %v7096 = vmul.f32 %v7095, 0.6931472
          %v7097 = vlog2.pop %v7090
          %v7098 = vmul.f32 %v7097, 0.6931472
          %v7099 = vlog2.pop %v7092
          %v7100 = vmul.f32 %v7099, 0.6931472
          %v7101 = vlog2.pop %v7094
          %v7102 = vmul.f32 %v7101, 0.6931472
          %v7103 = vsub.f32 %v7075, %v7096
          %v7104 = vsub.f32 %v7076, %v7098
          %v7105 = vsub.f32 %v7077, %v7100
          %v7106 = vsub.f32 %v7078, %v7102
          %7107 = vst [vmem:[%s2559] sm:$0xff] %v7103
          %7108 = vst [vmem:[%s2559 + $0x8] sm:$0xff] %v7104
          %7109 = vst [vmem:[%s2559 + $0x10] sm:$0xff] %v7105
          %7110 = vst [vmem:[%s2559 + $0x18] sm:$0xff] %v7106
          %v7111 = vld [vmem:[#allocation2] sm:$0xff]
          %v7112 = vld [vmem:[#allocation2 + $0x8] sm:$0xff]
          %v7113 = vld [vmem:[#allocation2 + $0x10] sm:$0xff]
          %v7114 = vld [vmem:[#allocation2 + $0x18] sm:$0xff]
          %v7115 = vld [vmem:[%s81] sm:$0xf]
          %v7116 = vld [vmem:[%s81 + $0x4] sm:$0xf]
          %v7117 = vld [vmem:[%s81 + $0x8] sm:$0xf]
          %v7118 = vld [vmem:[%s81 + $0xc] sm:$0xf]
          %v7119 = vld [vmem:[%s81 + $0x10] sm:$0xf]
          %v7120 = vld [vmem:[%s81 + $0x14] sm:$0xf]
          %v7121 = vld [vmem:[%s81 + $0x18] sm:$0xf]
          %v7122 = vld [vmem:[%s81 + $0x1c] sm:$0xf]
          %v7123 = vld [vmem:[%s81 + $0x20] sm:$0xf]
          %v7124 = vld [vmem:[%s81 + $0x24] sm:$0xf]
          %v7125 = vld [vmem:[%s81 + $0x28] sm:$0xf]
          %v7126 = vld [vmem:[%s81 + $0x2c] sm:$0xf]
          %v7127 = vld [vmem:[%s81 + $0x30] sm:$0xf]
          %v7128 = vld [vmem:[%s81 + $0x34] sm:$0xf]
          %v7129 = vld [vmem:[%s81 + $0x38] sm:$0xf]
          %v7130 = vld [vmem:[%s81 + $0x3c] sm:$0xf]
          %v7131 = vpack.c.bf16 %v7104, %v7103
          %v7132 = vpack.c.bf16 %v7106, %v7105
          %v7149 = vunpack.c.l.b16 %v7115
          %v7150 = vunpack.c.l.b16 %v7116
          %v7151 = vunpack.c.l.b16 %v7117
          %v7152 = vunpack.c.l.b16 %v7118
          %v7153 = vunpack.c.l.b16 %v7119
          %v7154 = vunpack.c.l.b16 %v7120
          %v7155 = vunpack.c.l.b16 %v7121
          %v7156 = vunpack.c.l.b16 %v7122
          %v7157 = vunpack.c.l.b16 %v7123
          %v7158 = vunpack.c.l.b16 %v7124
          %v7159 = vunpack.c.l.b16 %v7125
          %v7160 = vunpack.c.l.b16 %v7126
          %v7161 = vunpack.c.l.b16 %v7127
          %v7162 = vunpack.c.l.b16 %v7128
          %v7163 = vunpack.c.l.b16 %v7129
          %v7164 = vunpack.c.l.b16 %v7130
          %v7165 = vpack.c.b16 %v7150, %v7149
          %v7166 = vpack.c.b16 %v7152, %v7151
          %v7167 = vpack.c.b16 %v7154, %v7153
          %v7168 = vpack.c.b16 %v7156, %v7155
          %v7169 = vpack.c.b16 %v7158, %v7157
          %v7170 = vpack.c.b16 %v7160, %v7159
          %v7171 = vpack.c.b16 %v7162, %v7161
          %v7172 = vpack.c.b16 %v7164, %v7163
          %7181 = vmatprep.subr.bf16.mxu0 0
          %7182 = vmatpush1.bf16.msra.mxu0 %v7165
          %7183 = vmatprep.subr.bf16.mxu0 0
          %7184 = vmatpush1.bf16.msra.mxu0 %v7166
          %7185 = vmatprep.subr.bf16.mxu0 0
          %7186 = vmatpush1.bf16.msra.mxu0 %v7167
          %7187 = vmatprep.subr.bf16.mxu0 0
          %7188 = vmatpush1.bf16.msra.mxu0 %v7168
          %7189 = vmatprep.subr.bf16.mxu0 0
          %7190 = vmatpush1.bf16.msra.mxu0 %v7169
          %7191 = vmatprep.subr.bf16.mxu0 0
          %7192 = vmatpush1.bf16.msra.mxu0 %v7170
          %7193 = vmatprep.subr.bf16.mxu0 0
          %7194 = vmatpush1.bf16.msra.mxu0 %v7171
          %7195 = vmatprep.subr.bf16.mxu0 0
          %7196 = vmatpush1.bf16.msra.mxu0 %v7172
          %7197 = vmatprep.subr.bf16.mxu0 0
          %7198 = vmatpush1.bf16.msra.mxu0 0
          %7199 = vmatprep.subr.bf16.mxu0 0
          %7200 = vmatpush1.bf16.msra.mxu0 0
          %7201 = vmatprep.subr.bf16.mxu0 0
          %7202 = vmatpush1.bf16.msra.mxu0 0
          %7203 = vmatprep.subr.bf16.mxu0 0
          %7204 = vmatpush1.bf16.msra.mxu0 0
          %7205 = vmatprep.subr.bf16.mxu0 0
          %7206 = vmatpush1.bf16.msra.mxu0 0
          %7207 = vmatprep.subr.bf16.mxu0 0
          %7208 = vmatpush1.bf16.msra.mxu0 0
          %7209 = vmatprep.subr.bf16.mxu0 0
          %7210 = vmatpush1.bf16.msra.mxu0 0
          %7211 = vmatprep.subr.bf16.mxu0 0
          %7212 = vmatpush1.bf16.msra.mxu0 0
          %7213 = vmatprep.mubr.bf16.mxu0 0
          %7214 = vmatmul.mubr.bf16.gmra.mrb[0].mxu0 %v7131
          %v7215 = vpop.f32.mrb[0].mxu0
          %v7216 = vadd.f32 0.0, %v7215
          %v7217 = vpop.f32.mrb[0].mxu0
          %v7218 = vpop.f32.mrb[0].mxu0
          %v7219 = vadd.f32 0.0, %v7218
          %v7220 = vpop.f32.mrb[0].mxu0
          %7221 = vmatprep.mubr.bf16.mxu0 0
          %7222 = vmatmul.mubr.bf16.gmra.mrb[0].mxu0 %v7132
          %v7223 = vpop.f32.mrb[0].mxu0
          %v7224 = vadd.f32 0.0, %v7223
          %v7225 = vpop.f32.mrb[0].mxu0
          %v7226 = vpop.f32.mrb[0].mxu0
          %v7227 = vadd.f32 0.0, %v7226
          %v7228 = vpop.f32.mrb[0].mxu0
          %7229 = vdwg.mxu0
          %v7230 = vadd.f32 %v7111, %v7216
          %v7231 = vadd.f32 %v7112, %v7219
          %v7232 = vadd.f32 %v7113, %v7224
          %v7233 = vadd.f32 %v7114, %v7227
          %v7234 = vld [vmem:[%s83] sm:$0x1]
          %v7236 = vlaneseq
          %v7237 = vshrl.u32 %v7236, 7
          %v7238 = vsub.s32 0, %v7237
          %v7239 = vrot.slane %v7234, %v7238
          %v7241 = vadd.f32 %v7230, %v7239
          %v7242 = vadd.f32 %v7231, %v7239
          %v7243 = vadd.f32 %v7232, %v7239
          %v7244 = vadd.f32 %v7233, %v7239
          %7245 = vst [vmem:[#allocation2] sm:$0xff] %v7241
          %7246 = vst [vmem:[#allocation2 + $0x8] sm:$0xff] %v7242
          %7247 = vst [vmem:[#allocation2 + $0x10] sm:$0xff] %v7243
          %7248 = vst [vmem:[#allocation2 + $0x18] sm:$0xff] %v7244
        $region348: #{tpu_custom_call.1} parent=195 // pred_fallthru
          _
        %p7249 = scmp.eq.s32.totalorder %s127, 2
        // Predicated region
        $region349: #{tpu_custom_call.1} parent=195 // pred_check
          %p7250 = pneg %p7249
        $region350: #{tpu_custom_call.1} parent=195 // pred_check_branch
          %7252 = sbr.rel (%p7250) target = $region352
        $region351: #{tpu_custom_call.1} parent=195 // pred_region
          %v7253 = vld [vmem:[#allocation2] sm:$0xff]
          %v7254 = vld [vmem:[#allocation2 + $0x8] sm:$0xff]
          %v7255 = vld [vmem:[#allocation2 + $0x10] sm:$0xff]
          %v7256 = vld [vmem:[#allocation2 + $0x18] sm:$0xff]
          %7257 = vst [vmem:[#allocation47] sm:$0xff] %v7253
          %7258 = vst [vmem:[#allocation47 + $0x8] sm:$0xff] %v7254
          %7259 = vst [vmem:[#allocation47 + $0x10] sm:$0xff] %v7255
          %7260 = vst [vmem:[#allocation47 + $0x18] sm:$0xff] %v7256
          %v7261 = vld [vmem:[%s77] sm:$0xf]
          %v7262 = vld [vmem:[%s77 + $0x4] sm:$0xf]
          %v7263 = vld [vmem:[%s77 + $0x8] sm:$0xf]
          %v7264 = vld [vmem:[%s77 + $0xc] sm:$0xf]
          %v7265 = vld [vmem:[%s77 + $0x10] sm:$0xf]
          %v7266 = vld [vmem:[%s77 + $0x14] sm:$0xf]
          %v7267 = vld [vmem:[%s77 + $0x18] sm:$0xf]
          %v7268 = vld [vmem:[%s77 + $0x1c] sm:$0xf]
          %v7269 = vld [vmem:[%s77 + $0x20] sm:$0xf]
          %v7270 = vld [vmem:[%s77 + $0x24] sm:$0xf]
          %v7271 = vld [vmem:[%s77 + $0x28] sm:$0xf]
          %v7272 = vld [vmem:[%s77 + $0x2c] sm:$0xf]
          %v7273 = vld [vmem:[%s77 + $0x30] sm:$0xf]
          %v7274 = vld [vmem:[%s77 + $0x34] sm:$0xf]
          %v7275 = vld [vmem:[%s77 + $0x38] sm:$0xf]
          %v7276 = vld [vmem:[%s77 + $0x3c] sm:$0xf]
          %v7277 = vld [vmem:[%s79] sm:$0x1]
          %v7278 = vpack.c.bf16 %v7254, %v7253
          %v7279 = vpack.c.bf16 %v7256, %v7255
          %v7281 = vlaneseq
          %v7282 = vshrl.u32 %v7281, 7
          %v7283 = vsub.s32 0, %v7282
          %v7284 = vrot.slane %v7277, %v7283
          %v7302 = vunpack.c.l.b16 %v7261
          %v7303 = vunpack.c.l.b16 %v7262
          %v7304 = vunpack.c.l.b16 %v7263
          %v7305 = vunpack.c.l.b16 %v7264
          %v7306 = vunpack.c.l.b16 %v7265
          %v7307 = vunpack.c.l.b16 %v7266
          %v7308 = vunpack.c.l.b16 %v7267
          %v7309 = vunpack.c.l.b16 %v7268
          %v7310 = vunpack.c.l.b16 %v7269
          %v7311 = vunpack.c.l.b16 %v7270
          %v7312 = vunpack.c.l.b16 %v7271
          %v7313 = vunpack.c.l.b16 %v7272
          %v7314 = vunpack.c.l.b16 %v7273
          %v7315 = vunpack.c.l.b16 %v7274
          %v7316 = vunpack.c.l.b16 %v7275
          %v7317 = vunpack.c.l.b16 %v7276
          %v7318 = vpack.c.b16 %v7303, %v7302
          %v7319 = vpack.c.b16 %v7305, %v7304
          %v7320 = vpack.c.b16 %v7307, %v7306
          %v7321 = vpack.c.b16 %v7309, %v7308
          %v7322 = vpack.c.b16 %v7311, %v7310
          %v7323 = vpack.c.b16 %v7313, %v7312
          %v7324 = vpack.c.b16 %v7315, %v7314
          %v7325 = vpack.c.b16 %v7317, %v7316
          %7334 = vmatprep.subr.bf16.mxu0 0
          %7335 = vmatpush1.bf16.msra.mxu0 %v7318
          %7336 = vmatprep.subr.bf16.mxu0 0
          %7337 = vmatpush1.bf16.msra.mxu0 %v7319
          %7338 = vmatprep.subr.bf16.mxu0 0
          %7339 = vmatpush1.bf16.msra.mxu0 %v7320
          %7340 = vmatprep.subr.bf16.mxu0 0
          %7341 = vmatpush1.bf16.msra.mxu0 %v7321
          %7342 = vmatprep.subr.bf16.mxu0 0
          %7343 = vmatpush1.bf16.msra.mxu0 %v7322
          %7344 = vmatprep.subr.bf16.mxu0 0
          %7345 = vmatpush1.bf16.msra.mxu0 %v7323
          %7346 = vmatprep.subr.bf16.mxu0 0
          %7347 = vmatpush1.bf16.msra.mxu0 %v7324
          %7348 = vmatprep.subr.bf16.mxu0 0
          %7349 = vmatpush1.bf16.msra.mxu0 %v7325
          %7350 = vmatprep.subr.bf16.mxu0 0
          %7351 = vmatpush1.bf16.msra.mxu0 0
          %7352 = vmatprep.subr.bf16.mxu0 0
          %7353 = vmatpush1.bf16.msra.mxu0 0
          %7354 = vmatprep.subr.bf16.mxu0 0
          %7355 = vmatpush1.bf16.msra.mxu0 0
          %7356 = vmatprep.subr.bf16.mxu0 0
          %7357 = vmatpush1.bf16.msra.mxu0 0
          %7358 = vmatprep.subr.bf16.mxu0 0
          %7359 = vmatpush1.bf16.msra.mxu0 0
          %7360 = vmatprep.subr.bf16.mxu0 0
          %7361 = vmatpush1.bf16.msra.mxu0 0
          %7362 = vmatprep.subr.bf16.mxu0 0
          %7363 = vmatpush1.bf16.msra.mxu0 0
          %7364 = vmatprep.subr.bf16.mxu0 0
          %7365 = vmatpush1.bf16.msra.mxu0 0
          %7366 = vmatprep.mubr.bf16.mxu0 0
          %7367 = vmatmul.mubr.bf16.gmra.mrb[0].mxu0 %v7278
          %v7368 = vpop.f32.mrb[0].mxu0
          %v7369 = vadd.f32 %v7284, %v7368
          %v7370 = vpop.f32.mrb[0].mxu0
          %v7371 = vpop.f32.mrb[0].mxu0
          %v7372 = vadd.f32 %v7284, %v7371
          %v7373 = vpop.f32.mrb[0].mxu0
          %7374 = vmatprep.mubr.bf16.mxu0 0
          %7375 = vmatmul.mubr.bf16.gmra.mrb[0].mxu0 %v7279
          %v7376 = vpop.f32.mrb[0].mxu0
          %v7377 = vadd.f32 %v7284, %v7376
          %v7378 = vpop.f32.mrb[0].mxu0
          %v7379 = vpop.f32.mrb[0].mxu0
          %v7380 = vadd.f32 %v7284, %v7379
          %v7381 = vpop.f32.mrb[0].mxu0
          %7382 = vdwg.mxu0
          %7383 = vmax.xlane.f32.xlu0 %v7369
          %v7384 = vpop.xlane.xlu0 %7383
          %7385 = vmax.xlane.f32.xlu0 %v7372
          %v7386 = vpop.xlane.xlu0 %7385
          %7387 = vmax.xlane.f32.xlu0 %v7377
          %v7388 = vpop.xlane.xlu0 %7387
          %7389 = vmax.xlane.f32.xlu0 %v7380
          %v7390 = vpop.xlane.xlu0 %7389
          %v7391 = vsub.f32 %v7369, %v7384
          %v7392 = vsub.f32 %v7372, %v7386
          %v7393 = vsub.f32 %v7377, %v7388
          %v7394 = vsub.f32 %v7380, %v7390
          %v7395 = vmul.f32 %v7391, 1.442695
          %v7396 = vpow.pop %v7395
          %v7397 = vmul.f32 %v7392, 1.442695
          %v7398 = vpow.pop %v7397
          %v7399 = vmul.f32 %v7393, 1.442695
          %v7400 = vpow.pop %v7399
          %v7401 = vmul.f32 %v7394, 1.442695
          %v7402 = vpow.pop %v7401
          %7403 = vadd.xlane.f32.xlu0 %v7396
          %v7404 = vpop.xlane.xlu0 %7403
          %7405 = vadd.xlane.f32.xlu0 %v7398
          %v7406 = vpop.xlane.xlu0 %7405
          %7407 = vadd.xlane.f32.xlu0 %v7400
          %v7408 = vpop.xlane.xlu0 %7407
          %7409 = vadd.xlane.f32.xlu0 %v7402
          %v7410 = vpop.xlane.xlu0 %7409
          %v7411 = vlog2.pop %v7404
          %v7412 = vmul.f32 %v7411, 0.6931472
          %v7413 = vlog2.pop %v7406
          %v7414 = vmul.f32 %v7413, 0.6931472
          %v7415 = vlog2.pop %v7408
          %v7416 = vmul.f32 %v7415, 0.6931472
          %v7417 = vlog2.pop %v7410
          %v7418 = vmul.f32 %v7417, 0.6931472
          %v7419 = vsub.f32 %v7391, %v7412
          %v7420 = vsub.f32 %v7392, %v7414
          %v7421 = vsub.f32 %v7393, %v7416
          %v7422 = vsub.f32 %v7394, %v7418
          %7423 = vst [vmem:[#allocation46] sm:$0xff] %v7419
          %7424 = vst [vmem:[#allocation46 + $0x8] sm:$0xff] %v7420
          %7425 = vst [vmem:[#allocation46 + $0x10] sm:$0xff] %v7421
          %7426 = vst [vmem:[#allocation46 + $0x18] sm:$0xff] %v7422
        $region352: #{tpu_custom_call.1} parent=195 // pred_fallthru
          _
        %s7427 = sand.u32 %s122, 1
        %s7428 = scalar_lea.sflag [#allocation9], %s7427
        %s7429 = sand.u32 %s1300, 1
        %s7430 = smul.addr %s7429, 32
        %s7431 = scalar_lea.vmem [#allocation49], %s7430
        %s7432 = sand.u32 %s122, 1
        %s7433 = scalar_lea.sflag [#allocation9], %s7432
        %s7434 = sand.u32 %s1328, 1
        %s7435 = smul.addr %s7434, 32
        %s7436 = scalar_lea.vmem [#allocation50], %s7435
        // Predicated region
        $region353: #{tpu_custom_call.1} parent=195 // pred_check
          %p7437 = pneg %p1256
        $region354: #{tpu_custom_call.1} parent=195 // pred_check_branch
          %7439 = sbr.rel (%p7437) target = $region356
        $region355: #{tpu_custom_call.1} parent=195 // pred_region
          %s7440 = smul.u32 2, %s126
          %s7442 = ssub.s32 512, 512
          %7443 = vsyncadd [#allocation9], %s7442
          %s7444 = smul.addr %s7440, 2
          %s7445 = smul.addr %s7444, 128
          %s7446 = scalar_lea.hbm %s93, %s7445
          %s7447 = sshll.u32 [#allocation46], 4
          %s7448 = int_to_ptr.vmem [resolvable:$true] %s7447
          %7453 = dma.vmem_to_hbm [thread:$0]  %s7448, 512, %s7446, [#allocation9], 128, 128, 8
        $region356: #{tpu_custom_call.1} parent=195 // pred_fallthru
          _
        // Predicated region
        $region357: #{tpu_custom_call.1} parent=195 // pred_check
          %p7454 = pneg %p1282
        $region358: #{tpu_custom_call.1} parent=195 // pred_check_branch
          %7456 = sbr.rel (%p7454) target = $region360
        $region359: #{tpu_custom_call.1} parent=195 // pred_region
          %s7457 = smul.u32 2, %s126
          %s7459 = ssub.s32 512, 512
          %7460 = vsyncadd [#allocation48], %s7459
          %s7461 = smul.addr %s7457, 2
          %s7462 = smul.addr %s7461, 128
          %s7463 = scalar_lea.hbm %s95, %s7462
          %s7464 = sshll.u32 [#allocation47], 4
          %s7465 = int_to_ptr.vmem [resolvable:$true] %s7464
          %7470 = dma.vmem_to_hbm [thread:$0]  %s7465, 512, %s7463, [#allocation48], 128, 128, 8
        $region360: #{tpu_custom_call.1} parent=195 // pred_fallthru
          _
        // Predicated region
        $region361: #{tpu_custom_call.1} parent=195 // pred_check
          %p7471 = pneg %p1310
        $region362: #{tpu_custom_call.1} parent=195 // pred_check_branch
          %7473 = sbr.rel (%p7471) target = $region364
        $region363: #{tpu_custom_call.1} parent=195 // pred_region
          %s7474 = smul.u32 2, %s126
          %s7476 = ssub.s32 512, 512
          %7477 = vsyncadd %s7428, %s7476
          %s7478 = smul.addr %s7474, 2
          %s7479 = smul.addr %s127, 4
          %s7480 = sadd.s32 %s7478, %s7479
          %s7481 = smul.addr %s7480, 128
          %s7482 = scalar_lea.hbm %s97, %s7481
          %s7483 = sshll.u32 %s7431, 4
          %s7484 = int_to_ptr.vmem [resolvable:$true] %s7483
          %7489 = dma.vmem_to_hbm [thread:$0]  %s7484, 512, %s7482, %s7428, 128, 128, 8
        $region364: #{tpu_custom_call.1} parent=195 // pred_fallthru
          _
        // Predicated region
        $region365: #{tpu_custom_call.1} parent=195 // pred_check
          %p7490 = pneg %p1338
        $region366: #{tpu_custom_call.1} parent=195 // pred_check_branch
          %7492 = sbr.rel (%p7490) target = $region368
        $region367: #{tpu_custom_call.1} parent=195 // pred_region
          %s7493 = smul.u32 2, %s126
          %s7495 = ssub.s32 512, 512
          %7496 = vsyncadd %s7433, %s7495
          %s7497 = smul.addr %s7493, 2
          %s7498 = smul.addr %s127, 4
          %s7499 = sadd.s32 %s7497, %s7498
          %s7500 = smul.addr %s7499, 128
          %s7501 = scalar_lea.hbm %s99, %s7500
          %s7502 = sshll.u32 %s7436, 4
          %s7503 = int_to_ptr.vmem [resolvable:$true] %s7502
          %7508 = dma.vmem_to_hbm [thread:$0]  %s7503, 512, %s7501, %s7433, 128, 128, 8
        $region368: #{tpu_custom_call.1} parent=195 // pred_fallthru
          _
        // Predicated region
        $region369: #{tpu_custom_call.1} parent=195 // pred_check
          %p7509 = pneg %p1256
        $region370: #{tpu_custom_call.1} parent=195 // pred_check_branch
          %7511 = sbr.rel (%p7509) target = $region372
        $region371: #{tpu_custom_call.1} parent=195 // pred_region
          %7512 = dma.done [#allocation9], 512
        $region372: #{tpu_custom_call.1} parent=195 // pred_fallthru
          _
        // Predicated region
        $region373: #{tpu_custom_call.1} parent=195 // pred_check
          %p7513 = pneg %p1282
        $region374: #{tpu_custom_call.1} parent=195 // pred_check_branch
          %7515 = sbr.rel (%p7513) target = $region376
        $region375: #{tpu_custom_call.1} parent=195 // pred_region
          %7516 = dma.done [#allocation48], 512
        $region376: #{tpu_custom_call.1} parent=195 // pred_fallthru
          _
      $region196: #{tpu_custom_call.1} parent=5 // pred_fallthru
        _
      %p7517 = scmp.le.s32.totalorder 2, %s117
      // Predicated region
      $region377: #{tpu_custom_call.1} parent=5 // pred_check
        %p7518 = pneg %p7517
      $region378: #{tpu_custom_call.1} parent=5 // pred_check_branch
        %7520 = sbr.rel (%p7518) target = $region380
      $region379: #{tpu_custom_call.1} parent=5 // pred_region
        %s7521 = ssub.s32 %s117, 2
        // Predicated region
        $region381: #{tpu_custom_call.1} parent=379 // pred_check
          %p7522 = pneg %p1316
        $region382: #{tpu_custom_call.1} parent=379 // pred_check_branch
          %7524 = sbr.rel (%p7522) target = $region384
        $region383: #{tpu_custom_call.1} parent=379 // pred_region
          %s7525 = sand.u32 %s123, 1
          %s7526 = scalar_lea.sflag [#allocation9], %s7525
          %s7527 = sand.u32 %s1301, 1
          %s7528 = smul.addr %s7527, 32
          %s7529 = scalar_lea.vmem [#allocation49], %s7528
          %7530 = dma.done %s7526, 512
        $region384: #{tpu_custom_call.1} parent=379 // pred_fallthru
          _
        // Predicated region
        $region385: #{tpu_custom_call.1} parent=379 // pred_check
          %p7531 = pneg %p1344
        $region386: #{tpu_custom_call.1} parent=379 // pred_check_branch
          %7533 = sbr.rel (%p7531) target = $region388
        $region387: #{tpu_custom_call.1} parent=379 // pred_region
          %s7534 = sand.u32 %s123, 1
          %s7535 = scalar_lea.sflag [#allocation9], %s7534
          %s7536 = sand.u32 %s1329, 1
          %s7537 = smul.addr %s7536, 32
          %s7538 = scalar_lea.vmem [#allocation50], %s7537
          %7539 = dma.done %s7535, 512
        $region388: #{tpu_custom_call.1} parent=379 // pred_fallthru
          _
      $region380: #{tpu_custom_call.1} parent=5 // pred_fallthru
        _
    $region6: #{tpu_custom_call.1} parent=1 // loop_footer
      %s121 = sadd.s32 1, %s117
    $region7: #{tpu_custom_call.1} parent=1 // loop_footer_branch
      %116 = sbr.rel target = $region3
    $region8: #{tpu_custom_call.1} parent=1 // loop_exit
      _
    %7540 = vsyncpa [#allocation8], 1
    %s7541 = scalar_lea.sflag [#allocation8], 1
    %7542 = vsyncpa %s7541, 1
    %7543 = vsyncpa [#allocation11], 1
    %7544 = vsyncpa [#allocation45], 1
    %7545 = vsyncpa [#allocation9], 1
    %s7546 = scalar_lea.sflag [#allocation9], 1
    %7547 = vsyncpa %s7546, 1
    %7548 = vsyncpa [#allocation48], 1

</llo_original>
